<compile_context>
chip_gen: v7x
topology: tpu7x:2x2x1
jax: 0.10.0
libtpu: 0.0.40
codegen_flags: <defaults>
</compile_context>

<pallas_src>
import jax
import jax.numpy as jnp
from jax import lax
from jax.experimental import pallas as pl
from jax.experimental.pallas import tpu as pltpu

C_OUT = 32   # every conv layer has 32 output channels
C_IN1 = 8    # conv1's single input channel, zero-padded to 8 lanes


# ------------------------------ fused kernel ------------------------------- #

def _conv3x3_relu_pool(x_pad, w_ref, b_ref, H, W, Cin, write_out):
    """conv3x3('same') + bias + ReLU + maxpool2x2 for one layer of one image.

    x_pad : VMEM ref (H+2, W+2, Cin); 1-pixel border is zero ('same' padding).
    w_ref : VMEM ref (3, 3, Cin, C_OUT)  (HWIO).
    b_ref : VMEM ref (1, C_OUT).
    write_out(pr, pooled): stores pooled output row `pr`; pooled = (W//2, C_OUT).
    """
    W2 = W // 2
    # stride-2 column-compaction matrices, hoisted out of the row loop.
    ii = lax.broadcasted_iota(jnp.int32, (W, 2 * W), 0)
    jj = lax.broadcasted_iota(jnp.int32, (W, 2 * W), 1)
    sel_even = jnp.where(jj == 2 * ii, 1.0, 0.0).astype(jnp.float32)
    sel_odd = jnp.where(jj == 2 * ii + 1, 1.0, 0.0).astype(jnp.float32)
    bias = b_ref[...]                                            # (1, C_OUT)

    def body(pr, carry):
        r0 = 2 * pr                                              # first conv row of the pair
        acc = jnp.zeros((2 * W, C_OUT), jnp.float32)             # register resident
        for dh in range(3):                                      # 9 taps, unrolled
            for dw in range(3):
                patch = x_pad[pl.ds(r0 + dh, 2), dw:dw + W, :]   # (2, W, Cin)
                acc = acc + jnp.dot(patch.reshape(2 * W, Cin), w_ref[dh, dw],
                                    preferred_element_type=jnp.float32)
        acc = jnp.maximum(acc + bias, 0.0)                       # bias + ReLU
        # 2x2 max-pool.  Flat row s = r*W + w (r in {0,1}); compact even/odd w
        # columns with tiny selection matmuls, then fold the two conv rows.
        even = jnp.dot(sel_even, acc, preferred_element_type=jnp.float32)   # (W, C)
        odd = jnp.dot(sel_odd, acc, preferred_element_type=jnp.float32)     # (W, C)
        m = jnp.maximum(even, odd)                               # [row r0 | row r0+1]
        pooled = jnp.maximum(m[0:W2, :], m[W2:W, :])             # (W2, C_OUT)
        write_out(pr, pooled)
        return carry

    lax.fori_loop(0, H // 2, body, 0)


def simple_cnn_kernel(x_ref, w1, b1, w2, b2, w3, b3, w4, b4, fcw_ref, fcb_ref,
                      o_ref, buf1, buf2, buf3, buf4, feat):
    """Whole SimpleCNN forward for one image (one grid step per image)."""
    H = x_ref.shape[1]                                           # 64

    # Zero the padded scratch activations: interiors are overwritten below, the
    # 1-pixel borders stay zero and provide the conv 'same' padding in-kernel.
    for buf in (buf1, buf2, buf3, buf4):
        buf[...] = jnp.zeros(buf.shape, buf.dtype)

    # Stage this image into the interior of the layer-1 padded buffer.
    buf1[1:1 + H, 1:1 + H, :] = x_ref[0]

    def write_padded(out_buf, W2):
        def write(pr, pooled):
            out_buf[pl.ds(1 + pr, 1), 1:1 + W2, :] = pooled.reshape(1, W2, C_OUT)
        return write

    def write_feat(pr, pooled):                                  # layer-4 output
        feat[pl.ds(pr, 1), :, :] = pooled.reshape(1, pooled.shape[0], C_OUT)

    _conv3x3_relu_pool(buf1, w1, b1, H, H, C_IN1, write_padded(buf2, H // 2))
    _conv3x3_relu_pool(buf2, w2, b2, H // 2, H // 2, C_OUT, write_padded(buf3, H // 4))
    _conv3x3_relu_pool(buf3, w3, b3, H // 4, H // 4, C_OUT, write_padded(buf4, H // 8))
    _conv3x3_relu_pool(buf4, w4, b4, H // 8, H // 8, C_OUT, write_feat)

    # FC (32*4*4 -> 1) + sigmoid.  fc weights are stored in (h, w, c) order, so
    # the NHWC features feed the FC directly (no runtime flatten/transpose).
    prod = feat[...] * fcw_ref[...]                              # (4, 4, 32)
    z = jnp.sum(prod, axis=2, keepdims=True)                     # (4, 4, 1)
    z = jnp.sum(z, axis=1, keepdims=True)                        # (4, 1, 1)
    z = jnp.sum(z, axis=0, keepdims=True)                        # (1, 1, 1)
    o_ref[...] = 1.0 / (1.0 + jnp.exp(-(z + fcb_ref[...])))


# ------------------------------ forward wrapper ----------------------------- #

def simple_cnn_forward(x_nchw, params):
    N, C, H, W = x_nchw.shape
    assert C == 1 and H == W and H % 16 == 0
    # NCHW with C=1 -> NHWC is a pure reshape; pad channels 1 -> 8 once (tiny).
    x = x_nchw.reshape(N, H, W, 1).astype(jnp.float32)
    x = jnp.pad(x, ((0, 0), (0, 0), (0, 0), (0, C_IN1 - 1)))

    (w1, b1), (w2, b2), (w3, b3), (w4, b4) = params["convs"]
    fcw, fcb = params["fc_w"], params["fc_b"]
    H4 = H // 16

    def full(shape):
        return pl.BlockSpec(shape, lambda n: (0,) * len(shape))

    out = pl.pallas_call(
        simple_cnn_kernel,
        out_shape=jax.ShapeDtypeStruct((N, 1, 1), jnp.float32),
        grid=(N,),
        in_specs=[
            pl.BlockSpec((1, H, W, C_IN1), lambda n: (n, 0, 0, 0)),
            full((3, 3, C_IN1, C_OUT)), full((1, C_OUT)),
            full((3, 3, C_OUT, C_OUT)), full((1, C_OUT)),
            full((3, 3, C_OUT, C_OUT)), full((1, C_OUT)),
            full((3, 3, C_OUT, C_OUT)), full((1, C_OUT)),
            full((H4, H4, C_OUT)), full((1, 1)),
        ],
        out_specs=pl.BlockSpec((1, 1, 1), lambda n: (n, 0, 0)),
        scratch_shapes=[
            pltpu.VMEM((H + 2, W + 2, C_IN1), jnp.float32),           # layer-1 padded in
            pltpu.VMEM((H // 2 + 2, W // 2 + 2, C_OUT), jnp.float32),  # layer-2 padded in
            pltpu.VMEM((H // 4 + 2, W // 4 + 2, C_OUT), jnp.float32),  # layer-3 padded in
            pltpu.VMEM((H // 8 + 2, W // 8 + 2, C_OUT), jnp.float32),  # layer-4 padded in
            pltpu.VMEM((H4, H4, C_OUT), jnp.float32),                  # pooled features
        ],
        compiler_params=pltpu.CompilerParams(
            dimension_semantics=("parallel",)),
    )(x, w1, b1, w2, b2, w3, b3, w4, b4, fcw, fcb)
    return out.reshape(N, 1)


# --------------------------- reference (pure JAX) --------------------------- #

def reference_forward(x_nchw, params):
    n = x_nchw.shape[0]
    x = x_nchw.reshape(n, x_nchw.shape[2], x_nchw.shape[3], 1).astype(jnp.float32)
    x = jnp.pad(x, ((0, 0), (0, 0), (0, 0), (0, C_IN1 - 1)))
    for (w, b) in params["convs"]:
        x = lax.conv_general_dilated(
            x, w, window_strides=(1, 1), padding="SAME",
            dimension_numbers=("NHWC", "HWIO", "NHWC"),
            precision=lax.Precision.HIGHEST)
        x = jnp.maximum(x + b.reshape(1, 1, 1, -1), 0.0)
        nb, h, wd, c = x.shape
        x = x.reshape(nb, h // 2, 2, wd // 2, 2, c).max(axis=(2, 4))
    z = jnp.einsum("nhwc,hwc->n", x, params["fc_w"],
                   precision=lax.Precision.HIGHEST)[:, None] + params["fc_b"]
    return jax.nn.sigmoid(z)


# ------------------------------ parameter init ------------------------------ #

def init_params(key, spatial=64):
    def conv_init(k, cin, cout):
        bound = 1.0 / (cin * 9) ** 0.5
        kw, kb = jax.random.split(k)
        w = jax.random.uniform(kw, (3, 3, cin, cout), jnp.float32, -bound, bound)
        b = jax.random.uniform(kb, (1, cout), jnp.float32, -bound, bound)
        return w, b

    k1, k2, k3, k4, k5 = jax.random.split(key, 5)
    w1, b1 = conv_init(k1, 1, C_OUT)
    w1 = jnp.pad(w1, ((0, 0), (0, 0), (0, C_IN1 - 1), (0, 0)))   # Cin 1 -> 8 (zeros)
    convs = [(w1, b1),
             conv_init(k2, C_OUT, C_OUT),
             conv_init(k3, C_OUT, C_OUT),
             conv_init(k4, C_OUT, C_OUT)]

    s4 = spatial // 16                                           # spatial after 4 pools
    feat = C_OUT * s4 * s4
    bound = 1.0 / feat ** 0.5
    kw, kb = jax.random.split(k5)
    # fc weight stored directly in (h, w, c) order; a real PyTorch checkpoint's
    # fc1.weight (flattened in (c, h, w) order) would be permuted once here.
    fc_w = jax.random.uniform(kw, (s4, s4, C_OUT), jnp.float32, -bound, bound)
    fc_b = jax.random.uniform(kb, (1, 1), jnp.float32, -bound, bound)
    return {"convs": convs, "fc_w": fc_w, "fc_b": fc_b}


if __name__ == "__main__":
    key = jax.random.PRNGKey(0)
    kx, kp = jax.random.split(key)
    spatial = 64
    x = jax.random.normal(kx, (2, 1, spatial, spatial), jnp.float32)  # NCHW, like PyTorch
    params = init_params(kp, spatial=spatial)

    out = jax.jit(simple_cnn_forward)(x, params)
    out = jax.block_until_ready(out)

    assert out.shape == (2, 1), out.shape
    assert bool(jnp.all(jnp.isfinite(out)))
    assert bool(jnp.all((out >= 0.0) & (out <= 1.0)))

    ref = jax.jit(reference_forward)(x, params)
    assert bool(jnp.allclose(out, ref, atol=2e-3, rtol=0.0)), (out, ref)

    print("KERNEL_OK")
</pallas_src>

<mosaic_0001>
module attributes {stable_mosaic.version = 11 : i64} {
  func.func @simple_cnn_kernel(%arg0: i32, %arg1: memref<1x64x64x8xf32, #tpu.memory_space<vmem>>, %arg2: memref<3x3x8x32xf32, #tpu.memory_space<vmem>>, %arg3: memref<1x32xf32, #tpu.memory_space<vmem>>, %arg4: memref<3x3x32x32xf32, #tpu.memory_space<vmem>>, %arg5: memref<1x32xf32, #tpu.memory_space<vmem>>, %arg6: memref<3x3x32x32xf32, #tpu.memory_space<vmem>>, %arg7: memref<1x32xf32, #tpu.memory_space<vmem>>, %arg8: memref<3x3x32x32xf32, #tpu.memory_space<vmem>>, %arg9: memref<1x32xf32, #tpu.memory_space<vmem>>, %arg10: memref<4x4x32xf32, #tpu.memory_space<vmem>>, %arg11: memref<1x1xf32, #tpu.memory_space<vmem>>, %arg12: memref<1x1x1xf32, #tpu.memory_space<vmem>>, %arg13: memref<66x66x8xf32, #tpu.memory_space<vmem>>, %arg14: memref<34x34x32xf32, #tpu.memory_space<vmem>>, %arg15: memref<18x18x32xf32, #tpu.memory_space<vmem>>, %arg16: memref<10x10x32xf32, #tpu.memory_space<vmem>>, %arg17: memref<4x4x32xf32, #tpu.memory_space<vmem>>) attributes {dimension_semantics = [#tpu.dimension_semantics<parallel>], iteration_bounds = array<i64: 2>, scalar_prefetch = 0 : i64, scratch_operands = 5 : i64, tpu.core_type = #tpu.core_type<tc>, window_params = [{transform_indices = @transform_0, window_bounds = array<i64: 1, 64, 64, 8>}, {pipeline_mode = #tpu.pipeline_mode<synchronous>, transform_indices = @transform_1, window_bounds = array<i64: 3, 3, 8, 32>}, {pipeline_mode = #tpu.pipeline_mode<synchronous>, transform_indices = @transform_2, window_bounds = array<i64: 1, 32>}, {pipeline_mode = #tpu.pipeline_mode<synchronous>, transform_indices = @transform_3, window_bounds = array<i64: 3, 3, 32, 32>}, {pipeline_mode = #tpu.pipeline_mode<synchronous>, transform_indices = @transform_4, window_bounds = array<i64: 1, 32>}, {pipeline_mode = #tpu.pipeline_mode<synchronous>, transform_indices = @transform_5, window_bounds = array<i64: 3, 3, 32, 32>}, {pipeline_mode = #tpu.pipeline_mode<synchronous>, transform_indices = @transform_6, window_bounds = array<i64: 1, 32>}, {pipeline_mode = #tpu.pipeline_mode<synchronous>, transform_indices = @transform_7, window_bounds = array<i64: 3, 3, 32, 32>}, {pipeline_mode = #tpu.pipeline_mode<synchronous>, transform_indices = @transform_8, window_bounds = array<i64: 1, 32>}, {pipeline_mode = #tpu.pipeline_mode<synchronous>, transform_indices = @transform_9, window_bounds = array<i64: 4, 4, 32>}, {pipeline_mode = #tpu.pipeline_mode<synchronous>, transform_indices = @transform_10, window_bounds = array<i64: 1, 1>}, {transform_indices = @transform_11, window_bounds = array<i64: 1, 1, 1>}]} {
    %cst = arith.constant 0.000000e+00 : f32
    %0 = vector.broadcast %cst : f32 to vector<66x66x8xf32>
    %c0 = arith.constant 0 : index
    %c0_0 = arith.constant 0 : index
    %c0_1 = arith.constant 0 : index
    %1 = vector.load %arg13[%c0, %c0_0, %c0_1] : memref<66x66x8xf32, #tpu.memory_space<vmem>>, vector<66x66x8xf32>
    tpu.vector_store %arg13[%c0, %c0_0, %c0_1], %0 {strides = array<i32>} : memref<66x66x8xf32, #tpu.memory_space<vmem>>, vector<66x66x8xf32>,
    %cst_2 = arith.constant 0.000000e+00 : f32
    %2 = vector.broadcast %cst_2 : f32 to vector<34x34x32xf32>
    %c0_3 = arith.constant 0 : index
    %c0_4 = arith.constant 0 : index
    %c0_5 = arith.constant 0 : index
    %3 = vector.load %arg14[%c0_3, %c0_4, %c0_5] : memref<34x34x32xf32, #tpu.memory_space<vmem>>, vector<34x34x32xf32>
    tpu.vector_store %arg14[%c0_3, %c0_4, %c0_5], %2 {strides = array<i32>} : memref<34x34x32xf32, #tpu.memory_space<vmem>>, vector<34x34x32xf32>,
    %cst_6 = arith.constant 0.000000e+00 : f32
    %4 = vector.broadcast %cst_6 : f32 to vector<18x18x32xf32>
    %c0_7 = arith.constant 0 : index
    %c0_8 = arith.constant 0 : index
    %c0_9 = arith.constant 0 : index
    %5 = vector.load %arg15[%c0_7, %c0_8, %c0_9] : memref<18x18x32xf32, #tpu.memory_space<vmem>>, vector<18x18x32xf32>
    tpu.vector_store %arg15[%c0_7, %c0_8, %c0_9], %4 {strides = array<i32>} : memref<18x18x32xf32, #tpu.memory_space<vmem>>, vector<18x18x32xf32>,
    %cst_10 = arith.constant 0.000000e+00 : f32
    %6 = vector.broadcast %cst_10 : f32 to vector<10x10x32xf32>
    %c0_11 = arith.constant 0 : index
    %c0_12 = arith.constant 0 : index
    %c0_13 = arith.constant 0 : index
    %7 = vector.load %arg16[%c0_11, %c0_12, %c0_13] : memref<10x10x32xf32, #tpu.memory_space<vmem>>, vector<10x10x32xf32>
    tpu.vector_store %arg16[%c0_11, %c0_12, %c0_13], %6 {strides = array<i32>} : memref<10x10x32xf32, #tpu.memory_space<vmem>>, vector<10x10x32xf32>,
    %c0_14 = arith.constant 0 : index
    %c0_15 = arith.constant 0 : index
    %c0_16 = arith.constant 0 : index
    %c0_17 = arith.constant 0 : index
    %8 = vector.load %arg1[%c0_14, %c0_15, %c0_16, %c0_17] : memref<1x64x64x8xf32, #tpu.memory_space<vmem>>, vector<1x64x64x8xf32>
    %9 = vector.shape_cast %8 : vector<1x64x64x8xf32> to vector<64x64x8xf32>
    %c1 = arith.constant 1 : index
    %c1_18 = arith.constant 1 : index
    %c0_19 = arith.constant 0 : index
    %10 = vector.load %arg13[%c1, %c1_18, %c0_19] : memref<66x66x8xf32, #tpu.memory_space<vmem>>, vector<64x64x8xf32>
    tpu.vector_store %arg13[%c1, %c1_18, %c0_19], %9 {strides = array<i32>} : memref<66x66x8xf32, #tpu.memory_space<vmem>>, vector<64x64x8xf32>,
    %11 = tpu.iota {dimensions = array<i32: 0>} : vector<64x128xi32>
    %12 = tpu.iota {dimensions = array<i32: 1>} : vector<64x128xi32>
    %c2_i32 = arith.constant 2 : i32
    %13 = vector.broadcast %c2_i32 : i32 to vector<64x128xi32>
    %14 = arith.muli %13, %11 : vector<64x128xi32>
    %15 = arith.cmpi eq, %12, %14 : vector<64x128xi32>
    %cst_20 = arith.constant 1.000000e+00 : f32
    %cst_21 = arith.constant 0.000000e+00 : f32
    %16 = vector.broadcast %cst_20 : f32 to vector<64x128xf32>
    %17 = vector.broadcast %cst_21 : f32 to vector<64x128xf32>
    %18 = arith.select %15, %16, %17 : vector<64x128xi1>, vector<64x128xf32>
    %c2_i32_22 = arith.constant 2 : i32
    %19 = vector.broadcast %c2_i32_22 : i32 to vector<64x128xi32>
    %20 = arith.muli %19, %11 : vector<64x128xi32>
    %c1_i32 = arith.constant 1 : i32
    %21 = vector.broadcast %c1_i32 : i32 to vector<64x128xi32>
    %22 = arith.addi %20, %21 : vector<64x128xi32>
    %23 = arith.cmpi eq, %12, %22 : vector<64x128xi32>
    %cst_23 = arith.constant 1.000000e+00 : f32
    %cst_24 = arith.constant 0.000000e+00 : f32
    %24 = vector.broadcast %cst_23 : f32 to vector<64x128xf32>
    %25 = vector.broadcast %cst_24 : f32 to vector<64x128xf32>
    %26 = arith.select %23, %24, %25 : vector<64x128xi1>, vector<64x128xf32>
    %c0_25 = arith.constant 0 : index
    %c0_26 = arith.constant 0 : index
    %27 = vector.load %arg3[%c0_25, %c0_26] : memref<1x32xf32, #tpu.memory_space<vmem>>, vector<1x32xf32>
    %c0_i32 = arith.constant 0 : i32
    %c32_i32 = arith.constant 32 : i32
    %28 = arith.addi %c0_i32, %c32_i32 : i32
    %c1_i32_27 = arith.constant 1 : i32
    scf.for %arg18 = %c0_i32 to %28 step %c1_i32_27  : i32 {
      %c2_i32_82 = arith.constant 2 : i32
      %103 = arith.muli %c2_i32_82, %arg18 : i32
      %cst_83 = arith.constant 0.000000e+00 : f32
      %104 = vector.broadcast %cst_83 : f32 to vector<128x32xf32>
      %c0_i32_84 = arith.constant 0 : i32
      %105 = arith.addi %103, %c0_i32_84 : i32
      %106 = arith.index_cast %105 : i32 to index
      %c0_85 = arith.constant 0 : index
      %c0_86 = arith.constant 0 : index
      %107 = vector.load %arg13[%106, %c0_85, %c0_86] : memref<66x66x8xf32, #tpu.memory_space<vmem>>, vector<2x64x8xf32>
      %108 = vector.shape_cast %107 : vector<2x64x8xf32> to vector<128x8xf32>
      %c0_87 = arith.constant 0 : index
      %c0_88 = arith.constant 0 : index
      %c0_89 = arith.constant 0 : index
      %c0_90 = arith.constant 0 : index
      %109 = vector.load %arg2[%c0_87, %c0_88, %c0_89, %c0_90] : memref<3x3x8x32xf32, #tpu.memory_space<vmem>>, vector<1x1x8x32xf32>
      %110 = vector.shape_cast %109 : vector<1x1x8x32xf32> to vector<8x32xf32>
      %cst_91 = arith.constant dense<0.000000e+00> : vector<128x32xf32>
      %111 = tpu.matmul %108, %110, %cst_91 {dimension_numbers = #tpu.dot_dimension_numbers<[1], [0], [0], [1], [0, 0, 1, 1], [], []>} : vector<128x8xf32>, vector<8x32xf32>, vector<128x32xf32> -> vector<128x32xf32>
      %112 = arith.addf %104, %111 : vector<128x32xf32>
      %c0_i32_92 = arith.constant 0 : i32
      %113 = arith.addi %103, %c0_i32_92 : i32
      %114 = arith.index_cast %113 : i32 to index
      %c1_93 = arith.constant 1 : index
      %c0_94 = arith.constant 0 : index
      %115 = vector.load %arg13[%114, %c1_93, %c0_94] : memref<66x66x8xf32, #tpu.memory_space<vmem>>, vector<2x64x8xf32>
      %116 = vector.shape_cast %115 : vector<2x64x8xf32> to vector<128x8xf32>
      %c0_95 = arith.constant 0 : index
      %c1_96 = arith.constant 1 : index
      %c0_97 = arith.constant 0 : index
      %c0_98 = arith.constant 0 : index
      %117 = vector.load %arg2[%c0_95, %c1_96, %c0_97, %c0_98] : memref<3x3x8x32xf32, #tpu.memory_space<vmem>>, vector<1x1x8x32xf32>
      %118 = vector.shape_cast %117 : vector<1x1x8x32xf32> to vector<8x32xf32>
      %cst_99 = arith.constant dense<0.000000e+00> : vector<128x32xf32>
      %119 = tpu.matmul %116, %118, %cst_99 {dimension_numbers = #tpu.dot_dimension_numbers<[1], [0], [0], [1], [0, 0, 1, 1], [], []>} : vector<128x8xf32>, vector<8x32xf32>, vector<128x32xf32> -> vector<128x32xf32>
      %120 = arith.addf %112, %119 : vector<128x32xf32>
      %c0_i32_100 = arith.constant 0 : i32
      %121 = arith.addi %103, %c0_i32_100 : i32
      %122 = arith.index_cast %121 : i32 to index
      %c2 = arith.constant 2 : index
      %c0_101 = arith.constant 0 : index
      %123 = vector.load %arg13[%122, %c2, %c0_101] : memref<66x66x8xf32, #tpu.memory_space<vmem>>, vector<2x64x8xf32>
      %124 = vector.shape_cast %123 : vector<2x64x8xf32> to vector<128x8xf32>
      %c0_102 = arith.constant 0 : index
      %c2_103 = arith.constant 2 : index
      %c0_104 = arith.constant 0 : index
      %c0_105 = arith.constant 0 : index
      %125 = vector.load %arg2[%c0_102, %c2_103, %c0_104, %c0_105] : memref<3x3x8x32xf32, #tpu.memory_space<vmem>>, vector<1x1x8x32xf32>
      %126 = vector.shape_cast %125 : vector<1x1x8x32xf32> to vector<8x32xf32>
      %cst_106 = arith.constant dense<0.000000e+00> : vector<128x32xf32>
      %127 = tpu.matmul %124, %126, %cst_106 {dimension_numbers = #tpu.dot_dimension_numbers<[1], [0], [0], [1], [0, 0, 1, 1], [], []>} : vector<128x8xf32>, vector<8x32xf32>, vector<128x32xf32> -> vector<128x32xf32>
      %128 = arith.addf %120, %127 : vector<128x32xf32>
      %c1_i32_107 = arith.constant 1 : i32
      %129 = arith.addi %103, %c1_i32_107 : i32
      %130 = arith.index_cast %129 : i32 to index
      %c0_108 = arith.constant 0 : index
      %c0_109 = arith.constant 0 : index
      %131 = vector.load %arg13[%130, %c0_108, %c0_109] : memref<66x66x8xf32, #tpu.memory_space<vmem>>, vector<2x64x8xf32>
      %132 = vector.shape_cast %131 : vector<2x64x8xf32> to vector<128x8xf32>
      %c1_110 = arith.constant 1 : index
      %c0_111 = arith.constant 0 : index
      %c0_112 = arith.constant 0 : index
      %c0_113 = arith.constant 0 : index
      %133 = vector.load %arg2[%c1_110, %c0_111, %c0_112, %c0_113] : memref<3x3x8x32xf32, #tpu.memory_space<vmem>>, vector<1x1x8x32xf32>
      %134 = vector.shape_cast %133 : vector<1x1x8x32xf32> to vector<8x32xf32>
      %cst_114 = arith.constant dense<0.000000e+00> : vector<128x32xf32>
      %135 = tpu.matmul %132, %134, %cst_114 {dimension_numbers = #tpu.dot_dimension_numbers<[1], [0], [0], [1], [0, 0, 1, 1], [], []>} : vector<128x8xf32>, vector<8x32xf32>, vector<128x32xf32> -> vector<128x32xf32>
      %136 = arith.addf %128, %135 : vector<128x32xf32>
      %c1_i32_115 = arith.constant 1 : i32
      %137 = arith.addi %103, %c1_i32_115 : i32
      %138 = arith.index_cast %137 : i32 to index
      %c1_116 = arith.constant 1 : index
      %c0_117 = arith.constant 0 : index
      %139 = vector.load %arg13[%138, %c1_116, %c0_117] : memref<66x66x8xf32, #tpu.memory_space<vmem>>, vector<2x64x8xf32>
      %140 = vector.shape_cast %139 : vector<2x64x8xf32> to vector<128x8xf32>
      %c1_118 = arith.constant 1 : index
      %c1_119 = arith.constant 1 : index
      %c0_120 = arith.constant 0 : index
      %c0_121 = arith.constant 0 : index
      %141 = vector.load %arg2[%c1_118, %c1_119, %c0_120, %c0_121] : memref<3x3x8x32xf32, #tpu.memory_space<vmem>>, vector<1x1x8x32xf32>
      %142 = vector.shape_cast %141 : vector<1x1x8x32xf32> to vector<8x32xf32>
      %cst_122 = arith.constant dense<0.000000e+00> : vector<128x32xf32>
      %143 = tpu.matmul %140, %142, %cst_122 {dimension_numbers = #tpu.dot_dimension_numbers<[1], [0], [0], [1], [0, 0, 1, 1], [], []>} : vector<128x8xf32>, vector<8x32xf32>, vector<128x32xf32> -> vector<128x32xf32>
      %144 = arith.addf %136, %143 : vector<128x32xf32>
      %c1_i32_123 = arith.constant 1 : i32
      %145 = arith.addi %103, %c1_i32_123 : i32
      %146 = arith.index_cast %145 : i32 to index
      %c2_124 = arith.constant 2 : index
      %c0_125 = arith.constant 0 : index
      %147 = vector.load %arg13[%146, %c2_124, %c0_125] : memref<66x66x8xf32, #tpu.memory_space<vmem>>, vector<2x64x8xf32>
      %148 = vector.shape_cast %147 : vector<2x64x8xf32> to vector<128x8xf32>
      %c1_126 = arith.constant 1 : index
      %c2_127 = arith.constant 2 : index
      %c0_128 = arith.constant 0 : index
      %c0_129 = arith.constant 0 : index
      %149 = vector.load %arg2[%c1_126, %c2_127, %c0_128, %c0_129] : memref<3x3x8x32xf32, #tpu.memory_space<vmem>>, vector<1x1x8x32xf32>
      %150 = vector.shape_cast %149 : vector<1x1x8x32xf32> to vector<8x32xf32>
      %cst_130 = arith.constant dense<0.000000e+00> : vector<128x32xf32>
      %151 = tpu.matmul %148, %150, %cst_130 {dimension_numbers = #tpu.dot_dimension_numbers<[1], [0], [0], [1], [0, 0, 1, 1], [], []>} : vector<128x8xf32>, vector<8x32xf32>, vector<128x32xf32> -> vector<128x32xf32>
      %152 = arith.addf %144, %151 : vector<128x32xf32>
      %c2_i32_131 = arith.constant 2 : i32
      %153 = arith.addi %103, %c2_i32_131 : i32
      %154 = arith.index_cast %153 : i32 to index
      %c0_132 = arith.constant 0 : index
      %c0_133 = arith.constant 0 : index
      %155 = vector.load %arg13[%154, %c0_132, %c0_133] : memref<66x66x8xf32, #tpu.memory_space<vmem>>, vector<2x64x8xf32>
      %156 = vector.shape_cast %155 : vector<2x64x8xf32> to vector<128x8xf32>
      %c2_134 = arith.constant 2 : index
      %c0_135 = arith.constant 0 : index
      %c0_136 = arith.constant 0 : index
      %c0_137 = arith.constant 0 : index
      %157 = vector.load %arg2[%c2_134, %c0_135, %c0_136, %c0_137] : memref<3x3x8x32xf32, #tpu.memory_space<vmem>>, vector<1x1x8x32xf32>
      %158 = vector.shape_cast %157 : vector<1x1x8x32xf32> to vector<8x32xf32>
      %cst_138 = arith.constant dense<0.000000e+00> : vector<128x32xf32>
      %159 = tpu.matmul %156, %158, %cst_138 {dimension_numbers = #tpu.dot_dimension_numbers<[1], [0], [0], [1], [0, 0, 1, 1], [], []>} : vector<128x8xf32>, vector<8x32xf32>, vector<128x32xf32> -> vector<128x32xf32>
      %160 = arith.addf %152, %159 : vector<128x32xf32>
      %c2_i32_139 = arith.constant 2 : i32
      %161 = arith.addi %103, %c2_i32_139 : i32
      %162 = arith.index_cast %161 : i32 to index
      %c1_140 = arith.constant 1 : index
      %c0_141 = arith.constant 0 : index
      %163 = vector.load %arg13[%162, %c1_140, %c0_141] : memref<66x66x8xf32, #tpu.memory_space<vmem>>, vector<2x64x8xf32>
      %164 = vector.shape_cast %163 : vector<2x64x8xf32> to vector<128x8xf32>
      %c2_142 = arith.constant 2 : index
      %c1_143 = arith.constant 1 : index
      %c0_144 = arith.constant 0 : index
      %c0_145 = arith.constant 0 : index
      %165 = vector.load %arg2[%c2_142, %c1_143, %c0_144, %c0_145] : memref<3x3x8x32xf32, #tpu.memory_space<vmem>>, vector<1x1x8x32xf32>
      %166 = vector.shape_cast %165 : vector<1x1x8x32xf32> to vector<8x32xf32>
      %cst_146 = arith.constant dense<0.000000e+00> : vector<128x32xf32>
      %167 = tpu.matmul %164, %166, %cst_146 {dimension_numbers = #tpu.dot_dimension_numbers<[1], [0], [0], [1], [0, 0, 1, 1], [], []>} : vector<128x8xf32>, vector<8x32xf32>, vector<128x32xf32> -> vector<128x32xf32>
      %168 = arith.addf %160, %167 : vector<128x32xf32>
      %c2_i32_147 = arith.constant 2 : i32
      %169 = arith.addi %103, %c2_i32_147 : i32
      %170 = arith.index_cast %169 : i32 to index
      %c2_148 = arith.constant 2 : index
      %c0_149 = arith.constant 0 : index
      %171 = vector.load %arg13[%170, %c2_148, %c0_149] : memref<66x66x8xf32, #tpu.memory_space<vmem>>, vector<2x64x8xf32>
      %172 = vector.shape_cast %171 : vector<2x64x8xf32> to vector<128x8xf32>
      %c2_150 = arith.constant 2 : index
      %c2_151 = arith.constant 2 : index
      %c0_152 = arith.constant 0 : index
      %c0_153 = arith.constant 0 : index
      %173 = vector.load %arg2[%c2_150, %c2_151, %c0_152, %c0_153] : memref<3x3x8x32xf32, #tpu.memory_space<vmem>>, vector<1x1x8x32xf32>
      %174 = vector.shape_cast %173 : vector<1x1x8x32xf32> to vector<8x32xf32>
      %cst_154 = arith.constant dense<0.000000e+00> : vector<128x32xf32>
      %175 = tpu.matmul %172, %174, %cst_154 {dimension_numbers = #tpu.dot_dimension_numbers<[1], [0], [0], [1], [0, 0, 1, 1], [], []>} : vector<128x8xf32>, vector<8x32xf32>, vector<128x32xf32> -> vector<128x32xf32>
      %176 = arith.addf %168, %175 : vector<128x32xf32>
      %177 = vector.broadcast %27 : vector<1x32xf32> to vector<128x32xf32>
      %178 = arith.addf %176, %177 : vector<128x32xf32>
      %cst_155 = arith.constant 0.000000e+00 : f32
      %179 = vector.broadcast %cst_155 : f32 to vector<128x32xf32>
      %180 = arith.maximumf %178, %179 : vector<128x32xf32>
      %cst_156 = arith.constant dense<0.000000e+00> : vector<64x32xf32>
      %181 = tpu.matmul %18, %180, %cst_156 {dimension_numbers = #tpu.dot_dimension_numbers<[1], [0], [0], [1], [0, 0, 1, 1], [], []>} : vector<64x128xf32>, vector<128x32xf32>, vector<64x32xf32> -> vector<64x32xf32>
      %cst_157 = arith.constant dense<0.000000e+00> : vector<64x32xf32>
      %182 = tpu.matmul %26, %180, %cst_157 {dimension_numbers = #tpu.dot_dimension_numbers<[1], [0], [0], [1], [0, 0, 1, 1], [], []>} : vector<64x128xf32>, vector<128x32xf32>, vector<64x32xf32> -> vector<64x32xf32>
      %183 = arith.maximumf %181, %182 : vector<64x32xf32>
      %184 = vector.extract_strided_slice %183 {offsets = [0, 0], sizes = [32, 32], strides = [1, 1]} : vector<64x32xf32> to vector<32x32xf32>
      %185 = vector.extract_strided_slice %183 {offsets = [32, 0], sizes = [32, 32], strides = [1, 1]} : vector<64x32xf32> to vector<32x32xf32>
      %186 = arith.maximumf %184, %185 : vector<32x32xf32>
      %187 = vector.shape_cast %186 : vector<32x32xf32> to vector<1x32x32xf32>
      %c1_i32_158 = arith.constant 1 : i32
      %188 = arith.addi %c1_i32_158, %arg18 : i32
      %189 = arith.index_cast %188 : i32 to index
      %c1_159 = arith.constant 1 : index
      %c0_160 = arith.constant 0 : index
      %190 = vector.load %arg14[%189, %c1_159, %c0_160] : memref<34x34x32xf32, #tpu.memory_space<vmem>>, vector<1x32x32xf32>
      tpu.vector_store %arg14[%189, %c1_159, %c0_160], %187 {strides = array<i32>} : memref<34x34x32xf32, #tpu.memory_space<vmem>>, vector<1x32x32xf32>,
    }
    %c32_i32_28 = arith.constant 32 : i32
    %29 = tpu.iota {dimensions = array<i32: 0>} : vector<32x64xi32>
    %30 = tpu.iota {dimensions = array<i32: 1>} : vector<32x64xi32>
    %c2_i32_29 = arith.constant 2 : i32
    %31 = vector.broadcast %c2_i32_29 : i32 to vector<32x64xi32>
    %32 = arith.muli %31, %29 : vector<32x64xi32>
    %33 = arith.cmpi eq, %30, %32 : vector<32x64xi32>
    %cst_30 = arith.constant 1.000000e+00 : f32
    %cst_31 = arith.constant 0.000000e+00 : f32
    %34 = vector.broadcast %cst_30 : f32 to vector<32x64xf32>
    %35 = vector.broadcast %cst_31 : f32 to vector<32x64xf32>
    %36 = arith.select %33, %34, %35 : vector<32x64xi1>, vector<32x64xf32>
    %c2_i32_32 = arith.constant 2 : i32
    %37 = vector.broadcast %c2_i32_32 : i32 to vector<32x64xi32>
    %38 = arith.muli %37, %29 : vector<32x64xi32>
    %c1_i32_33 = arith.constant 1 : i32
    %39 = vector.broadcast %c1_i32_33 : i32 to vector<32x64xi32>
    %40 = arith.addi %38, %39 : vector<32x64xi32>
    %41 = arith.cmpi eq, %30, %40 : vector<32x64xi32>
    %cst_34 = arith.constant 1.000000e+00 : f32
    %cst_35 = arith.constant 0.000000e+00 : f32
    %42 = vector.broadcast %cst_34 : f32 to vector<32x64xf32>
    %43 = vector.broadcast %cst_35 : f32 to vector<32x64xf32>
    %44 = arith.select %41, %42, %43 : vector<32x64xi1>, vector<32x64xf32>
    %c0_36 = arith.constant 0 : index
    %c0_37 = arith.constant 0 : index
    %45 = vector.load %arg5[%c0_36, %c0_37] : memref<1x32xf32, #tpu.memory_space<vmem>>, vector<1x32xf32>
    %c0_i32_38 = arith.constant 0 : i32
    %c16_i32 = arith.constant 16 : i32
    %46 = arith.addi %c0_i32_38, %c16_i32 : i32
    %c1_i32_39 = arith.constant 1 : i32
    scf.for %arg18 = %c0_i32_38 to %46 step %c1_i32_39  : i32 {
      %c2_i32_82 = arith.constant 2 : i32
      %103 = arith.muli %c2_i32_82, %arg18 : i32
      %cst_83 = arith.constant 0.000000e+00 : f32
      %104 = vector.broadcast %cst_83 : f32 to vector<64x32xf32>
      %c0_i32_84 = arith.constant 0 : i32
      %105 = arith.addi %103, %c0_i32_84 : i32
      %106 = arith.index_cast %105 : i32 to index
      %c0_85 = arith.constant 0 : index
      %c0_86 = arith.constant 0 : index
      %107 = vector.load %arg14[%106, %c0_85, %c0_86] : memref<34x34x32xf32, #tpu.memory_space<vmem>>, vector<2x32x32xf32>
      %108 = vector.shape_cast %107 : vector<2x32x32xf32> to vector<64x32xf32>
      %c0_87 = arith.constant 0 : index
      %c0_88 = arith.constant 0 : index
      %c0_89 = arith.constant 0 : index
      %c0_90 = arith.constant 0 : index
      %109 = vector.load %arg4[%c0_87, %c0_88, %c0_89, %c0_90] : memref<3x3x32x32xf32, #tpu.memory_space<vmem>>, vector<1x1x32x32xf32>
      %110 = vector.shape_cast %109 : vector<1x1x32x32xf32> to vector<32x32xf32>
      %cst_91 = arith.constant dense<0.000000e+00> : vector<64x32xf32>
      %111 = tpu.matmul %108, %110, %cst_91 {dimension_numbers = #tpu.dot_dimension_numbers<[1], [0], [0], [1], [0, 0, 1, 1], [], []>} : vector<64x32xf32>, vector<32x32xf32>, vector<64x32xf32> -> vector<64x32xf32>
      %112 = arith.addf %104, %111 : vector<64x32xf32>
      %c0_i32_92 = arith.constant 0 : i32
      %113 = arith.addi %103, %c0_i32_92 : i32
      %114 = arith.index_cast %113 : i32 to index
      %c1_93 = arith.constant 1 : index
      %c0_94 = arith.constant 0 : index
      %115 = vector.load %arg14[%114, %c1_93, %c0_94] : memref<34x34x32xf32, #tpu.memory_space<vmem>>, vector<2x32x32xf32>
      %116 = vector.shape_cast %115 : vector<2x32x32xf32> to vector<64x32xf32>
      %c0_95 = arith.constant 0 : index
      %c1_96 = arith.constant 1 : index
      %c0_97 = arith.constant 0 : index
      %c0_98 = arith.constant 0 : index
      %117 = vector.load %arg4[%c0_95, %c1_96, %c0_97, %c0_98] : memref<3x3x32x32xf32, #tpu.memory_space<vmem>>, vector<1x1x32x32xf32>
      %118 = vector.shape_cast %117 : vector<1x1x32x32xf32> to vector<32x32xf32>
      %cst_99 = arith.constant dense<0.000000e+00> : vector<64x32xf32>
      %119 = tpu.matmul %116, %118, %cst_99 {dimension_numbers = #tpu.dot_dimension_numbers<[1], [0], [0], [1], [0, 0, 1, 1], [], []>} : vector<64x32xf32>, vector<32x32xf32>, vector<64x32xf32> -> vector<64x32xf32>
      %120 = arith.addf %112, %119 : vector<64x32xf32>
      %c0_i32_100 = arith.constant 0 : i32
      %121 = arith.addi %103, %c0_i32_100 : i32
      %122 = arith.index_cast %121 : i32 to index
      %c2 = arith.constant 2 : index
      %c0_101 = arith.constant 0 : index
      %123 = vector.load %arg14[%122, %c2, %c0_101] : memref<34x34x32xf32, #tpu.memory_space<vmem>>, vector<2x32x32xf32>
      %124 = vector.shape_cast %123 : vector<2x32x32xf32> to vector<64x32xf32>
      %c0_102 = arith.constant 0 : index
      %c2_103 = arith.constant 2 : index
      %c0_104 = arith.constant 0 : index
      %c0_105 = arith.constant 0 : index
      %125 = vector.load %arg4[%c0_102, %c2_103, %c0_104, %c0_105] : memref<3x3x32x32xf32, #tpu.memory_space<vmem>>, vector<1x1x32x32xf32>
      %126 = vector.shape_cast %125 : vector<1x1x32x32xf32> to vector<32x32xf32>
      %cst_106 = arith.constant dense<0.000000e+00> : vector<64x32xf32>
      %127 = tpu.matmul %124, %126, %cst_106 {dimension_numbers = #tpu.dot_dimension_numbers<[1], [0], [0], [1], [0, 0, 1, 1], [], []>} : vector<64x32xf32>, vector<32x32xf32>, vector<64x32xf32> -> vector<64x32xf32>
      %128 = arith.addf %120, %127 : vector<64x32xf32>
      %c1_i32_107 = arith.constant 1 : i32
      %129 = arith.addi %103, %c1_i32_107 : i32
      %130 = arith.index_cast %129 : i32 to index
      %c0_108 = arith.constant 0 : index
      %c0_109 = arith.constant 0 : index
      %131 = vector.load %arg14[%130, %c0_108, %c0_109] : memref<34x34x32xf32, #tpu.memory_space<vmem>>, vector<2x32x32xf32>
      %132 = vector.shape_cast %131 : vector<2x32x32xf32> to vector<64x32xf32>
      %c1_110 = arith.constant 1 : index
      %c0_111 = arith.constant 0 : index
      %c0_112 = arith.constant 0 : index
      %c0_113 = arith.constant 0 : index
      %133 = vector.load %arg4[%c1_110, %c0_111, %c0_112, %c0_113] : memref<3x3x32x32xf32, #tpu.memory_space<vmem>>, vector<1x1x32x32xf32>
      %134 = vector.shape_cast %133 : vector<1x1x32x32xf32> to vector<32x32xf32>
      %cst_114 = arith.constant dense<0.000000e+00> : vector<64x32xf32>
      %135 = tpu.matmul %132, %134, %cst_114 {dimension_numbers = #tpu.dot_dimension_numbers<[1], [0], [0], [1], [0, 0, 1, 1], [], []>} : vector<64x32xf32>, vector<32x32xf32>, vector<64x32xf32> -> vector<64x32xf32>
      %136 = arith.addf %128, %135 : vector<64x32xf32>
      %c1_i32_115 = arith.constant 1 : i32
      %137 = arith.addi %103, %c1_i32_115 : i32
      %138 = arith.index_cast %137 : i32 to index
      %c1_116 = arith.constant 1 : index
      %c0_117 = arith.constant 0 : index
      %139 = vector.load %arg14[%138, %c1_116, %c0_117] : memref<34x34x32xf32, #tpu.memory_space<vmem>>, vector<2x32x32xf32>
      %140 = vector.shape_cast %139 : vector<2x32x32xf32> to vector<64x32xf32>
      %c1_118 = arith.constant 1 : index
      %c1_119 = arith.constant 1 : index
      %c0_120 = arith.constant 0 : index
      %c0_121 = arith.constant 0 : index
      %141 = vector.load %arg4[%c1_118, %c1_119, %c0_120, %c0_121] : memref<3x3x32x32xf32, #tpu.memory_space<vmem>>, vector<1x1x32x32xf32>
      %142 = vector.shape_cast %141 : vector<1x1x32x32xf32> to vector<32x32xf32>
      %cst_122 = arith.constant dense<0.000000e+00> : vector<64x32xf32>
      %143 = tpu.matmul %140, %142, %cst_122 {dimension_numbers = #tpu.dot_dimension_numbers<[1], [0], [0], [1], [0, 0, 1, 1], [], []>} : vector<64x32xf32>, vector<32x32xf32>, vector<64x32xf32> -> vector<64x32xf32>
      %144 = arith.addf %136, %143 : vector<64x32xf32>
      %c1_i32_123 = arith.constant 1 : i32
      %145 = arith.addi %103, %c1_i32_123 : i32
      %146 = arith.index_cast %145 : i32 to index
      %c2_124 = arith.constant 2 : index
      %c0_125 = arith.constant 0 : index
      %147 = vector.load %arg14[%146, %c2_124, %c0_125] : memref<34x34x32xf32, #tpu.memory_space<vmem>>, vector<2x32x32xf32>
      %148 = vector.shape_cast %147 : vector<2x32x32xf32> to vector<64x32xf32>
      %c1_126 = arith.constant 1 : index
      %c2_127 = arith.constant 2 : index
      %c0_128 = arith.constant 0 : index
      %c0_129 = arith.constant 0 : index
      %149 = vector.load %arg4[%c1_126, %c2_127, %c0_128, %c0_129] : memref<3x3x32x32xf32, #tpu.memory_space<vmem>>, vector<1x1x32x32xf32>
      %150 = vector.shape_cast %149 : vector<1x1x32x32xf32> to vector<32x32xf32>
      %cst_130 = arith.constant dense<0.000000e+00> : vector<64x32xf32>
      %151 = tpu.matmul %148, %150, %cst_130 {dimension_numbers = #tpu.dot_dimension_numbers<[1], [0], [0], [1], [0, 0, 1, 1], [], []>} : vector<64x32xf32>, vector<32x32xf32>, vector<64x32xf32> -> vector<64x32xf32>
      %152 = arith.addf %144, %151 : vector<64x32xf32>
      %c2_i32_131 = arith.constant 2 : i32
      %153 = arith.addi %103, %c2_i32_131 : i32
      %154 = arith.index_cast %153 : i32 to index
      %c0_132 = arith.constant 0 : index
      %c0_133 = arith.constant 0 : index
      %155 = vector.load %arg14[%154, %c0_132, %c0_133] : memref<34x34x32xf32, #tpu.memory_space<vmem>>, vector<2x32x32xf32>
      %156 = vector.shape_cast %155 : vector<2x32x32xf32> to vector<64x32xf32>
      %c2_134 = arith.constant 2 : index
      %c0_135 = arith.constant 0 : index
      %c0_136 = arith.constant 0 : index
      %c0_137 = arith.constant 0 : index
      %157 = vector.load %arg4[%c2_134, %c0_135, %c0_136, %c0_137] : memref<3x3x32x32xf32, #tpu.memory_space<vmem>>, vector<1x1x32x32xf32>
      %158 = vector.shape_cast %157 : vector<1x1x32x32xf32> to vector<32x32xf32>
      %cst_138 = arith.constant dense<0.000000e+00> : vector<64x32xf32>
      %159 = tpu.matmul %156, %158, %cst_138 {dimension_numbers = #tpu.dot_dimension_numbers<[1], [0], [0], [1], [0, 0, 1, 1], [], []>} : vector<64x32xf32>, vector<32x32xf32>, vector<64x32xf32> -> vector<64x32xf32>
      %160 = arith.addf %152, %159 : vector<64x32xf32>
      %c2_i32_139 = arith.constant 2 : i32
      %161 = arith.addi %103, %c2_i32_139 : i32
      %162 = arith.index_cast %161 : i32 to index
      %c1_140 = arith.constant 1 : index
      %c0_141 = arith.constant 0 : index
      %163 = vector.load %arg14[%162, %c1_140, %c0_141] : memref<34x34x32xf32, #tpu.memory_space<vmem>>, vector<2x32x32xf32>
      %164 = vector.shape_cast %163 : vector<2x32x32xf32> to vector<64x32xf32>
      %c2_142 = arith.constant 2 : index
      %c1_143 = arith.constant 1 : index
      %c0_144 = arith.constant 0 : index
      %c0_145 = arith.constant 0 : index
      %165 = vector.load %arg4[%c2_142, %c1_143, %c0_144, %c0_145] : memref<3x3x32x32xf32, #tpu.memory_space<vmem>>, vector<1x1x32x32xf32>
      %166 = vector.shape_cast %165 : vector<1x1x32x32xf32> to vector<32x32xf32>
      %cst_146 = arith.constant dense<0.000000e+00> : vector<64x32xf32>
      %167 = tpu.matmul %164, %166, %cst_146 {dimension_numbers = #tpu.dot_dimension_numbers<[1], [0], [0], [1], [0, 0, 1, 1], [], []>} : vector<64x32xf32>, vector<32x32xf32>, vector<64x32xf32> -> vector<64x32xf32>
      %168 = arith.addf %160, %167 : vector<64x32xf32>
      %c2_i32_147 = arith.constant 2 : i32
      %169 = arith.addi %103, %c2_i32_147 : i32
      %170 = arith.index_cast %169 : i32 to index
      %c2_148 = arith.constant 2 : index
      %c0_149 = arith.constant 0 : index
      %171 = vector.load %arg14[%170, %c2_148, %c0_149] : memref<34x34x32xf32, #tpu.memory_space<vmem>>, vector<2x32x32xf32>
      %172 = vector.shape_cast %171 : vector<2x32x32xf32> to vector<64x32xf32>
      %c2_150 = arith.constant 2 : index
      %c2_151 = arith.constant 2 : index
      %c0_152 = arith.constant 0 : index
      %c0_153 = arith.constant 0 : index
      %173 = vector.load %arg4[%c2_150, %c2_151, %c0_152, %c0_153] : memref<3x3x32x32xf32, #tpu.memory_space<vmem>>, vector<1x1x32x32xf32>
      %174 = vector.shape_cast %173 : vector<1x1x32x32xf32> to vector<32x32xf32>
      %cst_154 = arith.constant dense<0.000000e+00> : vector<64x32xf32>
      %175 = tpu.matmul %172, %174, %cst_154 {dimension_numbers = #tpu.dot_dimension_numbers<[1], [0], [0], [1], [0, 0, 1, 1], [], []>} : vector<64x32xf32>, vector<32x32xf32>, vector<64x32xf32> -> vector<64x32xf32>
      %176 = arith.addf %168, %175 : vector<64x32xf32>
      %177 = vector.broadcast %45 : vector<1x32xf32> to vector<64x32xf32>
      %178 = arith.addf %176, %177 : vector<64x32xf32>
      %cst_155 = arith.constant 0.000000e+00 : f32
      %179 = vector.broadcast %cst_155 : f32 to vector<64x32xf32>
      %180 = arith.maximumf %178, %179 : vector<64x32xf32>
      %cst_156 = arith.constant dense<0.000000e+00> : vector<32x32xf32>
      %181 = tpu.matmul %36, %180, %cst_156 {dimension_numbers = #tpu.dot_dimension_numbers<[1], [0], [0], [1], [0, 0, 1, 1], [], []>} : vector<32x64xf32>, vector<64x32xf32>, vector<32x32xf32> -> vector<32x32xf32>
      %cst_157 = arith.constant dense<0.000000e+00> : vector<32x32xf32>
      %182 = tpu.matmul %44, %180, %cst_157 {dimension_numbers = #tpu.dot_dimension_numbers<[1], [0], [0], [1], [0, 0, 1, 1], [], []>} : vector<32x64xf32>, vector<64x32xf32>, vector<32x32xf32> -> vector<32x32xf32>
      %183 = arith.maximumf %181, %182 : vector<32x32xf32>
      %184 = vector.extract_strided_slice %183 {offsets = [0, 0], sizes = [16, 32], strides = [1, 1]} : vector<32x32xf32> to vector<16x32xf32>
      %185 = vector.extract_strided_slice %183 {offsets = [16, 0], sizes = [16, 32], strides = [1, 1]} : vector<32x32xf32> to vector<16x32xf32>
      %186 = arith.maximumf %184, %185 : vector<16x32xf32>
      %187 = vector.shape_cast %186 : vector<16x32xf32> to vector<1x16x32xf32>
      %c1_i32_158 = arith.constant 1 : i32
      %188 = arith.addi %c1_i32_158, %arg18 : i32
      %189 = arith.index_cast %188 : i32 to index
      %c1_159 = arith.constant 1 : index
      %c0_160 = arith.constant 0 : index
      %190 = vector.load %arg15[%189, %c1_159, %c0_160] : memref<18x18x32xf32, #tpu.memory_space<vmem>>, vector<1x16x32xf32>
      tpu.vector_store %arg15[%189, %c1_159, %c0_160], %187 {strides = array<i32>} : memref<18x18x32xf32, #tpu.memory_space<vmem>>, vector<1x16x32xf32>,
    }
    %c16_i32_40 = arith.constant 16 : i32
    %47 = tpu.iota {dimensions = array<i32: 0>} : vector<16x32xi32>
    %48 = tpu.iota {dimensions = array<i32: 1>} : vector<16x32xi32>
    %c2_i32_41 = arith.constant 2 : i32
    %49 = vector.broadcast %c2_i32_41 : i32 to vector<16x32xi32>
    %50 = arith.muli %49, %47 : vector<16x32xi32>
    %51 = arith.cmpi eq, %48, %50 : vector<16x32xi32>
    %cst_42 = arith.constant 1.000000e+00 : f32
    %cst_43 = arith.constant 0.000000e+00 : f32
    %52 = vector.broadcast %cst_42 : f32 to vector<16x32xf32>
    %53 = vector.broadcast %cst_43 : f32 to vector<16x32xf32>
    %54 = arith.select %51, %52, %53 : vector<16x32xi1>, vector<16x32xf32>
    %c2_i32_44 = arith.constant 2 : i32
    %55 = vector.broadcast %c2_i32_44 : i32 to vector<16x32xi32>
    %56 = arith.muli %55, %47 : vector<16x32xi32>
    %c1_i32_45 = arith.constant 1 : i32
    %57 = vector.broadcast %c1_i32_45 : i32 to vector<16x32xi32>
    %58 = arith.addi %56, %57 : vector<16x32xi32>
    %59 = arith.cmpi eq, %48, %58 : vector<16x32xi32>
    %cst_46 = arith.constant 1.000000e+00 : f32
    %cst_47 = arith.constant 0.000000e+00 : f32
    %60 = vector.broadcast %cst_46 : f32 to vector<16x32xf32>
    %61 = vector.broadcast %cst_47 : f32 to vector<16x32xf32>
    %62 = arith.select %59, %60, %61 : vector<16x32xi1>, vector<16x32xf32>
    %c0_48 = arith.constant 0 : index
    %c0_49 = arith.constant 0 : index
    %63 = vector.load %arg7[%c0_48, %c0_49] : memref<1x32xf32, #tpu.memory_space<vmem>>, vector<1x32xf32>
    %c0_i32_50 = arith.constant 0 : i32
    %c8_i32 = arith.constant 8 : i32
    %64 = arith.addi %c0_i32_50, %c8_i32 : i32
    %c1_i32_51 = arith.constant 1 : i32
    scf.for %arg18 = %c0_i32_50 to %64 step %c1_i32_51  : i32 {
      %c2_i32_82 = arith.constant 2 : i32
      %103 = arith.muli %c2_i32_82, %arg18 : i32
      %cst_83 = arith.constant 0.000000e+00 : f32
      %104 = vector.broadcast %cst_83 : f32 to vector<32x32xf32>
      %c0_i32_84 = arith.constant 0 : i32
      %105 = arith.addi %103, %c0_i32_84 : i32
      %106 = arith.index_cast %105 : i32 to index
      %c0_85 = arith.constant 0 : index
      %c0_86 = arith.constant 0 : index
      %107 = vector.load %arg15[%106, %c0_85, %c0_86] : memref<18x18x32xf32, #tpu.memory_space<vmem>>, vector<2x16x32xf32>
      %108 = vector.shape_cast %107 : vector<2x16x32xf32> to vector<32x32xf32>
      %c0_87 = arith.constant 0 : index
      %c0_88 = arith.constant 0 : index
      %c0_89 = arith.constant 0 : index
      %c0_90 = arith.constant 0 : index
      %109 = vector.load %arg6[%c0_87, %c0_88, %c0_89, %c0_90] : memref<3x3x32x32xf32, #tpu.memory_space<vmem>>, vector<1x1x32x32xf32>
      %110 = vector.shape_cast %109 : vector<1x1x32x32xf32> to vector<32x32xf32>
      %cst_91 = arith.constant dense<0.000000e+00> : vector<32x32xf32>
      %111 = tpu.matmul %108, %110, %cst_91 {dimension_numbers = #tpu.dot_dimension_numbers<[1], [0], [0], [1], [0, 0, 1, 1], [], []>} : vector<32x32xf32>, vector<32x32xf32>, vector<32x32xf32> -> vector<32x32xf32>
      %112 = arith.addf %104, %111 : vector<32x32xf32>
      %c0_i32_92 = arith.constant 0 : i32
      %113 = arith.addi %103, %c0_i32_92 : i32
      %114 = arith.index_cast %113 : i32 to index
      %c1_93 = arith.constant 1 : index
      %c0_94 = arith.constant 0 : index
      %115 = vector.load %arg15[%114, %c1_93, %c0_94] : memref<18x18x32xf32, #tpu.memory_space<vmem>>, vector<2x16x32xf32>
      %116 = vector.shape_cast %115 : vector<2x16x32xf32> to vector<32x32xf32>
      %c0_95 = arith.constant 0 : index
      %c1_96 = arith.constant 1 : index
      %c0_97 = arith.constant 0 : index
      %c0_98 = arith.constant 0 : index
      %117 = vector.load %arg6[%c0_95, %c1_96, %c0_97, %c0_98] : memref<3x3x32x32xf32, #tpu.memory_space<vmem>>, vector<1x1x32x32xf32>
      %118 = vector.shape_cast %117 : vector<1x1x32x32xf32> to vector<32x32xf32>
      %cst_99 = arith.constant dense<0.000000e+00> : vector<32x32xf32>
      %119 = tpu.matmul %116, %118, %cst_99 {dimension_numbers = #tpu.dot_dimension_numbers<[1], [0], [0], [1], [0, 0, 1, 1], [], []>} : vector<32x32xf32>, vector<32x32xf32>, vector<32x32xf32> -> vector<32x32xf32>
      %120 = arith.addf %112, %119 : vector<32x32xf32>
      %c0_i32_100 = arith.constant 0 : i32
      %121 = arith.addi %103, %c0_i32_100 : i32
      %122 = arith.index_cast %121 : i32 to index
      %c2 = arith.constant 2 : index
      %c0_101 = arith.constant 0 : index
      %123 = vector.load %arg15[%122, %c2, %c0_101] : memref<18x18x32xf32, #tpu.memory_space<vmem>>, vector<2x16x32xf32>
      %124 = vector.shape_cast %123 : vector<2x16x32xf32> to vector<32x32xf32>
      %c0_102 = arith.constant 0 : index
      %c2_103 = arith.constant 2 : index
      %c0_104 = arith.constant 0 : index
      %c0_105 = arith.constant 0 : index
      %125 = vector.load %arg6[%c0_102, %c2_103, %c0_104, %c0_105] : memref<3x3x32x32xf32, #tpu.memory_space<vmem>>, vector<1x1x32x32xf32>
      %126 = vector.shape_cast %125 : vector<1x1x32x32xf32> to vector<32x32xf32>
      %cst_106 = arith.constant dense<0.000000e+00> : vector<32x32xf32>
      %127 = tpu.matmul %124, %126, %cst_106 {dimension_numbers = #tpu.dot_dimension_numbers<[1], [0], [0], [1], [0, 0, 1, 1], [], []>} : vector<32x32xf32>, vector<32x32xf32>, vector<32x32xf32> -> vector<32x32xf32>
      %128 = arith.addf %120, %127 : vector<32x32xf32>
      %c1_i32_107 = arith.constant 1 : i32
      %129 = arith.addi %103, %c1_i32_107 : i32
      %130 = arith.index_cast %129 : i32 to index
      %c0_108 = arith.constant 0 : index
      %c0_109 = arith.constant 0 : index
      %131 = vector.load %arg15[%130, %c0_108, %c0_109] : memref<18x18x32xf32, #tpu.memory_space<vmem>>, vector<2x16x32xf32>
      %132 = vector.shape_cast %131 : vector<2x16x32xf32> to vector<32x32xf32>
      %c1_110 = arith.constant 1 : index
      %c0_111 = arith.constant 0 : index
      %c0_112 = arith.constant 0 : index
      %c0_113 = arith.constant 0 : index
      %133 = vector.load %arg6[%c1_110, %c0_111, %c0_112, %c0_113] : memref<3x3x32x32xf32, #tpu.memory_space<vmem>>, vector<1x1x32x32xf32>
      %134 = vector.shape_cast %133 : vector<1x1x32x32xf32> to vector<32x32xf32>
      %cst_114 = arith.constant dense<0.000000e+00> : vector<32x32xf32>
      %135 = tpu.matmul %132, %134, %cst_114 {dimension_numbers = #tpu.dot_dimension_numbers<[1], [0], [0], [1], [0, 0, 1, 1], [], []>} : vector<32x32xf32>, vector<32x32xf32>, vector<32x32xf32> -> vector<32x32xf32>
      %136 = arith.addf %128, %135 : vector<32x32xf32>
      %c1_i32_115 = arith.constant 1 : i32
      %137 = arith.addi %103, %c1_i32_115 : i32
      %138 = arith.index_cast %137 : i32 to index
      %c1_116 = arith.constant 1 : index
      %c0_117 = arith.constant 0 : index
      %139 = vector.load %arg15[%138, %c1_116, %c0_117] : memref<18x18x32xf32, #tpu.memory_space<vmem>>, vector<2x16x32xf32>
      %140 = vector.shape_cast %139 : vector<2x16x32xf32> to vector<32x32xf32>
      %c1_118 = arith.constant 1 : index
      %c1_119 = arith.constant 1 : index
      %c0_120 = arith.constant 0 : index
      %c0_121 = arith.constant 0 : index
      %141 = vector.load %arg6[%c1_118, %c1_119, %c0_120, %c0_121] : memref<3x3x32x32xf32, #tpu.memory_space<vmem>>, vector<1x1x32x32xf32>
      %142 = vector.shape_cast %141 : vector<1x1x32x32xf32> to vector<32x32xf32>
      %cst_122 = arith.constant dense<0.000000e+00> : vector<32x32xf32>
      %143 = tpu.matmul %140, %142, %cst_122 {dimension_numbers = #tpu.dot_dimension_numbers<[1], [0], [0], [1], [0, 0, 1, 1], [], []>} : vector<32x32xf32>, vector<32x32xf32>, vector<32x32xf32> -> vector<32x32xf32>
      %144 = arith.addf %136, %143 : vector<32x32xf32>
      %c1_i32_123 = arith.constant 1 : i32
      %145 = arith.addi %103, %c1_i32_123 : i32
      %146 = arith.index_cast %145 : i32 to index
      %c2_124 = arith.constant 2 : index
      %c0_125 = arith.constant 0 : index
      %147 = vector.load %arg15[%146, %c2_124, %c0_125] : memref<18x18x32xf32, #tpu.memory_space<vmem>>, vector<2x16x32xf32>
      %148 = vector.shape_cast %147 : vector<2x16x32xf32> to vector<32x32xf32>
      %c1_126 = arith.constant 1 : index
      %c2_127 = arith.constant 2 : index
      %c0_128 = arith.constant 0 : index
      %c0_129 = arith.constant 0 : index
      %149 = vector.load %arg6[%c1_126, %c2_127, %c0_128, %c0_129] : memref<3x3x32x32xf32, #tpu.memory_space<vmem>>, vector<1x1x32x32xf32>
      %150 = vector.shape_cast %149 : vector<1x1x32x32xf32> to vector<32x32xf32>
      %cst_130 = arith.constant dense<0.000000e+00> : vector<32x32xf32>
      %151 = tpu.matmul %148, %150, %cst_130 {dimension_numbers = #tpu.dot_dimension_numbers<[1], [0], [0], [1], [0, 0, 1, 1], [], []>} : vector<32x32xf32>, vector<32x32xf32>, vector<32x32xf32> -> vector<32x32xf32>
      %152 = arith.addf %144, %151 : vector<32x32xf32>
      %c2_i32_131 = arith.constant 2 : i32
      %153 = arith.addi %103, %c2_i32_131 : i32
      %154 = arith.index_cast %153 : i32 to index
      %c0_132 = arith.constant 0 : index
      %c0_133 = arith.constant 0 : index
      %155 = vector.load %arg15[%154, %c0_132, %c0_133] : memref<18x18x32xf32, #tpu.memory_space<vmem>>, vector<2x16x32xf32>
      %156 = vector.shape_cast %155 : vector<2x16x32xf32> to vector<32x32xf32>
      %c2_134 = arith.constant 2 : index
      %c0_135 = arith.constant 0 : index
      %c0_136 = arith.constant 0 : index
      %c0_137 = arith.constant 0 : index
      %157 = vector.load %arg6[%c2_134, %c0_135, %c0_136, %c0_137] : memref<3x3x32x32xf32, #tpu.memory_space<vmem>>, vector<1x1x32x32xf32>
      %158 = vector.shape_cast %157 : vector<1x1x32x32xf32> to vector<32x32xf32>
      %cst_138 = arith.constant dense<0.000000e+00> : vector<32x32xf32>
      %159 = tpu.matmul %156, %158, %cst_138 {dimension_numbers = #tpu.dot_dimension_numbers<[1], [0], [0], [1], [0, 0, 1, 1], [], []>} : vector<32x32xf32>, vector<32x32xf32>, vector<32x32xf32> -> vector<32x32xf32>
      %160 = arith.addf %152, %159 : vector<32x32xf32>
      %c2_i32_139 = arith.constant 2 : i32
      %161 = arith.addi %103, %c2_i32_139 : i32
      %162 = arith.index_cast %161 : i32 to index
      %c1_140 = arith.constant 1 : index
      %c0_141 = arith.constant 0 : index
      %163 = vector.load %arg15[%162, %c1_140, %c0_141] : memref<18x18x32xf32, #tpu.memory_space<vmem>>, vector<2x16x32xf32>
      %164 = vector.shape_cast %163 : vector<2x16x32xf32> to vector<32x32xf32>
      %c2_142 = arith.constant 2 : index
      %c1_143 = arith.constant 1 : index
      %c0_144 = arith.constant 0 : index
      %c0_145 = arith.constant 0 : index
      %165 = vector.load %arg6[%c2_142, %c1_143, %c0_144, %c0_145] : memref<3x3x32x32xf32, #tpu.memory_space<vmem>>, vector<1x1x32x32xf32>
      %166 = vector.shape_cast %165 : vector<1x1x32x32xf32> to vector<32x32xf32>
      %cst_146 = arith.constant dense<0.000000e+00> : vector<32x32xf32>
      %167 = tpu.matmul %164, %166, %cst_146 {dimension_numbers = #tpu.dot_dimension_numbers<[1], [0], [0], [1], [0, 0, 1, 1], [], []>} : vector<32x32xf32>, vector<32x32xf32>, vector<32x32xf32> -> vector<32x32xf32>
      %168 = arith.addf %160, %167 : vector<32x32xf32>
      %c2_i32_147 = arith.constant 2 : i32
      %169 = arith.addi %103, %c2_i32_147 : i32
      %170 = arith.index_cast %169 : i32 to index
      %c2_148 = arith.constant 2 : index
      %c0_149 = arith.constant 0 : index
      %171 = vector.load %arg15[%170, %c2_148, %c0_149] : memref<18x18x32xf32, #tpu.memory_space<vmem>>, vector<2x16x32xf32>
      %172 = vector.shape_cast %171 : vector<2x16x32xf32> to vector<32x32xf32>
      %c2_150 = arith.constant 2 : index
      %c2_151 = arith.constant 2 : index
      %c0_152 = arith.constant 0 : index
      %c0_153 = arith.constant 0 : index
      %173 = vector.load %arg6[%c2_150, %c2_151, %c0_152, %c0_153] : memref<3x3x32x32xf32, #tpu.memory_space<vmem>>, vector<1x1x32x32xf32>
      %174 = vector.shape_cast %173 : vector<1x1x32x32xf32> to vector<32x32xf32>
      %cst_154 = arith.constant dense<0.000000e+00> : vector<32x32xf32>
      %175 = tpu.matmul %172, %174, %cst_154 {dimension_numbers = #tpu.dot_dimension_numbers<[1], [0], [0], [1], [0, 0, 1, 1], [], []>} : vector<32x32xf32>, vector<32x32xf32>, vector<32x32xf32> -> vector<32x32xf32>
      %176 = arith.addf %168, %175 : vector<32x32xf32>
      %177 = vector.broadcast %63 : vector<1x32xf32> to vector<32x32xf32>
      %178 = arith.addf %176, %177 : vector<32x32xf32>
      %cst_155 = arith.constant 0.000000e+00 : f32
      %179 = vector.broadcast %cst_155 : f32 to vector<32x32xf32>
      %180 = arith.maximumf %178, %179 : vector<32x32xf32>
      %cst_156 = arith.constant dense<0.000000e+00> : vector<16x32xf32>
      %181 = tpu.matmul %54, %180, %cst_156 {dimension_numbers = #tpu.dot_dimension_numbers<[1], [0], [0], [1], [0, 0, 1, 1], [], []>} : vector<16x32xf32>, vector<32x32xf32>, vector<16x32xf32> -> vector<16x32xf32>
      %cst_157 = arith.constant dense<0.000000e+00> : vector<16x32xf32>
      %182 = tpu.matmul %62, %180, %cst_157 {dimension_numbers = #tpu.dot_dimension_numbers<[1], [0], [0], [1], [0, 0, 1, 1], [], []>} : vector<16x32xf32>, vector<32x32xf32>, vector<16x32xf32> -> vector<16x32xf32>
      %183 = arith.maximumf %181, %182 : vector<16x32xf32>
      %184 = vector.extract_strided_slice %183 {offsets = [0, 0], sizes = [8, 32], strides = [1, 1]} : vector<16x32xf32> to vector<8x32xf32>
      %185 = vector.extract_strided_slice %183 {offsets = [8, 0], sizes = [8, 32], strides = [1, 1]} : vector<16x32xf32> to vector<8x32xf32>
      %186 = arith.maximumf %184, %185 : vector<8x32xf32>
      %187 = vector.shape_cast %186 : vector<8x32xf32> to vector<1x8x32xf32>
      %c1_i32_158 = arith.constant 1 : i32
      %188 = arith.addi %c1_i32_158, %arg18 : i32
      %189 = arith.index_cast %188 : i32 to index
      %c1_159 = arith.constant 1 : index
      %c0_160 = arith.constant 0 : index
      %190 = vector.load %arg16[%189, %c1_159, %c0_160] : memref<10x10x32xf32, #tpu.memory_space<vmem>>, vector<1x8x32xf32>
      tpu.vector_store %arg16[%189, %c1_159, %c0_160], %187 {strides = array<i32>} : memref<10x10x32xf32, #tpu.memory_space<vmem>>, vector<1x8x32xf32>,
    }
    %c8_i32_52 = arith.constant 8 : i32
    %65 = tpu.iota {dimensions = array<i32: 0>} : vector<8x16xi32>
    %66 = tpu.iota {dimensions = array<i32: 1>} : vector<8x16xi32>
    %c2_i32_53 = arith.constant 2 : i32
    %67 = vector.broadcast %c2_i32_53 : i32 to vector<8x16xi32>
    %68 = arith.muli %67, %65 : vector<8x16xi32>
    %69 = arith.cmpi eq, %66, %68 : vector<8x16xi32>
    %cst_54 = arith.constant 1.000000e+00 : f32
    %cst_55 = arith.constant 0.000000e+00 : f32
    %70 = vector.broadcast %cst_54 : f32 to vector<8x16xf32>
    %71 = vector.broadcast %cst_55 : f32 to vector<8x16xf32>
    %72 = arith.select %69, %70, %71 : vector<8x16xi1>, vector<8x16xf32>
    %c2_i32_56 = arith.constant 2 : i32
    %73 = vector.broadcast %c2_i32_56 : i32 to vector<8x16xi32>
    %74 = arith.muli %73, %65 : vector<8x16xi32>
    %c1_i32_57 = arith.constant 1 : i32
    %75 = vector.broadcast %c1_i32_57 : i32 to vector<8x16xi32>
    %76 = arith.addi %74, %75 : vector<8x16xi32>
    %77 = arith.cmpi eq, %66, %76 : vector<8x16xi32>
    %cst_58 = arith.constant 1.000000e+00 : f32
    %cst_59 = arith.constant 0.000000e+00 : f32
    %78 = vector.broadcast %cst_58 : f32 to vector<8x16xf32>
    %79 = vector.broadcast %cst_59 : f32 to vector<8x16xf32>
    %80 = arith.select %77, %78, %79 : vector<8x16xi1>, vector<8x16xf32>
    %c0_60 = arith.constant 0 : index
    %c0_61 = arith.constant 0 : index
    %81 = vector.load %arg9[%c0_60, %c0_61] : memref<1x32xf32, #tpu.memory_space<vmem>>, vector<1x32xf32>
    %c0_i32_62 = arith.constant 0 : i32
    %c4_i32 = arith.constant 4 : i32
    %82 = arith.addi %c0_i32_62, %c4_i32 : i32
    %c1_i32_63 = arith.constant 1 : i32
    scf.for %arg18 = %c0_i32_62 to %82 step %c1_i32_63  : i32 {
      %c2_i32_82 = arith.constant 2 : i32
      %103 = arith.muli %c2_i32_82, %arg18 : i32
      %cst_83 = arith.constant 0.000000e+00 : f32
      %104 = vector.broadcast %cst_83 : f32 to vector<16x32xf32>
      %c0_i32_84 = arith.constant 0 : i32
      %105 = arith.addi %103, %c0_i32_84 : i32
      %106 = arith.index_cast %105 : i32 to index
      %c0_85 = arith.constant 0 : index
      %c0_86 = arith.constant 0 : index
      %107 = vector.load %arg16[%106, %c0_85, %c0_86] : memref<10x10x32xf32, #tpu.memory_space<vmem>>, vector<2x8x32xf32>
      %108 = vector.shape_cast %107 : vector<2x8x32xf32> to vector<16x32xf32>
      %c0_87 = arith.constant 0 : index
      %c0_88 = arith.constant 0 : index
      %c0_89 = arith.constant 0 : index
      %c0_90 = arith.constant 0 : index
      %109 = vector.load %arg8[%c0_87, %c0_88, %c0_89, %c0_90] : memref<3x3x32x32xf32, #tpu.memory_space<vmem>>, vector<1x1x32x32xf32>
      %110 = vector.shape_cast %109 : vector<1x1x32x32xf32> to vector<32x32xf32>
      %cst_91 = arith.constant dense<0.000000e+00> : vector<16x32xf32>
      %111 = tpu.matmul %108, %110, %cst_91 {dimension_numbers = #tpu.dot_dimension_numbers<[1], [0], [0], [1], [0, 0, 1, 1], [], []>} : vector<16x32xf32>, vector<32x32xf32>, vector<16x32xf32> -> vector<16x32xf32>
      %112 = arith.addf %104, %111 : vector<16x32xf32>
      %c0_i32_92 = arith.constant 0 : i32
      %113 = arith.addi %103, %c0_i32_92 : i32
      %114 = arith.index_cast %113 : i32 to index
      %c1_93 = arith.constant 1 : index
      %c0_94 = arith.constant 0 : index
      %115 = vector.load %arg16[%114, %c1_93, %c0_94] : memref<10x10x32xf32, #tpu.memory_space<vmem>>, vector<2x8x32xf32>
      %116 = vector.shape_cast %115 : vector<2x8x32xf32> to vector<16x32xf32>
      %c0_95 = arith.constant 0 : index
      %c1_96 = arith.constant 1 : index
      %c0_97 = arith.constant 0 : index
      %c0_98 = arith.constant 0 : index
      %117 = vector.load %arg8[%c0_95, %c1_96, %c0_97, %c0_98] : memref<3x3x32x32xf32, #tpu.memory_space<vmem>>, vector<1x1x32x32xf32>
      %118 = vector.shape_cast %117 : vector<1x1x32x32xf32> to vector<32x32xf32>
      %cst_99 = arith.constant dense<0.000000e+00> : vector<16x32xf32>
      %119 = tpu.matmul %116, %118, %cst_99 {dimension_numbers = #tpu.dot_dimension_numbers<[1], [0], [0], [1], [0, 0, 1, 1], [], []>} : vector<16x32xf32>, vector<32x32xf32>, vector<16x32xf32> -> vector<16x32xf32>
      %120 = arith.addf %112, %119 : vector<16x32xf32>
      %c0_i32_100 = arith.constant 0 : i32
      %121 = arith.addi %103, %c0_i32_100 : i32
      %122 = arith.index_cast %121 : i32 to index
      %c2 = arith.constant 2 : index
      %c0_101 = arith.constant 0 : index
      %123 = vector.load %arg16[%122, %c2, %c0_101] : memref<10x10x32xf32, #tpu.memory_space<vmem>>, vector<2x8x32xf32>
      %124 = vector.shape_cast %123 : vector<2x8x32xf32> to vector<16x32xf32>
      %c0_102 = arith.constant 0 : index
      %c2_103 = arith.constant 2 : index
      %c0_104 = arith.constant 0 : index
      %c0_105 = arith.constant 0 : index
      %125 = vector.load %arg8[%c0_102, %c2_103, %c0_104, %c0_105] : memref<3x3x32x32xf32, #tpu.memory_space<vmem>>, vector<1x1x32x32xf32>
      %126 = vector.shape_cast %125 : vector<1x1x32x32xf32> to vector<32x32xf32>
      %cst_106 = arith.constant dense<0.000000e+00> : vector<16x32xf32>
      %127 = tpu.matmul %124, %126, %cst_106 {dimension_numbers = #tpu.dot_dimension_numbers<[1], [0], [0], [1], [0, 0, 1, 1], [], []>} : vector<16x32xf32>, vector<32x32xf32>, vector<16x32xf32> -> vector<16x32xf32>
      %128 = arith.addf %120, %127 : vector<16x32xf32>
      %c1_i32_107 = arith.constant 1 : i32
      %129 = arith.addi %103, %c1_i32_107 : i32
      %130 = arith.index_cast %129 : i32 to index
      %c0_108 = arith.constant 0 : index
      %c0_109 = arith.constant 0 : index
      %131 = vector.load %arg16[%130, %c0_108, %c0_109] : memref<10x10x32xf32, #tpu.memory_space<vmem>>, vector<2x8x32xf32>
      %132 = vector.shape_cast %131 : vector<2x8x32xf32> to vector<16x32xf32>
      %c1_110 = arith.constant 1 : index
      %c0_111 = arith.constant 0 : index
      %c0_112 = arith.constant 0 : index
      %c0_113 = arith.constant 0 : index
      %133 = vector.load %arg8[%c1_110, %c0_111, %c0_112, %c0_113] : memref<3x3x32x32xf32, #tpu.memory_space<vmem>>, vector<1x1x32x32xf32>
      %134 = vector.shape_cast %133 : vector<1x1x32x32xf32> to vector<32x32xf32>
      %cst_114 = arith.constant dense<0.000000e+00> : vector<16x32xf32>
      %135 = tpu.matmul %132, %134, %cst_114 {dimension_numbers = #tpu.dot_dimension_numbers<[1], [0], [0], [1], [0, 0, 1, 1], [], []>} : vector<16x32xf32>, vector<32x32xf32>, vector<16x32xf32> -> vector<16x32xf32>
      %136 = arith.addf %128, %135 : vector<16x32xf32>
      %c1_i32_115 = arith.constant 1 : i32
      %137 = arith.addi %103, %c1_i32_115 : i32
      %138 = arith.index_cast %137 : i32 to index
      %c1_116 = arith.constant 1 : index
      %c0_117 = arith.constant 0 : index
      %139 = vector.load %arg16[%138, %c1_116, %c0_117] : memref<10x10x32xf32, #tpu.memory_space<vmem>>, vector<2x8x32xf32>
      %140 = vector.shape_cast %139 : vector<2x8x32xf32> to vector<16x32xf32>
      %c1_118 = arith.constant 1 : index
      %c1_119 = arith.constant 1 : index
      %c0_120 = arith.constant 0 : index
      %c0_121 = arith.constant 0 : index
      %141 = vector.load %arg8[%c1_118, %c1_119, %c0_120, %c0_121] : memref<3x3x32x32xf32, #tpu.memory_space<vmem>>, vector<1x1x32x32xf32>
      %142 = vector.shape_cast %141 : vector<1x1x32x32xf32> to vector<32x32xf32>
      %cst_122 = arith.constant dense<0.000000e+00> : vector<16x32xf32>
      %143 = tpu.matmul %140, %142, %cst_122 {dimension_numbers = #tpu.dot_dimension_numbers<[1], [0], [0], [1], [0, 0, 1, 1], [], []>} : vector<16x32xf32>, vector<32x32xf32>, vector<16x32xf32> -> vector<16x32xf32>
      %144 = arith.addf %136, %143 : vector<16x32xf32>
      %c1_i32_123 = arith.constant 1 : i32
      %145 = arith.addi %103, %c1_i32_123 : i32
      %146 = arith.index_cast %145 : i32 to index
      %c2_124 = arith.constant 2 : index
      %c0_125 = arith.constant 0 : index
      %147 = vector.load %arg16[%146, %c2_124, %c0_125] : memref<10x10x32xf32, #tpu.memory_space<vmem>>, vector<2x8x32xf32>
      %148 = vector.shape_cast %147 : vector<2x8x32xf32> to vector<16x32xf32>
      %c1_126 = arith.constant 1 : index
      %c2_127 = arith.constant 2 : index
      %c0_128 = arith.constant 0 : index
      %c0_129 = arith.constant 0 : index
      %149 = vector.load %arg8[%c1_126, %c2_127, %c0_128, %c0_129] : memref<3x3x32x32xf32, #tpu.memory_space<vmem>>, vector<1x1x32x32xf32>
      %150 = vector.shape_cast %149 : vector<1x1x32x32xf32> to vector<32x32xf32>
      %cst_130 = arith.constant dense<0.000000e+00> : vector<16x32xf32>
      %151 = tpu.matmul %148, %150, %cst_130 {dimension_numbers = #tpu.dot_dimension_numbers<[1], [0], [0], [1], [0, 0, 1, 1], [], []>} : vector<16x32xf32>, vector<32x32xf32>, vector<16x32xf32> -> vector<16x32xf32>
      %152 = arith.addf %144, %151 : vector<16x32xf32>
      %c2_i32_131 = arith.constant 2 : i32
      %153 = arith.addi %103, %c2_i32_131 : i32
      %154 = arith.index_cast %153 : i32 to index
      %c0_132 = arith.constant 0 : index
      %c0_133 = arith.constant 0 : index
      %155 = vector.load %arg16[%154, %c0_132, %c0_133] : memref<10x10x32xf32, #tpu.memory_space<vmem>>, vector<2x8x32xf32>
      %156 = vector.shape_cast %155 : vector<2x8x32xf32> to vector<16x32xf32>
      %c2_134 = arith.constant 2 : index
      %c0_135 = arith.constant 0 : index
      %c0_136 = arith.constant 0 : index
      %c0_137 = arith.constant 0 : index
      %157 = vector.load %arg8[%c2_134, %c0_135, %c0_136, %c0_137] : memref<3x3x32x32xf32, #tpu.memory_space<vmem>>, vector<1x1x32x32xf32>
      %158 = vector.shape_cast %157 : vector<1x1x32x32xf32> to vector<32x32xf32>
      %cst_138 = arith.constant dense<0.000000e+00> : vector<16x32xf32>
      %159 = tpu.matmul %156, %158, %cst_138 {dimension_numbers = #tpu.dot_dimension_numbers<[1], [0], [0], [1], [0, 0, 1, 1], [], []>} : vector<16x32xf32>, vector<32x32xf32>, vector<16x32xf32> -> vector<16x32xf32>
      %160 = arith.addf %152, %159 : vector<16x32xf32>
      %c2_i32_139 = arith.constant 2 : i32
      %161 = arith.addi %103, %c2_i32_139 : i32
      %162 = arith.index_cast %161 : i32 to index
      %c1_140 = arith.constant 1 : index
      %c0_141 = arith.constant 0 : index
      %163 = vector.load %arg16[%162, %c1_140, %c0_141] : memref<10x10x32xf32, #tpu.memory_space<vmem>>, vector<2x8x32xf32>
      %164 = vector.shape_cast %163 : vector<2x8x32xf32> to vector<16x32xf32>
      %c2_142 = arith.constant 2 : index
      %c1_143 = arith.constant 1 : index
      %c0_144 = arith.constant 0 : index
      %c0_145 = arith.constant 0 : index
      %165 = vector.load %arg8[%c2_142, %c1_143, %c0_144, %c0_145] : memref<3x3x32x32xf32, #tpu.memory_space<vmem>>, vector<1x1x32x32xf32>
      %166 = vector.shape_cast %165 : vector<1x1x32x32xf32> to vector<32x32xf32>
      %cst_146 = arith.constant dense<0.000000e+00> : vector<16x32xf32>
      %167 = tpu.matmul %164, %166, %cst_146 {dimension_numbers = #tpu.dot_dimension_numbers<[1], [0], [0], [1], [0, 0, 1, 1], [], []>} : vector<16x32xf32>, vector<32x32xf32>, vector<16x32xf32> -> vector<16x32xf32>
      %168 = arith.addf %160, %167 : vector<16x32xf32>
      %c2_i32_147 = arith.constant 2 : i32
      %169 = arith.addi %103, %c2_i32_147 : i32
      %170 = arith.index_cast %169 : i32 to index
      %c2_148 = arith.constant 2 : index
      %c0_149 = arith.constant 0 : index
      %171 = vector.load %arg16[%170, %c2_148, %c0_149] : memref<10x10x32xf32, #tpu.memory_space<vmem>>, vector<2x8x32xf32>
      %172 = vector.shape_cast %171 : vector<2x8x32xf32> to vector<16x32xf32>
      %c2_150 = arith.constant 2 : index
      %c2_151 = arith.constant 2 : index
      %c0_152 = arith.constant 0 : index
      %c0_153 = arith.constant 0 : index
      %173 = vector.load %arg8[%c2_150, %c2_151, %c0_152, %c0_153] : memref<3x3x32x32xf32, #tpu.memory_space<vmem>>, vector<1x1x32x32xf32>
      %174 = vector.shape_cast %173 : vector<1x1x32x32xf32> to vector<32x32xf32>
      %cst_154 = arith.constant dense<0.000000e+00> : vector<16x32xf32>
      %175 = tpu.matmul %172, %174, %cst_154 {dimension_numbers = #tpu.dot_dimension_numbers<[1], [0], [0], [1], [0, 0, 1, 1], [], []>} : vector<16x32xf32>, vector<32x32xf32>, vector<16x32xf32> -> vector<16x32xf32>
      %176 = arith.addf %168, %175 : vector<16x32xf32>
      %177 = vector.broadcast %81 : vector<1x32xf32> to vector<16x32xf32>
      %178 = arith.addf %176, %177 : vector<16x32xf32>
      %cst_155 = arith.constant 0.000000e+00 : f32
      %179 = vector.broadcast %cst_155 : f32 to vector<16x32xf32>
      %180 = arith.maximumf %178, %179 : vector<16x32xf32>
      %cst_156 = arith.constant dense<0.000000e+00> : vector<8x32xf32>
      %181 = tpu.matmul %72, %180, %cst_156 {dimension_numbers = #tpu.dot_dimension_numbers<[1], [0], [0], [1], [0, 0, 1, 1], [], []>} : vector<8x16xf32>, vector<16x32xf32>, vector<8x32xf32> -> vector<8x32xf32>
      %cst_157 = arith.constant dense<0.000000e+00> : vector<8x32xf32>
      %182 = tpu.matmul %80, %180, %cst_157 {dimension_numbers = #tpu.dot_dimension_numbers<[1], [0], [0], [1], [0, 0, 1, 1], [], []>} : vector<8x16xf32>, vector<16x32xf32>, vector<8x32xf32> -> vector<8x32xf32>
      %183 = arith.maximumf %181, %182 : vector<8x32xf32>
      %184 = vector.extract_strided_slice %183 {offsets = [0, 0], sizes = [4, 32], strides = [1, 1]} : vector<8x32xf32> to vector<4x32xf32>
      %185 = vector.extract_strided_slice %183 {offsets = [4, 0], sizes = [4, 32], strides = [1, 1]} : vector<8x32xf32> to vector<4x32xf32>
      %186 = arith.maximumf %184, %185 : vector<4x32xf32>
      %187 = vector.shape_cast %186 : vector<4x32xf32> to vector<1x4x32xf32>
      %188 = arith.index_cast %arg18 : i32 to index
      %c0_158 = arith.constant 0 : index
      %c0_159 = arith.constant 0 : index
      %189 = vector.load %arg17[%188, %c0_158, %c0_159] : memref<4x4x32xf32, #tpu.memory_space<vmem>>, vector<1x4x32xf32>
      tpu.vector_store %arg17[%188, %c0_158, %c0_159], %187 {strides = array<i32>} : memref<4x4x32xf32, #tpu.memory_space<vmem>>, vector<1x4x32xf32>,
    }
    %c4_i32_64 = arith.constant 4 : i32
    %c0_65 = arith.constant 0 : index
    %c0_66 = arith.constant 0 : index
    %c0_67 = arith.constant 0 : index
    %83 = vector.load %arg17[%c0_65, %c0_66, %c0_67] : memref<4x4x32xf32, #tpu.memory_space<vmem>>, vector<4x4x32xf32>
    %c0_68 = arith.constant 0 : index
    %c0_69 = arith.constant 0 : index
    %c0_70 = arith.constant 0 : index
    %84 = vector.load %arg10[%c0_68, %c0_69, %c0_70] : memref<4x4x32xf32, #tpu.memory_space<vmem>>, vector<4x4x32xf32>
    %85 = arith.mulf %83, %84 : vector<4x4x32xf32>
    %cst_71 = arith.constant dense<0.000000e+00> : vector<4x4xf32>
    %86 = vector.multi_reduction <add>, %85, %cst_71 [2] : vector<4x4x32xf32> to vector<4x4xf32>
    %87 = vector.shape_cast %86 : vector<4x4xf32> to vector<4x4x1xf32>
    %cst_72 = arith.constant dense<0.000000e+00> : vector<4x1xf32>
    %88 = vector.multi_reduction <add>, %87, %cst_72 [1] : vector<4x4x1xf32> to vector<4x1xf32>
    %89 = vector.shape_cast %88 : vector<4x1xf32> to vector<4x1x1xf32>
    %cst_73 = arith.constant dense<0.000000e+00> : vector<1x1xf32>
    %90 = vector.multi_reduction <add>, %89, %cst_73 [0] : vector<4x1x1xf32> to vector<1x1xf32>
    %91 = vector.shape_cast %90 : vector<1x1xf32> to vector<1x1x1xf32>
    %c0_74 = arith.constant 0 : index
    %c0_75 = arith.constant 0 : index
    %92 = vector.load %arg11[%c0_74, %c0_75] : memref<1x1xf32, #tpu.memory_space<vmem>>, vector<1x1xf32>
    %93 = vector.shape_cast %92 : vector<1x1xf32> to vector<1x1x1xf32>
    %94 = arith.addf %91, %93 : vector<1x1x1xf32>
    %cst_76 = arith.constant 0.000000e+00 : f32
    %95 = vector.broadcast %cst_76 : f32 to vector<1x1x1xf32>
    %96 = arith.subf %95, %94 : vector<1x1x1xf32>
    %97 = math.exp %96 : vector<1x1x1xf32>
    %cst_77 = arith.constant 1.000000e+00 : f32
    %98 = vector.broadcast %cst_77 : f32 to vector<1x1x1xf32>
    %99 = arith.addf %98, %97 : vector<1x1x1xf32>
    %cst_78 = arith.constant 1.000000e+00 : f32
    %100 = vector.broadcast %cst_78 : f32 to vector<1x1x1xf32>
    %101 = arith.divf %100, %99 : vector<1x1x1xf32>
    %c0_79 = arith.constant 0 : index
    %c0_80 = arith.constant 0 : index
    %c0_81 = arith.constant 0 : index
    %102 = vector.load %arg12[%c0_79, %c0_80, %c0_81] : memref<1x1x1xf32, #tpu.memory_space<vmem>>, vector<1x1x1xf32>
    tpu.vector_store %arg12[%c0_79, %c0_80, %c0_81], %101 {strides = array<i32>} : memref<1x1x1xf32, #tpu.memory_space<vmem>>, vector<1x1x1xf32>,
    return
  }
  func.func @transform_0(%arg0: i32) -> (i32, i32, i32, i32) {
    %c0_i32 = arith.constant 0 : i32
    %c0_i32_0 = arith.constant 0 : i32
    %c0_i32_1 = arith.constant 0 : i32
    %c0_i32_2 = arith.constant 0 : i32
    return %arg0, %c0_i32, %c0_i32_0, %c0_i32_1 : i32, i32, i32, i32
  }
  func.func @transform_1(%arg0: i32) -> (i32, i32, i32, i32) {
    %c0_i32 = arith.constant 0 : i32
    %c0_i32_0 = arith.constant 0 : i32
    %c0_i32_1 = arith.constant 0 : i32
    %c0_i32_2 = arith.constant 0 : i32
    %c0_i32_3 = arith.constant 0 : i32
    return %c0_i32, %c0_i32_0, %c0_i32_1, %c0_i32_2 : i32, i32, i32, i32
  }
  func.func @transform_2(%arg0: i32) -> (i32, i32) {
    %c0_i32 = arith.constant 0 : i32
    %c0_i32_0 = arith.constant 0 : i32
    %c0_i32_1 = arith.constant 0 : i32
    return %c0_i32, %c0_i32_0 : i32, i32
  }
  func.func @transform_3(%arg0: i32) -> (i32, i32, i32, i32) {
    %c0_i32 = arith.constant 0 : i32
    %c0_i32_0 = arith.constant 0 : i32
    %c0_i32_1 = arith.constant 0 : i32
    %c0_i32_2 = arith.constant 0 : i32
    %c0_i32_3 = arith.constant 0 : i32
    return %c0_i32, %c0_i32_0, %c0_i32_1, %c0_i32_2 : i32, i32, i32, i32
  }
  func.func @transform_4(%arg0: i32) -> (i32, i32) {
    %c0_i32 = arith.constant 0 : i32
    %c0_i32_0 = arith.constant 0 : i32
    %c0_i32_1 = arith.constant 0 : i32
    return %c0_i32, %c0_i32_0 : i32, i32
  }
  func.func @transform_5(%arg0: i32) -> (i32, i32, i32, i32) {
    %c0_i32 = arith.constant 0 : i32
    %c0_i32_0 = arith.constant 0 : i32
    %c0_i32_1 = arith.constant 0 : i32
    %c0_i32_2 = arith.constant 0 : i32
    %c0_i32_3 = arith.constant 0 : i32
    return %c0_i32, %c0_i32_0, %c0_i32_1, %c0_i32_2 : i32, i32, i32, i32
  }
  func.func @transform_6(%arg0: i32) -> (i32, i32) {
    %c0_i32 = arith.constant 0 : i32
    %c0_i32_0 = arith.constant 0 : i32
    %c0_i32_1 = arith.constant 0 : i32
    return %c0_i32, %c0_i32_0 : i32, i32
  }
  func.func @transform_7(%arg0: i32) -> (i32, i32, i32, i32) {
    %c0_i32 = arith.constant 0 : i32
    %c0_i32_0 = arith.constant 0 : i32
    %c0_i32_1 = arith.constant 0 : i32
    %c0_i32_2 = arith.constant 0 : i32
    %c0_i32_3 = arith.constant 0 : i32
    return %c0_i32, %c0_i32_0, %c0_i32_1, %c0_i32_2 : i32, i32, i32, i32
  }
  func.func @transform_8(%arg0: i32) -> (i32, i32) {
    %c0_i32 = arith.constant 0 : i32
    %c0_i32_0 = arith.constant 0 : i32
    %c0_i32_1 = arith.constant 0 : i32
    return %c0_i32, %c0_i32_0 : i32, i32
  }
  func.func @transform_9(%arg0: i32) -> (i32, i32, i32) {
    %c0_i32 = arith.constant 0 : i32
    %c0_i32_0 = arith.constant 0 : i32
    %c0_i32_1 = arith.constant 0 : i32
    %c0_i32_2 = arith.constant 0 : i32
    return %c0_i32, %c0_i32_0, %c0_i32_1 : i32, i32, i32
  }
  func.func @transform_10(%arg0: i32) -> (i32, i32) {
    %c0_i32 = arith.constant 0 : i32
    %c0_i32_0 = arith.constant 0 : i32
    %c0_i32_1 = arith.constant 0 : i32
    return %c0_i32, %c0_i32_0 : i32, i32
  }
  func.func @transform_11(%arg0: i32) -> (i32, i32, i32) {
    %c0_i32 = arith.constant 0 : i32
    %c0_i32_0 = arith.constant 0 : i32
    %c0_i32_1 = arith.constant 0 : i32
    return %arg0, %c0_i32, %c0_i32_0 : i32, i32, i32
  }
}

</mosaic_0001>

<llo_original>
// kernel: simple_cnn_forward.1
$region0: #{simple_cnn_forward.1}
  #allocation0 [shape = 'u32[]', space=smem, size = 0x4, offset = 0x4, fixed_abs, tag = 'smem constant byte address 0x4 - core index']
  #allocation1 [shape = 'u32[144,128]{1,0:T(1,128)}', space=vmem, size = 0x12000, scoped, tag = 'internal scratch']
  #allocation2 [shape = 'f32[66,66,8]{2,1,0:T(8,128)}', space=vmem, size = 0x252000, scoped, tag = 'scratch operand']
  #allocation3 [shape = 'f32[34,34,32]{2,1,0:T(8,128)}', space=vmem, size = 0xaa000, scoped, tag = 'scratch operand']
  #allocation4 [shape = 'f32[18,18,32]{2,1,0:T(8,128)}', space=vmem, size = 0x36000, scoped, tag = 'scratch operand']
  #allocation5 [shape = 'f32[10,10,32]{2,1,0:T(8,128)}', space=vmem, size = 0x14000, scoped, tag = 'scratch operand']
  #allocation6 [shape = 'f32[4,4,32]{2,1,0:T(4,128)}', space=vmem, size = 0x2000, scoped, tag = 'scratch operand']
  #allocation7 [shape = 'f32[1,1]{1,0:T(1,128)S(1)}', space=vmem, size = 0x200, scoped, tag = 'scoped memory for simple_cnn_forward.1']
  %s0 = inlined_call_operand.vmem [shape: f32[2,64,64,8], index: 0, kind: input, shape index: {}]
  %s1 = inlined_call_operand.vmem [shape: f32[3,3,8,32], index: 1, kind: input, shape index: {}]
  %s2 = inlined_call_operand.vmem [shape: f32[1,32], index: 2, kind: input, shape index: {}]
  %s3 = inlined_call_operand.vmem [shape: f32[3,3,32,32], index: 3, kind: input, shape index: {}]
  %s4 = inlined_call_operand.vmem [shape: f32[1,32], index: 4, kind: input, shape index: {}]
  %s5 = inlined_call_operand.vmem [shape: f32[3,3,32,32], index: 5, kind: input, shape index: {}]
  %s6 = inlined_call_operand.vmem [shape: f32[1,32], index: 6, kind: input, shape index: {}]
  %s7 = inlined_call_operand.vmem [shape: f32[3,3,32,32], index: 7, kind: input, shape index: {}]
  %s8 = inlined_call_operand.vmem [shape: f32[1,32], index: 8, kind: input, shape index: {}]
  %s9 = inlined_call_operand.vmem [shape: f32[4,4,32], index: 9, kind: input, shape index: {}]
  %s10 = inlined_call_operand.<no memory space> [shape: f32[1,1], index: 10, kind: input, shape index: {}]
  %s11 = inlined_call_operand.vmem [shape: f32[2,1,1], index: 11, kind: output, shape index: {}]
  %s12 = sld [smem:[#allocation0]]
  $region105: #{simple_cnn_forward.1} parent=0
    _
  %s14 = ssub.s32 1, %s12
  %s15 = scalar_select 0, %s14, %s12
  %v16 = vstv %s10
  %17 = vst [vmem:[#allocation7] sm:$0x1] %v16
  loop: start=0, step=1, limit=4
  $region2: #{simple_cnn_forward.1} parent=0 // loop_pre_header
    _
  $region3: #{simple_cnn_forward.1} parent=0 // loop_header
    %s19 = sphi 0, %s23
    %p20 = scmp.ge.s32.totalorder %s19, 4
    %s29 = sphi 0, %s31
    %s32 = sphi 0, %s29
    %s33 = sphi 0, %s32
    %s49 = sphi 0, %s33
    %s53 = sphi 0, %s53
    %s55 = sphi 0, %s53
    %s56 = sphi 0, %s55
    %s70 = sphi 0, %s56
    %s74 = sphi 0, %s74
    %s76 = sphi 0, %s74
    %s77 = sphi 0, %s76
    %s91 = sphi 0, %s77
    %s95 = sphi 0, %s95
    %s97 = sphi 0, %s95
    %s98 = sphi 0, %s97
    %s112 = sphi 0, %s98
    %s116 = sphi 0, %s116
    %s118 = sphi 0, %s116
    %s119 = sphi 0, %s118
    %s133 = sphi 0, %s119
    %s137 = sphi 0, %s137
    %s139 = sphi 0, %s137
    %s140 = sphi 0, %s139
    %s154 = sphi 0, %s140
    %s158 = sphi 0, %s158
    %s160 = sphi 0, %s158
    %s161 = sphi 0, %s160
    %s175 = sphi 0, %s161
    %s179 = sphi 0, %s179
    %s181 = sphi 0, %s179
    %s182 = sphi 0, %s181
    %s196 = sphi 0, %s182
    %s200 = sphi 0, %s200
    %s202 = sphi 0, %s200
    %s203 = sphi 0, %s202
    %s217 = sphi 0, %s203
    %s221 = sphi 0, %s221
    %s223 = sphi 0, %s221
    %s224 = sphi 0, %s223
    %s238 = sphi 0, %s224
    %s242 = sphi 0, %s242
    %s244 = sphi 0, %s242
    %s245 = sphi 0, %s244
    %s259 = sphi 0, %s245
    %s265 = sphi 0, %s267
    %s268 = sphi 0, %s265
    %s269 = sphi 0, %s268
    %s285 = sphi 0, %s269
  $region4: #{simple_cnn_forward.1} parent=0 // loop_header_branch
    %22 = sbr.rel (%p20) target = $region8
  $region5: #{simple_cnn_forward.1} parent=0 // loop_body
    %s24 = ssub.s32 %s19, 1
    %s25 = ssub.s32 %s19, 2
    %s26 = sadd.s32 %s19, 1
    %s27 = ssub.s32 %s19, %s26
    %p28 = scmp.eq.s32.totalorder %s27, 0
    %s30 = sadd.s32 %s29, 1
    %s31 = scalar_select %p28, %s29, %s30
    %p34 = pneg %p28
    %p35 = scmp.eq.s32.totalorder %s19, 1
    %p36 = por %p34, %p35
    %p37 = scmp.ne.s32.totalorder %s29, %s32
    %p38 = scmp.eq.s32.totalorder %s19, 0
    %p39 = por %p37, %p38
    %p40 = scmp.ne.s32.totalorder %s29, %s32
    %p41 = scmp.eq.s32.totalorder %s24, 1
    %p42 = por %p40, %p41
    %p43 = scmp.ne.s32.totalorder %s32, %s33
    %p44 = scmp.eq.s32.totalorder %s24, 0
    %p45 = por %p43, %p44
    %p46 = scmp.ne.s32.totalorder %s32, %s33
    %p47 = scmp.eq.s32.totalorder %s25, 1
    %p48 = por %p46, %p47
    %p50 = scmp.ne.s32.totalorder %s33, %s49
    %p51 = scmp.eq.s32.totalorder %s25, 0
    %p52 = por %p50, %p51
    %s54 = sadd.s32 %s53, 1
    %p57 = scmp.eq.s32.totalorder %s19, 1
    %p58 = scmp.ne.s32.totalorder %s53, %s55
    %p59 = scmp.eq.s32.totalorder %s19, 0
    %p60 = por %p58, %p59
    %p61 = scmp.ne.s32.totalorder %s53, %s55
    %p62 = scmp.eq.s32.totalorder %s24, 1
    %p63 = por %p61, %p62
    %p64 = scmp.ne.s32.totalorder %s55, %s56
    %p65 = scmp.eq.s32.totalorder %s24, 0
    %p66 = por %p64, %p65
    %p67 = scmp.ne.s32.totalorder %s55, %s56
    %p68 = scmp.eq.s32.totalorder %s25, 1
    %p69 = por %p67, %p68
    %p71 = scmp.ne.s32.totalorder %s56, %s70
    %p72 = scmp.eq.s32.totalorder %s25, 0
    %p73 = por %p71, %p72
    %s75 = sadd.s32 %s74, 1
    %p78 = scmp.eq.s32.totalorder %s19, 1
    %p79 = scmp.ne.s32.totalorder %s74, %s76
    %p80 = scmp.eq.s32.totalorder %s19, 0
    %p81 = por %p79, %p80
    %p82 = scmp.ne.s32.totalorder %s74, %s76
    %p83 = scmp.eq.s32.totalorder %s24, 1
    %p84 = por %p82, %p83
    %p85 = scmp.ne.s32.totalorder %s76, %s77
    %p86 = scmp.eq.s32.totalorder %s24, 0
    %p87 = por %p85, %p86
    %p88 = scmp.ne.s32.totalorder %s76, %s77
    %p89 = scmp.eq.s32.totalorder %s25, 1
    %p90 = por %p88, %p89
    %p92 = scmp.ne.s32.totalorder %s77, %s91
    %p93 = scmp.eq.s32.totalorder %s25, 0
    %p94 = por %p92, %p93
    %s96 = sadd.s32 %s95, 1
    %p99 = scmp.eq.s32.totalorder %s19, 1
    %p100 = scmp.ne.s32.totalorder %s95, %s97
    %p101 = scmp.eq.s32.totalorder %s19, 0
    %p102 = por %p100, %p101
    %p103 = scmp.ne.s32.totalorder %s95, %s97
    %p104 = scmp.eq.s32.totalorder %s24, 1
    %p105 = por %p103, %p104
    %p106 = scmp.ne.s32.totalorder %s97, %s98
    %p107 = scmp.eq.s32.totalorder %s24, 0
    %p108 = por %p106, %p107
    %p109 = scmp.ne.s32.totalorder %s97, %s98
    %p110 = scmp.eq.s32.totalorder %s25, 1
    %p111 = por %p109, %p110
    %p113 = scmp.ne.s32.totalorder %s98, %s112
    %p114 = scmp.eq.s32.totalorder %s25, 0
    %p115 = por %p113, %p114
    %s117 = sadd.s32 %s116, 1
    %p120 = scmp.eq.s32.totalorder %s19, 1
    %p121 = scmp.ne.s32.totalorder %s116, %s118
    %p122 = scmp.eq.s32.totalorder %s19, 0
    %p123 = por %p121, %p122
    %p124 = scmp.ne.s32.totalorder %s116, %s118
    %p125 = scmp.eq.s32.totalorder %s24, 1
    %p126 = por %p124, %p125
    %p127 = scmp.ne.s32.totalorder %s118, %s119
    %p128 = scmp.eq.s32.totalorder %s24, 0
    %p129 = por %p127, %p128
    %p130 = scmp.ne.s32.totalorder %s118, %s119
    %p131 = scmp.eq.s32.totalorder %s25, 1
    %p132 = por %p130, %p131
    %p134 = scmp.ne.s32.totalorder %s119, %s133
    %p135 = scmp.eq.s32.totalorder %s25, 0
    %p136 = por %p134, %p135
    %s138 = sadd.s32 %s137, 1
    %p141 = scmp.eq.s32.totalorder %s19, 1
    %p142 = scmp.ne.s32.totalorder %s137, %s139
    %p143 = scmp.eq.s32.totalorder %s19, 0
    %p144 = por %p142, %p143
    %p145 = scmp.ne.s32.totalorder %s137, %s139
    %p146 = scmp.eq.s32.totalorder %s24, 1
    %p147 = por %p145, %p146
    %p148 = scmp.ne.s32.totalorder %s139, %s140
    %p149 = scmp.eq.s32.totalorder %s24, 0
    %p150 = por %p148, %p149
    %p151 = scmp.ne.s32.totalorder %s139, %s140
    %p152 = scmp.eq.s32.totalorder %s25, 1
    %p153 = por %p151, %p152
    %p155 = scmp.ne.s32.totalorder %s140, %s154
    %p156 = scmp.eq.s32.totalorder %s25, 0
    %p157 = por %p155, %p156
    %s159 = sadd.s32 %s158, 1
    %p162 = scmp.eq.s32.totalorder %s19, 1
    %p163 = scmp.ne.s32.totalorder %s158, %s160
    %p164 = scmp.eq.s32.totalorder %s19, 0
    %p165 = por %p163, %p164
    %p166 = scmp.ne.s32.totalorder %s158, %s160
    %p167 = scmp.eq.s32.totalorder %s24, 1
    %p168 = por %p166, %p167
    %p169 = scmp.ne.s32.totalorder %s160, %s161
    %p170 = scmp.eq.s32.totalorder %s24, 0
    %p171 = por %p169, %p170
    %p172 = scmp.ne.s32.totalorder %s160, %s161
    %p173 = scmp.eq.s32.totalorder %s25, 1
    %p174 = por %p172, %p173
    %p176 = scmp.ne.s32.totalorder %s161, %s175
    %p177 = scmp.eq.s32.totalorder %s25, 0
    %p178 = por %p176, %p177
    %s180 = sadd.s32 %s179, 1
    %p183 = scmp.eq.s32.totalorder %s19, 1
    %p184 = scmp.ne.s32.totalorder %s179, %s181
    %p185 = scmp.eq.s32.totalorder %s19, 0
    %p186 = por %p184, %p185
    %p187 = scmp.ne.s32.totalorder %s179, %s181
    %p188 = scmp.eq.s32.totalorder %s24, 1
    %p189 = por %p187, %p188
    %p190 = scmp.ne.s32.totalorder %s181, %s182
    %p191 = scmp.eq.s32.totalorder %s24, 0
    %p192 = por %p190, %p191
    %p193 = scmp.ne.s32.totalorder %s181, %s182
    %p194 = scmp.eq.s32.totalorder %s25, 1
    %p195 = por %p193, %p194
    %p197 = scmp.ne.s32.totalorder %s182, %s196
    %p198 = scmp.eq.s32.totalorder %s25, 0
    %p199 = por %p197, %p198
    %s201 = sadd.s32 %s200, 1
    %p204 = scmp.eq.s32.totalorder %s19, 1
    %p205 = scmp.ne.s32.totalorder %s200, %s202
    %p206 = scmp.eq.s32.totalorder %s19, 0
    %p207 = por %p205, %p206
    %p208 = scmp.ne.s32.totalorder %s200, %s202
    %p209 = scmp.eq.s32.totalorder %s24, 1
    %p210 = por %p208, %p209
    %p211 = scmp.ne.s32.totalorder %s202, %s203
    %p212 = scmp.eq.s32.totalorder %s24, 0
    %p213 = por %p211, %p212
    %p214 = scmp.ne.s32.totalorder %s202, %s203
    %p215 = scmp.eq.s32.totalorder %s25, 1
    %p216 = por %p214, %p215
    %p218 = scmp.ne.s32.totalorder %s203, %s217
    %p219 = scmp.eq.s32.totalorder %s25, 0
    %p220 = por %p218, %p219
    %s222 = sadd.s32 %s221, 1
    %p225 = scmp.eq.s32.totalorder %s19, 1
    %p226 = scmp.ne.s32.totalorder %s221, %s223
    %p227 = scmp.eq.s32.totalorder %s19, 0
    %p228 = por %p226, %p227
    %p229 = scmp.ne.s32.totalorder %s221, %s223
    %p230 = scmp.eq.s32.totalorder %s24, 1
    %p231 = por %p229, %p230
    %p232 = scmp.ne.s32.totalorder %s223, %s224
    %p233 = scmp.eq.s32.totalorder %s24, 0
    %p234 = por %p232, %p233
    %p235 = scmp.ne.s32.totalorder %s223, %s224
    %p236 = scmp.eq.s32.totalorder %s25, 1
    %p237 = por %p235, %p236
    %p239 = scmp.ne.s32.totalorder %s224, %s238
    %p240 = scmp.eq.s32.totalorder %s25, 0
    %p241 = por %p239, %p240
    %s243 = sadd.s32 %s242, 1
    %p246 = scmp.eq.s32.totalorder %s19, 1
    %p247 = scmp.ne.s32.totalorder %s242, %s244
    %p248 = scmp.eq.s32.totalorder %s19, 0
    %p249 = por %p247, %p248
    %p250 = scmp.ne.s32.totalorder %s242, %s244
    %p251 = scmp.eq.s32.totalorder %s24, 1
    %p252 = por %p250, %p251
    %p253 = scmp.ne.s32.totalorder %s244, %s245
    %p254 = scmp.eq.s32.totalorder %s24, 0
    %p255 = por %p253, %p254
    %p256 = scmp.ne.s32.totalorder %s244, %s245
    %p257 = scmp.eq.s32.totalorder %s25, 1
    %p258 = por %p256, %p257
    %p260 = scmp.ne.s32.totalorder %s245, %s259
    %p261 = scmp.eq.s32.totalorder %s25, 0
    %p262 = por %p260, %p261
    %s263 = ssub.s32 %s19, %s26
    %p264 = scmp.eq.s32.totalorder %s263, 0
    %s266 = sadd.s32 %s265, 1
    %s267 = scalar_select %p264, %s265, %s266
    %p270 = pneg %p264
    %p271 = scmp.eq.s32.totalorder %s19, 1
    %p272 = por %p270, %p271
    %p273 = scmp.ne.s32.totalorder %s265, %s268
    %p274 = scmp.eq.s32.totalorder %s19, 0
    %p275 = por %p273, %p274
    %p276 = scmp.ne.s32.totalorder %s265, %s268
    %p277 = scmp.eq.s32.totalorder %s24, 1
    %p278 = por %p276, %p277
    %p279 = scmp.ne.s32.totalorder %s268, %s269
    %p280 = scmp.eq.s32.totalorder %s24, 0
    %p281 = por %p279, %p280
    %p282 = scmp.ne.s32.totalorder %s268, %s269
    %p283 = scmp.eq.s32.totalorder %s25, 1
    %p284 = por %p282, %p283
    %p286 = scmp.ne.s32.totalorder %s269, %s285
    %p287 = scmp.eq.s32.totalorder %s25, 0
    %p288 = por %p286, %p287
    %p289 = scmp.le.s32.totalorder 1, %s19
    %p290 = scmp.lt.s32.totalorder %s19, 3
    %p291 = pnand %p289, %p290
    %p292 = pneg %p291
    // Predicated region
    $region9: #{simple_cnn_forward.1} parent=5 // pred_check
      _
    $region10: #{simple_cnn_forward.1} parent=5 // pred_check_branch
      %294 = sbr.rel (%p291) target = $region12
    $region11: #{simple_cnn_forward.1} parent=5 // pred_region
      %s295 = ssub.s32 %s19, 1
      // Predicated region
      $region13: #{simple_cnn_forward.1} parent=11 // pred_check
        %p296 = pneg %p66
      $region14: #{simple_cnn_forward.1} parent=11 // pred_check_branch
        %298 = sbr.rel (%p296) target = $region16
      $region15: #{simple_cnn_forward.1} parent=11 // pred_region
        _
      $region16: #{simple_cnn_forward.1} parent=11 // pred_fallthru
        _
      // Predicated region
      $region17: #{simple_cnn_forward.1} parent=11 // pred_check
        %p299 = pneg %p87
      $region18: #{simple_cnn_forward.1} parent=11 // pred_check_branch
        %301 = sbr.rel (%p299) target = $region20
      $region19: #{simple_cnn_forward.1} parent=11 // pred_region
        _
      $region20: #{simple_cnn_forward.1} parent=11 // pred_fallthru
        _
      // Predicated region
      $region21: #{simple_cnn_forward.1} parent=11 // pred_check
        %p302 = pneg %p108
      $region22: #{simple_cnn_forward.1} parent=11 // pred_check_branch
        %304 = sbr.rel (%p302) target = $region24
      $region23: #{simple_cnn_forward.1} parent=11 // pred_region
        _
      $region24: #{simple_cnn_forward.1} parent=11 // pred_fallthru
        _
      // Predicated region
      $region25: #{simple_cnn_forward.1} parent=11 // pred_check
        %p305 = pneg %p129
      $region26: #{simple_cnn_forward.1} parent=11 // pred_check_branch
        %307 = sbr.rel (%p305) target = $region28
      $region27: #{simple_cnn_forward.1} parent=11 // pred_region
        _
      $region28: #{simple_cnn_forward.1} parent=11 // pred_fallthru
        _
      // Predicated region
      $region29: #{simple_cnn_forward.1} parent=11 // pred_check
        %p308 = pneg %p150
      $region30: #{simple_cnn_forward.1} parent=11 // pred_check_branch
        %310 = sbr.rel (%p308) target = $region32
      $region31: #{simple_cnn_forward.1} parent=11 // pred_region
        _
      $region32: #{simple_cnn_forward.1} parent=11 // pred_fallthru
        _
      // Predicated region
      $region33: #{simple_cnn_forward.1} parent=11 // pred_check
        %p311 = pneg %p171
      $region34: #{simple_cnn_forward.1} parent=11 // pred_check_branch
        %313 = sbr.rel (%p311) target = $region36
      $region35: #{simple_cnn_forward.1} parent=11 // pred_region
        _
      $region36: #{simple_cnn_forward.1} parent=11 // pred_fallthru
        _
      // Predicated region
      $region37: #{simple_cnn_forward.1} parent=11 // pred_check
        %p314 = pneg %p192
      $region38: #{simple_cnn_forward.1} parent=11 // pred_check_branch
        %316 = sbr.rel (%p314) target = $region40
      $region39: #{simple_cnn_forward.1} parent=11 // pred_region
        _
      $region40: #{simple_cnn_forward.1} parent=11 // pred_fallthru
        _
      // Predicated region
      $region41: #{simple_cnn_forward.1} parent=11 // pred_check
        %p317 = pneg %p213
      $region42: #{simple_cnn_forward.1} parent=11 // pred_check_branch
        %319 = sbr.rel (%p317) target = $region44
      $region43: #{simple_cnn_forward.1} parent=11 // pred_region
        _
      $region44: #{simple_cnn_forward.1} parent=11 // pred_fallthru
        _
      // Predicated region
      $region45: #{simple_cnn_forward.1} parent=11 // pred_check
        %p320 = pneg %p234
      $region46: #{simple_cnn_forward.1} parent=11 // pred_check_branch
        %322 = sbr.rel (%p320) target = $region48
      $region47: #{simple_cnn_forward.1} parent=11 // pred_region
        _
      $region48: #{simple_cnn_forward.1} parent=11 // pred_fallthru
        _
      // Predicated region
      $region49: #{simple_cnn_forward.1} parent=11 // pred_check
        %p323 = pneg %p255
      $region50: #{simple_cnn_forward.1} parent=11 // pred_check_branch
        %325 = sbr.rel (%p323) target = $region52
      $region51: #{simple_cnn_forward.1} parent=11 // pred_region
        _
      $region52: #{simple_cnn_forward.1} parent=11 // pred_fallthru
        _
    $region12: #{simple_cnn_forward.1} parent=5 // pred_fallthru
      _
    %p326 = scmp.lt.s32.totalorder %s19, 2
    // Predicated region
    $region53: #{simple_cnn_forward.1} parent=5 // pred_check
      %p327 = pneg %p326
    $region54: #{simple_cnn_forward.1} parent=5 // pred_check_branch
      %329 = sbr.rel (%p327) target = $region56
    $region55: #{simple_cnn_forward.1} parent=5 // pred_region
      // Predicated region
      $region57: #{simple_cnn_forward.1} parent=55 // pred_check
        %p330 = pneg %p39
      $region58: #{simple_cnn_forward.1} parent=55 // pred_check_branch
        %332 = sbr.rel (%p330) target = $region60
      $region59: #{simple_cnn_forward.1} parent=55 // pred_region
        %p333 = scmp.lt.s32.totalorder %s19, 1
        %s334 = scalar_select %p333, %s19, 1
        %s335 = smul.addr %s334, 512
        %s336 = smul.addr %s335, 8
        %s337 = scalar_lea.vmem %s0, %s336
      $region60: #{simple_cnn_forward.1} parent=55 // pred_fallthru
        _
    $region56: #{simple_cnn_forward.1} parent=5 // pred_fallthru
      _
    %p338 = scmp.le.s32.totalorder 1, %s19
    %p339 = scmp.lt.s32.totalorder %s19, 3
    %p340 = pnand %p338, %p339
    %p341 = pneg %p340
    // Predicated region
    $region61: #{simple_cnn_forward.1} parent=5 // pred_check
      _
    $region62: #{simple_cnn_forward.1} parent=5 // pred_check_branch
      %343 = sbr.rel (%p340) target = $region64
    $region63: #{simple_cnn_forward.1} parent=5 // pred_region
      %s344 = ssub.s32 %s19, 1
      %p345 = scmp.lt.s32.totalorder %s24, 1
      %s346 = scalar_select %p345, %s24, 1
      %s347 = smul.addr %s346, 512
      %s348 = smul.addr %s347, 8
      %s349 = scalar_lea.vmem %s0, %s348
      %p350 = pneg %p45
      %p351 = pneg %p42
      %p352 = pneg %p66
      %p353 = pneg %p63
      %p354 = pneg %p87
      %p355 = pneg %p84
      %p356 = pneg %p108
      %p357 = pneg %p105
      %p358 = pneg %p129
      %p359 = pneg %p126
      %p360 = pneg %p150
      %p361 = pneg %p147
      %p362 = pneg %p171
      %p363 = pneg %p168
      %p364 = pneg %p192
      %p365 = pneg %p189
      %p366 = pneg %p213
      %p367 = pneg %p210
      %p368 = pneg %p234
      %p369 = pneg %p231
      %p370 = pneg %p255
      %p371 = pneg %p252
      %p372 = pneg %p281
      %p373 = pneg %p278
      %p374 = scmp.lt.s32.totalorder %s24, 1
      %s375 = scalar_select %p374, %s24, 1
      %s376 = scalar_lea.vmem %s11, %s375
      %p377 = scmp.lt.s32.totalorder %s24, 1
      %s378 = scalar_select %p377, %s24, 1
      %s379 = smul.addr %s378, 512
      %s380 = smul.addr %s379, 8
      %s381 = scalar_lea.vmem %s0, %s380
      %p382 = scmp.lt.s32.totalorder %s24, 1
      %s383 = scalar_select %p382, %s24, 1
      %s384 = scalar_lea.vmem %s11, %s383
      %vm385 = vcmask 64512
      %386 = vst.msk [vmem:[#allocation2] sm:$0xff] %vm385, 0.0
      %387 = vst.msk [vmem:[#allocation2 + $0x8] sm:$0xff] %vm385, 0.0
      %388 = vst.msk [vmem:[#allocation2 + $0x10] sm:$0xff] %vm385, 0.0
      %389 = vst.msk [vmem:[#allocation2 + $0x18] sm:$0xff] %vm385, 0.0
      %390 = vst.msk [vmem:[#allocation2 + $0x20] sm:$0xff] %vm385, 0.0
      %391 = vst.msk [vmem:[#allocation2 + $0x28] sm:$0xff] %vm385, 0.0
      %392 = vst.msk [vmem:[#allocation2 + $0x30] sm:$0xff] %vm385, 0.0
      %393 = vst.msk [vmem:[#allocation2 + $0x38] sm:$0xff] %vm385, 0.0
      %vm394 = vcmask 58368
      %395 = vst.msk [vmem:[#allocation2 + $0x40] sm:$0x3] %vm394, 0.0
      %396 = vst.msk [vmem:[#allocation2 + $0x48] sm:$0xff] %vm385, 0.0
      %397 = vst.msk [vmem:[#allocation2 + $0x50] sm:$0xff] %vm385, 0.0
      %398 = vst.msk [vmem:[#allocation2 + $0x58] sm:$0xff] %vm385, 0.0
      %399 = vst.msk [vmem:[#allocation2 + $0x60] sm:$0xff] %vm385, 0.0
      %400 = vst.msk [vmem:[#allocation2 + $0x68] sm:$0xff] %vm385, 0.0
      %401 = vst.msk [vmem:[#allocation2 + $0x70] sm:$0xff] %vm385, 0.0
      %402 = vst.msk [vmem:[#allocation2 + $0x78] sm:$0xff] %vm385, 0.0
      %403 = vst.msk [vmem:[#allocation2 + $0x80] sm:$0xff] %vm385, 0.0
      %404 = vst.msk [vmem:[#allocation2 + $0x88] sm:$0x3] %vm394, 0.0
      %405 = vst.msk [vmem:[#allocation2 + $0x90] sm:$0xff] %vm385, 0.0
      %406 = vst.msk [vmem:[#allocation2 + $0x98] sm:$0xff] %vm385, 0.0
      %407 = vst.msk [vmem:[#allocation2 + $0xa0] sm:$0xff] %vm385, 0.0
      %408 = vst.msk [vmem:[#allocation2 + $0xa8] sm:$0xff] %vm385, 0.0
      %409 = vst.msk [vmem:[#allocation2 + $0xb0] sm:$0xff] %vm385, 0.0
      %410 = vst.msk [vmem:[#allocation2 + $0xb8] sm:$0xff] %vm385, 0.0
      %411 = vst.msk [vmem:[#allocation2 + $0xc0] sm:$0xff] %vm385, 0.0
      %412 = vst.msk [vmem:[#allocation2 + $0xc8] sm:$0xff] %vm385, 0.0
      %413 = vst.msk [vmem:[#allocation2 + $0xd0] sm:$0x3] %vm394, 0.0
      %414 = vst.msk [vmem:[#allocation2 + $0xd8] sm:$0xff] %vm385, 0.0
      %415 = vst.msk [vmem:[#allocation2 + $0xe0] sm:$0xff] %vm385, 0.0
      %416 = vst.msk [vmem:[#allocation2 + $0xe8] sm:$0xff] %vm385, 0.0
      %417 = vst.msk [vmem:[#allocation2 + $0xf0] sm:$0xff] %vm385, 0.0
      %418 = vst.msk [vmem:[#allocation2 + $0xf8] sm:$0xff] %vm385, 0.0
      %419 = vst.msk [vmem:[#allocation2 + $0x100] sm:$0xff] %vm385, 0.0
      %420 = vst.msk [vmem:[#allocation2 + $0x108] sm:$0xff] %vm385, 0.0
      %421 = vst.msk [vmem:[#allocation2 + $0x110] sm:$0xff] %vm385, 0.0
      %422 = vst.msk [vmem:[#allocation2 + $0x118] sm:$0x3] %vm394, 0.0
      %423 = vst.msk [vmem:[#allocation2 + $0x120] sm:$0xff] %vm385, 0.0
      %424 = vst.msk [vmem:[#allocation2 + $0x128] sm:$0xff] %vm385, 0.0
      %425 = vst.msk [vmem:[#allocation2 + $0x130] sm:$0xff] %vm385, 0.0
      %426 = vst.msk [vmem:[#allocation2 + $0x138] sm:$0xff] %vm385, 0.0
      %427 = vst.msk [vmem:[#allocation2 + $0x140] sm:$0xff] %vm385, 0.0
      %428 = vst.msk [vmem:[#allocation2 + $0x148] sm:$0xff] %vm385, 0.0
      %429 = vst.msk [vmem:[#allocation2 + $0x150] sm:$0xff] %vm385, 0.0
      %430 = vst.msk [vmem:[#allocation2 + $0x158] sm:$0xff] %vm385, 0.0
      %431 = vst.msk [vmem:[#allocation2 + $0x160] sm:$0x3] %vm394, 0.0
      %432 = vst.msk [vmem:[#allocation2 + $0x168] sm:$0xff] %vm385, 0.0
      %433 = vst.msk [vmem:[#allocation2 + $0x170] sm:$0xff] %vm385, 0.0
      %434 = vst.msk [vmem:[#allocation2 + $0x178] sm:$0xff] %vm385, 0.0
      %435 = vst.msk [vmem:[#allocation2 + $0x180] sm:$0xff] %vm385, 0.0
      %436 = vst.msk [vmem:[#allocation2 + $0x188] sm:$0xff] %vm385, 0.0
      %437 = vst.msk [vmem:[#allocation2 + $0x190] sm:$0xff] %vm385, 0.0
      %438 = vst.msk [vmem:[#allocation2 + $0x198] sm:$0xff] %vm385, 0.0
      %439 = vst.msk [vmem:[#allocation2 + $0x1a0] sm:$0xff] %vm385, 0.0
      %440 = vst.msk [vmem:[#allocation2 + $0x1a8] sm:$0x3] %vm394, 0.0
      %441 = vst.msk [vmem:[#allocation2 + $0x1b0] sm:$0xff] %vm385, 0.0
      %442 = vst.msk [vmem:[#allocation2 + $0x1b8] sm:$0xff] %vm385, 0.0
      %443 = vst.msk [vmem:[#allocation2 + $0x1c0] sm:$0xff] %vm385, 0.0
      %444 = vst.msk [vmem:[#allocation2 + $0x1c8] sm:$0xff] %vm385, 0.0
      %445 = vst.msk [vmem:[#allocation2 + $0x1d0] sm:$0xff] %vm385, 0.0
      %446 = vst.msk [vmem:[#allocation2 + $0x1d8] sm:$0xff] %vm385, 0.0
      %447 = vst.msk [vmem:[#allocation2 + $0x1e0] sm:$0xff] %vm385, 0.0
      %448 = vst.msk [vmem:[#allocation2 + $0x1e8] sm:$0xff] %vm385, 0.0
      %449 = vst.msk [vmem:[#allocation2 + $0x1f0] sm:$0x3] %vm394, 0.0
      %450 = vst.msk [vmem:[#allocation2 + $0x1f8] sm:$0xff] %vm385, 0.0
      %451 = vst.msk [vmem:[#allocation2 + $0x200] sm:$0xff] %vm385, 0.0
      %452 = vst.msk [vmem:[#allocation2 + $0x208] sm:$0xff] %vm385, 0.0
      %453 = vst.msk [vmem:[#allocation2 + $0x210] sm:$0xff] %vm385, 0.0
      %454 = vst.msk [vmem:[#allocation2 + $0x218] sm:$0xff] %vm385, 0.0
      %455 = vst.msk [vmem:[#allocation2 + $0x220] sm:$0xff] %vm385, 0.0
      %456 = vst.msk [vmem:[#allocation2 + $0x228] sm:$0xff] %vm385, 0.0
      %457 = vst.msk [vmem:[#allocation2 + $0x230] sm:$0xff] %vm385, 0.0
      %458 = vst.msk [vmem:[#allocation2 + $0x238] sm:$0x3] %vm394, 0.0
      %459 = vst.msk [vmem:[#allocation2 + $0x240] sm:$0xff] %vm385, 0.0
      %460 = vst.msk [vmem:[#allocation2 + $0x248] sm:$0xff] %vm385, 0.0
      %461 = vst.msk [vmem:[#allocation2 + $0x250] sm:$0xff] %vm385, 0.0
      %462 = vst.msk [vmem:[#allocation2 + $0x258] sm:$0xff] %vm385, 0.0
      %463 = vst.msk [vmem:[#allocation2 + $0x260] sm:$0xff] %vm385, 0.0
      %464 = vst.msk [vmem:[#allocation2 + $0x268] sm:$0xff] %vm385, 0.0
      %465 = vst.msk [vmem:[#allocation2 + $0x270] sm:$0xff] %vm385, 0.0
      %466 = vst.msk [vmem:[#allocation2 + $0x278] sm:$0xff] %vm385, 0.0
      %467 = vst.msk [vmem:[#allocation2 + $0x280] sm:$0x3] %vm394, 0.0
      %468 = vst.msk [vmem:[#allocation2 + $0x288] sm:$0xff] %vm385, 0.0
      %469 = vst.msk [vmem:[#allocation2 + $0x290] sm:$0xff] %vm385, 0.0
      %470 = vst.msk [vmem:[#allocation2 + $0x298] sm:$0xff] %vm385, 0.0
      %471 = vst.msk [vmem:[#allocation2 + $0x2a0] sm:$0xff] %vm385, 0.0
      %472 = vst.msk [vmem:[#allocation2 + $0x2a8] sm:$0xff] %vm385, 0.0
      %473 = vst.msk [vmem:[#allocation2 + $0x2b0] sm:$0xff] %vm385, 0.0
      %474 = vst.msk [vmem:[#allocation2 + $0x2b8] sm:$0xff] %vm385, 0.0
      %475 = vst.msk [vmem:[#allocation2 + $0x2c0] sm:$0xff] %vm385, 0.0
      %476 = vst.msk [vmem:[#allocation2 + $0x2c8] sm:$0x3] %vm394, 0.0
      %477 = vst.msk [vmem:[#allocation2 + $0x2d0] sm:$0xff] %vm385, 0.0
      %478 = vst.msk [vmem:[#allocation2 + $0x2d8] sm:$0xff] %vm385, 0.0
      %479 = vst.msk [vmem:[#allocation2 + $0x2e0] sm:$0xff] %vm385, 0.0
      %480 = vst.msk [vmem:[#allocation2 + $0x2e8] sm:$0xff] %vm385, 0.0
      %481 = vst.msk [vmem:[#allocation2 + $0x2f0] sm:$0xff] %vm385, 0.0
      %482 = vst.msk [vmem:[#allocation2 + $0x2f8] sm:$0xff] %vm385, 0.0
      %483 = vst.msk [vmem:[#allocation2 + $0x300] sm:$0xff] %vm385, 0.0
      %484 = vst.msk [vmem:[#allocation2 + $0x308] sm:$0xff] %vm385, 0.0
      %485 = vst.msk [vmem:[#allocation2 + $0x310] sm:$0x3] %vm394, 0.0
      %486 = vst.msk [vmem:[#allocation2 + $0x318] sm:$0xff] %vm385, 0.0
      %487 = vst.msk [vmem:[#allocation2 + $0x320] sm:$0xff] %vm385, 0.0
      %488 = vst.msk [vmem:[#allocation2 + $0x328] sm:$0xff] %vm385, 0.0
      %489 = vst.msk [vmem:[#allocation2 + $0x330] sm:$0xff] %vm385, 0.0
      %490 = vst.msk [vmem:[#allocation2 + $0x338] sm:$0xff] %vm385, 0.0
      %491 = vst.msk [vmem:[#allocation2 + $0x340] sm:$0xff] %vm385, 0.0
      %492 = vst.msk [vmem:[#allocation2 + $0x348] sm:$0xff] %vm385, 0.0
      %493 = vst.msk [vmem:[#allocation2 + $0x350] sm:$0xff] %vm385, 0.0
      %494 = vst.msk [vmem:[#allocation2 + $0x358] sm:$0x3] %vm394, 0.0
      %495 = vst.msk [vmem:[#allocation2 + $0x360] sm:$0xff] %vm385, 0.0
      %496 = vst.msk [vmem:[#allocation2 + $0x368] sm:$0xff] %vm385, 0.0
      %497 = vst.msk [vmem:[#allocation2 + $0x370] sm:$0xff] %vm385, 0.0
      %498 = vst.msk [vmem:[#allocation2 + $0x378] sm:$0xff] %vm385, 0.0
      %499 = vst.msk [vmem:[#allocation2 + $0x380] sm:$0xff] %vm385, 0.0
      %500 = vst.msk [vmem:[#allocation2 + $0x388] sm:$0xff] %vm385, 0.0
      %501 = vst.msk [vmem:[#allocation2 + $0x390] sm:$0xff] %vm385, 0.0
      %502 = vst.msk [vmem:[#allocation2 + $0x398] sm:$0xff] %vm385, 0.0
      %503 = vst.msk [vmem:[#allocation2 + $0x3a0] sm:$0x3] %vm394, 0.0
      %504 = vst.msk [vmem:[#allocation2 + $0x3a8] sm:$0xff] %vm385, 0.0
      %505 = vst.msk [vmem:[#allocation2 + $0x3b0] sm:$0xff] %vm385, 0.0
      %506 = vst.msk [vmem:[#allocation2 + $0x3b8] sm:$0xff] %vm385, 0.0
      %507 = vst.msk [vmem:[#allocation2 + $0x3c0] sm:$0xff] %vm385, 0.0
      %508 = vst.msk [vmem:[#allocation2 + $0x3c8] sm:$0xff] %vm385, 0.0
      %509 = vst.msk [vmem:[#allocation2 + $0x3d0] sm:$0xff] %vm385, 0.0
      %510 = vst.msk [vmem:[#allocation2 + $0x3d8] sm:$0xff] %vm385, 0.0
      %511 = vst.msk [vmem:[#allocation2 + $0x3e0] sm:$0xff] %vm385, 0.0
      %512 = vst.msk [vmem:[#allocation2 + $0x3e8] sm:$0x3] %vm394, 0.0
      %513 = vst.msk [vmem:[#allocation2 + $0x3f0] sm:$0xff] %vm385, 0.0
      %514 = vst.msk [vmem:[#allocation2 + $0x3f8] sm:$0xff] %vm385, 0.0
      %515 = vst.msk [vmem:[#allocation2 + $0x400] sm:$0xff] %vm385, 0.0
      %516 = vst.msk [vmem:[#allocation2 + $0x408] sm:$0xff] %vm385, 0.0
      %517 = vst.msk [vmem:[#allocation2 + $0x410] sm:$0xff] %vm385, 0.0
      %518 = vst.msk [vmem:[#allocation2 + $0x418] sm:$0xff] %vm385, 0.0
      %519 = vst.msk [vmem:[#allocation2 + $0x420] sm:$0xff] %vm385, 0.0
      %520 = vst.msk [vmem:[#allocation2 + $0x428] sm:$0xff] %vm385, 0.0
      %521 = vst.msk [vmem:[#allocation2 + $0x430] sm:$0x3] %vm394, 0.0
      %522 = vst.msk [vmem:[#allocation2 + $0x438] sm:$0xff] %vm385, 0.0
      %523 = vst.msk [vmem:[#allocation2 + $0x440] sm:$0xff] %vm385, 0.0
      %524 = vst.msk [vmem:[#allocation2 + $0x448] sm:$0xff] %vm385, 0.0
      %525 = vst.msk [vmem:[#allocation2 + $0x450] sm:$0xff] %vm385, 0.0
      %526 = vst.msk [vmem:[#allocation2 + $0x458] sm:$0xff] %vm385, 0.0
      %527 = vst.msk [vmem:[#allocation2 + $0x460] sm:$0xff] %vm385, 0.0
      %528 = vst.msk [vmem:[#allocation2 + $0x468] sm:$0xff] %vm385, 0.0
      %529 = vst.msk [vmem:[#allocation2 + $0x470] sm:$0xff] %vm385, 0.0
      %530 = vst.msk [vmem:[#allocation2 + $0x478] sm:$0x3] %vm394, 0.0
      %531 = vst.msk [vmem:[#allocation2 + $0x480] sm:$0xff] %vm385, 0.0
      %532 = vst.msk [vmem:[#allocation2 + $0x488] sm:$0xff] %vm385, 0.0
      %533 = vst.msk [vmem:[#allocation2 + $0x490] sm:$0xff] %vm385, 0.0
      %534 = vst.msk [vmem:[#allocation2 + $0x498] sm:$0xff] %vm385, 0.0
      %535 = vst.msk [vmem:[#allocation2 + $0x4a0] sm:$0xff] %vm385, 0.0
      %536 = vst.msk [vmem:[#allocation2 + $0x4a8] sm:$0xff] %vm385, 0.0
      %537 = vst.msk [vmem:[#allocation2 + $0x4b0] sm:$0xff] %vm385, 0.0
      %538 = vst.msk [vmem:[#allocation2 + $0x4b8] sm:$0xff] %vm385, 0.0
      %539 = vst.msk [vmem:[#allocation2 + $0x4c0] sm:$0x3] %vm394, 0.0
      %540 = vst.msk [vmem:[#allocation2 + $0x4c8] sm:$0xff] %vm385, 0.0
      %541 = vst.msk [vmem:[#allocation2 + $0x4d0] sm:$0xff] %vm385, 0.0
      %542 = vst.msk [vmem:[#allocation2 + $0x4d8] sm:$0xff] %vm385, 0.0
      %543 = vst.msk [vmem:[#allocation2 + $0x4e0] sm:$0xff] %vm385, 0.0
      %544 = vst.msk [vmem:[#allocation2 + $0x4e8] sm:$0xff] %vm385, 0.0
      %545 = vst.msk [vmem:[#allocation2 + $0x4f0] sm:$0xff] %vm385, 0.0
      %546 = vst.msk [vmem:[#allocation2 + $0x4f8] sm:$0xff] %vm385, 0.0
      %547 = vst.msk [vmem:[#allocation2 + $0x500] sm:$0xff] %vm385, 0.0
      %548 = vst.msk [vmem:[#allocation2 + $0x508] sm:$0x3] %vm394, 0.0
      %549 = vst.msk [vmem:[#allocation2 + $0x510] sm:$0xff] %vm385, 0.0
      %550 = vst.msk [vmem:[#allocation2 + $0x518] sm:$0xff] %vm385, 0.0
      %551 = vst.msk [vmem:[#allocation2 + $0x520] sm:$0xff] %vm385, 0.0
      %552 = vst.msk [vmem:[#allocation2 + $0x528] sm:$0xff] %vm385, 0.0
      %553 = vst.msk [vmem:[#allocation2 + $0x530] sm:$0xff] %vm385, 0.0
      %554 = vst.msk [vmem:[#allocation2 + $0x538] sm:$0xff] %vm385, 0.0
      %555 = vst.msk [vmem:[#allocation2 + $0x540] sm:$0xff] %vm385, 0.0
      %556 = vst.msk [vmem:[#allocation2 + $0x548] sm:$0xff] %vm385, 0.0
      %557 = vst.msk [vmem:[#allocation2 + $0x550] sm:$0x3] %vm394, 0.0
      %558 = vst.msk [vmem:[#allocation2 + $0x558] sm:$0xff] %vm385, 0.0
      %559 = vst.msk [vmem:[#allocation2 + $0x560] sm:$0xff] %vm385, 0.0
      %560 = vst.msk [vmem:[#allocation2 + $0x568] sm:$0xff] %vm385, 0.0
      %561 = vst.msk [vmem:[#allocation2 + $0x570] sm:$0xff] %vm385, 0.0
      %562 = vst.msk [vmem:[#allocation2 + $0x578] sm:$0xff] %vm385, 0.0
      %563 = vst.msk [vmem:[#allocation2 + $0x580] sm:$0xff] %vm385, 0.0
      %564 = vst.msk [vmem:[#allocation2 + $0x588] sm:$0xff] %vm385, 0.0
      %565 = vst.msk [vmem:[#allocation2 + $0x590] sm:$0xff] %vm385, 0.0
      %566 = vst.msk [vmem:[#allocation2 + $0x598] sm:$0x3] %vm394, 0.0
      %567 = vst.msk [vmem:[#allocation2 + $0x5a0] sm:$0xff] %vm385, 0.0
      %568 = vst.msk [vmem:[#allocation2 + $0x5a8] sm:$0xff] %vm385, 0.0
      %569 = vst.msk [vmem:[#allocation2 + $0x5b0] sm:$0xff] %vm385, 0.0
      %570 = vst.msk [vmem:[#allocation2 + $0x5b8] sm:$0xff] %vm385, 0.0
      %571 = vst.msk [vmem:[#allocation2 + $0x5c0] sm:$0xff] %vm385, 0.0
      %572 = vst.msk [vmem:[#allocation2 + $0x5c8] sm:$0xff] %vm385, 0.0
      %573 = vst.msk [vmem:[#allocation2 + $0x5d0] sm:$0xff] %vm385, 0.0
      %574 = vst.msk [vmem:[#allocation2 + $0x5d8] sm:$0xff] %vm385, 0.0
      %575 = vst.msk [vmem:[#allocation2 + $0x5e0] sm:$0x3] %vm394, 0.0
      %576 = vst.msk [vmem:[#allocation2 + $0x5e8] sm:$0xff] %vm385, 0.0
      %577 = vst.msk [vmem:[#allocation2 + $0x5f0] sm:$0xff] %vm385, 0.0
      %578 = vst.msk [vmem:[#allocation2 + $0x5f8] sm:$0xff] %vm385, 0.0
      %579 = vst.msk [vmem:[#allocation2 + $0x600] sm:$0xff] %vm385, 0.0
      %580 = vst.msk [vmem:[#allocation2 + $0x608] sm:$0xff] %vm385, 0.0
      %581 = vst.msk [vmem:[#allocation2 + $0x610] sm:$0xff] %vm385, 0.0
      %582 = vst.msk [vmem:[#allocation2 + $0x618] sm:$0xff] %vm385, 0.0
      %583 = vst.msk [vmem:[#allocation2 + $0x620] sm:$0xff] %vm385, 0.0
      %584 = vst.msk [vmem:[#allocation2 + $0x628] sm:$0x3] %vm394, 0.0
      %585 = vst.msk [vmem:[#allocation2 + $0x630] sm:$0xff] %vm385, 0.0
      %586 = vst.msk [vmem:[#allocation2 + $0x638] sm:$0xff] %vm385, 0.0
      %587 = vst.msk [vmem:[#allocation2 + $0x640] sm:$0xff] %vm385, 0.0
      %588 = vst.msk [vmem:[#allocation2 + $0x648] sm:$0xff] %vm385, 0.0
      %589 = vst.msk [vmem:[#allocation2 + $0x650] sm:$0xff] %vm385, 0.0
      %590 = vst.msk [vmem:[#allocation2 + $0x658] sm:$0xff] %vm385, 0.0
      %591 = vst.msk [vmem:[#allocation2 + $0x660] sm:$0xff] %vm385, 0.0
      %592 = vst.msk [vmem:[#allocation2 + $0x668] sm:$0xff] %vm385, 0.0
      %593 = vst.msk [vmem:[#allocation2 + $0x670] sm:$0x3] %vm394, 0.0
      %594 = vst.msk [vmem:[#allocation2 + $0x678] sm:$0xff] %vm385, 0.0
      %595 = vst.msk [vmem:[#allocation2 + $0x680] sm:$0xff] %vm385, 0.0
      %596 = vst.msk [vmem:[#allocation2 + $0x688] sm:$0xff] %vm385, 0.0
      %597 = vst.msk [vmem:[#allocation2 + $0x690] sm:$0xff] %vm385, 0.0
      %598 = vst.msk [vmem:[#allocation2 + $0x698] sm:$0xff] %vm385, 0.0
      %599 = vst.msk [vmem:[#allocation2 + $0x6a0] sm:$0xff] %vm385, 0.0
      %600 = vst.msk [vmem:[#allocation2 + $0x6a8] sm:$0xff] %vm385, 0.0
      %601 = vst.msk [vmem:[#allocation2 + $0x6b0] sm:$0xff] %vm385, 0.0
      %602 = vst.msk [vmem:[#allocation2 + $0x6b8] sm:$0x3] %vm394, 0.0
      %603 = vst.msk [vmem:[#allocation2 + $0x6c0] sm:$0xff] %vm385, 0.0
      %604 = vst.msk [vmem:[#allocation2 + $0x6c8] sm:$0xff] %vm385, 0.0
      %605 = vst.msk [vmem:[#allocation2 + $0x6d0] sm:$0xff] %vm385, 0.0
      %606 = vst.msk [vmem:[#allocation2 + $0x6d8] sm:$0xff] %vm385, 0.0
      %607 = vst.msk [vmem:[#allocation2 + $0x6e0] sm:$0xff] %vm385, 0.0
      %608 = vst.msk [vmem:[#allocation2 + $0x6e8] sm:$0xff] %vm385, 0.0
      %609 = vst.msk [vmem:[#allocation2 + $0x6f0] sm:$0xff] %vm385, 0.0
      %610 = vst.msk [vmem:[#allocation2 + $0x6f8] sm:$0xff] %vm385, 0.0
      %611 = vst.msk [vmem:[#allocation2 + $0x700] sm:$0x3] %vm394, 0.0
      %612 = vst.msk [vmem:[#allocation2 + $0x708] sm:$0xff] %vm385, 0.0
      %613 = vst.msk [vmem:[#allocation2 + $0x710] sm:$0xff] %vm385, 0.0
      %614 = vst.msk [vmem:[#allocation2 + $0x718] sm:$0xff] %vm385, 0.0
      %615 = vst.msk [vmem:[#allocation2 + $0x720] sm:$0xff] %vm385, 0.0
      %616 = vst.msk [vmem:[#allocation2 + $0x728] sm:$0xff] %vm385, 0.0
      %617 = vst.msk [vmem:[#allocation2 + $0x730] sm:$0xff] %vm385, 0.0
      %618 = vst.msk [vmem:[#allocation2 + $0x738] sm:$0xff] %vm385, 0.0
      %619 = vst.msk [vmem:[#allocation2 + $0x740] sm:$0xff] %vm385, 0.0
      %620 = vst.msk [vmem:[#allocation2 + $0x748] sm:$0x3] %vm394, 0.0
      %621 = vst.msk [vmem:[#allocation2 + $0x750] sm:$0xff] %vm385, 0.0
      %622 = vst.msk [vmem:[#allocation2 + $0x758] sm:$0xff] %vm385, 0.0
      %623 = vst.msk [vmem:[#allocation2 + $0x760] sm:$0xff] %vm385, 0.0
      %624 = vst.msk [vmem:[#allocation2 + $0x768] sm:$0xff] %vm385, 0.0
      %625 = vst.msk [vmem:[#allocation2 + $0x770] sm:$0xff] %vm385, 0.0
      %626 = vst.msk [vmem:[#allocation2 + $0x778] sm:$0xff] %vm385, 0.0
      %627 = vst.msk [vmem:[#allocation2 + $0x780] sm:$0xff] %vm385, 0.0
      %628 = vst.msk [vmem:[#allocation2 + $0x788] sm:$0xff] %vm385, 0.0
      %629 = vst.msk [vmem:[#allocation2 + $0x790] sm:$0x3] %vm394, 0.0
      %630 = vst.msk [vmem:[#allocation2 + $0x798] sm:$0xff] %vm385, 0.0
      %631 = vst.msk [vmem:[#allocation2 + $0x7a0] sm:$0xff] %vm385, 0.0
      %632 = vst.msk [vmem:[#allocation2 + $0x7a8] sm:$0xff] %vm385, 0.0
      %633 = vst.msk [vmem:[#allocation2 + $0x7b0] sm:$0xff] %vm385, 0.0
      %634 = vst.msk [vmem:[#allocation2 + $0x7b8] sm:$0xff] %vm385, 0.0
      %635 = vst.msk [vmem:[#allocation2 + $0x7c0] sm:$0xff] %vm385, 0.0
      %636 = vst.msk [vmem:[#allocation2 + $0x7c8] sm:$0xff] %vm385, 0.0
      %637 = vst.msk [vmem:[#allocation2 + $0x7d0] sm:$0xff] %vm385, 0.0
      %638 = vst.msk [vmem:[#allocation2 + $0x7d8] sm:$0x3] %vm394, 0.0
      %639 = vst.msk [vmem:[#allocation2 + $0x7e0] sm:$0xff] %vm385, 0.0
      %640 = vst.msk [vmem:[#allocation2 + $0x7e8] sm:$0xff] %vm385, 0.0
      %641 = vst.msk [vmem:[#allocation2 + $0x7f0] sm:$0xff] %vm385, 0.0
      %642 = vst.msk [vmem:[#allocation2 + $0x7f8] sm:$0xff] %vm385, 0.0
      %643 = vst.msk [vmem:[#allocation2 + $0x800] sm:$0xff] %vm385, 0.0
      %644 = vst.msk [vmem:[#allocation2 + $0x808] sm:$0xff] %vm385, 0.0
      %645 = vst.msk [vmem:[#allocation2 + $0x810] sm:$0xff] %vm385, 0.0
      %646 = vst.msk [vmem:[#allocation2 + $0x818] sm:$0xff] %vm385, 0.0
      %647 = vst.msk [vmem:[#allocation2 + $0x820] sm:$0x3] %vm394, 0.0
      %648 = vst.msk [vmem:[#allocation2 + $0x828] sm:$0xff] %vm385, 0.0
      %649 = vst.msk [vmem:[#allocation2 + $0x830] sm:$0xff] %vm385, 0.0
      %650 = vst.msk [vmem:[#allocation2 + $0x838] sm:$0xff] %vm385, 0.0
      %651 = vst.msk [vmem:[#allocation2 + $0x840] sm:$0xff] %vm385, 0.0
      %652 = vst.msk [vmem:[#allocation2 + $0x848] sm:$0xff] %vm385, 0.0
      %653 = vst.msk [vmem:[#allocation2 + $0x850] sm:$0xff] %vm385, 0.0
      %654 = vst.msk [vmem:[#allocation2 + $0x858] sm:$0xff] %vm385, 0.0
      %655 = vst.msk [vmem:[#allocation2 + $0x860] sm:$0xff] %vm385, 0.0
      %656 = vst.msk [vmem:[#allocation2 + $0x868] sm:$0x3] %vm394, 0.0
      %657 = vst.msk [vmem:[#allocation2 + $0x870] sm:$0xff] %vm385, 0.0
      %658 = vst.msk [vmem:[#allocation2 + $0x878] sm:$0xff] %vm385, 0.0
      %659 = vst.msk [vmem:[#allocation2 + $0x880] sm:$0xff] %vm385, 0.0
      %660 = vst.msk [vmem:[#allocation2 + $0x888] sm:$0xff] %vm385, 0.0
      %661 = vst.msk [vmem:[#allocation2 + $0x890] sm:$0xff] %vm385, 0.0
      %662 = vst.msk [vmem:[#allocation2 + $0x898] sm:$0xff] %vm385, 0.0
      %663 = vst.msk [vmem:[#allocation2 + $0x8a0] sm:$0xff] %vm385, 0.0
      %664 = vst.msk [vmem:[#allocation2 + $0x8a8] sm:$0xff] %vm385, 0.0
      %665 = vst.msk [vmem:[#allocation2 + $0x8b0] sm:$0x3] %vm394, 0.0
      %666 = vst.msk [vmem:[#allocation2 + $0x8b8] sm:$0xff] %vm385, 0.0
      %667 = vst.msk [vmem:[#allocation2 + $0x8c0] sm:$0xff] %vm385, 0.0
      %668 = vst.msk [vmem:[#allocation2 + $0x8c8] sm:$0xff] %vm385, 0.0
      %669 = vst.msk [vmem:[#allocation2 + $0x8d0] sm:$0xff] %vm385, 0.0
      %670 = vst.msk [vmem:[#allocation2 + $0x8d8] sm:$0xff] %vm385, 0.0
      %671 = vst.msk [vmem:[#allocation2 + $0x8e0] sm:$0xff] %vm385, 0.0
      %672 = vst.msk [vmem:[#allocation2 + $0x8e8] sm:$0xff] %vm385, 0.0
      %673 = vst.msk [vmem:[#allocation2 + $0x8f0] sm:$0xff] %vm385, 0.0
      %674 = vst.msk [vmem:[#allocation2 + $0x8f8] sm:$0x3] %vm394, 0.0
      %675 = vst.msk [vmem:[#allocation2 + $0x900] sm:$0xff] %vm385, 0.0
      %676 = vst.msk [vmem:[#allocation2 + $0x908] sm:$0xff] %vm385, 0.0
      %677 = vst.msk [vmem:[#allocation2 + $0x910] sm:$0xff] %vm385, 0.0
      %678 = vst.msk [vmem:[#allocation2 + $0x918] sm:$0xff] %vm385, 0.0
      %679 = vst.msk [vmem:[#allocation2 + $0x920] sm:$0xff] %vm385, 0.0
      %680 = vst.msk [vmem:[#allocation2 + $0x928] sm:$0xff] %vm385, 0.0
      %681 = vst.msk [vmem:[#allocation2 + $0x930] sm:$0xff] %vm385, 0.0
      %682 = vst.msk [vmem:[#allocation2 + $0x938] sm:$0xff] %vm385, 0.0
      %683 = vst.msk [vmem:[#allocation2 + $0x940] sm:$0x3] %vm394, 0.0
      %684 = vst.msk [vmem:[#allocation2 + $0x948] sm:$0xff] %vm385, 0.0
      %685 = vst.msk [vmem:[#allocation2 + $0x950] sm:$0xff] %vm385, 0.0
      %686 = vst.msk [vmem:[#allocation2 + $0x958] sm:$0xff] %vm385, 0.0
      %687 = vst.msk [vmem:[#allocation2 + $0x960] sm:$0xff] %vm385, 0.0
      %688 = vst.msk [vmem:[#allocation2 + $0x968] sm:$0xff] %vm385, 0.0
      %689 = vst.msk [vmem:[#allocation2 + $0x970] sm:$0xff] %vm385, 0.0
      %690 = vst.msk [vmem:[#allocation2 + $0x978] sm:$0xff] %vm385, 0.0
      %691 = vst.msk [vmem:[#allocation2 + $0x980] sm:$0xff] %vm385, 0.0
      %692 = vst.msk [vmem:[#allocation2 + $0x988] sm:$0x3] %vm394, 0.0
      %693 = vst.msk [vmem:[#allocation2 + $0x990] sm:$0xff] %vm385, 0.0
      %694 = vst.msk [vmem:[#allocation2 + $0x998] sm:$0xff] %vm385, 0.0
      %695 = vst.msk [vmem:[#allocation2 + $0x9a0] sm:$0xff] %vm385, 0.0
      %696 = vst.msk [vmem:[#allocation2 + $0x9a8] sm:$0xff] %vm385, 0.0
      %697 = vst.msk [vmem:[#allocation2 + $0x9b0] sm:$0xff] %vm385, 0.0
      %698 = vst.msk [vmem:[#allocation2 + $0x9b8] sm:$0xff] %vm385, 0.0
      %699 = vst.msk [vmem:[#allocation2 + $0x9c0] sm:$0xff] %vm385, 0.0
      %700 = vst.msk [vmem:[#allocation2 + $0x9c8] sm:$0xff] %vm385, 0.0
      %701 = vst.msk [vmem:[#allocation2 + $0x9d0] sm:$0x3] %vm394, 0.0
      %702 = vst.msk [vmem:[#allocation2 + $0x9d8] sm:$0xff] %vm385, 0.0
      %703 = vst.msk [vmem:[#allocation2 + $0x9e0] sm:$0xff] %vm385, 0.0
      %704 = vst.msk [vmem:[#allocation2 + $0x9e8] sm:$0xff] %vm385, 0.0
      %705 = vst.msk [vmem:[#allocation2 + $0x9f0] sm:$0xff] %vm385, 0.0
      %706 = vst.msk [vmem:[#allocation2 + $0x9f8] sm:$0xff] %vm385, 0.0
      %707 = vst.msk [vmem:[#allocation2 + $0xa00] sm:$0xff] %vm385, 0.0
      %708 = vst.msk [vmem:[#allocation2 + $0xa08] sm:$0xff] %vm385, 0.0
      %709 = vst.msk [vmem:[#allocation2 + $0xa10] sm:$0xff] %vm385, 0.0
      %710 = vst.msk [vmem:[#allocation2 + $0xa18] sm:$0x3] %vm394, 0.0
      %711 = vst.msk [vmem:[#allocation2 + $0xa20] sm:$0xff] %vm385, 0.0
      %712 = vst.msk [vmem:[#allocation2 + $0xa28] sm:$0xff] %vm385, 0.0
      %713 = vst.msk [vmem:[#allocation2 + $0xa30] sm:$0xff] %vm385, 0.0
      %714 = vst.msk [vmem:[#allocation2 + $0xa38] sm:$0xff] %vm385, 0.0
      %715 = vst.msk [vmem:[#allocation2 + $0xa40] sm:$0xff] %vm385, 0.0
      %716 = vst.msk [vmem:[#allocation2 + $0xa48] sm:$0xff] %vm385, 0.0
      %717 = vst.msk [vmem:[#allocation2 + $0xa50] sm:$0xff] %vm385, 0.0
      %718 = vst.msk [vmem:[#allocation2 + $0xa58] sm:$0xff] %vm385, 0.0
      %719 = vst.msk [vmem:[#allocation2 + $0xa60] sm:$0x3] %vm394, 0.0
      %720 = vst.msk [vmem:[#allocation2 + $0xa68] sm:$0xff] %vm385, 0.0
      %721 = vst.msk [vmem:[#allocation2 + $0xa70] sm:$0xff] %vm385, 0.0
      %722 = vst.msk [vmem:[#allocation2 + $0xa78] sm:$0xff] %vm385, 0.0
      %723 = vst.msk [vmem:[#allocation2 + $0xa80] sm:$0xff] %vm385, 0.0
      %724 = vst.msk [vmem:[#allocation2 + $0xa88] sm:$0xff] %vm385, 0.0
      %725 = vst.msk [vmem:[#allocation2 + $0xa90] sm:$0xff] %vm385, 0.0
      %726 = vst.msk [vmem:[#allocation2 + $0xa98] sm:$0xff] %vm385, 0.0
      %727 = vst.msk [vmem:[#allocation2 + $0xaa0] sm:$0xff] %vm385, 0.0
      %728 = vst.msk [vmem:[#allocation2 + $0xaa8] sm:$0x3] %vm394, 0.0
      %729 = vst.msk [vmem:[#allocation2 + $0xab0] sm:$0xff] %vm385, 0.0
      %730 = vst.msk [vmem:[#allocation2 + $0xab8] sm:$0xff] %vm385, 0.0
      %731 = vst.msk [vmem:[#allocation2 + $0xac0] sm:$0xff] %vm385, 0.0
      %732 = vst.msk [vmem:[#allocation2 + $0xac8] sm:$0xff] %vm385, 0.0
      %733 = vst.msk [vmem:[#allocation2 + $0xad0] sm:$0xff] %vm385, 0.0
      %734 = vst.msk [vmem:[#allocation2 + $0xad8] sm:$0xff] %vm385, 0.0
      %735 = vst.msk [vmem:[#allocation2 + $0xae0] sm:$0xff] %vm385, 0.0
      %736 = vst.msk [vmem:[#allocation2 + $0xae8] sm:$0xff] %vm385, 0.0
      %737 = vst.msk [vmem:[#allocation2 + $0xaf0] sm:$0x3] %vm394, 0.0
      %738 = vst.msk [vmem:[#allocation2 + $0xaf8] sm:$0xff] %vm385, 0.0
      %739 = vst.msk [vmem:[#allocation2 + $0xb00] sm:$0xff] %vm385, 0.0
      %740 = vst.msk [vmem:[#allocation2 + $0xb08] sm:$0xff] %vm385, 0.0
      %741 = vst.msk [vmem:[#allocation2 + $0xb10] sm:$0xff] %vm385, 0.0
      %742 = vst.msk [vmem:[#allocation2 + $0xb18] sm:$0xff] %vm385, 0.0
      %743 = vst.msk [vmem:[#allocation2 + $0xb20] sm:$0xff] %vm385, 0.0
      %744 = vst.msk [vmem:[#allocation2 + $0xb28] sm:$0xff] %vm385, 0.0
      %745 = vst.msk [vmem:[#allocation2 + $0xb30] sm:$0xff] %vm385, 0.0
      %746 = vst.msk [vmem:[#allocation2 + $0xb38] sm:$0x3] %vm394, 0.0
      %747 = vst.msk [vmem:[#allocation2 + $0xb40] sm:$0xff] %vm385, 0.0
      %748 = vst.msk [vmem:[#allocation2 + $0xb48] sm:$0xff] %vm385, 0.0
      %749 = vst.msk [vmem:[#allocation2 + $0xb50] sm:$0xff] %vm385, 0.0
      %750 = vst.msk [vmem:[#allocation2 + $0xb58] sm:$0xff] %vm385, 0.0
      %751 = vst.msk [vmem:[#allocation2 + $0xb60] sm:$0xff] %vm385, 0.0
      %752 = vst.msk [vmem:[#allocation2 + $0xb68] sm:$0xff] %vm385, 0.0
      %753 = vst.msk [vmem:[#allocation2 + $0xb70] sm:$0xff] %vm385, 0.0
      %754 = vst.msk [vmem:[#allocation2 + $0xb78] sm:$0xff] %vm385, 0.0
      %755 = vst.msk [vmem:[#allocation2 + $0xb80] sm:$0x3] %vm394, 0.0
      %756 = vst.msk [vmem:[#allocation2 + $0xb88] sm:$0xff] %vm385, 0.0
      %757 = vst.msk [vmem:[#allocation2 + $0xb90] sm:$0xff] %vm385, 0.0
      %758 = vst.msk [vmem:[#allocation2 + $0xb98] sm:$0xff] %vm385, 0.0
      %759 = vst.msk [vmem:[#allocation2 + $0xba0] sm:$0xff] %vm385, 0.0
      %760 = vst.msk [vmem:[#allocation2 + $0xba8] sm:$0xff] %vm385, 0.0
      %761 = vst.msk [vmem:[#allocation2 + $0xbb0] sm:$0xff] %vm385, 0.0
      %762 = vst.msk [vmem:[#allocation2 + $0xbb8] sm:$0xff] %vm385, 0.0
      %763 = vst.msk [vmem:[#allocation2 + $0xbc0] sm:$0xff] %vm385, 0.0
      %764 = vst.msk [vmem:[#allocation2 + $0xbc8] sm:$0x3] %vm394, 0.0
      %765 = vst.msk [vmem:[#allocation2 + $0xbd0] sm:$0xff] %vm385, 0.0
      %766 = vst.msk [vmem:[#allocation2 + $0xbd8] sm:$0xff] %vm385, 0.0
      %767 = vst.msk [vmem:[#allocation2 + $0xbe0] sm:$0xff] %vm385, 0.0
      %768 = vst.msk [vmem:[#allocation2 + $0xbe8] sm:$0xff] %vm385, 0.0
      %769 = vst.msk [vmem:[#allocation2 + $0xbf0] sm:$0xff] %vm385, 0.0
      %770 = vst.msk [vmem:[#allocation2 + $0xbf8] sm:$0xff] %vm385, 0.0
      %771 = vst.msk [vmem:[#allocation2 + $0xc00] sm:$0xff] %vm385, 0.0
      %772 = vst.msk [vmem:[#allocation2 + $0xc08] sm:$0xff] %vm385, 0.0
      %773 = vst.msk [vmem:[#allocation2 + $0xc10] sm:$0x3] %vm394, 0.0
      %774 = vst.msk [vmem:[#allocation2 + $0xc18] sm:$0xff] %vm385, 0.0
      %775 = vst.msk [vmem:[#allocation2 + $0xc20] sm:$0xff] %vm385, 0.0
      %776 = vst.msk [vmem:[#allocation2 + $0xc28] sm:$0xff] %vm385, 0.0
      %777 = vst.msk [vmem:[#allocation2 + $0xc30] sm:$0xff] %vm385, 0.0
      %778 = vst.msk [vmem:[#allocation2 + $0xc38] sm:$0xff] %vm385, 0.0
      %779 = vst.msk [vmem:[#allocation2 + $0xc40] sm:$0xff] %vm385, 0.0
      %780 = vst.msk [vmem:[#allocation2 + $0xc48] sm:$0xff] %vm385, 0.0
      %781 = vst.msk [vmem:[#allocation2 + $0xc50] sm:$0xff] %vm385, 0.0
      %782 = vst.msk [vmem:[#allocation2 + $0xc58] sm:$0x3] %vm394, 0.0
      %783 = vst.msk [vmem:[#allocation2 + $0xc60] sm:$0xff] %vm385, 0.0
      %784 = vst.msk [vmem:[#allocation2 + $0xc68] sm:$0xff] %vm385, 0.0
      %785 = vst.msk [vmem:[#allocation2 + $0xc70] sm:$0xff] %vm385, 0.0
      %786 = vst.msk [vmem:[#allocation2 + $0xc78] sm:$0xff] %vm385, 0.0
      %787 = vst.msk [vmem:[#allocation2 + $0xc80] sm:$0xff] %vm385, 0.0
      %788 = vst.msk [vmem:[#allocation2 + $0xc88] sm:$0xff] %vm385, 0.0
      %789 = vst.msk [vmem:[#allocation2 + $0xc90] sm:$0xff] %vm385, 0.0
      %790 = vst.msk [vmem:[#allocation2 + $0xc98] sm:$0xff] %vm385, 0.0
      %791 = vst.msk [vmem:[#allocation2 + $0xca0] sm:$0x3] %vm394, 0.0
      %792 = vst.msk [vmem:[#allocation2 + $0xca8] sm:$0xff] %vm385, 0.0
      %793 = vst.msk [vmem:[#allocation2 + $0xcb0] sm:$0xff] %vm385, 0.0
      %794 = vst.msk [vmem:[#allocation2 + $0xcb8] sm:$0xff] %vm385, 0.0
      %795 = vst.msk [vmem:[#allocation2 + $0xcc0] sm:$0xff] %vm385, 0.0
      %796 = vst.msk [vmem:[#allocation2 + $0xcc8] sm:$0xff] %vm385, 0.0
      %797 = vst.msk [vmem:[#allocation2 + $0xcd0] sm:$0xff] %vm385, 0.0
      %798 = vst.msk [vmem:[#allocation2 + $0xcd8] sm:$0xff] %vm385, 0.0
      %799 = vst.msk [vmem:[#allocation2 + $0xce0] sm:$0xff] %vm385, 0.0
      %800 = vst.msk [vmem:[#allocation2 + $0xce8] sm:$0x3] %vm394, 0.0
      %801 = vst.msk [vmem:[#allocation2 + $0xcf0] sm:$0xff] %vm385, 0.0
      %802 = vst.msk [vmem:[#allocation2 + $0xcf8] sm:$0xff] %vm385, 0.0
      %803 = vst.msk [vmem:[#allocation2 + $0xd00] sm:$0xff] %vm385, 0.0
      %804 = vst.msk [vmem:[#allocation2 + $0xd08] sm:$0xff] %vm385, 0.0
      %805 = vst.msk [vmem:[#allocation2 + $0xd10] sm:$0xff] %vm385, 0.0
      %806 = vst.msk [vmem:[#allocation2 + $0xd18] sm:$0xff] %vm385, 0.0
      %807 = vst.msk [vmem:[#allocation2 + $0xd20] sm:$0xff] %vm385, 0.0
      %808 = vst.msk [vmem:[#allocation2 + $0xd28] sm:$0xff] %vm385, 0.0
      %809 = vst.msk [vmem:[#allocation2 + $0xd30] sm:$0x3] %vm394, 0.0
      %810 = vst.msk [vmem:[#allocation2 + $0xd38] sm:$0xff] %vm385, 0.0
      %811 = vst.msk [vmem:[#allocation2 + $0xd40] sm:$0xff] %vm385, 0.0
      %812 = vst.msk [vmem:[#allocation2 + $0xd48] sm:$0xff] %vm385, 0.0
      %813 = vst.msk [vmem:[#allocation2 + $0xd50] sm:$0xff] %vm385, 0.0
      %814 = vst.msk [vmem:[#allocation2 + $0xd58] sm:$0xff] %vm385, 0.0
      %815 = vst.msk [vmem:[#allocation2 + $0xd60] sm:$0xff] %vm385, 0.0
      %816 = vst.msk [vmem:[#allocation2 + $0xd68] sm:$0xff] %vm385, 0.0
      %817 = vst.msk [vmem:[#allocation2 + $0xd70] sm:$0xff] %vm385, 0.0
      %818 = vst.msk [vmem:[#allocation2 + $0xd78] sm:$0x3] %vm394, 0.0
      %819 = vst.msk [vmem:[#allocation2 + $0xd80] sm:$0xff] %vm385, 0.0
      %820 = vst.msk [vmem:[#allocation2 + $0xd88] sm:$0xff] %vm385, 0.0
      %821 = vst.msk [vmem:[#allocation2 + $0xd90] sm:$0xff] %vm385, 0.0
      %822 = vst.msk [vmem:[#allocation2 + $0xd98] sm:$0xff] %vm385, 0.0
      %823 = vst.msk [vmem:[#allocation2 + $0xda0] sm:$0xff] %vm385, 0.0
      %824 = vst.msk [vmem:[#allocation2 + $0xda8] sm:$0xff] %vm385, 0.0
      %825 = vst.msk [vmem:[#allocation2 + $0xdb0] sm:$0xff] %vm385, 0.0
      %826 = vst.msk [vmem:[#allocation2 + $0xdb8] sm:$0xff] %vm385, 0.0
      %827 = vst.msk [vmem:[#allocation2 + $0xdc0] sm:$0x3] %vm394, 0.0
      %828 = vst.msk [vmem:[#allocation2 + $0xdc8] sm:$0xff] %vm385, 0.0
      %829 = vst.msk [vmem:[#allocation2 + $0xdd0] sm:$0xff] %vm385, 0.0
      %830 = vst.msk [vmem:[#allocation2 + $0xdd8] sm:$0xff] %vm385, 0.0
      %831 = vst.msk [vmem:[#allocation2 + $0xde0] sm:$0xff] %vm385, 0.0
      %832 = vst.msk [vmem:[#allocation2 + $0xde8] sm:$0xff] %vm385, 0.0
      %833 = vst.msk [vmem:[#allocation2 + $0xdf0] sm:$0xff] %vm385, 0.0
      %834 = vst.msk [vmem:[#allocation2 + $0xdf8] sm:$0xff] %vm385, 0.0
      %835 = vst.msk [vmem:[#allocation2 + $0xe00] sm:$0xff] %vm385, 0.0
      %836 = vst.msk [vmem:[#allocation2 + $0xe08] sm:$0x3] %vm394, 0.0
      %837 = vst.msk [vmem:[#allocation2 + $0xe10] sm:$0xff] %vm385, 0.0
      %838 = vst.msk [vmem:[#allocation2 + $0xe18] sm:$0xff] %vm385, 0.0
      %839 = vst.msk [vmem:[#allocation2 + $0xe20] sm:$0xff] %vm385, 0.0
      %840 = vst.msk [vmem:[#allocation2 + $0xe28] sm:$0xff] %vm385, 0.0
      %841 = vst.msk [vmem:[#allocation2 + $0xe30] sm:$0xff] %vm385, 0.0
      %842 = vst.msk [vmem:[#allocation2 + $0xe38] sm:$0xff] %vm385, 0.0
      %843 = vst.msk [vmem:[#allocation2 + $0xe40] sm:$0xff] %vm385, 0.0
      %844 = vst.msk [vmem:[#allocation2 + $0xe48] sm:$0xff] %vm385, 0.0
      %845 = vst.msk [vmem:[#allocation2 + $0xe50] sm:$0x3] %vm394, 0.0
      %846 = vst.msk [vmem:[#allocation2 + $0xe58] sm:$0xff] %vm385, 0.0
      %847 = vst.msk [vmem:[#allocation2 + $0xe60] sm:$0xff] %vm385, 0.0
      %848 = vst.msk [vmem:[#allocation2 + $0xe68] sm:$0xff] %vm385, 0.0
      %849 = vst.msk [vmem:[#allocation2 + $0xe70] sm:$0xff] %vm385, 0.0
      %850 = vst.msk [vmem:[#allocation2 + $0xe78] sm:$0xff] %vm385, 0.0
      %851 = vst.msk [vmem:[#allocation2 + $0xe80] sm:$0xff] %vm385, 0.0
      %852 = vst.msk [vmem:[#allocation2 + $0xe88] sm:$0xff] %vm385, 0.0
      %853 = vst.msk [vmem:[#allocation2 + $0xe90] sm:$0xff] %vm385, 0.0
      %854 = vst.msk [vmem:[#allocation2 + $0xe98] sm:$0x3] %vm394, 0.0
      %855 = vst.msk [vmem:[#allocation2 + $0xea0] sm:$0xff] %vm385, 0.0
      %856 = vst.msk [vmem:[#allocation2 + $0xea8] sm:$0xff] %vm385, 0.0
      %857 = vst.msk [vmem:[#allocation2 + $0xeb0] sm:$0xff] %vm385, 0.0
      %858 = vst.msk [vmem:[#allocation2 + $0xeb8] sm:$0xff] %vm385, 0.0
      %859 = vst.msk [vmem:[#allocation2 + $0xec0] sm:$0xff] %vm385, 0.0
      %860 = vst.msk [vmem:[#allocation2 + $0xec8] sm:$0xff] %vm385, 0.0
      %861 = vst.msk [vmem:[#allocation2 + $0xed0] sm:$0xff] %vm385, 0.0
      %862 = vst.msk [vmem:[#allocation2 + $0xed8] sm:$0xff] %vm385, 0.0
      %863 = vst.msk [vmem:[#allocation2 + $0xee0] sm:$0x3] %vm394, 0.0
      %864 = vst.msk [vmem:[#allocation2 + $0xee8] sm:$0xff] %vm385, 0.0
      %865 = vst.msk [vmem:[#allocation2 + $0xef0] sm:$0xff] %vm385, 0.0
      %866 = vst.msk [vmem:[#allocation2 + $0xef8] sm:$0xff] %vm385, 0.0
      %867 = vst.msk [vmem:[#allocation2 + $0xf00] sm:$0xff] %vm385, 0.0
      %868 = vst.msk [vmem:[#allocation2 + $0xf08] sm:$0xff] %vm385, 0.0
      %869 = vst.msk [vmem:[#allocation2 + $0xf10] sm:$0xff] %vm385, 0.0
      %870 = vst.msk [vmem:[#allocation2 + $0xf18] sm:$0xff] %vm385, 0.0
      %871 = vst.msk [vmem:[#allocation2 + $0xf20] sm:$0xff] %vm385, 0.0
      %872 = vst.msk [vmem:[#allocation2 + $0xf28] sm:$0x3] %vm394, 0.0
      %873 = vst.msk [vmem:[#allocation2 + $0xf30] sm:$0xff] %vm385, 0.0
      %874 = vst.msk [vmem:[#allocation2 + $0xf38] sm:$0xff] %vm385, 0.0
      %875 = vst.msk [vmem:[#allocation2 + $0xf40] sm:$0xff] %vm385, 0.0
      %876 = vst.msk [vmem:[#allocation2 + $0xf48] sm:$0xff] %vm385, 0.0
      %877 = vst.msk [vmem:[#allocation2 + $0xf50] sm:$0xff] %vm385, 0.0
      %878 = vst.msk [vmem:[#allocation2 + $0xf58] sm:$0xff] %vm385, 0.0
      %879 = vst.msk [vmem:[#allocation2 + $0xf60] sm:$0xff] %vm385, 0.0
      %880 = vst.msk [vmem:[#allocation2 + $0xf68] sm:$0xff] %vm385, 0.0
      %881 = vst.msk [vmem:[#allocation2 + $0xf70] sm:$0x3] %vm394, 0.0
      %882 = vst.msk [vmem:[#allocation2 + $0xf78] sm:$0xff] %vm385, 0.0
      %883 = vst.msk [vmem:[#allocation2 + $0xf80] sm:$0xff] %vm385, 0.0
      %884 = vst.msk [vmem:[#allocation2 + $0xf88] sm:$0xff] %vm385, 0.0
      %885 = vst.msk [vmem:[#allocation2 + $0xf90] sm:$0xff] %vm385, 0.0
      %886 = vst.msk [vmem:[#allocation2 + $0xf98] sm:$0xff] %vm385, 0.0
      %887 = vst.msk [vmem:[#allocation2 + $0xfa0] sm:$0xff] %vm385, 0.0
      %888 = vst.msk [vmem:[#allocation2 + $0xfa8] sm:$0xff] %vm385, 0.0
      %889 = vst.msk [vmem:[#allocation2 + $0xfb0] sm:$0xff] %vm385, 0.0
      %890 = vst.msk [vmem:[#allocation2 + $0xfb8] sm:$0x3] %vm394, 0.0
      %891 = vst.msk [vmem:[#allocation2 + $0xfc0] sm:$0xff] %vm385, 0.0
      %892 = vst.msk [vmem:[#allocation2 + $0xfc8] sm:$0xff] %vm385, 0.0
      %893 = vst.msk [vmem:[#allocation2 + $0xfd0] sm:$0xff] %vm385, 0.0
      %894 = vst.msk [vmem:[#allocation2 + $0xfd8] sm:$0xff] %vm385, 0.0
      %895 = vst.msk [vmem:[#allocation2 + $0xfe0] sm:$0xff] %vm385, 0.0
      %896 = vst.msk [vmem:[#allocation2 + $0xfe8] sm:$0xff] %vm385, 0.0
      %897 = vst.msk [vmem:[#allocation2 + $0xff0] sm:$0xff] %vm385, 0.0
      %898 = vst.msk [vmem:[#allocation2 + $0xff8] sm:$0xff] %vm385, 0.0
      %899 = vst.msk [vmem:[#allocation2 + $0x1000] sm:$0x3] %vm394, 0.0
      %900 = vst.msk [vmem:[#allocation2 + $0x1008] sm:$0xff] %vm385, 0.0
      %901 = vst.msk [vmem:[#allocation2 + $0x1010] sm:$0xff] %vm385, 0.0
      %902 = vst.msk [vmem:[#allocation2 + $0x1018] sm:$0xff] %vm385, 0.0
      %903 = vst.msk [vmem:[#allocation2 + $0x1020] sm:$0xff] %vm385, 0.0
      %904 = vst.msk [vmem:[#allocation2 + $0x1028] sm:$0xff] %vm385, 0.0
      %905 = vst.msk [vmem:[#allocation2 + $0x1030] sm:$0xff] %vm385, 0.0
      %906 = vst.msk [vmem:[#allocation2 + $0x1038] sm:$0xff] %vm385, 0.0
      %907 = vst.msk [vmem:[#allocation2 + $0x1040] sm:$0xff] %vm385, 0.0
      %908 = vst.msk [vmem:[#allocation2 + $0x1048] sm:$0x3] %vm394, 0.0
      %909 = vst.msk [vmem:[#allocation2 + $0x1050] sm:$0xff] %vm385, 0.0
      %910 = vst.msk [vmem:[#allocation2 + $0x1058] sm:$0xff] %vm385, 0.0
      %911 = vst.msk [vmem:[#allocation2 + $0x1060] sm:$0xff] %vm385, 0.0
      %912 = vst.msk [vmem:[#allocation2 + $0x1068] sm:$0xff] %vm385, 0.0
      %913 = vst.msk [vmem:[#allocation2 + $0x1070] sm:$0xff] %vm385, 0.0
      %914 = vst.msk [vmem:[#allocation2 + $0x1078] sm:$0xff] %vm385, 0.0
      %915 = vst.msk [vmem:[#allocation2 + $0x1080] sm:$0xff] %vm385, 0.0
      %916 = vst.msk [vmem:[#allocation2 + $0x1088] sm:$0xff] %vm385, 0.0
      %917 = vst.msk [vmem:[#allocation2 + $0x1090] sm:$0x3] %vm394, 0.0
      %918 = vst.msk [vmem:[#allocation2 + $0x1098] sm:$0xff] %vm385, 0.0
      %919 = vst.msk [vmem:[#allocation2 + $0x10a0] sm:$0xff] %vm385, 0.0
      %920 = vst.msk [vmem:[#allocation2 + $0x10a8] sm:$0xff] %vm385, 0.0
      %921 = vst.msk [vmem:[#allocation2 + $0x10b0] sm:$0xff] %vm385, 0.0
      %922 = vst.msk [vmem:[#allocation2 + $0x10b8] sm:$0xff] %vm385, 0.0
      %923 = vst.msk [vmem:[#allocation2 + $0x10c0] sm:$0xff] %vm385, 0.0
      %924 = vst.msk [vmem:[#allocation2 + $0x10c8] sm:$0xff] %vm385, 0.0
      %925 = vst.msk [vmem:[#allocation2 + $0x10d0] sm:$0xff] %vm385, 0.0
      %926 = vst.msk [vmem:[#allocation2 + $0x10d8] sm:$0x3] %vm394, 0.0
      %927 = vst.msk [vmem:[#allocation2 + $0x10e0] sm:$0xff] %vm385, 0.0
      %928 = vst.msk [vmem:[#allocation2 + $0x10e8] sm:$0xff] %vm385, 0.0
      %929 = vst.msk [vmem:[#allocation2 + $0x10f0] sm:$0xff] %vm385, 0.0
      %930 = vst.msk [vmem:[#allocation2 + $0x10f8] sm:$0xff] %vm385, 0.0
      %931 = vst.msk [vmem:[#allocation2 + $0x1100] sm:$0xff] %vm385, 0.0
      %932 = vst.msk [vmem:[#allocation2 + $0x1108] sm:$0xff] %vm385, 0.0
      %933 = vst.msk [vmem:[#allocation2 + $0x1110] sm:$0xff] %vm385, 0.0
      %934 = vst.msk [vmem:[#allocation2 + $0x1118] sm:$0xff] %vm385, 0.0
      %935 = vst.msk [vmem:[#allocation2 + $0x1120] sm:$0x3] %vm394, 0.0
      %936 = vst.msk [vmem:[#allocation2 + $0x1128] sm:$0xff] %vm385, 0.0
      %937 = vst.msk [vmem:[#allocation2 + $0x1130] sm:$0xff] %vm385, 0.0
      %938 = vst.msk [vmem:[#allocation2 + $0x1138] sm:$0xff] %vm385, 0.0
      %939 = vst.msk [vmem:[#allocation2 + $0x1140] sm:$0xff] %vm385, 0.0
      %940 = vst.msk [vmem:[#allocation2 + $0x1148] sm:$0xff] %vm385, 0.0
      %941 = vst.msk [vmem:[#allocation2 + $0x1150] sm:$0xff] %vm385, 0.0
      %942 = vst.msk [vmem:[#allocation2 + $0x1158] sm:$0xff] %vm385, 0.0
      %943 = vst.msk [vmem:[#allocation2 + $0x1160] sm:$0xff] %vm385, 0.0
      %944 = vst.msk [vmem:[#allocation2 + $0x1168] sm:$0x3] %vm394, 0.0
      %945 = vst.msk [vmem:[#allocation2 + $0x1170] sm:$0xff] %vm385, 0.0
      %946 = vst.msk [vmem:[#allocation2 + $0x1178] sm:$0xff] %vm385, 0.0
      %947 = vst.msk [vmem:[#allocation2 + $0x1180] sm:$0xff] %vm385, 0.0
      %948 = vst.msk [vmem:[#allocation2 + $0x1188] sm:$0xff] %vm385, 0.0
      %949 = vst.msk [vmem:[#allocation2 + $0x1190] sm:$0xff] %vm385, 0.0
      %950 = vst.msk [vmem:[#allocation2 + $0x1198] sm:$0xff] %vm385, 0.0
      %951 = vst.msk [vmem:[#allocation2 + $0x11a0] sm:$0xff] %vm385, 0.0
      %952 = vst.msk [vmem:[#allocation2 + $0x11a8] sm:$0xff] %vm385, 0.0
      %953 = vst.msk [vmem:[#allocation2 + $0x11b0] sm:$0x3] %vm394, 0.0
      %954 = vst.msk [vmem:[#allocation2 + $0x11b8] sm:$0xff] %vm385, 0.0
      %955 = vst.msk [vmem:[#allocation2 + $0x11c0] sm:$0xff] %vm385, 0.0
      %956 = vst.msk [vmem:[#allocation2 + $0x11c8] sm:$0xff] %vm385, 0.0
      %957 = vst.msk [vmem:[#allocation2 + $0x11d0] sm:$0xff] %vm385, 0.0
      %958 = vst.msk [vmem:[#allocation2 + $0x11d8] sm:$0xff] %vm385, 0.0
      %959 = vst.msk [vmem:[#allocation2 + $0x11e0] sm:$0xff] %vm385, 0.0
      %960 = vst.msk [vmem:[#allocation2 + $0x11e8] sm:$0xff] %vm385, 0.0
      %961 = vst.msk [vmem:[#allocation2 + $0x11f0] sm:$0xff] %vm385, 0.0
      %962 = vst.msk [vmem:[#allocation2 + $0x11f8] sm:$0x3] %vm394, 0.0
      %963 = vst.msk [vmem:[#allocation2 + $0x1200] sm:$0xff] %vm385, 0.0
      %964 = vst.msk [vmem:[#allocation2 + $0x1208] sm:$0xff] %vm385, 0.0
      %965 = vst.msk [vmem:[#allocation2 + $0x1210] sm:$0xff] %vm385, 0.0
      %966 = vst.msk [vmem:[#allocation2 + $0x1218] sm:$0xff] %vm385, 0.0
      %967 = vst.msk [vmem:[#allocation2 + $0x1220] sm:$0xff] %vm385, 0.0
      %968 = vst.msk [vmem:[#allocation2 + $0x1228] sm:$0xff] %vm385, 0.0
      %969 = vst.msk [vmem:[#allocation2 + $0x1230] sm:$0xff] %vm385, 0.0
      %970 = vst.msk [vmem:[#allocation2 + $0x1238] sm:$0xff] %vm385, 0.0
      %971 = vst.msk [vmem:[#allocation2 + $0x1240] sm:$0x3] %vm394, 0.0
      %972 = vst.msk [vmem:[#allocation2 + $0x1248] sm:$0xff] %vm385, 0.0
      %973 = vst.msk [vmem:[#allocation2 + $0x1250] sm:$0xff] %vm385, 0.0
      %974 = vst.msk [vmem:[#allocation2 + $0x1258] sm:$0xff] %vm385, 0.0
      %975 = vst.msk [vmem:[#allocation2 + $0x1260] sm:$0xff] %vm385, 0.0
      %976 = vst.msk [vmem:[#allocation2 + $0x1268] sm:$0xff] %vm385, 0.0
      %977 = vst.msk [vmem:[#allocation2 + $0x1270] sm:$0xff] %vm385, 0.0
      %978 = vst.msk [vmem:[#allocation2 + $0x1278] sm:$0xff] %vm385, 0.0
      %979 = vst.msk [vmem:[#allocation2 + $0x1280] sm:$0xff] %vm385, 0.0
      %980 = vst.msk [vmem:[#allocation2 + $0x1288] sm:$0x3] %vm394, 0.0
      %vm981 = vcmask 261120
      %982 = vst.msk [vmem:[#allocation3] sm:$0xff] %vm981, 0.0
      %983 = vst.msk [vmem:[#allocation3 + $0x8] sm:$0xff] %vm981, 0.0
      %984 = vst.msk [vmem:[#allocation3 + $0x10] sm:$0xff] %vm981, 0.0
      %985 = vst.msk [vmem:[#allocation3 + $0x18] sm:$0xff] %vm981, 0.0
      %vm986 = vcmask 254976
      %987 = vst.msk [vmem:[#allocation3 + $0x20] sm:$0x3] %vm986, 0.0
      %988 = vst.msk [vmem:[#allocation3 + $0x28] sm:$0xff] %vm981, 0.0
      %989 = vst.msk [vmem:[#allocation3 + $0x30] sm:$0xff] %vm981, 0.0
      %990 = vst.msk [vmem:[#allocation3 + $0x38] sm:$0xff] %vm981, 0.0
      %991 = vst.msk [vmem:[#allocation3 + $0x40] sm:$0xff] %vm981, 0.0
      %992 = vst.msk [vmem:[#allocation3 + $0x48] sm:$0x3] %vm986, 0.0
      %993 = vst.msk [vmem:[#allocation3 + $0x50] sm:$0xff] %vm981, 0.0
      %994 = vst.msk [vmem:[#allocation3 + $0x58] sm:$0xff] %vm981, 0.0
      %995 = vst.msk [vmem:[#allocation3 + $0x60] sm:$0xff] %vm981, 0.0
      %996 = vst.msk [vmem:[#allocation3 + $0x68] sm:$0xff] %vm981, 0.0
      %997 = vst.msk [vmem:[#allocation3 + $0x70] sm:$0x3] %vm986, 0.0
      %998 = vst.msk [vmem:[#allocation3 + $0x78] sm:$0xff] %vm981, 0.0
      %999 = vst.msk [vmem:[#allocation3 + $0x80] sm:$0xff] %vm981, 0.0
      %1000 = vst.msk [vmem:[#allocation3 + $0x88] sm:$0xff] %vm981, 0.0
      %1001 = vst.msk [vmem:[#allocation3 + $0x90] sm:$0xff] %vm981, 0.0
      %1002 = vst.msk [vmem:[#allocation3 + $0x98] sm:$0x3] %vm986, 0.0
      %1003 = vst.msk [vmem:[#allocation3 + $0xa0] sm:$0xff] %vm981, 0.0
      %1004 = vst.msk [vmem:[#allocation3 + $0xa8] sm:$0xff] %vm981, 0.0
      %1005 = vst.msk [vmem:[#allocation3 + $0xb0] sm:$0xff] %vm981, 0.0
      %1006 = vst.msk [vmem:[#allocation3 + $0xb8] sm:$0xff] %vm981, 0.0
      %1007 = vst.msk [vmem:[#allocation3 + $0xc0] sm:$0x3] %vm986, 0.0
      %1008 = vst.msk [vmem:[#allocation3 + $0xc8] sm:$0xff] %vm981, 0.0
      %1009 = vst.msk [vmem:[#allocation3 + $0xd0] sm:$0xff] %vm981, 0.0
      %1010 = vst.msk [vmem:[#allocation3 + $0xd8] sm:$0xff] %vm981, 0.0
      %1011 = vst.msk [vmem:[#allocation3 + $0xe0] sm:$0xff] %vm981, 0.0
      %1012 = vst.msk [vmem:[#allocation3 + $0xe8] sm:$0x3] %vm986, 0.0
      %1013 = vst.msk [vmem:[#allocation3 + $0xf0] sm:$0xff] %vm981, 0.0
      %1014 = vst.msk [vmem:[#allocation3 + $0xf8] sm:$0xff] %vm981, 0.0
      %1015 = vst.msk [vmem:[#allocation3 + $0x100] sm:$0xff] %vm981, 0.0
      %1016 = vst.msk [vmem:[#allocation3 + $0x108] sm:$0xff] %vm981, 0.0
      %1017 = vst.msk [vmem:[#allocation3 + $0x110] sm:$0x3] %vm986, 0.0
      %1018 = vst.msk [vmem:[#allocation3 + $0x118] sm:$0xff] %vm981, 0.0
      %1019 = vst.msk [vmem:[#allocation3 + $0x120] sm:$0xff] %vm981, 0.0
      %1020 = vst.msk [vmem:[#allocation3 + $0x128] sm:$0xff] %vm981, 0.0
      %1021 = vst.msk [vmem:[#allocation3 + $0x130] sm:$0xff] %vm981, 0.0
      %1022 = vst.msk [vmem:[#allocation3 + $0x138] sm:$0x3] %vm986, 0.0
      %1023 = vst.msk [vmem:[#allocation3 + $0x140] sm:$0xff] %vm981, 0.0
      %1024 = vst.msk [vmem:[#allocation3 + $0x148] sm:$0xff] %vm981, 0.0
      %1025 = vst.msk [vmem:[#allocation3 + $0x150] sm:$0xff] %vm981, 0.0
      %1026 = vst.msk [vmem:[#allocation3 + $0x158] sm:$0xff] %vm981, 0.0
      %1027 = vst.msk [vmem:[#allocation3 + $0x160] sm:$0x3] %vm986, 0.0
      %1028 = vst.msk [vmem:[#allocation3 + $0x168] sm:$0xff] %vm981, 0.0
      %1029 = vst.msk [vmem:[#allocation3 + $0x170] sm:$0xff] %vm981, 0.0
      %1030 = vst.msk [vmem:[#allocation3 + $0x178] sm:$0xff] %vm981, 0.0
      %1031 = vst.msk [vmem:[#allocation3 + $0x180] sm:$0xff] %vm981, 0.0
      %1032 = vst.msk [vmem:[#allocation3 + $0x188] sm:$0x3] %vm986, 0.0
      %1033 = vst.msk [vmem:[#allocation3 + $0x190] sm:$0xff] %vm981, 0.0
      %1034 = vst.msk [vmem:[#allocation3 + $0x198] sm:$0xff] %vm981, 0.0
      %1035 = vst.msk [vmem:[#allocation3 + $0x1a0] sm:$0xff] %vm981, 0.0
      %1036 = vst.msk [vmem:[#allocation3 + $0x1a8] sm:$0xff] %vm981, 0.0
      %1037 = vst.msk [vmem:[#allocation3 + $0x1b0] sm:$0x3] %vm986, 0.0
      %1038 = vst.msk [vmem:[#allocation3 + $0x1b8] sm:$0xff] %vm981, 0.0
      %1039 = vst.msk [vmem:[#allocation3 + $0x1c0] sm:$0xff] %vm981, 0.0
      %1040 = vst.msk [vmem:[#allocation3 + $0x1c8] sm:$0xff] %vm981, 0.0
      %1041 = vst.msk [vmem:[#allocation3 + $0x1d0] sm:$0xff] %vm981, 0.0
      %1042 = vst.msk [vmem:[#allocation3 + $0x1d8] sm:$0x3] %vm986, 0.0
      %1043 = vst.msk [vmem:[#allocation3 + $0x1e0] sm:$0xff] %vm981, 0.0
      %1044 = vst.msk [vmem:[#allocation3 + $0x1e8] sm:$0xff] %vm981, 0.0
      %1045 = vst.msk [vmem:[#allocation3 + $0x1f0] sm:$0xff] %vm981, 0.0
      %1046 = vst.msk [vmem:[#allocation3 + $0x1f8] sm:$0xff] %vm981, 0.0
      %1047 = vst.msk [vmem:[#allocation3 + $0x200] sm:$0x3] %vm986, 0.0
      %1048 = vst.msk [vmem:[#allocation3 + $0x208] sm:$0xff] %vm981, 0.0
      %1049 = vst.msk [vmem:[#allocation3 + $0x210] sm:$0xff] %vm981, 0.0
      %1050 = vst.msk [vmem:[#allocation3 + $0x218] sm:$0xff] %vm981, 0.0
      %1051 = vst.msk [vmem:[#allocation3 + $0x220] sm:$0xff] %vm981, 0.0
      %1052 = vst.msk [vmem:[#allocation3 + $0x228] sm:$0x3] %vm986, 0.0
      %1053 = vst.msk [vmem:[#allocation3 + $0x230] sm:$0xff] %vm981, 0.0
      %1054 = vst.msk [vmem:[#allocation3 + $0x238] sm:$0xff] %vm981, 0.0
      %1055 = vst.msk [vmem:[#allocation3 + $0x240] sm:$0xff] %vm981, 0.0
      %1056 = vst.msk [vmem:[#allocation3 + $0x248] sm:$0xff] %vm981, 0.0
      %1057 = vst.msk [vmem:[#allocation3 + $0x250] sm:$0x3] %vm986, 0.0
      %1058 = vst.msk [vmem:[#allocation3 + $0x258] sm:$0xff] %vm981, 0.0
      %1059 = vst.msk [vmem:[#allocation3 + $0x260] sm:$0xff] %vm981, 0.0
      %1060 = vst.msk [vmem:[#allocation3 + $0x268] sm:$0xff] %vm981, 0.0
      %1061 = vst.msk [vmem:[#allocation3 + $0x270] sm:$0xff] %vm981, 0.0
      %1062 = vst.msk [vmem:[#allocation3 + $0x278] sm:$0x3] %vm986, 0.0
      %1063 = vst.msk [vmem:[#allocation3 + $0x280] sm:$0xff] %vm981, 0.0
      %1064 = vst.msk [vmem:[#allocation3 + $0x288] sm:$0xff] %vm981, 0.0
      %1065 = vst.msk [vmem:[#allocation3 + $0x290] sm:$0xff] %vm981, 0.0
      %1066 = vst.msk [vmem:[#allocation3 + $0x298] sm:$0xff] %vm981, 0.0
      %1067 = vst.msk [vmem:[#allocation3 + $0x2a0] sm:$0x3] %vm986, 0.0
      %1068 = vst.msk [vmem:[#allocation3 + $0x2a8] sm:$0xff] %vm981, 0.0
      %1069 = vst.msk [vmem:[#allocation3 + $0x2b0] sm:$0xff] %vm981, 0.0
      %1070 = vst.msk [vmem:[#allocation3 + $0x2b8] sm:$0xff] %vm981, 0.0
      %1071 = vst.msk [vmem:[#allocation3 + $0x2c0] sm:$0xff] %vm981, 0.0
      %1072 = vst.msk [vmem:[#allocation3 + $0x2c8] sm:$0x3] %vm986, 0.0
      %1073 = vst.msk [vmem:[#allocation3 + $0x2d0] sm:$0xff] %vm981, 0.0
      %1074 = vst.msk [vmem:[#allocation3 + $0x2d8] sm:$0xff] %vm981, 0.0
      %1075 = vst.msk [vmem:[#allocation3 + $0x2e0] sm:$0xff] %vm981, 0.0
      %1076 = vst.msk [vmem:[#allocation3 + $0x2e8] sm:$0xff] %vm981, 0.0
      %1077 = vst.msk [vmem:[#allocation3 + $0x2f0] sm:$0x3] %vm986, 0.0
      %1078 = vst.msk [vmem:[#allocation3 + $0x2f8] sm:$0xff] %vm981, 0.0
      %1079 = vst.msk [vmem:[#allocation3 + $0x300] sm:$0xff] %vm981, 0.0
      %1080 = vst.msk [vmem:[#allocation3 + $0x308] sm:$0xff] %vm981, 0.0
      %1081 = vst.msk [vmem:[#allocation3 + $0x310] sm:$0xff] %vm981, 0.0
      %1082 = vst.msk [vmem:[#allocation3 + $0x318] sm:$0x3] %vm986, 0.0
      %1083 = vst.msk [vmem:[#allocation3 + $0x320] sm:$0xff] %vm981, 0.0
      %1084 = vst.msk [vmem:[#allocation3 + $0x328] sm:$0xff] %vm981, 0.0
      %1085 = vst.msk [vmem:[#allocation3 + $0x330] sm:$0xff] %vm981, 0.0
      %1086 = vst.msk [vmem:[#allocation3 + $0x338] sm:$0xff] %vm981, 0.0
      %1087 = vst.msk [vmem:[#allocation3 + $0x340] sm:$0x3] %vm986, 0.0
      %1088 = vst.msk [vmem:[#allocation3 + $0x348] sm:$0xff] %vm981, 0.0
      %1089 = vst.msk [vmem:[#allocation3 + $0x350] sm:$0xff] %vm981, 0.0
      %1090 = vst.msk [vmem:[#allocation3 + $0x358] sm:$0xff] %vm981, 0.0
      %1091 = vst.msk [vmem:[#allocation3 + $0x360] sm:$0xff] %vm981, 0.0
      %1092 = vst.msk [vmem:[#allocation3 + $0x368] sm:$0x3] %vm986, 0.0
      %1093 = vst.msk [vmem:[#allocation3 + $0x370] sm:$0xff] %vm981, 0.0
      %1094 = vst.msk [vmem:[#allocation3 + $0x378] sm:$0xff] %vm981, 0.0
      %1095 = vst.msk [vmem:[#allocation3 + $0x380] sm:$0xff] %vm981, 0.0
      %1096 = vst.msk [vmem:[#allocation3 + $0x388] sm:$0xff] %vm981, 0.0
      %1097 = vst.msk [vmem:[#allocation3 + $0x390] sm:$0x3] %vm986, 0.0
      %1098 = vst.msk [vmem:[#allocation3 + $0x398] sm:$0xff] %vm981, 0.0
      %1099 = vst.msk [vmem:[#allocation3 + $0x3a0] sm:$0xff] %vm981, 0.0
      %1100 = vst.msk [vmem:[#allocation3 + $0x3a8] sm:$0xff] %vm981, 0.0
      %1101 = vst.msk [vmem:[#allocation3 + $0x3b0] sm:$0xff] %vm981, 0.0
      %1102 = vst.msk [vmem:[#allocation3 + $0x3b8] sm:$0x3] %vm986, 0.0
      %1103 = vst.msk [vmem:[#allocation3 + $0x3c0] sm:$0xff] %vm981, 0.0
      %1104 = vst.msk [vmem:[#allocation3 + $0x3c8] sm:$0xff] %vm981, 0.0
      %1105 = vst.msk [vmem:[#allocation3 + $0x3d0] sm:$0xff] %vm981, 0.0
      %1106 = vst.msk [vmem:[#allocation3 + $0x3d8] sm:$0xff] %vm981, 0.0
      %1107 = vst.msk [vmem:[#allocation3 + $0x3e0] sm:$0x3] %vm986, 0.0
      %1108 = vst.msk [vmem:[#allocation3 + $0x3e8] sm:$0xff] %vm981, 0.0
      %1109 = vst.msk [vmem:[#allocation3 + $0x3f0] sm:$0xff] %vm981, 0.0
      %1110 = vst.msk [vmem:[#allocation3 + $0x3f8] sm:$0xff] %vm981, 0.0
      %1111 = vst.msk [vmem:[#allocation3 + $0x400] sm:$0xff] %vm981, 0.0
      %1112 = vst.msk [vmem:[#allocation3 + $0x408] sm:$0x3] %vm986, 0.0
      %1113 = vst.msk [vmem:[#allocation3 + $0x410] sm:$0xff] %vm981, 0.0
      %1114 = vst.msk [vmem:[#allocation3 + $0x418] sm:$0xff] %vm981, 0.0
      %1115 = vst.msk [vmem:[#allocation3 + $0x420] sm:$0xff] %vm981, 0.0
      %1116 = vst.msk [vmem:[#allocation3 + $0x428] sm:$0xff] %vm981, 0.0
      %1117 = vst.msk [vmem:[#allocation3 + $0x430] sm:$0x3] %vm986, 0.0
      %1118 = vst.msk [vmem:[#allocation3 + $0x438] sm:$0xff] %vm981, 0.0
      %1119 = vst.msk [vmem:[#allocation3 + $0x440] sm:$0xff] %vm981, 0.0
      %1120 = vst.msk [vmem:[#allocation3 + $0x448] sm:$0xff] %vm981, 0.0
      %1121 = vst.msk [vmem:[#allocation3 + $0x450] sm:$0xff] %vm981, 0.0
      %1122 = vst.msk [vmem:[#allocation3 + $0x458] sm:$0x3] %vm986, 0.0
      %1123 = vst.msk [vmem:[#allocation3 + $0x460] sm:$0xff] %vm981, 0.0
      %1124 = vst.msk [vmem:[#allocation3 + $0x468] sm:$0xff] %vm981, 0.0
      %1125 = vst.msk [vmem:[#allocation3 + $0x470] sm:$0xff] %vm981, 0.0
      %1126 = vst.msk [vmem:[#allocation3 + $0x478] sm:$0xff] %vm981, 0.0
      %1127 = vst.msk [vmem:[#allocation3 + $0x480] sm:$0x3] %vm986, 0.0
      %1128 = vst.msk [vmem:[#allocation3 + $0x488] sm:$0xff] %vm981, 0.0
      %1129 = vst.msk [vmem:[#allocation3 + $0x490] sm:$0xff] %vm981, 0.0
      %1130 = vst.msk [vmem:[#allocation3 + $0x498] sm:$0xff] %vm981, 0.0
      %1131 = vst.msk [vmem:[#allocation3 + $0x4a0] sm:$0xff] %vm981, 0.0
      %1132 = vst.msk [vmem:[#allocation3 + $0x4a8] sm:$0x3] %vm986, 0.0
      %1133 = vst.msk [vmem:[#allocation3 + $0x4b0] sm:$0xff] %vm981, 0.0
      %1134 = vst.msk [vmem:[#allocation3 + $0x4b8] sm:$0xff] %vm981, 0.0
      %1135 = vst.msk [vmem:[#allocation3 + $0x4c0] sm:$0xff] %vm981, 0.0
      %1136 = vst.msk [vmem:[#allocation3 + $0x4c8] sm:$0xff] %vm981, 0.0
      %1137 = vst.msk [vmem:[#allocation3 + $0x4d0] sm:$0x3] %vm986, 0.0
      %1138 = vst.msk [vmem:[#allocation3 + $0x4d8] sm:$0xff] %vm981, 0.0
      %1139 = vst.msk [vmem:[#allocation3 + $0x4e0] sm:$0xff] %vm981, 0.0
      %1140 = vst.msk [vmem:[#allocation3 + $0x4e8] sm:$0xff] %vm981, 0.0
      %1141 = vst.msk [vmem:[#allocation3 + $0x4f0] sm:$0xff] %vm981, 0.0
      %1142 = vst.msk [vmem:[#allocation3 + $0x4f8] sm:$0x3] %vm986, 0.0
      %1143 = vst.msk [vmem:[#allocation3 + $0x500] sm:$0xff] %vm981, 0.0
      %1144 = vst.msk [vmem:[#allocation3 + $0x508] sm:$0xff] %vm981, 0.0
      %1145 = vst.msk [vmem:[#allocation3 + $0x510] sm:$0xff] %vm981, 0.0
      %1146 = vst.msk [vmem:[#allocation3 + $0x518] sm:$0xff] %vm981, 0.0
      %1147 = vst.msk [vmem:[#allocation3 + $0x520] sm:$0x3] %vm986, 0.0
      %1148 = vst.msk [vmem:[#allocation3 + $0x528] sm:$0xff] %vm981, 0.0
      %1149 = vst.msk [vmem:[#allocation3 + $0x530] sm:$0xff] %vm981, 0.0
      %1150 = vst.msk [vmem:[#allocation3 + $0x538] sm:$0xff] %vm981, 0.0
      %1151 = vst.msk [vmem:[#allocation3 + $0x540] sm:$0xff] %vm981, 0.0
      %1152 = vst.msk [vmem:[#allocation3 + $0x548] sm:$0x3] %vm986, 0.0
      %1153 = vst.msk [vmem:[#allocation4] sm:$0xff] %vm981, 0.0
      %1154 = vst.msk [vmem:[#allocation4 + $0x8] sm:$0xff] %vm981, 0.0
      %1155 = vst.msk [vmem:[#allocation4 + $0x10] sm:$0x3] %vm986, 0.0
      %1156 = vst.msk [vmem:[#allocation4 + $0x18] sm:$0xff] %vm981, 0.0
      %1157 = vst.msk [vmem:[#allocation4 + $0x20] sm:$0xff] %vm981, 0.0
      %1158 = vst.msk [vmem:[#allocation4 + $0x28] sm:$0x3] %vm986, 0.0
      %1159 = vst.msk [vmem:[#allocation4 + $0x30] sm:$0xff] %vm981, 0.0
      %1160 = vst.msk [vmem:[#allocation4 + $0x38] sm:$0xff] %vm981, 0.0
      %1161 = vst.msk [vmem:[#allocation4 + $0x40] sm:$0x3] %vm986, 0.0
      %1162 = vst.msk [vmem:[#allocation4 + $0x48] sm:$0xff] %vm981, 0.0
      %1163 = vst.msk [vmem:[#allocation4 + $0x50] sm:$0xff] %vm981, 0.0
      %1164 = vst.msk [vmem:[#allocation4 + $0x58] sm:$0x3] %vm986, 0.0
      %1165 = vst.msk [vmem:[#allocation4 + $0x60] sm:$0xff] %vm981, 0.0
      %1166 = vst.msk [vmem:[#allocation4 + $0x68] sm:$0xff] %vm981, 0.0
      %1167 = vst.msk [vmem:[#allocation4 + $0x70] sm:$0x3] %vm986, 0.0
      %1168 = vst.msk [vmem:[#allocation4 + $0x78] sm:$0xff] %vm981, 0.0
      %1169 = vst.msk [vmem:[#allocation4 + $0x80] sm:$0xff] %vm981, 0.0
      %1170 = vst.msk [vmem:[#allocation4 + $0x88] sm:$0x3] %vm986, 0.0
      %1171 = vst.msk [vmem:[#allocation4 + $0x90] sm:$0xff] %vm981, 0.0
      %1172 = vst.msk [vmem:[#allocation4 + $0x98] sm:$0xff] %vm981, 0.0
      %1173 = vst.msk [vmem:[#allocation4 + $0xa0] sm:$0x3] %vm986, 0.0
      %1174 = vst.msk [vmem:[#allocation4 + $0xa8] sm:$0xff] %vm981, 0.0
      %1175 = vst.msk [vmem:[#allocation4 + $0xb0] sm:$0xff] %vm981, 0.0
      %1176 = vst.msk [vmem:[#allocation4 + $0xb8] sm:$0x3] %vm986, 0.0
      %1177 = vst.msk [vmem:[#allocation4 + $0xc0] sm:$0xff] %vm981, 0.0
      %1178 = vst.msk [vmem:[#allocation4 + $0xc8] sm:$0xff] %vm981, 0.0
      %1179 = vst.msk [vmem:[#allocation4 + $0xd0] sm:$0x3] %vm986, 0.0
      %1180 = vst.msk [vmem:[#allocation4 + $0xd8] sm:$0xff] %vm981, 0.0
      %1181 = vst.msk [vmem:[#allocation4 + $0xe0] sm:$0xff] %vm981, 0.0
      %1182 = vst.msk [vmem:[#allocation4 + $0xe8] sm:$0x3] %vm986, 0.0
      %1183 = vst.msk [vmem:[#allocation4 + $0xf0] sm:$0xff] %vm981, 0.0
      %1184 = vst.msk [vmem:[#allocation4 + $0xf8] sm:$0xff] %vm981, 0.0
      %1185 = vst.msk [vmem:[#allocation4 + $0x100] sm:$0x3] %vm986, 0.0
      %1186 = vst.msk [vmem:[#allocation4 + $0x108] sm:$0xff] %vm981, 0.0
      %1187 = vst.msk [vmem:[#allocation4 + $0x110] sm:$0xff] %vm981, 0.0
      %1188 = vst.msk [vmem:[#allocation4 + $0x118] sm:$0x3] %vm986, 0.0
      %1189 = vst.msk [vmem:[#allocation4 + $0x120] sm:$0xff] %vm981, 0.0
      %1190 = vst.msk [vmem:[#allocation4 + $0x128] sm:$0xff] %vm981, 0.0
      %1191 = vst.msk [vmem:[#allocation4 + $0x130] sm:$0x3] %vm986, 0.0
      %1192 = vst.msk [vmem:[#allocation4 + $0x138] sm:$0xff] %vm981, 0.0
      %1193 = vst.msk [vmem:[#allocation4 + $0x140] sm:$0xff] %vm981, 0.0
      %1194 = vst.msk [vmem:[#allocation4 + $0x148] sm:$0x3] %vm986, 0.0
      %1195 = vst.msk [vmem:[#allocation4 + $0x150] sm:$0xff] %vm981, 0.0
      %1196 = vst.msk [vmem:[#allocation4 + $0x158] sm:$0xff] %vm981, 0.0
      %1197 = vst.msk [vmem:[#allocation4 + $0x160] sm:$0x3] %vm986, 0.0
      %1198 = vst.msk [vmem:[#allocation4 + $0x168] sm:$0xff] %vm981, 0.0
      %1199 = vst.msk [vmem:[#allocation4 + $0x170] sm:$0xff] %vm981, 0.0
      %1200 = vst.msk [vmem:[#allocation4 + $0x178] sm:$0x3] %vm986, 0.0
      %1201 = vst.msk [vmem:[#allocation4 + $0x180] sm:$0xff] %vm981, 0.0
      %1202 = vst.msk [vmem:[#allocation4 + $0x188] sm:$0xff] %vm981, 0.0
      %1203 = vst.msk [vmem:[#allocation4 + $0x190] sm:$0x3] %vm986, 0.0
      %1204 = vst.msk [vmem:[#allocation4 + $0x198] sm:$0xff] %vm981, 0.0
      %1205 = vst.msk [vmem:[#allocation4 + $0x1a0] sm:$0xff] %vm981, 0.0
      %1206 = vst.msk [vmem:[#allocation4 + $0x1a8] sm:$0x3] %vm986, 0.0
      %1207 = vst.msk [vmem:[#allocation5] sm:$0xff] %vm981, 0.0
      %1208 = vst.msk [vmem:[#allocation5 + $0x8] sm:$0x3] %vm986, 0.0
      %1209 = vst.msk [vmem:[#allocation5 + $0x10] sm:$0xff] %vm981, 0.0
      %1210 = vst.msk [vmem:[#allocation5 + $0x18] sm:$0x3] %vm986, 0.0
      %1211 = vst.msk [vmem:[#allocation5 + $0x20] sm:$0xff] %vm981, 0.0
      %1212 = vst.msk [vmem:[#allocation5 + $0x28] sm:$0x3] %vm986, 0.0
      %1213 = vst.msk [vmem:[#allocation5 + $0x30] sm:$0xff] %vm981, 0.0
      %1214 = vst.msk [vmem:[#allocation5 + $0x38] sm:$0x3] %vm986, 0.0
      %1215 = vst.msk [vmem:[#allocation5 + $0x40] sm:$0xff] %vm981, 0.0
      %1216 = vst.msk [vmem:[#allocation5 + $0x48] sm:$0x3] %vm986, 0.0
      %1217 = vst.msk [vmem:[#allocation5 + $0x50] sm:$0xff] %vm981, 0.0
      %1218 = vst.msk [vmem:[#allocation5 + $0x58] sm:$0x3] %vm986, 0.0
      %1219 = vst.msk [vmem:[#allocation5 + $0x60] sm:$0xff] %vm981, 0.0
      %1220 = vst.msk [vmem:[#allocation5 + $0x68] sm:$0x3] %vm986, 0.0
      %1221 = vst.msk [vmem:[#allocation5 + $0x70] sm:$0xff] %vm981, 0.0
      %1222 = vst.msk [vmem:[#allocation5 + $0x78] sm:$0x3] %vm986, 0.0
      %1223 = vst.msk [vmem:[#allocation5 + $0x80] sm:$0xff] %vm981, 0.0
      %1224 = vst.msk [vmem:[#allocation5 + $0x88] sm:$0x3] %vm986, 0.0
      %1225 = vst.msk [vmem:[#allocation5 + $0x90] sm:$0xff] %vm981, 0.0
      %1226 = vst.msk [vmem:[#allocation5 + $0x98] sm:$0x3] %vm986, 0.0
      %v1227 = vld [vmem:[%s381] sm:$0xff]
      %v1228 = vld [vmem:[%s381 + $0x8] sm:$0xff]
      %v1229 = vld [vmem:[%s381 + $0x10] sm:$0xff]
      %v1230 = vld [vmem:[%s381 + $0x18] sm:$0xff]
      %v1231 = vld [vmem:[%s381 + $0x20] sm:$0xff]
      %v1232 = vld [vmem:[%s381 + $0x28] sm:$0xff]
      %v1233 = vld [vmem:[%s381 + $0x30] sm:$0xff]
      %v1234 = vld [vmem:[%s381 + $0x38] sm:$0xff]
      %v1235 = vld [vmem:[%s381 + $0x40] sm:$0xff]
      %v1236 = vld [vmem:[%s381 + $0x48] sm:$0xff]
      %v1237 = vld [vmem:[%s381 + $0x50] sm:$0xff]
      %v1238 = vld [vmem:[%s381 + $0x58] sm:$0xff]
      %v1239 = vld [vmem:[%s381 + $0x60] sm:$0xff]
      %v1240 = vld [vmem:[%s381 + $0x68] sm:$0xff]
      %v1241 = vld [vmem:[%s381 + $0x70] sm:$0xff]
      %v1242 = vld [vmem:[%s381 + $0x78] sm:$0xff]
      %v1243 = vld [vmem:[%s381 + $0x80] sm:$0xff]
      %v1244 = vld [vmem:[%s381 + $0x88] sm:$0xff]
      %v1245 = vld [vmem:[%s381 + $0x90] sm:$0xff]
      %v1246 = vld [vmem:[%s381 + $0x98] sm:$0xff]
      %v1247 = vld [vmem:[%s381 + $0xa0] sm:$0xff]
      %v1248 = vld [vmem:[%s381 + $0xa8] sm:$0xff]
      %v1249 = vld [vmem:[%s381 + $0xb0] sm:$0xff]
      %v1250 = vld [vmem:[%s381 + $0xb8] sm:$0xff]
      %v1251 = vld [vmem:[%s381 + $0xc0] sm:$0xff]
      %v1252 = vld [vmem:[%s381 + $0xc8] sm:$0xff]
      %v1253 = vld [vmem:[%s381 + $0xd0] sm:$0xff]
      %v1254 = vld [vmem:[%s381 + $0xd8] sm:$0xff]
      %v1255 = vld [vmem:[%s381 + $0xe0] sm:$0xff]
      %v1256 = vld [vmem:[%s381 + $0xe8] sm:$0xff]
      %v1257 = vld [vmem:[%s381 + $0xf0] sm:$0xff]
      %v1258 = vld [vmem:[%s381 + $0xf8] sm:$0xff]
      %v1259 = vld [vmem:[%s381 + $0x100] sm:$0xff]
      %v1260 = vld [vmem:[%s381 + $0x108] sm:$0xff]
      %v1261 = vld [vmem:[%s381 + $0x110] sm:$0xff]
      %v1262 = vld [vmem:[%s381 + $0x118] sm:$0xff]
      %v1263 = vld [vmem:[%s381 + $0x120] sm:$0xff]
      %v1264 = vld [vmem:[%s381 + $0x128] sm:$0xff]
      %v1265 = vld [vmem:[%s381 + $0x130] sm:$0xff]
      %v1266 = vld [vmem:[%s381 + $0x138] sm:$0xff]
      %v1267 = vld [vmem:[%s381 + $0x140] sm:$0xff]
      %v1268 = vld [vmem:[%s381 + $0x148] sm:$0xff]
      %v1269 = vld [vmem:[%s381 + $0x150] sm:$0xff]
      %v1270 = vld [vmem:[%s381 + $0x158] sm:$0xff]
      %v1271 = vld [vmem:[%s381 + $0x160] sm:$0xff]
      %v1272 = vld [vmem:[%s381 + $0x168] sm:$0xff]
      %v1273 = vld [vmem:[%s381 + $0x170] sm:$0xff]
      %v1274 = vld [vmem:[%s381 + $0x178] sm:$0xff]
      %v1275 = vld [vmem:[%s381 + $0x180] sm:$0xff]
      %v1276 = vld [vmem:[%s381 + $0x188] sm:$0xff]
      %v1277 = vld [vmem:[%s381 + $0x190] sm:$0xff]
      %v1278 = vld [vmem:[%s381 + $0x198] sm:$0xff]
      %v1279 = vld [vmem:[%s381 + $0x1a0] sm:$0xff]
      %v1280 = vld [vmem:[%s381 + $0x1a8] sm:$0xff]
      %v1281 = vld [vmem:[%s381 + $0x1b0] sm:$0xff]
      %v1282 = vld [vmem:[%s381 + $0x1b8] sm:$0xff]
      %v1283 = vld [vmem:[%s381 + $0x1c0] sm:$0xff]
      %v1284 = vld [vmem:[%s381 + $0x1c8] sm:$0xff]
      %v1285 = vld [vmem:[%s381 + $0x1d0] sm:$0xff]
      %v1286 = vld [vmem:[%s381 + $0x1d8] sm:$0xff]
      %v1287 = vld [vmem:[%s381 + $0x1e0] sm:$0xff]
      %v1288 = vld [vmem:[%s381 + $0x1e8] sm:$0xff]
      %v1289 = vld [vmem:[%s381 + $0x1f0] sm:$0xff]
      %v1290 = vld [vmem:[%s381 + $0x1f8] sm:$0xff]
      %v1291 = vld [vmem:[%s381 + $0x200] sm:$0xff]
      %v1292 = vld [vmem:[%s381 + $0x208] sm:$0xff]
      %v1293 = vld [vmem:[%s381 + $0x210] sm:$0xff]
      %v1294 = vld [vmem:[%s381 + $0x218] sm:$0xff]
      %v1295 = vld [vmem:[%s381 + $0x220] sm:$0xff]
      %v1296 = vld [vmem:[%s381 + $0x228] sm:$0xff]
      %v1297 = vld [vmem:[%s381 + $0x230] sm:$0xff]
      %v1298 = vld [vmem:[%s381 + $0x238] sm:$0xff]
      %v1299 = vld [vmem:[%s381 + $0x240] sm:$0xff]
      %v1300 = vld [vmem:[%s381 + $0x248] sm:$0xff]
      %v1301 = vld [vmem:[%s381 + $0x250] sm:$0xff]
      %v1302 = vld [vmem:[%s381 + $0x258] sm:$0xff]
      %v1303 = vld [vmem:[%s381 + $0x260] sm:$0xff]
      %v1304 = vld [vmem:[%s381 + $0x268] sm:$0xff]
      %v1305 = vld [vmem:[%s381 + $0x270] sm:$0xff]
      %v1306 = vld [vmem:[%s381 + $0x278] sm:$0xff]
      %v1307 = vld [vmem:[%s381 + $0x280] sm:$0xff]
      %v1308 = vld [vmem:[%s381 + $0x288] sm:$0xff]
      %v1309 = vld [vmem:[%s381 + $0x290] sm:$0xff]
      %v1310 = vld [vmem:[%s381 + $0x298] sm:$0xff]
      %v1311 = vld [vmem:[%s381 + $0x2a0] sm:$0xff]
      %v1312 = vld [vmem:[%s381 + $0x2a8] sm:$0xff]
      %v1313 = vld [vmem:[%s381 + $0x2b0] sm:$0xff]
      %v1314 = vld [vmem:[%s381 + $0x2b8] sm:$0xff]
      %v1315 = vld [vmem:[%s381 + $0x2c0] sm:$0xff]
      %v1316 = vld [vmem:[%s381 + $0x2c8] sm:$0xff]
      %v1317 = vld [vmem:[%s381 + $0x2d0] sm:$0xff]
      %v1318 = vld [vmem:[%s381 + $0x2d8] sm:$0xff]
      %v1319 = vld [vmem:[%s381 + $0x2e0] sm:$0xff]
      %v1320 = vld [vmem:[%s381 + $0x2e8] sm:$0xff]
      %v1321 = vld [vmem:[%s381 + $0x2f0] sm:$0xff]
      %v1322 = vld [vmem:[%s381 + $0x2f8] sm:$0xff]
      %v1323 = vld [vmem:[%s381 + $0x300] sm:$0xff]
      %v1324 = vld [vmem:[%s381 + $0x308] sm:$0xff]
      %v1325 = vld [vmem:[%s381 + $0x310] sm:$0xff]
      %v1326 = vld [vmem:[%s381 + $0x318] sm:$0xff]
      %v1327 = vld [vmem:[%s381 + $0x320] sm:$0xff]
      %v1328 = vld [vmem:[%s381 + $0x328] sm:$0xff]
      %v1329 = vld [vmem:[%s381 + $0x330] sm:$0xff]
      %v1330 = vld [vmem:[%s381 + $0x338] sm:$0xff]
      %v1331 = vld [vmem:[%s381 + $0x340] sm:$0xff]
      %v1332 = vld [vmem:[%s381 + $0x348] sm:$0xff]
      %v1333 = vld [vmem:[%s381 + $0x350] sm:$0xff]
      %v1334 = vld [vmem:[%s381 + $0x358] sm:$0xff]
      %v1335 = vld [vmem:[%s381 + $0x360] sm:$0xff]
      %v1336 = vld [vmem:[%s381 + $0x368] sm:$0xff]
      %v1337 = vld [vmem:[%s381 + $0x370] sm:$0xff]
      %v1338 = vld [vmem:[%s381 + $0x378] sm:$0xff]
      %v1339 = vld [vmem:[%s381 + $0x380] sm:$0xff]
      %v1340 = vld [vmem:[%s381 + $0x388] sm:$0xff]
      %v1341 = vld [vmem:[%s381 + $0x390] sm:$0xff]
      %v1342 = vld [vmem:[%s381 + $0x398] sm:$0xff]
      %v1343 = vld [vmem:[%s381 + $0x3a0] sm:$0xff]
      %v1344 = vld [vmem:[%s381 + $0x3a8] sm:$0xff]
      %v1345 = vld [vmem:[%s381 + $0x3b0] sm:$0xff]
      %v1346 = vld [vmem:[%s381 + $0x3b8] sm:$0xff]
      %v1347 = vld [vmem:[%s381 + $0x3c0] sm:$0xff]
      %v1348 = vld [vmem:[%s381 + $0x3c8] sm:$0xff]
      %v1349 = vld [vmem:[%s381 + $0x3d0] sm:$0xff]
      %v1350 = vld [vmem:[%s381 + $0x3d8] sm:$0xff]
      %v1351 = vld [vmem:[%s381 + $0x3e0] sm:$0xff]
      %v1352 = vld [vmem:[%s381 + $0x3e8] sm:$0xff]
      %v1353 = vld [vmem:[%s381 + $0x3f0] sm:$0xff]
      %v1354 = vld [vmem:[%s381 + $0x3f8] sm:$0xff]
      %v1355 = vld [vmem:[%s381 + $0x400] sm:$0xff]
      %v1356 = vld [vmem:[%s381 + $0x408] sm:$0xff]
      %v1357 = vld [vmem:[%s381 + $0x410] sm:$0xff]
      %v1358 = vld [vmem:[%s381 + $0x418] sm:$0xff]
      %v1359 = vld [vmem:[%s381 + $0x420] sm:$0xff]
      %v1360 = vld [vmem:[%s381 + $0x428] sm:$0xff]
      %v1361 = vld [vmem:[%s381 + $0x430] sm:$0xff]
      %v1362 = vld [vmem:[%s381 + $0x438] sm:$0xff]
      %v1363 = vld [vmem:[%s381 + $0x440] sm:$0xff]
      %v1364 = vld [vmem:[%s381 + $0x448] sm:$0xff]
      %v1365 = vld [vmem:[%s381 + $0x450] sm:$0xff]
      %v1366 = vld [vmem:[%s381 + $0x458] sm:$0xff]
      %v1367 = vld [vmem:[%s381 + $0x460] sm:$0xff]
      %v1368 = vld [vmem:[%s381 + $0x468] sm:$0xff]
      %v1369 = vld [vmem:[%s381 + $0x470] sm:$0xff]
      %v1370 = vld [vmem:[%s381 + $0x478] sm:$0xff]
      %v1371 = vld [vmem:[%s381 + $0x480] sm:$0xff]
      %v1372 = vld [vmem:[%s381 + $0x488] sm:$0xff]
      %v1373 = vld [vmem:[%s381 + $0x490] sm:$0xff]
      %v1374 = vld [vmem:[%s381 + $0x498] sm:$0xff]
      %v1375 = vld [vmem:[%s381 + $0x4a0] sm:$0xff]
      %v1376 = vld [vmem:[%s381 + $0x4a8] sm:$0xff]
      %v1377 = vld [vmem:[%s381 + $0x4b0] sm:$0xff]
      %v1378 = vld [vmem:[%s381 + $0x4b8] sm:$0xff]
      %v1379 = vld [vmem:[%s381 + $0x4c0] sm:$0xff]
      %v1380 = vld [vmem:[%s381 + $0x4c8] sm:$0xff]
      %v1381 = vld [vmem:[%s381 + $0x4d0] sm:$0xff]
      %v1382 = vld [vmem:[%s381 + $0x4d8] sm:$0xff]
      %v1383 = vld [vmem:[%s381 + $0x4e0] sm:$0xff]
      %v1384 = vld [vmem:[%s381 + $0x4e8] sm:$0xff]
      %v1385 = vld [vmem:[%s381 + $0x4f0] sm:$0xff]
      %v1386 = vld [vmem:[%s381 + $0x4f8] sm:$0xff]
      %v1387 = vld [vmem:[%s381 + $0x500] sm:$0xff]
      %v1388 = vld [vmem:[%s381 + $0x508] sm:$0xff]
      %v1389 = vld [vmem:[%s381 + $0x510] sm:$0xff]
      %v1390 = vld [vmem:[%s381 + $0x518] sm:$0xff]
      %v1391 = vld [vmem:[%s381 + $0x520] sm:$0xff]
      %v1392 = vld [vmem:[%s381 + $0x528] sm:$0xff]
      %v1393 = vld [vmem:[%s381 + $0x530] sm:$0xff]
      %v1394 = vld [vmem:[%s381 + $0x538] sm:$0xff]
      %v1395 = vld [vmem:[%s381 + $0x540] sm:$0xff]
      %v1396 = vld [vmem:[%s381 + $0x548] sm:$0xff]
      %v1397 = vld [vmem:[%s381 + $0x550] sm:$0xff]
      %v1398 = vld [vmem:[%s381 + $0x558] sm:$0xff]
      %v1399 = vld [vmem:[%s381 + $0x560] sm:$0xff]
      %v1400 = vld [vmem:[%s381 + $0x568] sm:$0xff]
      %v1401 = vld [vmem:[%s381 + $0x570] sm:$0xff]
      %v1402 = vld [vmem:[%s381 + $0x578] sm:$0xff]
      %v1403 = vld [vmem:[%s381 + $0x580] sm:$0xff]
      %v1404 = vld [vmem:[%s381 + $0x588] sm:$0xff]
      %v1405 = vld [vmem:[%s381 + $0x590] sm:$0xff]
      %v1406 = vld [vmem:[%s381 + $0x598] sm:$0xff]
      %v1407 = vld [vmem:[%s381 + $0x5a0] sm:$0xff]
      %v1408 = vld [vmem:[%s381 + $0x5a8] sm:$0xff]
      %v1409 = vld [vmem:[%s381 + $0x5b0] sm:$0xff]
      %v1410 = vld [vmem:[%s381 + $0x5b8] sm:$0xff]
      %v1411 = vld [vmem:[%s381 + $0x5c0] sm:$0xff]
      %v1412 = vld [vmem:[%s381 + $0x5c8] sm:$0xff]
      %v1413 = vld [vmem:[%s381 + $0x5d0] sm:$0xff]
      %v1414 = vld [vmem:[%s381 + $0x5d8] sm:$0xff]
      %v1415 = vld [vmem:[%s381 + $0x5e0] sm:$0xff]
      %v1416 = vld [vmem:[%s381 + $0x5e8] sm:$0xff]
      %v1417 = vld [vmem:[%s381 + $0x5f0] sm:$0xff]
      %v1418 = vld [vmem:[%s381 + $0x5f8] sm:$0xff]
      %v1419 = vld [vmem:[%s381 + $0x600] sm:$0xff]
      %v1420 = vld [vmem:[%s381 + $0x608] sm:$0xff]
      %v1421 = vld [vmem:[%s381 + $0x610] sm:$0xff]
      %v1422 = vld [vmem:[%s381 + $0x618] sm:$0xff]
      %v1423 = vld [vmem:[%s381 + $0x620] sm:$0xff]
      %v1424 = vld [vmem:[%s381 + $0x628] sm:$0xff]
      %v1425 = vld [vmem:[%s381 + $0x630] sm:$0xff]
      %v1426 = vld [vmem:[%s381 + $0x638] sm:$0xff]
      %v1427 = vld [vmem:[%s381 + $0x640] sm:$0xff]
      %v1428 = vld [vmem:[%s381 + $0x648] sm:$0xff]
      %v1429 = vld [vmem:[%s381 + $0x650] sm:$0xff]
      %v1430 = vld [vmem:[%s381 + $0x658] sm:$0xff]
      %v1431 = vld [vmem:[%s381 + $0x660] sm:$0xff]
      %v1432 = vld [vmem:[%s381 + $0x668] sm:$0xff]
      %v1433 = vld [vmem:[%s381 + $0x670] sm:$0xff]
      %v1434 = vld [vmem:[%s381 + $0x678] sm:$0xff]
      %v1435 = vld [vmem:[%s381 + $0x680] sm:$0xff]
      %v1436 = vld [vmem:[%s381 + $0x688] sm:$0xff]
      %v1437 = vld [vmem:[%s381 + $0x690] sm:$0xff]
      %v1438 = vld [vmem:[%s381 + $0x698] sm:$0xff]
      %v1439 = vld [vmem:[%s381 + $0x6a0] sm:$0xff]
      %v1440 = vld [vmem:[%s381 + $0x6a8] sm:$0xff]
      %v1441 = vld [vmem:[%s381 + $0x6b0] sm:$0xff]
      %v1442 = vld [vmem:[%s381 + $0x6b8] sm:$0xff]
      %v1443 = vld [vmem:[%s381 + $0x6c0] sm:$0xff]
      %v1444 = vld [vmem:[%s381 + $0x6c8] sm:$0xff]
      %v1445 = vld [vmem:[%s381 + $0x6d0] sm:$0xff]
      %v1446 = vld [vmem:[%s381 + $0x6d8] sm:$0xff]
      %v1447 = vld [vmem:[%s381 + $0x6e0] sm:$0xff]
      %v1448 = vld [vmem:[%s381 + $0x6e8] sm:$0xff]
      %v1449 = vld [vmem:[%s381 + $0x6f0] sm:$0xff]
      %v1450 = vld [vmem:[%s381 + $0x6f8] sm:$0xff]
      %v1451 = vld [vmem:[%s381 + $0x700] sm:$0xff]
      %v1452 = vld [vmem:[%s381 + $0x708] sm:$0xff]
      %v1453 = vld [vmem:[%s381 + $0x710] sm:$0xff]
      %v1454 = vld [vmem:[%s381 + $0x718] sm:$0xff]
      %v1455 = vld [vmem:[%s381 + $0x720] sm:$0xff]
      %v1456 = vld [vmem:[%s381 + $0x728] sm:$0xff]
      %v1457 = vld [vmem:[%s381 + $0x730] sm:$0xff]
      %v1458 = vld [vmem:[%s381 + $0x738] sm:$0xff]
      %v1459 = vld [vmem:[%s381 + $0x740] sm:$0xff]
      %v1460 = vld [vmem:[%s381 + $0x748] sm:$0xff]
      %v1461 = vld [vmem:[%s381 + $0x750] sm:$0xff]
      %v1462 = vld [vmem:[%s381 + $0x758] sm:$0xff]
      %v1463 = vld [vmem:[%s381 + $0x760] sm:$0xff]
      %v1464 = vld [vmem:[%s381 + $0x768] sm:$0xff]
      %v1465 = vld [vmem:[%s381 + $0x770] sm:$0xff]
      %v1466 = vld [vmem:[%s381 + $0x778] sm:$0xff]
      %v1467 = vld [vmem:[%s381 + $0x780] sm:$0xff]
      %v1468 = vld [vmem:[%s381 + $0x788] sm:$0xff]
      %v1469 = vld [vmem:[%s381 + $0x790] sm:$0xff]
      %v1470 = vld [vmem:[%s381 + $0x798] sm:$0xff]
      %v1471 = vld [vmem:[%s381 + $0x7a0] sm:$0xff]
      %v1472 = vld [vmem:[%s381 + $0x7a8] sm:$0xff]
      %v1473 = vld [vmem:[%s381 + $0x7b0] sm:$0xff]
      %v1474 = vld [vmem:[%s381 + $0x7b8] sm:$0xff]
      %v1475 = vld [vmem:[%s381 + $0x7c0] sm:$0xff]
      %v1476 = vld [vmem:[%s381 + $0x7c8] sm:$0xff]
      %v1477 = vld [vmem:[%s381 + $0x7d0] sm:$0xff]
      %v1478 = vld [vmem:[%s381 + $0x7d8] sm:$0xff]
      %v1479 = vld [vmem:[%s381 + $0x7e0] sm:$0xff]
      %v1480 = vld [vmem:[%s381 + $0x7e8] sm:$0xff]
      %v1481 = vld [vmem:[%s381 + $0x7f0] sm:$0xff]
      %v1482 = vld [vmem:[%s381 + $0x7f8] sm:$0xff]
      %v1483 = vld [vmem:[%s381 + $0x800] sm:$0xff]
      %v1484 = vld [vmem:[%s381 + $0x808] sm:$0xff]
      %v1485 = vld [vmem:[%s381 + $0x810] sm:$0xff]
      %v1486 = vld [vmem:[%s381 + $0x818] sm:$0xff]
      %v1487 = vld [vmem:[%s381 + $0x820] sm:$0xff]
      %v1488 = vld [vmem:[%s381 + $0x828] sm:$0xff]
      %v1489 = vld [vmem:[%s381 + $0x830] sm:$0xff]
      %v1490 = vld [vmem:[%s381 + $0x838] sm:$0xff]
      %v1491 = vld [vmem:[%s381 + $0x840] sm:$0xff]
      %v1492 = vld [vmem:[%s381 + $0x848] sm:$0xff]
      %v1493 = vld [vmem:[%s381 + $0x850] sm:$0xff]
      %v1494 = vld [vmem:[%s381 + $0x858] sm:$0xff]
      %v1495 = vld [vmem:[%s381 + $0x860] sm:$0xff]
      %v1496 = vld [vmem:[%s381 + $0x868] sm:$0xff]
      %v1497 = vld [vmem:[%s381 + $0x870] sm:$0xff]
      %v1498 = vld [vmem:[%s381 + $0x878] sm:$0xff]
      %v1499 = vld [vmem:[%s381 + $0x880] sm:$0xff]
      %v1500 = vld [vmem:[%s381 + $0x888] sm:$0xff]
      %v1501 = vld [vmem:[%s381 + $0x890] sm:$0xff]
      %v1502 = vld [vmem:[%s381 + $0x898] sm:$0xff]
      %v1503 = vld [vmem:[%s381 + $0x8a0] sm:$0xff]
      %v1504 = vld [vmem:[%s381 + $0x8a8] sm:$0xff]
      %v1505 = vld [vmem:[%s381 + $0x8b0] sm:$0xff]
      %v1506 = vld [vmem:[%s381 + $0x8b8] sm:$0xff]
      %v1507 = vld [vmem:[%s381 + $0x8c0] sm:$0xff]
      %v1508 = vld [vmem:[%s381 + $0x8c8] sm:$0xff]
      %v1509 = vld [vmem:[%s381 + $0x8d0] sm:$0xff]
      %v1510 = vld [vmem:[%s381 + $0x8d8] sm:$0xff]
      %v1511 = vld [vmem:[%s381 + $0x8e0] sm:$0xff]
      %v1512 = vld [vmem:[%s381 + $0x8e8] sm:$0xff]
      %v1513 = vld [vmem:[%s381 + $0x8f0] sm:$0xff]
      %v1514 = vld [vmem:[%s381 + $0x8f8] sm:$0xff]
      %v1515 = vld [vmem:[%s381 + $0x900] sm:$0xff]
      %v1516 = vld [vmem:[%s381 + $0x908] sm:$0xff]
      %v1517 = vld [vmem:[%s381 + $0x910] sm:$0xff]
      %v1518 = vld [vmem:[%s381 + $0x918] sm:$0xff]
      %v1519 = vld [vmem:[%s381 + $0x920] sm:$0xff]
      %v1520 = vld [vmem:[%s381 + $0x928] sm:$0xff]
      %v1521 = vld [vmem:[%s381 + $0x930] sm:$0xff]
      %v1522 = vld [vmem:[%s381 + $0x938] sm:$0xff]
      %v1523 = vld [vmem:[%s381 + $0x940] sm:$0xff]
      %v1524 = vld [vmem:[%s381 + $0x948] sm:$0xff]
      %v1525 = vld [vmem:[%s381 + $0x950] sm:$0xff]
      %v1526 = vld [vmem:[%s381 + $0x958] sm:$0xff]
      %v1527 = vld [vmem:[%s381 + $0x960] sm:$0xff]
      %v1528 = vld [vmem:[%s381 + $0x968] sm:$0xff]
      %v1529 = vld [vmem:[%s381 + $0x970] sm:$0xff]
      %v1530 = vld [vmem:[%s381 + $0x978] sm:$0xff]
      %v1531 = vld [vmem:[%s381 + $0x980] sm:$0xff]
      %v1532 = vld [vmem:[%s381 + $0x988] sm:$0xff]
      %v1533 = vld [vmem:[%s381 + $0x990] sm:$0xff]
      %v1534 = vld [vmem:[%s381 + $0x998] sm:$0xff]
      %v1535 = vld [vmem:[%s381 + $0x9a0] sm:$0xff]
      %v1536 = vld [vmem:[%s381 + $0x9a8] sm:$0xff]
      %v1537 = vld [vmem:[%s381 + $0x9b0] sm:$0xff]
      %v1538 = vld [vmem:[%s381 + $0x9b8] sm:$0xff]
      %v1539 = vld [vmem:[%s381 + $0x9c0] sm:$0xff]
      %v1540 = vld [vmem:[%s381 + $0x9c8] sm:$0xff]
      %v1541 = vld [vmem:[%s381 + $0x9d0] sm:$0xff]
      %v1542 = vld [vmem:[%s381 + $0x9d8] sm:$0xff]
      %v1543 = vld [vmem:[%s381 + $0x9e0] sm:$0xff]
      %v1544 = vld [vmem:[%s381 + $0x9e8] sm:$0xff]
      %v1545 = vld [vmem:[%s381 + $0x9f0] sm:$0xff]
      %v1546 = vld [vmem:[%s381 + $0x9f8] sm:$0xff]
      %v1547 = vld [vmem:[%s381 + $0xa00] sm:$0xff]
      %v1548 = vld [vmem:[%s381 + $0xa08] sm:$0xff]
      %v1549 = vld [vmem:[%s381 + $0xa10] sm:$0xff]
      %v1550 = vld [vmem:[%s381 + $0xa18] sm:$0xff]
      %v1551 = vld [vmem:[%s381 + $0xa20] sm:$0xff]
      %v1552 = vld [vmem:[%s381 + $0xa28] sm:$0xff]
      %v1553 = vld [vmem:[%s381 + $0xa30] sm:$0xff]
      %v1554 = vld [vmem:[%s381 + $0xa38] sm:$0xff]
      %v1555 = vld [vmem:[%s381 + $0xa40] sm:$0xff]
      %v1556 = vld [vmem:[%s381 + $0xa48] sm:$0xff]
      %v1557 = vld [vmem:[%s381 + $0xa50] sm:$0xff]
      %v1558 = vld [vmem:[%s381 + $0xa58] sm:$0xff]
      %v1559 = vld [vmem:[%s381 + $0xa60] sm:$0xff]
      %v1560 = vld [vmem:[%s381 + $0xa68] sm:$0xff]
      %v1561 = vld [vmem:[%s381 + $0xa70] sm:$0xff]
      %v1562 = vld [vmem:[%s381 + $0xa78] sm:$0xff]
      %v1563 = vld [vmem:[%s381 + $0xa80] sm:$0xff]
      %v1564 = vld [vmem:[%s381 + $0xa88] sm:$0xff]
      %v1565 = vld [vmem:[%s381 + $0xa90] sm:$0xff]
      %v1566 = vld [vmem:[%s381 + $0xa98] sm:$0xff]
      %v1567 = vld [vmem:[%s381 + $0xaa0] sm:$0xff]
      %v1568 = vld [vmem:[%s381 + $0xaa8] sm:$0xff]
      %v1569 = vld [vmem:[%s381 + $0xab0] sm:$0xff]
      %v1570 = vld [vmem:[%s381 + $0xab8] sm:$0xff]
      %v1571 = vld [vmem:[%s381 + $0xac0] sm:$0xff]
      %v1572 = vld [vmem:[%s381 + $0xac8] sm:$0xff]
      %v1573 = vld [vmem:[%s381 + $0xad0] sm:$0xff]
      %v1574 = vld [vmem:[%s381 + $0xad8] sm:$0xff]
      %v1575 = vld [vmem:[%s381 + $0xae0] sm:$0xff]
      %v1576 = vld [vmem:[%s381 + $0xae8] sm:$0xff]
      %v1577 = vld [vmem:[%s381 + $0xaf0] sm:$0xff]
      %v1578 = vld [vmem:[%s381 + $0xaf8] sm:$0xff]
      %v1579 = vld [vmem:[%s381 + $0xb00] sm:$0xff]
      %v1580 = vld [vmem:[%s381 + $0xb08] sm:$0xff]
      %v1581 = vld [vmem:[%s381 + $0xb10] sm:$0xff]
      %v1582 = vld [vmem:[%s381 + $0xb18] sm:$0xff]
      %v1583 = vld [vmem:[%s381 + $0xb20] sm:$0xff]
      %v1584 = vld [vmem:[%s381 + $0xb28] sm:$0xff]
      %v1585 = vld [vmem:[%s381 + $0xb30] sm:$0xff]
      %v1586 = vld [vmem:[%s381 + $0xb38] sm:$0xff]
      %v1587 = vld [vmem:[%s381 + $0xb40] sm:$0xff]
      %v1588 = vld [vmem:[%s381 + $0xb48] sm:$0xff]
      %v1589 = vld [vmem:[%s381 + $0xb50] sm:$0xff]
      %v1590 = vld [vmem:[%s381 + $0xb58] sm:$0xff]
      %v1591 = vld [vmem:[%s381 + $0xb60] sm:$0xff]
      %v1592 = vld [vmem:[%s381 + $0xb68] sm:$0xff]
      %v1593 = vld [vmem:[%s381 + $0xb70] sm:$0xff]
      %v1594 = vld [vmem:[%s381 + $0xb78] sm:$0xff]
      %v1595 = vld [vmem:[%s381 + $0xb80] sm:$0xff]
      %v1596 = vld [vmem:[%s381 + $0xb88] sm:$0xff]
      %v1597 = vld [vmem:[%s381 + $0xb90] sm:$0xff]
      %v1598 = vld [vmem:[%s381 + $0xb98] sm:$0xff]
      %v1599 = vld [vmem:[%s381 + $0xba0] sm:$0xff]
      %v1600 = vld [vmem:[%s381 + $0xba8] sm:$0xff]
      %v1601 = vld [vmem:[%s381 + $0xbb0] sm:$0xff]
      %v1602 = vld [vmem:[%s381 + $0xbb8] sm:$0xff]
      %v1603 = vld [vmem:[%s381 + $0xbc0] sm:$0xff]
      %v1604 = vld [vmem:[%s381 + $0xbc8] sm:$0xff]
      %v1605 = vld [vmem:[%s381 + $0xbd0] sm:$0xff]
      %v1606 = vld [vmem:[%s381 + $0xbd8] sm:$0xff]
      %v1607 = vld [vmem:[%s381 + $0xbe0] sm:$0xff]
      %v1608 = vld [vmem:[%s381 + $0xbe8] sm:$0xff]
      %v1609 = vld [vmem:[%s381 + $0xbf0] sm:$0xff]
      %v1610 = vld [vmem:[%s381 + $0xbf8] sm:$0xff]
      %v1611 = vld [vmem:[%s381 + $0xc00] sm:$0xff]
      %v1612 = vld [vmem:[%s381 + $0xc08] sm:$0xff]
      %v1613 = vld [vmem:[%s381 + $0xc10] sm:$0xff]
      %v1614 = vld [vmem:[%s381 + $0xc18] sm:$0xff]
      %v1615 = vld [vmem:[%s381 + $0xc20] sm:$0xff]
      %v1616 = vld [vmem:[%s381 + $0xc28] sm:$0xff]
      %v1617 = vld [vmem:[%s381 + $0xc30] sm:$0xff]
      %v1618 = vld [vmem:[%s381 + $0xc38] sm:$0xff]
      %v1619 = vld [vmem:[%s381 + $0xc40] sm:$0xff]
      %v1620 = vld [vmem:[%s381 + $0xc48] sm:$0xff]
      %v1621 = vld [vmem:[%s381 + $0xc50] sm:$0xff]
      %v1622 = vld [vmem:[%s381 + $0xc58] sm:$0xff]
      %v1623 = vld [vmem:[%s381 + $0xc60] sm:$0xff]
      %v1624 = vld [vmem:[%s381 + $0xc68] sm:$0xff]
      %v1625 = vld [vmem:[%s381 + $0xc70] sm:$0xff]
      %v1626 = vld [vmem:[%s381 + $0xc78] sm:$0xff]
      %v1627 = vld [vmem:[%s381 + $0xc80] sm:$0xff]
      %v1628 = vld [vmem:[%s381 + $0xc88] sm:$0xff]
      %v1629 = vld [vmem:[%s381 + $0xc90] sm:$0xff]
      %v1630 = vld [vmem:[%s381 + $0xc98] sm:$0xff]
      %v1631 = vld [vmem:[%s381 + $0xca0] sm:$0xff]
      %v1632 = vld [vmem:[%s381 + $0xca8] sm:$0xff]
      %v1633 = vld [vmem:[%s381 + $0xcb0] sm:$0xff]
      %v1634 = vld [vmem:[%s381 + $0xcb8] sm:$0xff]
      %v1635 = vld [vmem:[%s381 + $0xcc0] sm:$0xff]
      %v1636 = vld [vmem:[%s381 + $0xcc8] sm:$0xff]
      %v1637 = vld [vmem:[%s381 + $0xcd0] sm:$0xff]
      %v1638 = vld [vmem:[%s381 + $0xcd8] sm:$0xff]
      %v1639 = vld [vmem:[%s381 + $0xce0] sm:$0xff]
      %v1640 = vld [vmem:[%s381 + $0xce8] sm:$0xff]
      %v1641 = vld [vmem:[%s381 + $0xcf0] sm:$0xff]
      %v1642 = vld [vmem:[%s381 + $0xcf8] sm:$0xff]
      %v1643 = vld [vmem:[%s381 + $0xd00] sm:$0xff]
      %v1644 = vld [vmem:[%s381 + $0xd08] sm:$0xff]
      %v1645 = vld [vmem:[%s381 + $0xd10] sm:$0xff]
      %v1646 = vld [vmem:[%s381 + $0xd18] sm:$0xff]
      %v1647 = vld [vmem:[%s381 + $0xd20] sm:$0xff]
      %v1648 = vld [vmem:[%s381 + $0xd28] sm:$0xff]
      %v1649 = vld [vmem:[%s381 + $0xd30] sm:$0xff]
      %v1650 = vld [vmem:[%s381 + $0xd38] sm:$0xff]
      %v1651 = vld [vmem:[%s381 + $0xd40] sm:$0xff]
      %v1652 = vld [vmem:[%s381 + $0xd48] sm:$0xff]
      %v1653 = vld [vmem:[%s381 + $0xd50] sm:$0xff]
      %v1654 = vld [vmem:[%s381 + $0xd58] sm:$0xff]
      %v1655 = vld [vmem:[%s381 + $0xd60] sm:$0xff]
      %v1656 = vld [vmem:[%s381 + $0xd68] sm:$0xff]
      %v1657 = vld [vmem:[%s381 + $0xd70] sm:$0xff]
      %v1658 = vld [vmem:[%s381 + $0xd78] sm:$0xff]
      %v1659 = vld [vmem:[%s381 + $0xd80] sm:$0xff]
      %v1660 = vld [vmem:[%s381 + $0xd88] sm:$0xff]
      %v1661 = vld [vmem:[%s381 + $0xd90] sm:$0xff]
      %v1662 = vld [vmem:[%s381 + $0xd98] sm:$0xff]
      %v1663 = vld [vmem:[%s381 + $0xda0] sm:$0xff]
      %v1664 = vld [vmem:[%s381 + $0xda8] sm:$0xff]
      %v1665 = vld [vmem:[%s381 + $0xdb0] sm:$0xff]
      %v1666 = vld [vmem:[%s381 + $0xdb8] sm:$0xff]
      %v1667 = vld [vmem:[%s381 + $0xdc0] sm:$0xff]
      %v1668 = vld [vmem:[%s381 + $0xdc8] sm:$0xff]
      %v1669 = vld [vmem:[%s381 + $0xdd0] sm:$0xff]
      %v1670 = vld [vmem:[%s381 + $0xdd8] sm:$0xff]
      %v1671 = vld [vmem:[%s381 + $0xde0] sm:$0xff]
      %v1672 = vld [vmem:[%s381 + $0xde8] sm:$0xff]
      %v1673 = vld [vmem:[%s381 + $0xdf0] sm:$0xff]
      %v1674 = vld [vmem:[%s381 + $0xdf8] sm:$0xff]
      %v1675 = vld [vmem:[%s381 + $0xe00] sm:$0xff]
      %v1676 = vld [vmem:[%s381 + $0xe08] sm:$0xff]
      %v1677 = vld [vmem:[%s381 + $0xe10] sm:$0xff]
      %v1678 = vld [vmem:[%s381 + $0xe18] sm:$0xff]
      %v1679 = vld [vmem:[%s381 + $0xe20] sm:$0xff]
      %v1680 = vld [vmem:[%s381 + $0xe28] sm:$0xff]
      %v1681 = vld [vmem:[%s381 + $0xe30] sm:$0xff]
      %v1682 = vld [vmem:[%s381 + $0xe38] sm:$0xff]
      %v1683 = vld [vmem:[%s381 + $0xe40] sm:$0xff]
      %v1684 = vld [vmem:[%s381 + $0xe48] sm:$0xff]
      %v1685 = vld [vmem:[%s381 + $0xe50] sm:$0xff]
      %v1686 = vld [vmem:[%s381 + $0xe58] sm:$0xff]
      %v1687 = vld [vmem:[%s381 + $0xe60] sm:$0xff]
      %v1688 = vld [vmem:[%s381 + $0xe68] sm:$0xff]
      %v1689 = vld [vmem:[%s381 + $0xe70] sm:$0xff]
      %v1690 = vld [vmem:[%s381 + $0xe78] sm:$0xff]
      %v1691 = vld [vmem:[%s381 + $0xe80] sm:$0xff]
      %v1692 = vld [vmem:[%s381 + $0xe88] sm:$0xff]
      %v1693 = vld [vmem:[%s381 + $0xe90] sm:$0xff]
      %v1694 = vld [vmem:[%s381 + $0xe98] sm:$0xff]
      %v1695 = vld [vmem:[%s381 + $0xea0] sm:$0xff]
      %v1696 = vld [vmem:[%s381 + $0xea8] sm:$0xff]
      %v1697 = vld [vmem:[%s381 + $0xeb0] sm:$0xff]
      %v1698 = vld [vmem:[%s381 + $0xeb8] sm:$0xff]
      %v1699 = vld [vmem:[%s381 + $0xec0] sm:$0xff]
      %v1700 = vld [vmem:[%s381 + $0xec8] sm:$0xff]
      %v1701 = vld [vmem:[%s381 + $0xed0] sm:$0xff]
      %v1702 = vld [vmem:[%s381 + $0xed8] sm:$0xff]
      %v1703 = vld [vmem:[%s381 + $0xee0] sm:$0xff]
      %v1704 = vld [vmem:[%s381 + $0xee8] sm:$0xff]
      %v1705 = vld [vmem:[%s381 + $0xef0] sm:$0xff]
      %v1706 = vld [vmem:[%s381 + $0xef8] sm:$0xff]
      %v1707 = vld [vmem:[%s381 + $0xf00] sm:$0xff]
      %v1708 = vld [vmem:[%s381 + $0xf08] sm:$0xff]
      %v1709 = vld [vmem:[%s381 + $0xf10] sm:$0xff]
      %v1710 = vld [vmem:[%s381 + $0xf18] sm:$0xff]
      %v1711 = vld [vmem:[%s381 + $0xf20] sm:$0xff]
      %v1712 = vld [vmem:[%s381 + $0xf28] sm:$0xff]
      %v1713 = vld [vmem:[%s381 + $0xf30] sm:$0xff]
      %v1714 = vld [vmem:[%s381 + $0xf38] sm:$0xff]
      %v1715 = vld [vmem:[%s381 + $0xf40] sm:$0xff]
      %v1716 = vld [vmem:[%s381 + $0xf48] sm:$0xff]
      %v1717 = vld [vmem:[%s381 + $0xf50] sm:$0xff]
      %v1718 = vld [vmem:[%s381 + $0xf58] sm:$0xff]
      %v1719 = vld [vmem:[%s381 + $0xf60] sm:$0xff]
      %v1720 = vld [vmem:[%s381 + $0xf68] sm:$0xff]
      %v1721 = vld [vmem:[%s381 + $0xf70] sm:$0xff]
      %v1722 = vld [vmem:[%s381 + $0xf78] sm:$0xff]
      %v1723 = vld [vmem:[%s381 + $0xf80] sm:$0xff]
      %v1724 = vld [vmem:[%s381 + $0xf88] sm:$0xff]
      %v1725 = vld [vmem:[%s381 + $0xf90] sm:$0xff]
      %v1726 = vld [vmem:[%s381 + $0xf98] sm:$0xff]
      %v1727 = vld [vmem:[%s381 + $0xfa0] sm:$0xff]
      %v1728 = vld [vmem:[%s381 + $0xfa8] sm:$0xff]
      %v1729 = vld [vmem:[%s381 + $0xfb0] sm:$0xff]
      %v1730 = vld [vmem:[%s381 + $0xfb8] sm:$0xff]
      %v1731 = vld [vmem:[%s381 + $0xfc0] sm:$0xff]
      %v1732 = vld [vmem:[%s381 + $0xfc8] sm:$0xff]
      %v1733 = vld [vmem:[%s381 + $0xfd0] sm:$0xff]
      %v1734 = vld [vmem:[%s381 + $0xfd8] sm:$0xff]
      %v1735 = vld [vmem:[%s381 + $0xfe0] sm:$0xff]
      %v1736 = vld [vmem:[%s381 + $0xfe8] sm:$0xff]
      %v1737 = vld [vmem:[%s381 + $0xff0] sm:$0xff]
      %v1738 = vld [vmem:[%s381 + $0xff8] sm:$0xff]
      %s1739 = scalar_lea.vmem [#allocation2], 72
      %1740 = vst.msk [vmem:[%s1739 + $0x1] sm:$0xff] %vm385, %v1227
      %1741 = vst.msk [vmem:[%s1739 + $0x9] sm:$0xff] %vm385, %v1228
      %1742 = vst.msk [vmem:[%s1739 + $0x11] sm:$0xff] %vm385, %v1229
      %1743 = vst.msk [vmem:[%s1739 + $0x19] sm:$0xff] %vm385, %v1230
      %1744 = vst.msk [vmem:[%s1739 + $0x21] sm:$0xff] %vm385, %v1231
      %1745 = vst.msk [vmem:[%s1739 + $0x29] sm:$0xff] %vm385, %v1232
      %1746 = vst.msk [vmem:[%s1739 + $0x31] sm:$0xff] %vm385, %v1233
      %1747 = vst.msk [vmem:[%s1739 + $0x39] sm:$0xff] %vm385, %v1234
      %1748 = vst.msk [vmem:[%s1739 + $0x49] sm:$0xff] %vm385, %v1235
      %1749 = vst.msk [vmem:[%s1739 + $0x51] sm:$0xff] %vm385, %v1236
      %1750 = vst.msk [vmem:[%s1739 + $0x59] sm:$0xff] %vm385, %v1237
      %1751 = vst.msk [vmem:[%s1739 + $0x61] sm:$0xff] %vm385, %v1238
      %1752 = vst.msk [vmem:[%s1739 + $0x69] sm:$0xff] %vm385, %v1239
      %1753 = vst.msk [vmem:[%s1739 + $0x71] sm:$0xff] %vm385, %v1240
      %1754 = vst.msk [vmem:[%s1739 + $0x79] sm:$0xff] %vm385, %v1241
      %1755 = vst.msk [vmem:[%s1739 + $0x81] sm:$0xff] %vm385, %v1242
      %1756 = vst.msk [vmem:[%s1739 + $0x91] sm:$0xff] %vm385, %v1243
      %1757 = vst.msk [vmem:[%s1739 + $0x99] sm:$0xff] %vm385, %v1244
      %1758 = vst.msk [vmem:[%s1739 + $0xa1] sm:$0xff] %vm385, %v1245
      %1759 = vst.msk [vmem:[%s1739 + $0xa9] sm:$0xff] %vm385, %v1246
      %1760 = vst.msk [vmem:[%s1739 + $0xb1] sm:$0xff] %vm385, %v1247
      %1761 = vst.msk [vmem:[%s1739 + $0xb9] sm:$0xff] %vm385, %v1248
      %1762 = vst.msk [vmem:[%s1739 + $0xc1] sm:$0xff] %vm385, %v1249
      %1763 = vst.msk [vmem:[%s1739 + $0xc9] sm:$0xff] %vm385, %v1250
      %1764 = vst.msk [vmem:[%s1739 + $0xd9] sm:$0xff] %vm385, %v1251
      %1765 = vst.msk [vmem:[%s1739 + $0xe1] sm:$0xff] %vm385, %v1252
      %1766 = vst.msk [vmem:[%s1739 + $0xe9] sm:$0xff] %vm385, %v1253
      %1767 = vst.msk [vmem:[%s1739 + $0xf1] sm:$0xff] %vm385, %v1254
      %1768 = vst.msk [vmem:[%s1739 + $0xf9] sm:$0xff] %vm385, %v1255
      %1769 = vst.msk [vmem:[%s1739 + $0x101] sm:$0xff] %vm385, %v1256
      %1770 = vst.msk [vmem:[%s1739 + $0x109] sm:$0xff] %vm385, %v1257
      %1771 = vst.msk [vmem:[%s1739 + $0x111] sm:$0xff] %vm385, %v1258
      %1772 = vst.msk [vmem:[%s1739 + $0x121] sm:$0xff] %vm385, %v1259
      %1773 = vst.msk [vmem:[%s1739 + $0x129] sm:$0xff] %vm385, %v1260
      %1774 = vst.msk [vmem:[%s1739 + $0x131] sm:$0xff] %vm385, %v1261
      %1775 = vst.msk [vmem:[%s1739 + $0x139] sm:$0xff] %vm385, %v1262
      %1776 = vst.msk [vmem:[%s1739 + $0x141] sm:$0xff] %vm385, %v1263
      %1777 = vst.msk [vmem:[%s1739 + $0x149] sm:$0xff] %vm385, %v1264
      %1778 = vst.msk [vmem:[%s1739 + $0x151] sm:$0xff] %vm385, %v1265
      %1779 = vst.msk [vmem:[%s1739 + $0x159] sm:$0xff] %vm385, %v1266
      %1780 = vst.msk [vmem:[%s1739 + $0x169] sm:$0xff] %vm385, %v1267
      %1781 = vst.msk [vmem:[%s1739 + $0x171] sm:$0xff] %vm385, %v1268
      %1782 = vst.msk [vmem:[%s1739 + $0x179] sm:$0xff] %vm385, %v1269
      %1783 = vst.msk [vmem:[%s1739 + $0x181] sm:$0xff] %vm385, %v1270
      %1784 = vst.msk [vmem:[%s1739 + $0x189] sm:$0xff] %vm385, %v1271
      %1785 = vst.msk [vmem:[%s1739 + $0x191] sm:$0xff] %vm385, %v1272
      %1786 = vst.msk [vmem:[%s1739 + $0x199] sm:$0xff] %vm385, %v1273
      %1787 = vst.msk [vmem:[%s1739 + $0x1a1] sm:$0xff] %vm385, %v1274
      %1788 = vst.msk [vmem:[%s1739 + $0x1b1] sm:$0xff] %vm385, %v1275
      %1789 = vst.msk [vmem:[%s1739 + $0x1b9] sm:$0xff] %vm385, %v1276
      %1790 = vst.msk [vmem:[%s1739 + $0x1c1] sm:$0xff] %vm385, %v1277
      %1791 = vst.msk [vmem:[%s1739 + $0x1c9] sm:$0xff] %vm385, %v1278
      %1792 = vst.msk [vmem:[%s1739 + $0x1d1] sm:$0xff] %vm385, %v1279
      %1793 = vst.msk [vmem:[%s1739 + $0x1d9] sm:$0xff] %vm385, %v1280
      %1794 = vst.msk [vmem:[%s1739 + $0x1e1] sm:$0xff] %vm385, %v1281
      %1795 = vst.msk [vmem:[%s1739 + $0x1e9] sm:$0xff] %vm385, %v1282
      %1796 = vst.msk [vmem:[%s1739 + $0x1f9] sm:$0xff] %vm385, %v1283
      %1797 = vst.msk [vmem:[%s1739 + $0x201] sm:$0xff] %vm385, %v1284
      %1798 = vst.msk [vmem:[%s1739 + $0x209] sm:$0xff] %vm385, %v1285
      %1799 = vst.msk [vmem:[%s1739 + $0x211] sm:$0xff] %vm385, %v1286
      %1800 = vst.msk [vmem:[%s1739 + $0x219] sm:$0xff] %vm385, %v1287
      %1801 = vst.msk [vmem:[%s1739 + $0x221] sm:$0xff] %vm385, %v1288
      %1802 = vst.msk [vmem:[%s1739 + $0x229] sm:$0xff] %vm385, %v1289
      %1803 = vst.msk [vmem:[%s1739 + $0x231] sm:$0xff] %vm385, %v1290
      %1804 = vst.msk [vmem:[%s1739 + $0x241] sm:$0xff] %vm385, %v1291
      %1805 = vst.msk [vmem:[%s1739 + $0x249] sm:$0xff] %vm385, %v1292
      %1806 = vst.msk [vmem:[%s1739 + $0x251] sm:$0xff] %vm385, %v1293
      %1807 = vst.msk [vmem:[%s1739 + $0x259] sm:$0xff] %vm385, %v1294
      %1808 = vst.msk [vmem:[%s1739 + $0x261] sm:$0xff] %vm385, %v1295
      %1809 = vst.msk [vmem:[%s1739 + $0x269] sm:$0xff] %vm385, %v1296
      %1810 = vst.msk [vmem:[%s1739 + $0x271] sm:$0xff] %vm385, %v1297
      %1811 = vst.msk [vmem:[%s1739 + $0x279] sm:$0xff] %vm385, %v1298
      %1812 = vst.msk [vmem:[%s1739 + $0x289] sm:$0xff] %vm385, %v1299
      %1813 = vst.msk [vmem:[%s1739 + $0x291] sm:$0xff] %vm385, %v1300
      %1814 = vst.msk [vmem:[%s1739 + $0x299] sm:$0xff] %vm385, %v1301
      %1815 = vst.msk [vmem:[%s1739 + $0x2a1] sm:$0xff] %vm385, %v1302
      %1816 = vst.msk [vmem:[%s1739 + $0x2a9] sm:$0xff] %vm385, %v1303
      %1817 = vst.msk [vmem:[%s1739 + $0x2b1] sm:$0xff] %vm385, %v1304
      %1818 = vst.msk [vmem:[%s1739 + $0x2b9] sm:$0xff] %vm385, %v1305
      %1819 = vst.msk [vmem:[%s1739 + $0x2c1] sm:$0xff] %vm385, %v1306
      %1820 = vst.msk [vmem:[%s1739 + $0x2d1] sm:$0xff] %vm385, %v1307
      %1821 = vst.msk [vmem:[%s1739 + $0x2d9] sm:$0xff] %vm385, %v1308
      %1822 = vst.msk [vmem:[%s1739 + $0x2e1] sm:$0xff] %vm385, %v1309
      %1823 = vst.msk [vmem:[%s1739 + $0x2e9] sm:$0xff] %vm385, %v1310
      %1824 = vst.msk [vmem:[%s1739 + $0x2f1] sm:$0xff] %vm385, %v1311
      %1825 = vst.msk [vmem:[%s1739 + $0x2f9] sm:$0xff] %vm385, %v1312
      %1826 = vst.msk [vmem:[%s1739 + $0x301] sm:$0xff] %vm385, %v1313
      %1827 = vst.msk [vmem:[%s1739 + $0x309] sm:$0xff] %vm385, %v1314
      %1828 = vst.msk [vmem:[%s1739 + $0x319] sm:$0xff] %vm385, %v1315
      %1829 = vst.msk [vmem:[%s1739 + $0x321] sm:$0xff] %vm385, %v1316
      %1830 = vst.msk [vmem:[%s1739 + $0x329] sm:$0xff] %vm385, %v1317
      %1831 = vst.msk [vmem:[%s1739 + $0x331] sm:$0xff] %vm385, %v1318
      %1832 = vst.msk [vmem:[%s1739 + $0x339] sm:$0xff] %vm385, %v1319
      %1833 = vst.msk [vmem:[%s1739 + $0x341] sm:$0xff] %vm385, %v1320
      %1834 = vst.msk [vmem:[%s1739 + $0x349] sm:$0xff] %vm385, %v1321
      %1835 = vst.msk [vmem:[%s1739 + $0x351] sm:$0xff] %vm385, %v1322
      %1836 = vst.msk [vmem:[%s1739 + $0x361] sm:$0xff] %vm385, %v1323
      %1837 = vst.msk [vmem:[%s1739 + $0x369] sm:$0xff] %vm385, %v1324
      %1838 = vst.msk [vmem:[%s1739 + $0x371] sm:$0xff] %vm385, %v1325
      %1839 = vst.msk [vmem:[%s1739 + $0x379] sm:$0xff] %vm385, %v1326
      %1840 = vst.msk [vmem:[%s1739 + $0x381] sm:$0xff] %vm385, %v1327
      %1841 = vst.msk [vmem:[%s1739 + $0x389] sm:$0xff] %vm385, %v1328
      %1842 = vst.msk [vmem:[%s1739 + $0x391] sm:$0xff] %vm385, %v1329
      %1843 = vst.msk [vmem:[%s1739 + $0x399] sm:$0xff] %vm385, %v1330
      %1844 = vst.msk [vmem:[%s1739 + $0x3a9] sm:$0xff] %vm385, %v1331
      %1845 = vst.msk [vmem:[%s1739 + $0x3b1] sm:$0xff] %vm385, %v1332
      %1846 = vst.msk [vmem:[%s1739 + $0x3b9] sm:$0xff] %vm385, %v1333
      %1847 = vst.msk [vmem:[%s1739 + $0x3c1] sm:$0xff] %vm385, %v1334
      %1848 = vst.msk [vmem:[%s1739 + $0x3c9] sm:$0xff] %vm385, %v1335
      %1849 = vst.msk [vmem:[%s1739 + $0x3d1] sm:$0xff] %vm385, %v1336
      %1850 = vst.msk [vmem:[%s1739 + $0x3d9] sm:$0xff] %vm385, %v1337
      %1851 = vst.msk [vmem:[%s1739 + $0x3e1] sm:$0xff] %vm385, %v1338
      %1852 = vst.msk [vmem:[%s1739 + $0x3f1] sm:$0xff] %vm385, %v1339
      %1853 = vst.msk [vmem:[%s1739 + $0x3f9] sm:$0xff] %vm385, %v1340
      %1854 = vst.msk [vmem:[%s1739 + $0x401] sm:$0xff] %vm385, %v1341
      %1855 = vst.msk [vmem:[%s1739 + $0x409] sm:$0xff] %vm385, %v1342
      %1856 = vst.msk [vmem:[%s1739 + $0x411] sm:$0xff] %vm385, %v1343
      %1857 = vst.msk [vmem:[%s1739 + $0x419] sm:$0xff] %vm385, %v1344
      %1858 = vst.msk [vmem:[%s1739 + $0x421] sm:$0xff] %vm385, %v1345
      %1859 = vst.msk [vmem:[%s1739 + $0x429] sm:$0xff] %vm385, %v1346
      %1860 = vst.msk [vmem:[%s1739 + $0x439] sm:$0xff] %vm385, %v1347
      %1861 = vst.msk [vmem:[%s1739 + $0x441] sm:$0xff] %vm385, %v1348
      %1862 = vst.msk [vmem:[%s1739 + $0x449] sm:$0xff] %vm385, %v1349
      %1863 = vst.msk [vmem:[%s1739 + $0x451] sm:$0xff] %vm385, %v1350
      %1864 = vst.msk [vmem:[%s1739 + $0x459] sm:$0xff] %vm385, %v1351
      %1865 = vst.msk [vmem:[%s1739 + $0x461] sm:$0xff] %vm385, %v1352
      %1866 = vst.msk [vmem:[%s1739 + $0x469] sm:$0xff] %vm385, %v1353
      %1867 = vst.msk [vmem:[%s1739 + $0x471] sm:$0xff] %vm385, %v1354
      %1868 = vst.msk [vmem:[%s1739 + $0x481] sm:$0xff] %vm385, %v1355
      %1869 = vst.msk [vmem:[%s1739 + $0x489] sm:$0xff] %vm385, %v1356
      %1870 = vst.msk [vmem:[%s1739 + $0x491] sm:$0xff] %vm385, %v1357
      %1871 = vst.msk [vmem:[%s1739 + $0x499] sm:$0xff] %vm385, %v1358
      %1872 = vst.msk [vmem:[%s1739 + $0x4a1] sm:$0xff] %vm385, %v1359
      %1873 = vst.msk [vmem:[%s1739 + $0x4a9] sm:$0xff] %vm385, %v1360
      %1874 = vst.msk [vmem:[%s1739 + $0x4b1] sm:$0xff] %vm385, %v1361
      %1875 = vst.msk [vmem:[%s1739 + $0x4b9] sm:$0xff] %vm385, %v1362
      %1876 = vst.msk [vmem:[%s1739 + $0x4c9] sm:$0xff] %vm385, %v1363
      %1877 = vst.msk [vmem:[%s1739 + $0x4d1] sm:$0xff] %vm385, %v1364
      %1878 = vst.msk [vmem:[%s1739 + $0x4d9] sm:$0xff] %vm385, %v1365
      %1879 = vst.msk [vmem:[%s1739 + $0x4e1] sm:$0xff] %vm385, %v1366
      %1880 = vst.msk [vmem:[%s1739 + $0x4e9] sm:$0xff] %vm385, %v1367
      %1881 = vst.msk [vmem:[%s1739 + $0x4f1] sm:$0xff] %vm385, %v1368
      %1882 = vst.msk [vmem:[%s1739 + $0x4f9] sm:$0xff] %vm385, %v1369
      %1883 = vst.msk [vmem:[%s1739 + $0x501] sm:$0xff] %vm385, %v1370
      %1884 = vst.msk [vmem:[%s1739 + $0x511] sm:$0xff] %vm385, %v1371
      %1885 = vst.msk [vmem:[%s1739 + $0x519] sm:$0xff] %vm385, %v1372
      %1886 = vst.msk [vmem:[%s1739 + $0x521] sm:$0xff] %vm385, %v1373
      %1887 = vst.msk [vmem:[%s1739 + $0x529] sm:$0xff] %vm385, %v1374
      %1888 = vst.msk [vmem:[%s1739 + $0x531] sm:$0xff] %vm385, %v1375
      %1889 = vst.msk [vmem:[%s1739 + $0x539] sm:$0xff] %vm385, %v1376
      %1890 = vst.msk [vmem:[%s1739 + $0x541] sm:$0xff] %vm385, %v1377
      %1891 = vst.msk [vmem:[%s1739 + $0x549] sm:$0xff] %vm385, %v1378
      %1892 = vst.msk [vmem:[%s1739 + $0x559] sm:$0xff] %vm385, %v1379
      %1893 = vst.msk [vmem:[%s1739 + $0x561] sm:$0xff] %vm385, %v1380
      %1894 = vst.msk [vmem:[%s1739 + $0x569] sm:$0xff] %vm385, %v1381
      %1895 = vst.msk [vmem:[%s1739 + $0x571] sm:$0xff] %vm385, %v1382
      %1896 = vst.msk [vmem:[%s1739 + $0x579] sm:$0xff] %vm385, %v1383
      %1897 = vst.msk [vmem:[%s1739 + $0x581] sm:$0xff] %vm385, %v1384
      %1898 = vst.msk [vmem:[%s1739 + $0x589] sm:$0xff] %vm385, %v1385
      %1899 = vst.msk [vmem:[%s1739 + $0x591] sm:$0xff] %vm385, %v1386
      %1900 = vst.msk [vmem:[%s1739 + $0x5a1] sm:$0xff] %vm385, %v1387
      %1901 = vst.msk [vmem:[%s1739 + $0x5a9] sm:$0xff] %vm385, %v1388
      %1902 = vst.msk [vmem:[%s1739 + $0x5b1] sm:$0xff] %vm385, %v1389
      %1903 = vst.msk [vmem:[%s1739 + $0x5b9] sm:$0xff] %vm385, %v1390
      %1904 = vst.msk [vmem:[%s1739 + $0x5c1] sm:$0xff] %vm385, %v1391
      %1905 = vst.msk [vmem:[%s1739 + $0x5c9] sm:$0xff] %vm385, %v1392
      %1906 = vst.msk [vmem:[%s1739 + $0x5d1] sm:$0xff] %vm385, %v1393
      %1907 = vst.msk [vmem:[%s1739 + $0x5d9] sm:$0xff] %vm385, %v1394
      %1908 = vst.msk [vmem:[%s1739 + $0x5e9] sm:$0xff] %vm385, %v1395
      %1909 = vst.msk [vmem:[%s1739 + $0x5f1] sm:$0xff] %vm385, %v1396
      %1910 = vst.msk [vmem:[%s1739 + $0x5f9] sm:$0xff] %vm385, %v1397
      %1911 = vst.msk [vmem:[%s1739 + $0x601] sm:$0xff] %vm385, %v1398
      %1912 = vst.msk [vmem:[%s1739 + $0x609] sm:$0xff] %vm385, %v1399
      %1913 = vst.msk [vmem:[%s1739 + $0x611] sm:$0xff] %vm385, %v1400
      %1914 = vst.msk [vmem:[%s1739 + $0x619] sm:$0xff] %vm385, %v1401
      %1915 = vst.msk [vmem:[%s1739 + $0x621] sm:$0xff] %vm385, %v1402
      %1916 = vst.msk [vmem:[%s1739 + $0x631] sm:$0xff] %vm385, %v1403
      %1917 = vst.msk [vmem:[%s1739 + $0x639] sm:$0xff] %vm385, %v1404
      %1918 = vst.msk [vmem:[%s1739 + $0x641] sm:$0xff] %vm385, %v1405
      %1919 = vst.msk [vmem:[%s1739 + $0x649] sm:$0xff] %vm385, %v1406
      %1920 = vst.msk [vmem:[%s1739 + $0x651] sm:$0xff] %vm385, %v1407
      %1921 = vst.msk [vmem:[%s1739 + $0x659] sm:$0xff] %vm385, %v1408
      %1922 = vst.msk [vmem:[%s1739 + $0x661] sm:$0xff] %vm385, %v1409
      %1923 = vst.msk [vmem:[%s1739 + $0x669] sm:$0xff] %vm385, %v1410
      %1924 = vst.msk [vmem:[%s1739 + $0x679] sm:$0xff] %vm385, %v1411
      %1925 = vst.msk [vmem:[%s1739 + $0x681] sm:$0xff] %vm385, %v1412
      %1926 = vst.msk [vmem:[%s1739 + $0x689] sm:$0xff] %vm385, %v1413
      %1927 = vst.msk [vmem:[%s1739 + $0x691] sm:$0xff] %vm385, %v1414
      %1928 = vst.msk [vmem:[%s1739 + $0x699] sm:$0xff] %vm385, %v1415
      %1929 = vst.msk [vmem:[%s1739 + $0x6a1] sm:$0xff] %vm385, %v1416
      %1930 = vst.msk [vmem:[%s1739 + $0x6a9] sm:$0xff] %vm385, %v1417
      %1931 = vst.msk [vmem:[%s1739 + $0x6b1] sm:$0xff] %vm385, %v1418
      %1932 = vst.msk [vmem:[%s1739 + $0x6c1] sm:$0xff] %vm385, %v1419
      %1933 = vst.msk [vmem:[%s1739 + $0x6c9] sm:$0xff] %vm385, %v1420
      %1934 = vst.msk [vmem:[%s1739 + $0x6d1] sm:$0xff] %vm385, %v1421
      %1935 = vst.msk [vmem:[%s1739 + $0x6d9] sm:$0xff] %vm385, %v1422
      %1936 = vst.msk [vmem:[%s1739 + $0x6e1] sm:$0xff] %vm385, %v1423
      %1937 = vst.msk [vmem:[%s1739 + $0x6e9] sm:$0xff] %vm385, %v1424
      %1938 = vst.msk [vmem:[%s1739 + $0x6f1] sm:$0xff] %vm385, %v1425
      %1939 = vst.msk [vmem:[%s1739 + $0x6f9] sm:$0xff] %vm385, %v1426
      %1940 = vst.msk [vmem:[%s1739 + $0x709] sm:$0xff] %vm385, %v1427
      %1941 = vst.msk [vmem:[%s1739 + $0x711] sm:$0xff] %vm385, %v1428
      %1942 = vst.msk [vmem:[%s1739 + $0x719] sm:$0xff] %vm385, %v1429
      %1943 = vst.msk [vmem:[%s1739 + $0x721] sm:$0xff] %vm385, %v1430
      %1944 = vst.msk [vmem:[%s1739 + $0x729] sm:$0xff] %vm385, %v1431
      %1945 = vst.msk [vmem:[%s1739 + $0x731] sm:$0xff] %vm385, %v1432
      %1946 = vst.msk [vmem:[%s1739 + $0x739] sm:$0xff] %vm385, %v1433
      %1947 = vst.msk [vmem:[%s1739 + $0x741] sm:$0xff] %vm385, %v1434
      %1948 = vst.msk [vmem:[%s1739 + $0x751] sm:$0xff] %vm385, %v1435
      %1949 = vst.msk [vmem:[%s1739 + $0x759] sm:$0xff] %vm385, %v1436
      %1950 = vst.msk [vmem:[%s1739 + $0x761] sm:$0xff] %vm385, %v1437
      %1951 = vst.msk [vmem:[%s1739 + $0x769] sm:$0xff] %vm385, %v1438
      %1952 = vst.msk [vmem:[%s1739 + $0x771] sm:$0xff] %vm385, %v1439
      %1953 = vst.msk [vmem:[%s1739 + $0x779] sm:$0xff] %vm385, %v1440
      %1954 = vst.msk [vmem:[%s1739 + $0x781] sm:$0xff] %vm385, %v1441
      %1955 = vst.msk [vmem:[%s1739 + $0x789] sm:$0xff] %vm385, %v1442
      %1956 = vst.msk [vmem:[%s1739 + $0x799] sm:$0xff] %vm385, %v1443
      %1957 = vst.msk [vmem:[%s1739 + $0x7a1] sm:$0xff] %vm385, %v1444
      %1958 = vst.msk [vmem:[%s1739 + $0x7a9] sm:$0xff] %vm385, %v1445
      %1959 = vst.msk [vmem:[%s1739 + $0x7b1] sm:$0xff] %vm385, %v1446
      %1960 = vst.msk [vmem:[%s1739 + $0x7b9] sm:$0xff] %vm385, %v1447
      %1961 = vst.msk [vmem:[%s1739 + $0x7c1] sm:$0xff] %vm385, %v1448
      %1962 = vst.msk [vmem:[%s1739 + $0x7c9] sm:$0xff] %vm385, %v1449
      %1963 = vst.msk [vmem:[%s1739 + $0x7d1] sm:$0xff] %vm385, %v1450
      %1964 = vst.msk [vmem:[%s1739 + $0x7e1] sm:$0xff] %vm385, %v1451
      %1965 = vst.msk [vmem:[%s1739 + $0x7e9] sm:$0xff] %vm385, %v1452
      %1966 = vst.msk [vmem:[%s1739 + $0x7f1] sm:$0xff] %vm385, %v1453
      %1967 = vst.msk [vmem:[%s1739 + $0x7f9] sm:$0xff] %vm385, %v1454
      %1968 = vst.msk [vmem:[%s1739 + $0x801] sm:$0xff] %vm385, %v1455
      %1969 = vst.msk [vmem:[%s1739 + $0x809] sm:$0xff] %vm385, %v1456
      %1970 = vst.msk [vmem:[%s1739 + $0x811] sm:$0xff] %vm385, %v1457
      %1971 = vst.msk [vmem:[%s1739 + $0x819] sm:$0xff] %vm385, %v1458
      %1972 = vst.msk [vmem:[%s1739 + $0x829] sm:$0xff] %vm385, %v1459
      %1973 = vst.msk [vmem:[%s1739 + $0x831] sm:$0xff] %vm385, %v1460
      %1974 = vst.msk [vmem:[%s1739 + $0x839] sm:$0xff] %vm385, %v1461
      %1975 = vst.msk [vmem:[%s1739 + $0x841] sm:$0xff] %vm385, %v1462
      %1976 = vst.msk [vmem:[%s1739 + $0x849] sm:$0xff] %vm385, %v1463
      %1977 = vst.msk [vmem:[%s1739 + $0x851] sm:$0xff] %vm385, %v1464
      %1978 = vst.msk [vmem:[%s1739 + $0x859] sm:$0xff] %vm385, %v1465
      %1979 = vst.msk [vmem:[%s1739 + $0x861] sm:$0xff] %vm385, %v1466
      %1980 = vst.msk [vmem:[%s1739 + $0x871] sm:$0xff] %vm385, %v1467
      %1981 = vst.msk [vmem:[%s1739 + $0x879] sm:$0xff] %vm385, %v1468
      %1982 = vst.msk [vmem:[%s1739 + $0x881] sm:$0xff] %vm385, %v1469
      %1983 = vst.msk [vmem:[%s1739 + $0x889] sm:$0xff] %vm385, %v1470
      %1984 = vst.msk [vmem:[%s1739 + $0x891] sm:$0xff] %vm385, %v1471
      %1985 = vst.msk [vmem:[%s1739 + $0x899] sm:$0xff] %vm385, %v1472
      %1986 = vst.msk [vmem:[%s1739 + $0x8a1] sm:$0xff] %vm385, %v1473
      %1987 = vst.msk [vmem:[%s1739 + $0x8a9] sm:$0xff] %vm385, %v1474
      %1988 = vst.msk [vmem:[%s1739 + $0x8b9] sm:$0xff] %vm385, %v1475
      %1989 = vst.msk [vmem:[%s1739 + $0x8c1] sm:$0xff] %vm385, %v1476
      %1990 = vst.msk [vmem:[%s1739 + $0x8c9] sm:$0xff] %vm385, %v1477
      %1991 = vst.msk [vmem:[%s1739 + $0x8d1] sm:$0xff] %vm385, %v1478
      %1992 = vst.msk [vmem:[%s1739 + $0x8d9] sm:$0xff] %vm385, %v1479
      %1993 = vst.msk [vmem:[%s1739 + $0x8e1] sm:$0xff] %vm385, %v1480
      %1994 = vst.msk [vmem:[%s1739 + $0x8e9] sm:$0xff] %vm385, %v1481
      %1995 = vst.msk [vmem:[%s1739 + $0x8f1] sm:$0xff] %vm385, %v1482
      %1996 = vst.msk [vmem:[%s1739 + $0x901] sm:$0xff] %vm385, %v1483
      %1997 = vst.msk [vmem:[%s1739 + $0x909] sm:$0xff] %vm385, %v1484
      %1998 = vst.msk [vmem:[%s1739 + $0x911] sm:$0xff] %vm385, %v1485
      %1999 = vst.msk [vmem:[%s1739 + $0x919] sm:$0xff] %vm385, %v1486
      %2000 = vst.msk [vmem:[%s1739 + $0x921] sm:$0xff] %vm385, %v1487
      %2001 = vst.msk [vmem:[%s1739 + $0x929] sm:$0xff] %vm385, %v1488
      %2002 = vst.msk [vmem:[%s1739 + $0x931] sm:$0xff] %vm385, %v1489
      %2003 = vst.msk [vmem:[%s1739 + $0x939] sm:$0xff] %vm385, %v1490
      %2004 = vst.msk [vmem:[%s1739 + $0x949] sm:$0xff] %vm385, %v1491
      %2005 = vst.msk [vmem:[%s1739 + $0x951] sm:$0xff] %vm385, %v1492
      %2006 = vst.msk [vmem:[%s1739 + $0x959] sm:$0xff] %vm385, %v1493
      %2007 = vst.msk [vmem:[%s1739 + $0x961] sm:$0xff] %vm385, %v1494
      %2008 = vst.msk [vmem:[%s1739 + $0x969] sm:$0xff] %vm385, %v1495
      %2009 = vst.msk [vmem:[%s1739 + $0x971] sm:$0xff] %vm385, %v1496
      %2010 = vst.msk [vmem:[%s1739 + $0x979] sm:$0xff] %vm385, %v1497
      %2011 = vst.msk [vmem:[%s1739 + $0x981] sm:$0xff] %vm385, %v1498
      %2012 = vst.msk [vmem:[%s1739 + $0x991] sm:$0xff] %vm385, %v1499
      %2013 = vst.msk [vmem:[%s1739 + $0x999] sm:$0xff] %vm385, %v1500
      %2014 = vst.msk [vmem:[%s1739 + $0x9a1] sm:$0xff] %vm385, %v1501
      %2015 = vst.msk [vmem:[%s1739 + $0x9a9] sm:$0xff] %vm385, %v1502
      %2016 = vst.msk [vmem:[%s1739 + $0x9b1] sm:$0xff] %vm385, %v1503
      %2017 = vst.msk [vmem:[%s1739 + $0x9b9] sm:$0xff] %vm385, %v1504
      %2018 = vst.msk [vmem:[%s1739 + $0x9c1] sm:$0xff] %vm385, %v1505
      %2019 = vst.msk [vmem:[%s1739 + $0x9c9] sm:$0xff] %vm385, %v1506
      %2020 = vst.msk [vmem:[%s1739 + $0x9d9] sm:$0xff] %vm385, %v1507
      %2021 = vst.msk [vmem:[%s1739 + $0x9e1] sm:$0xff] %vm385, %v1508
      %2022 = vst.msk [vmem:[%s1739 + $0x9e9] sm:$0xff] %vm385, %v1509
      %2023 = vst.msk [vmem:[%s1739 + $0x9f1] sm:$0xff] %vm385, %v1510
      %2024 = vst.msk [vmem:[%s1739 + $0x9f9] sm:$0xff] %vm385, %v1511
      %2025 = vst.msk [vmem:[%s1739 + $0xa01] sm:$0xff] %vm385, %v1512
      %2026 = vst.msk [vmem:[%s1739 + $0xa09] sm:$0xff] %vm385, %v1513
      %2027 = vst.msk [vmem:[%s1739 + $0xa11] sm:$0xff] %vm385, %v1514
      %2028 = vst.msk [vmem:[%s1739 + $0xa21] sm:$0xff] %vm385, %v1515
      %2029 = vst.msk [vmem:[%s1739 + $0xa29] sm:$0xff] %vm385, %v1516
      %2030 = vst.msk [vmem:[%s1739 + $0xa31] sm:$0xff] %vm385, %v1517
      %2031 = vst.msk [vmem:[%s1739 + $0xa39] sm:$0xff] %vm385, %v1518
      %2032 = vst.msk [vmem:[%s1739 + $0xa41] sm:$0xff] %vm385, %v1519
      %2033 = vst.msk [vmem:[%s1739 + $0xa49] sm:$0xff] %vm385, %v1520
      %2034 = vst.msk [vmem:[%s1739 + $0xa51] sm:$0xff] %vm385, %v1521
      %2035 = vst.msk [vmem:[%s1739 + $0xa59] sm:$0xff] %vm385, %v1522
      %2036 = vst.msk [vmem:[%s1739 + $0xa69] sm:$0xff] %vm385, %v1523
      %2037 = vst.msk [vmem:[%s1739 + $0xa71] sm:$0xff] %vm385, %v1524
      %2038 = vst.msk [vmem:[%s1739 + $0xa79] sm:$0xff] %vm385, %v1525
      %2039 = vst.msk [vmem:[%s1739 + $0xa81] sm:$0xff] %vm385, %v1526
      %2040 = vst.msk [vmem:[%s1739 + $0xa89] sm:$0xff] %vm385, %v1527
      %2041 = vst.msk [vmem:[%s1739 + $0xa91] sm:$0xff] %vm385, %v1528
      %2042 = vst.msk [vmem:[%s1739 + $0xa99] sm:$0xff] %vm385, %v1529
      %2043 = vst.msk [vmem:[%s1739 + $0xaa1] sm:$0xff] %vm385, %v1530
      %2044 = vst.msk [vmem:[%s1739 + $0xab1] sm:$0xff] %vm385, %v1531
      %2045 = vst.msk [vmem:[%s1739 + $0xab9] sm:$0xff] %vm385, %v1532
      %2046 = vst.msk [vmem:[%s1739 + $0xac1] sm:$0xff] %vm385, %v1533
      %2047 = vst.msk [vmem:[%s1739 + $0xac9] sm:$0xff] %vm385, %v1534
      %2048 = vst.msk [vmem:[%s1739 + $0xad1] sm:$0xff] %vm385, %v1535
      %2049 = vst.msk [vmem:[%s1739 + $0xad9] sm:$0xff] %vm385, %v1536
      %2050 = vst.msk [vmem:[%s1739 + $0xae1] sm:$0xff] %vm385, %v1537
      %2051 = vst.msk [vmem:[%s1739 + $0xae9] sm:$0xff] %vm385, %v1538
      %2052 = vst.msk [vmem:[%s1739 + $0xaf9] sm:$0xff] %vm385, %v1539
      %2053 = vst.msk [vmem:[%s1739 + $0xb01] sm:$0xff] %vm385, %v1540
      %2054 = vst.msk [vmem:[%s1739 + $0xb09] sm:$0xff] %vm385, %v1541
      %2055 = vst.msk [vmem:[%s1739 + $0xb11] sm:$0xff] %vm385, %v1542
      %2056 = vst.msk [vmem:[%s1739 + $0xb19] sm:$0xff] %vm385, %v1543
      %2057 = vst.msk [vmem:[%s1739 + $0xb21] sm:$0xff] %vm385, %v1544
      %2058 = vst.msk [vmem:[%s1739 + $0xb29] sm:$0xff] %vm385, %v1545
      %2059 = vst.msk [vmem:[%s1739 + $0xb31] sm:$0xff] %vm385, %v1546
      %2060 = vst.msk [vmem:[%s1739 + $0xb41] sm:$0xff] %vm385, %v1547
      %2061 = vst.msk [vmem:[%s1739 + $0xb49] sm:$0xff] %vm385, %v1548
      %2062 = vst.msk [vmem:[%s1739 + $0xb51] sm:$0xff] %vm385, %v1549
      %2063 = vst.msk [vmem:[%s1739 + $0xb59] sm:$0xff] %vm385, %v1550
      %2064 = vst.msk [vmem:[%s1739 + $0xb61] sm:$0xff] %vm385, %v1551
      %2065 = vst.msk [vmem:[%s1739 + $0xb69] sm:$0xff] %vm385, %v1552
      %2066 = vst.msk [vmem:[%s1739 + $0xb71] sm:$0xff] %vm385, %v1553
      %2067 = vst.msk [vmem:[%s1739 + $0xb79] sm:$0xff] %vm385, %v1554
      %2068 = vst.msk [vmem:[%s1739 + $0xb89] sm:$0xff] %vm385, %v1555
      %2069 = vst.msk [vmem:[%s1739 + $0xb91] sm:$0xff] %vm385, %v1556
      %2070 = vst.msk [vmem:[%s1739 + $0xb99] sm:$0xff] %vm385, %v1557
      %2071 = vst.msk [vmem:[%s1739 + $0xba1] sm:$0xff] %vm385, %v1558
      %2072 = vst.msk [vmem:[%s1739 + $0xba9] sm:$0xff] %vm385, %v1559
      %2073 = vst.msk [vmem:[%s1739 + $0xbb1] sm:$0xff] %vm385, %v1560
      %2074 = vst.msk [vmem:[%s1739 + $0xbb9] sm:$0xff] %vm385, %v1561
      %2075 = vst.msk [vmem:[%s1739 + $0xbc1] sm:$0xff] %vm385, %v1562
      %2076 = vst.msk [vmem:[%s1739 + $0xbd1] sm:$0xff] %vm385, %v1563
      %2077 = vst.msk [vmem:[%s1739 + $0xbd9] sm:$0xff] %vm385, %v1564
      %2078 = vst.msk [vmem:[%s1739 + $0xbe1] sm:$0xff] %vm385, %v1565
      %2079 = vst.msk [vmem:[%s1739 + $0xbe9] sm:$0xff] %vm385, %v1566
      %2080 = vst.msk [vmem:[%s1739 + $0xbf1] sm:$0xff] %vm385, %v1567
      %2081 = vst.msk [vmem:[%s1739 + $0xbf9] sm:$0xff] %vm385, %v1568
      %2082 = vst.msk [vmem:[%s1739 + $0xc01] sm:$0xff] %vm385, %v1569
      %2083 = vst.msk [vmem:[%s1739 + $0xc09] sm:$0xff] %vm385, %v1570
      %2084 = vst.msk [vmem:[%s1739 + $0xc19] sm:$0xff] %vm385, %v1571
      %2085 = vst.msk [vmem:[%s1739 + $0xc21] sm:$0xff] %vm385, %v1572
      %2086 = vst.msk [vmem:[%s1739 + $0xc29] sm:$0xff] %vm385, %v1573
      %2087 = vst.msk [vmem:[%s1739 + $0xc31] sm:$0xff] %vm385, %v1574
      %2088 = vst.msk [vmem:[%s1739 + $0xc39] sm:$0xff] %vm385, %v1575
      %2089 = vst.msk [vmem:[%s1739 + $0xc41] sm:$0xff] %vm385, %v1576
      %2090 = vst.msk [vmem:[%s1739 + $0xc49] sm:$0xff] %vm385, %v1577
      %2091 = vst.msk [vmem:[%s1739 + $0xc51] sm:$0xff] %vm385, %v1578
      %2092 = vst.msk [vmem:[%s1739 + $0xc61] sm:$0xff] %vm385, %v1579
      %2093 = vst.msk [vmem:[%s1739 + $0xc69] sm:$0xff] %vm385, %v1580
      %2094 = vst.msk [vmem:[%s1739 + $0xc71] sm:$0xff] %vm385, %v1581
      %2095 = vst.msk [vmem:[%s1739 + $0xc79] sm:$0xff] %vm385, %v1582
      %2096 = vst.msk [vmem:[%s1739 + $0xc81] sm:$0xff] %vm385, %v1583
      %2097 = vst.msk [vmem:[%s1739 + $0xc89] sm:$0xff] %vm385, %v1584
      %2098 = vst.msk [vmem:[%s1739 + $0xc91] sm:$0xff] %vm385, %v1585
      %2099 = vst.msk [vmem:[%s1739 + $0xc99] sm:$0xff] %vm385, %v1586
      %2100 = vst.msk [vmem:[%s1739 + $0xca9] sm:$0xff] %vm385, %v1587
      %2101 = vst.msk [vmem:[%s1739 + $0xcb1] sm:$0xff] %vm385, %v1588
      %2102 = vst.msk [vmem:[%s1739 + $0xcb9] sm:$0xff] %vm385, %v1589
      %2103 = vst.msk [vmem:[%s1739 + $0xcc1] sm:$0xff] %vm385, %v1590
      %2104 = vst.msk [vmem:[%s1739 + $0xcc9] sm:$0xff] %vm385, %v1591
      %2105 = vst.msk [vmem:[%s1739 + $0xcd1] sm:$0xff] %vm385, %v1592
      %2106 = vst.msk [vmem:[%s1739 + $0xcd9] sm:$0xff] %vm385, %v1593
      %2107 = vst.msk [vmem:[%s1739 + $0xce1] sm:$0xff] %vm385, %v1594
      %2108 = vst.msk [vmem:[%s1739 + $0xcf1] sm:$0xff] %vm385, %v1595
      %2109 = vst.msk [vmem:[%s1739 + $0xcf9] sm:$0xff] %vm385, %v1596
      %2110 = vst.msk [vmem:[%s1739 + $0xd01] sm:$0xff] %vm385, %v1597
      %2111 = vst.msk [vmem:[%s1739 + $0xd09] sm:$0xff] %vm385, %v1598
      %2112 = vst.msk [vmem:[%s1739 + $0xd11] sm:$0xff] %vm385, %v1599
      %2113 = vst.msk [vmem:[%s1739 + $0xd19] sm:$0xff] %vm385, %v1600
      %2114 = vst.msk [vmem:[%s1739 + $0xd21] sm:$0xff] %vm385, %v1601
      %2115 = vst.msk [vmem:[%s1739 + $0xd29] sm:$0xff] %vm385, %v1602
      %2116 = vst.msk [vmem:[%s1739 + $0xd39] sm:$0xff] %vm385, %v1603
      %2117 = vst.msk [vmem:[%s1739 + $0xd41] sm:$0xff] %vm385, %v1604
      %2118 = vst.msk [vmem:[%s1739 + $0xd49] sm:$0xff] %vm385, %v1605
      %2119 = vst.msk [vmem:[%s1739 + $0xd51] sm:$0xff] %vm385, %v1606
      %2120 = vst.msk [vmem:[%s1739 + $0xd59] sm:$0xff] %vm385, %v1607
      %2121 = vst.msk [vmem:[%s1739 + $0xd61] sm:$0xff] %vm385, %v1608
      %2122 = vst.msk [vmem:[%s1739 + $0xd69] sm:$0xff] %vm385, %v1609
      %2123 = vst.msk [vmem:[%s1739 + $0xd71] sm:$0xff] %vm385, %v1610
      %2124 = vst.msk [vmem:[%s1739 + $0xd81] sm:$0xff] %vm385, %v1611
      %2125 = vst.msk [vmem:[%s1739 + $0xd89] sm:$0xff] %vm385, %v1612
      %2126 = vst.msk [vmem:[%s1739 + $0xd91] sm:$0xff] %vm385, %v1613
      %2127 = vst.msk [vmem:[%s1739 + $0xd99] sm:$0xff] %vm385, %v1614
      %2128 = vst.msk [vmem:[%s1739 + $0xda1] sm:$0xff] %vm385, %v1615
      %2129 = vst.msk [vmem:[%s1739 + $0xda9] sm:$0xff] %vm385, %v1616
      %2130 = vst.msk [vmem:[%s1739 + $0xdb1] sm:$0xff] %vm385, %v1617
      %2131 = vst.msk [vmem:[%s1739 + $0xdb9] sm:$0xff] %vm385, %v1618
      %2132 = vst.msk [vmem:[%s1739 + $0xdc9] sm:$0xff] %vm385, %v1619
      %2133 = vst.msk [vmem:[%s1739 + $0xdd1] sm:$0xff] %vm385, %v1620
      %2134 = vst.msk [vmem:[%s1739 + $0xdd9] sm:$0xff] %vm385, %v1621
      %2135 = vst.msk [vmem:[%s1739 + $0xde1] sm:$0xff] %vm385, %v1622
      %2136 = vst.msk [vmem:[%s1739 + $0xde9] sm:$0xff] %vm385, %v1623
      %2137 = vst.msk [vmem:[%s1739 + $0xdf1] sm:$0xff] %vm385, %v1624
      %2138 = vst.msk [vmem:[%s1739 + $0xdf9] sm:$0xff] %vm385, %v1625
      %2139 = vst.msk [vmem:[%s1739 + $0xe01] sm:$0xff] %vm385, %v1626
      %2140 = vst.msk [vmem:[%s1739 + $0xe11] sm:$0xff] %vm385, %v1627
      %2141 = vst.msk [vmem:[%s1739 + $0xe19] sm:$0xff] %vm385, %v1628
      %2142 = vst.msk [vmem:[%s1739 + $0xe21] sm:$0xff] %vm385, %v1629
      %2143 = vst.msk [vmem:[%s1739 + $0xe29] sm:$0xff] %vm385, %v1630
      %2144 = vst.msk [vmem:[%s1739 + $0xe31] sm:$0xff] %vm385, %v1631
      %2145 = vst.msk [vmem:[%s1739 + $0xe39] sm:$0xff] %vm385, %v1632
      %2146 = vst.msk [vmem:[%s1739 + $0xe41] sm:$0xff] %vm385, %v1633
      %2147 = vst.msk [vmem:[%s1739 + $0xe49] sm:$0xff] %vm385, %v1634
      %2148 = vst.msk [vmem:[%s1739 + $0xe59] sm:$0xff] %vm385, %v1635
      %2149 = vst.msk [vmem:[%s1739 + $0xe61] sm:$0xff] %vm385, %v1636
      %2150 = vst.msk [vmem:[%s1739 + $0xe69] sm:$0xff] %vm385, %v1637
      %2151 = vst.msk [vmem:[%s1739 + $0xe71] sm:$0xff] %vm385, %v1638
      %2152 = vst.msk [vmem:[%s1739 + $0xe79] sm:$0xff] %vm385, %v1639
      %2153 = vst.msk [vmem:[%s1739 + $0xe81] sm:$0xff] %vm385, %v1640
      %2154 = vst.msk [vmem:[%s1739 + $0xe89] sm:$0xff] %vm385, %v1641
      %2155 = vst.msk [vmem:[%s1739 + $0xe91] sm:$0xff] %vm385, %v1642
      %2156 = vst.msk [vmem:[%s1739 + $0xea1] sm:$0xff] %vm385, %v1643
      %2157 = vst.msk [vmem:[%s1739 + $0xea9] sm:$0xff] %vm385, %v1644
      %2158 = vst.msk [vmem:[%s1739 + $0xeb1] sm:$0xff] %vm385, %v1645
      %2159 = vst.msk [vmem:[%s1739 + $0xeb9] sm:$0xff] %vm385, %v1646
      %2160 = vst.msk [vmem:[%s1739 + $0xec1] sm:$0xff] %vm385, %v1647
      %2161 = vst.msk [vmem:[%s1739 + $0xec9] sm:$0xff] %vm385, %v1648
      %2162 = vst.msk [vmem:[%s1739 + $0xed1] sm:$0xff] %vm385, %v1649
      %2163 = vst.msk [vmem:[%s1739 + $0xed9] sm:$0xff] %vm385, %v1650
      %2164 = vst.msk [vmem:[%s1739 + $0xee9] sm:$0xff] %vm385, %v1651
      %2165 = vst.msk [vmem:[%s1739 + $0xef1] sm:$0xff] %vm385, %v1652
      %2166 = vst.msk [vmem:[%s1739 + $0xef9] sm:$0xff] %vm385, %v1653
      %2167 = vst.msk [vmem:[%s1739 + $0xf01] sm:$0xff] %vm385, %v1654
      %2168 = vst.msk [vmem:[%s1739 + $0xf09] sm:$0xff] %vm385, %v1655
      %2169 = vst.msk [vmem:[%s1739 + $0xf11] sm:$0xff] %vm385, %v1656
      %2170 = vst.msk [vmem:[%s1739 + $0xf19] sm:$0xff] %vm385, %v1657
      %2171 = vst.msk [vmem:[%s1739 + $0xf21] sm:$0xff] %vm385, %v1658
      %2172 = vst.msk [vmem:[%s1739 + $0xf31] sm:$0xff] %vm385, %v1659
      %2173 = vst.msk [vmem:[%s1739 + $0xf39] sm:$0xff] %vm385, %v1660
      %2174 = vst.msk [vmem:[%s1739 + $0xf41] sm:$0xff] %vm385, %v1661
      %2175 = vst.msk [vmem:[%s1739 + $0xf49] sm:$0xff] %vm385, %v1662
      %2176 = vst.msk [vmem:[%s1739 + $0xf51] sm:$0xff] %vm385, %v1663
      %2177 = vst.msk [vmem:[%s1739 + $0xf59] sm:$0xff] %vm385, %v1664
      %2178 = vst.msk [vmem:[%s1739 + $0xf61] sm:$0xff] %vm385, %v1665
      %2179 = vst.msk [vmem:[%s1739 + $0xf69] sm:$0xff] %vm385, %v1666
      %2180 = vst.msk [vmem:[%s1739 + $0xf79] sm:$0xff] %vm385, %v1667
      %2181 = vst.msk [vmem:[%s1739 + $0xf81] sm:$0xff] %vm385, %v1668
      %2182 = vst.msk [vmem:[%s1739 + $0xf89] sm:$0xff] %vm385, %v1669
      %2183 = vst.msk [vmem:[%s1739 + $0xf91] sm:$0xff] %vm385, %v1670
      %2184 = vst.msk [vmem:[%s1739 + $0xf99] sm:$0xff] %vm385, %v1671
      %2185 = vst.msk [vmem:[%s1739 + $0xfa1] sm:$0xff] %vm385, %v1672
      %2186 = vst.msk [vmem:[%s1739 + $0xfa9] sm:$0xff] %vm385, %v1673
      %2187 = vst.msk [vmem:[%s1739 + $0xfb1] sm:$0xff] %vm385, %v1674
      %2188 = vst.msk [vmem:[%s1739 + $0xfc1] sm:$0xff] %vm385, %v1675
      %2189 = vst.msk [vmem:[%s1739 + $0xfc9] sm:$0xff] %vm385, %v1676
      %2190 = vst.msk [vmem:[%s1739 + $0xfd1] sm:$0xff] %vm385, %v1677
      %2191 = vst.msk [vmem:[%s1739 + $0xfd9] sm:$0xff] %vm385, %v1678
      %2192 = vst.msk [vmem:[%s1739 + $0xfe1] sm:$0xff] %vm385, %v1679
      %2193 = vst.msk [vmem:[%s1739 + $0xfe9] sm:$0xff] %vm385, %v1680
      %2194 = vst.msk [vmem:[%s1739 + $0xff1] sm:$0xff] %vm385, %v1681
      %2195 = vst.msk [vmem:[%s1739 + $0xff9] sm:$0xff] %vm385, %v1682
      %2196 = vst.msk [vmem:[%s1739 + $0x1009] sm:$0xff] %vm385, %v1683
      %2197 = vst.msk [vmem:[%s1739 + $0x1011] sm:$0xff] %vm385, %v1684
      %2198 = vst.msk [vmem:[%s1739 + $0x1019] sm:$0xff] %vm385, %v1685
      %2199 = vst.msk [vmem:[%s1739 + $0x1021] sm:$0xff] %vm385, %v1686
      %2200 = vst.msk [vmem:[%s1739 + $0x1029] sm:$0xff] %vm385, %v1687
      %2201 = vst.msk [vmem:[%s1739 + $0x1031] sm:$0xff] %vm385, %v1688
      %2202 = vst.msk [vmem:[%s1739 + $0x1039] sm:$0xff] %vm385, %v1689
      %2203 = vst.msk [vmem:[%s1739 + $0x1041] sm:$0xff] %vm385, %v1690
      %2204 = vst.msk [vmem:[%s1739 + $0x1051] sm:$0xff] %vm385, %v1691
      %2205 = vst.msk [vmem:[%s1739 + $0x1059] sm:$0xff] %vm385, %v1692
      %2206 = vst.msk [vmem:[%s1739 + $0x1061] sm:$0xff] %vm385, %v1693
      %2207 = vst.msk [vmem:[%s1739 + $0x1069] sm:$0xff] %vm385, %v1694
      %2208 = vst.msk [vmem:[%s1739 + $0x1071] sm:$0xff] %vm385, %v1695
      %2209 = vst.msk [vmem:[%s1739 + $0x1079] sm:$0xff] %vm385, %v1696
      %2210 = vst.msk [vmem:[%s1739 + $0x1081] sm:$0xff] %vm385, %v1697
      %2211 = vst.msk [vmem:[%s1739 + $0x1089] sm:$0xff] %vm385, %v1698
      %2212 = vst.msk [vmem:[%s1739 + $0x1099] sm:$0xff] %vm385, %v1699
      %2213 = vst.msk [vmem:[%s1739 + $0x10a1] sm:$0xff] %vm385, %v1700
      %2214 = vst.msk [vmem:[%s1739 + $0x10a9] sm:$0xff] %vm385, %v1701
      %2215 = vst.msk [vmem:[%s1739 + $0x10b1] sm:$0xff] %vm385, %v1702
      %2216 = vst.msk [vmem:[%s1739 + $0x10b9] sm:$0xff] %vm385, %v1703
      %2217 = vst.msk [vmem:[%s1739 + $0x10c1] sm:$0xff] %vm385, %v1704
      %2218 = vst.msk [vmem:[%s1739 + $0x10c9] sm:$0xff] %vm385, %v1705
      %2219 = vst.msk [vmem:[%s1739 + $0x10d1] sm:$0xff] %vm385, %v1706
      %2220 = vst.msk [vmem:[%s1739 + $0x10e1] sm:$0xff] %vm385, %v1707
      %2221 = vst.msk [vmem:[%s1739 + $0x10e9] sm:$0xff] %vm385, %v1708
      %2222 = vst.msk [vmem:[%s1739 + $0x10f1] sm:$0xff] %vm385, %v1709
      %2223 = vst.msk [vmem:[%s1739 + $0x10f9] sm:$0xff] %vm385, %v1710
      %2224 = vst.msk [vmem:[%s1739 + $0x1101] sm:$0xff] %vm385, %v1711
      %2225 = vst.msk [vmem:[%s1739 + $0x1109] sm:$0xff] %vm385, %v1712
      %2226 = vst.msk [vmem:[%s1739 + $0x1111] sm:$0xff] %vm385, %v1713
      %2227 = vst.msk [vmem:[%s1739 + $0x1119] sm:$0xff] %vm385, %v1714
      %2228 = vst.msk [vmem:[%s1739 + $0x1129] sm:$0xff] %vm385, %v1715
      %2229 = vst.msk [vmem:[%s1739 + $0x1131] sm:$0xff] %vm385, %v1716
      %2230 = vst.msk [vmem:[%s1739 + $0x1139] sm:$0xff] %vm385, %v1717
      %2231 = vst.msk [vmem:[%s1739 + $0x1141] sm:$0xff] %vm385, %v1718
      %2232 = vst.msk [vmem:[%s1739 + $0x1149] sm:$0xff] %vm385, %v1719
      %2233 = vst.msk [vmem:[%s1739 + $0x1151] sm:$0xff] %vm385, %v1720
      %2234 = vst.msk [vmem:[%s1739 + $0x1159] sm:$0xff] %vm385, %v1721
      %2235 = vst.msk [vmem:[%s1739 + $0x1161] sm:$0xff] %vm385, %v1722
      %2236 = vst.msk [vmem:[%s1739 + $0x1171] sm:$0xff] %vm385, %v1723
      %2237 = vst.msk [vmem:[%s1739 + $0x1179] sm:$0xff] %vm385, %v1724
      %2238 = vst.msk [vmem:[%s1739 + $0x1181] sm:$0xff] %vm385, %v1725
      %2239 = vst.msk [vmem:[%s1739 + $0x1189] sm:$0xff] %vm385, %v1726
      %2240 = vst.msk [vmem:[%s1739 + $0x1191] sm:$0xff] %vm385, %v1727
      %2241 = vst.msk [vmem:[%s1739 + $0x1199] sm:$0xff] %vm385, %v1728
      %2242 = vst.msk [vmem:[%s1739 + $0x11a1] sm:$0xff] %vm385, %v1729
      %2243 = vst.msk [vmem:[%s1739 + $0x11a9] sm:$0xff] %vm385, %v1730
      %2244 = vst.msk [vmem:[%s1739 + $0x11b9] sm:$0xff] %vm385, %v1731
      %2245 = vst.msk [vmem:[%s1739 + $0x11c1] sm:$0xff] %vm385, %v1732
      %2246 = vst.msk [vmem:[%s1739 + $0x11c9] sm:$0xff] %vm385, %v1733
      %2247 = vst.msk [vmem:[%s1739 + $0x11d1] sm:$0xff] %vm385, %v1734
      %2248 = vst.msk [vmem:[%s1739 + $0x11d9] sm:$0xff] %vm385, %v1735
      %2249 = vst.msk [vmem:[%s1739 + $0x11e1] sm:$0xff] %vm385, %v1736
      %2250 = vst.msk [vmem:[%s1739 + $0x11e9] sm:$0xff] %vm385, %v1737
      %2251 = vst.msk [vmem:[%s1739 + $0x11f1] sm:$0xff] %vm385, %v1738
      %v2252 = vlaneseq
      %v2253 = vshrl.u32 %v2252, 7
      %v2254 = vadd.s32 %v2253, 8
      %v2255 = vadd.s32 %v2253, 16
      %v2256 = vadd.s32 %v2253, 24
      %v2257 = vadd.s32 %v2253, 32
      %v2258 = vadd.s32 %v2253, 40
      %v2259 = vadd.s32 %v2253, 48
      %v2260 = vadd.s32 %v2253, 56
      %v2261 = vlaneseq
      %v2262 = vand.u32 %v2261, 127
      %v2263 = vmul.u32 %v2253, 2
      %v2264 = vmul.u32 %v2254, 2
      %v2265 = vmul.u32 %v2255, 2
      %v2266 = vmul.u32 %v2256, 2
      %v2267 = vmul.u32 %v2257, 2
      %v2268 = vmul.u32 %v2258, 2
      %v2269 = vmul.u32 %v2259, 2
      %v2270 = vmul.u32 %v2260, 2
      %vm2271 = vcmp.eq.s32.totalorder %v2262, %v2263
      %vm2272 = vcmp.eq.s32.totalorder %v2262, %v2264
      %vm2273 = vcmp.eq.s32.totalorder %v2262, %v2265
      %vm2274 = vcmp.eq.s32.totalorder %v2262, %v2266
      %vm2275 = vcmp.eq.s32.totalorder %v2262, %v2267
      %vm2276 = vcmp.eq.s32.totalorder %v2262, %v2268
      %vm2277 = vcmp.eq.s32.totalorder %v2262, %v2269
      %vm2278 = vcmp.eq.s32.totalorder %v2262, %v2270
      %v2279 = vsel %vm2271, 1.0, 0.0
      %v2280 = vsel %vm2272, 1.0, 0.0
      %v2281 = vsel %vm2273, 1.0, 0.0
      %v2282 = vsel %vm2274, 1.0, 0.0
      %v2283 = vsel %vm2275, 1.0, 0.0
      %v2284 = vsel %vm2276, 1.0, 0.0
      %v2285 = vsel %vm2277, 1.0, 0.0
      %v2286 = vsel %vm2278, 1.0, 0.0
      %v2287 = vadd.s32 %v2263, 1
      %v2288 = vadd.s32 %v2264, 1
      %v2289 = vadd.s32 %v2265, 1
      %v2290 = vadd.s32 %v2266, 1
      %v2291 = vadd.s32 %v2267, 1
      %v2292 = vadd.s32 %v2268, 1
      %v2293 = vadd.s32 %v2269, 1
      %v2294 = vadd.s32 %v2270, 1
      %vm2295 = vcmp.eq.s32.totalorder %v2262, %v2287
      %vm2296 = vcmp.eq.s32.totalorder %v2262, %v2288
      %vm2297 = vcmp.eq.s32.totalorder %v2262, %v2289
      %vm2298 = vcmp.eq.s32.totalorder %v2262, %v2290
      %vm2299 = vcmp.eq.s32.totalorder %v2262, %v2291
      %vm2300 = vcmp.eq.s32.totalorder %v2262, %v2292
      %vm2301 = vcmp.eq.s32.totalorder %v2262, %v2293
      %vm2302 = vcmp.eq.s32.totalorder %v2262, %v2294
      %v2303 = vsel %vm2295, 1.0, 0.0
      %v2304 = vsel %vm2296, 1.0, 0.0
      %v2305 = vsel %vm2297, 1.0, 0.0
      %v2306 = vsel %vm2298, 1.0, 0.0
      %v2307 = vsel %vm2299, 1.0, 0.0
      %v2308 = vsel %vm2300, 1.0, 0.0
      %v2309 = vsel %vm2301, 1.0, 0.0
      %v2310 = vsel %vm2302, 1.0, 0.0
      %v2311 = vld [vmem:[%s2] sm:$0x1]
      loop: start=0, step=1, limit=32
      $region65: #{simple_cnn_forward.1} parent=63 // loop_pre_header
        _
      $region66: #{simple_cnn_forward.1} parent=63 // loop_header
        %s2313 = sphi 0, %s2317
        %p2314 = scmp.ge.s32.totalorder %s2313, 32
      $region67: #{simple_cnn_forward.1} parent=63 // loop_header_branch
        %2316 = sbr.rel (%p2314) target = $region71
      $region68: #{simple_cnn_forward.1} parent=63 // loop_body
        %s2318 = smul.u32 %s2313, 2
        %s2319 = smul.u32 %s2318, 72
        %s2320 = scalar_lea.vmem [#allocation2], %s2319
        %v2321 = vld [vmem:[%s2320] sm:$0xff]
        %v2322 = vld [vmem:[%s2320 + $0x8] sm:$0xff]
        %v2323 = vld [vmem:[%s2320 + $0x10] sm:$0xff]
        %v2324 = vld [vmem:[%s2320 + $0x18] sm:$0xff]
        %v2325 = vld [vmem:[%s2320 + $0x20] sm:$0xff]
        %v2326 = vld [vmem:[%s2320 + $0x28] sm:$0xff]
        %v2327 = vld [vmem:[%s2320 + $0x30] sm:$0xff]
        %v2328 = vld [vmem:[%s2320 + $0x38] sm:$0xff]
        %v2329 = vld [vmem:[%s2320 + $0x48] sm:$0xff]
        %v2330 = vld [vmem:[%s2320 + $0x50] sm:$0xff]
        %v2331 = vld [vmem:[%s2320 + $0x58] sm:$0xff]
        %v2332 = vld [vmem:[%s2320 + $0x60] sm:$0xff]
        %v2333 = vld [vmem:[%s2320 + $0x68] sm:$0xff]
        %v2334 = vld [vmem:[%s2320 + $0x70] sm:$0xff]
        %v2335 = vld [vmem:[%s2320 + $0x78] sm:$0xff]
        %v2336 = vld [vmem:[%s2320 + $0x80] sm:$0xff]
        %v2337 = vld [vmem:[%s1] sm:$0xff]
        %v2338 = vld [vmem:[%s2320 + $0x1] sm:$0xff]
        %v2339 = vld [vmem:[%s2320 + $0x9] sm:$0xff]
        %v2340 = vld [vmem:[%s2320 + $0x11] sm:$0xff]
        %v2341 = vld [vmem:[%s2320 + $0x19] sm:$0xff]
        %v2342 = vld [vmem:[%s2320 + $0x21] sm:$0xff]
        %v2343 = vld [vmem:[%s2320 + $0x29] sm:$0xff]
        %v2344 = vld [vmem:[%s2320 + $0x31] sm:$0xff]
        %v2345 = vld [vmem:[%s2320 + $0x39] sm:$0xff]
        %v2346 = vld [vmem:[%s2320 + $0x49] sm:$0xff]
        %v2347 = vld [vmem:[%s2320 + $0x51] sm:$0xff]
        %v2348 = vld [vmem:[%s2320 + $0x59] sm:$0xff]
        %v2349 = vld [vmem:[%s2320 + $0x61] sm:$0xff]
        %v2350 = vld [vmem:[%s2320 + $0x69] sm:$0xff]
        %v2351 = vld [vmem:[%s2320 + $0x71] sm:$0xff]
        %v2352 = vld [vmem:[%s2320 + $0x79] sm:$0xff]
        %v2353 = vld [vmem:[%s2320 + $0x81] sm:$0xff]
        %s2354 = scalar_lea.vmem %s1, 8
        %v2355 = vld [vmem:[%s2354] sm:$0xff]
        %v2357 = vsel %vm385, %v2338, 0
        %v2360 = vsel %vm385, %v2339, 0
        %v2363 = vsel %vm385, %v2340, 0
        %v2366 = vsel %vm385, %v2341, 0
        %v2369 = vsel %vm385, %v2342, 0
        %v2372 = vsel %vm385, %v2343, 0
        %v2375 = vsel %vm385, %v2344, 0
        %v2378 = vsel %vm385, %v2345, 0
        %v2381 = vsel %vm385, %v2346, 0
        %v2384 = vsel %vm385, %v2347, 0
        %v2387 = vsel %vm385, %v2348, 0
        %v2390 = vsel %vm385, %v2349, 0
        %v2393 = vsel %vm385, %v2350, 0
        %v2396 = vsel %vm385, %v2351, 0
        %v2399 = vsel %vm385, %v2352, 0
        %v2402 = vsel %vm385, %v2353, 0
        %2404 = vmatprep.subr.mxu0 0.0
        %2405 = vmatpush1.msra.mxu0 %v2355
        %2406 = vmatprep.subr.mxu0 0.0
        %2407 = vmatpush1.msra.mxu0 0.0
        %2408 = vmatprep.subr.mxu0 0.0
        %2409 = vmatpush1.msra.mxu0 0.0
        %2410 = vmatprep.subr.mxu0 0.0
        %2411 = vmatpush1.msra.mxu0 0.0
        %2412 = vmatprep.subr.mxu0 0.0
        %2413 = vmatpush1.msra.mxu0 0.0
        %2414 = vmatprep.subr.mxu0 0.0
        %2415 = vmatpush1.msra.mxu0 0.0
        %2416 = vmatprep.subr.mxu0 0.0
        %2417 = vmatpush1.msra.mxu0 0.0
        %2418 = vmatprep.subr.mxu0 0.0
        %2419 = vmatpush1.msra.mxu0 0.0
        %2420 = vmatprep.subr.mxu0 0.0
        %2421 = vmatpush1.msra.mxu0 0.0
        %2422 = vmatprep.subr.mxu0 0.0
        %2423 = vmatpush1.msra.mxu0 0.0
        %2424 = vmatprep.subr.mxu0 0.0
        %2425 = vmatpush1.msra.mxu0 0.0
        %2426 = vmatprep.subr.mxu0 0.0
        %2427 = vmatpush1.msra.mxu0 0.0
        %2428 = vmatprep.subr.mxu0 0.0
        %2429 = vmatpush1.msra.mxu0 0.0
        %2430 = vmatprep.subr.mxu0 0.0
        %2431 = vmatpush1.msra.mxu0 0.0
        %2432 = vmatprep.subr.mxu0 0.0
        %2433 = vmatpush1.msra.mxu0 0.0
        %2434 = vmatprep.subr.mxu0 0.0
        %2435 = vmatpush1.msra.mxu0 0.0
        %2436 = vmatprep.subr.mxu0 0.0
        %2437 = vmatpush1.msra.mxu0 0.0
        %2438 = vmatprep.subr.mxu0 0.0
        %2439 = vmatpush1.msra.mxu0 0.0
        %2440 = vmatprep.subr.mxu0 0.0
        %2441 = vmatpush1.msra.mxu0 0.0
        %2442 = vmatprep.subr.mxu0 0.0
        %2443 = vmatpush1.msra.mxu0 0.0
        %2444 = vmatprep.subr.mxu0 0.0
        %2445 = vmatpush1.msra.mxu0 0.0
        %2446 = vmatprep.subr.mxu0 0.0
        %2447 = vmatpush1.msra.mxu0 0.0
        %2448 = vmatprep.subr.mxu0 0.0
        %2449 = vmatpush1.msra.mxu0 0.0
        %2450 = vmatprep.subr.mxu0 0.0
        %2451 = vmatpush1.msra.mxu0 0.0
        %2452 = vmatprep.subr.mxu0 0.0
        %2453 = vmatpush1.msra.mxu0 0.0
        %2454 = vmatprep.subr.mxu0 0.0
        %2455 = vmatpush1.msra.mxu0 0.0
        %2456 = vmatprep.subr.mxu0 0.0
        %2457 = vmatpush1.msra.mxu0 0.0
        %2458 = vmatprep.subr.mxu0 0.0
        %2459 = vmatpush1.msra.mxu0 0.0
        %2460 = vmatprep.subr.mxu0 0.0
        %2461 = vmatpush1.msra.mxu0 0.0
        %2462 = vmatprep.subr.mxu0 0.0
        %2463 = vmatpush1.msra.mxu0 0.0
        %2464 = vmatprep.subr.mxu0 0.0
        %2465 = vmatpush1.msra.mxu0 0.0
        %2466 = vmatprep.subr.mxu0 0.0
        %2467 = vmatpush1.msra.mxu0 0.0
        %2468 = vmatprep.mubr.f32.mxu0 0.0
        %2469 = vmatmul.mubr.f32.gmra.mrb[0].mxu0 %v2357
        %v2470 = vpop.f32.mrb[0].mxu0
        %v2471 = vadd.f32 0.0, %v2470
        %v2472 = vpop.f32.mrb[0].mxu0
        %2473 = vmatprep.mubr.f32.mxu0 0.0
        %2474 = vmatmul.mubr.f32.gmra.mrb[0].mxu0 %v2360
        %v2475 = vpop.f32.mrb[0].mxu0
        %v2476 = vadd.f32 0.0, %v2475
        %v2477 = vpop.f32.mrb[0].mxu0
        %2478 = vmatprep.mubr.f32.mxu0 0.0
        %2479 = vmatmul.mubr.f32.gmra.mrb[0].mxu0 %v2363
        %v2480 = vpop.f32.mrb[0].mxu0
        %v2481 = vadd.f32 0.0, %v2480
        %v2482 = vpop.f32.mrb[0].mxu0
        %2483 = vmatprep.mubr.f32.mxu0 0.0
        %2484 = vmatmul.mubr.f32.gmra.mrb[0].mxu0 %v2366
        %v2485 = vpop.f32.mrb[0].mxu0
        %v2486 = vadd.f32 0.0, %v2485
        %v2487 = vpop.f32.mrb[0].mxu0
        %2488 = vmatprep.mubr.f32.mxu0 0.0
        %2489 = vmatmul.mubr.f32.gmra.mrb[0].mxu0 %v2369
        %v2490 = vpop.f32.mrb[0].mxu0
        %v2491 = vadd.f32 0.0, %v2490
        %v2492 = vpop.f32.mrb[0].mxu0
        %2493 = vmatprep.mubr.f32.mxu0 0.0
        %2494 = vmatmul.mubr.f32.gmra.mrb[0].mxu0 %v2372
        %v2495 = vpop.f32.mrb[0].mxu0
        %v2496 = vadd.f32 0.0, %v2495
        %v2497 = vpop.f32.mrb[0].mxu0
        %2498 = vmatprep.mubr.f32.mxu0 0.0
        %2499 = vmatmul.mubr.f32.gmra.mrb[0].mxu0 %v2375
        %v2500 = vpop.f32.mrb[0].mxu0
        %v2501 = vadd.f32 0.0, %v2500
        %v2502 = vpop.f32.mrb[0].mxu0
        %2503 = vmatprep.mubr.f32.mxu0 0.0
        %2504 = vmatmul.mubr.f32.gmra.mrb[0].mxu0 %v2378
        %v2505 = vpop.f32.mrb[0].mxu0
        %v2506 = vadd.f32 0.0, %v2505
        %v2507 = vpop.f32.mrb[0].mxu0
        %2508 = vmatprep.mubr.f32.mxu0 0.0
        %2509 = vmatmul.mubr.f32.gmra.mrb[0].mxu0 %v2381
        %v2510 = vpop.f32.mrb[0].mxu0
        %v2511 = vadd.f32 0.0, %v2510
        %v2512 = vpop.f32.mrb[0].mxu0
        %2513 = vmatprep.mubr.f32.mxu0 0.0
        %2514 = vmatmul.mubr.f32.gmra.mrb[0].mxu0 %v2384
        %v2515 = vpop.f32.mrb[0].mxu0
        %v2516 = vadd.f32 0.0, %v2515
        %v2517 = vpop.f32.mrb[0].mxu0
        %2518 = vmatprep.mubr.f32.mxu0 0.0
        %2519 = vmatmul.mubr.f32.gmra.mrb[0].mxu0 %v2387
        %v2520 = vpop.f32.mrb[0].mxu0
        %v2521 = vadd.f32 0.0, %v2520
        %v2522 = vpop.f32.mrb[0].mxu0
        %2523 = vmatprep.mubr.f32.mxu0 0.0
        %2524 = vmatmul.mubr.f32.gmra.mrb[0].mxu0 %v2390
        %v2525 = vpop.f32.mrb[0].mxu0
        %v2526 = vadd.f32 0.0, %v2525
        %v2527 = vpop.f32.mrb[0].mxu0
        %2528 = vmatprep.mubr.f32.mxu0 0.0
        %2529 = vmatmul.mubr.f32.gmra.mrb[0].mxu0 %v2393
        %v2530 = vpop.f32.mrb[0].mxu0
        %v2531 = vadd.f32 0.0, %v2530
        %v2532 = vpop.f32.mrb[0].mxu0
        %2533 = vmatprep.mubr.f32.mxu0 0.0
        %2534 = vmatmul.mubr.f32.gmra.mrb[0].mxu0 %v2396
        %v2535 = vpop.f32.mrb[0].mxu0
        %v2536 = vadd.f32 0.0, %v2535
        %v2537 = vpop.f32.mrb[0].mxu0
        %2538 = vmatprep.mubr.f32.mxu0 0.0
        %2539 = vmatmul.mubr.f32.gmra.mrb[0].mxu0 %v2399
        %v2540 = vpop.f32.mrb[0].mxu0
        %v2541 = vadd.f32 0.0, %v2540
        %v2542 = vpop.f32.mrb[0].mxu0
        %2543 = vmatprep.mubr.f32.mxu0 0.0
        %2544 = vmatmul.mubr.f32.gmra.mrb[0].mxu0 %v2402
        %v2545 = vpop.f32.mrb[0].mxu0
        %v2546 = vadd.f32 0.0, %v2545
        %v2547 = vpop.f32.mrb[0].mxu0
        %2548 = vdwg.mxu0
        %v2550 = vsel %vm385, %v2321, 0
        %v2553 = vsel %vm385, %v2322, 0
        %v2556 = vsel %vm385, %v2323, 0
        %v2559 = vsel %vm385, %v2324, 0
        %v2562 = vsel %vm385, %v2325, 0
        %v2565 = vsel %vm385, %v2326, 0
        %v2568 = vsel %vm385, %v2327, 0
        %v2571 = vsel %vm385, %v2328, 0
        %v2574 = vsel %vm385, %v2329, 0
        %v2577 = vsel %vm385, %v2330, 0
        %v2580 = vsel %vm385, %v2331, 0
        %v2583 = vsel %vm385, %v2332, 0
        %v2586 = vsel %vm385, %v2333, 0
        %v2589 = vsel %vm385, %v2334, 0
        %v2592 = vsel %vm385, %v2335, 0
        %v2595 = vsel %vm385, %v2336, 0
        %2597 = vmatprep.subr.mxu0 0.0
        %2598 = vmatpush1.msra.mxu0 %v2337
        %2599 = vmatprep.subr.mxu0 0.0
        %2600 = vmatpush1.msra.mxu0 0.0
        %2601 = vmatprep.subr.mxu0 0.0
        %2602 = vmatpush1.msra.mxu0 0.0
        %2603 = vmatprep.subr.mxu0 0.0
        %2604 = vmatpush1.msra.mxu0 0.0
        %2605 = vmatprep.subr.mxu0 0.0
        %2606 = vmatpush1.msra.mxu0 0.0
        %2607 = vmatprep.subr.mxu0 0.0
        %2608 = vmatpush1.msra.mxu0 0.0
        %2609 = vmatprep.subr.mxu0 0.0
        %2610 = vmatpush1.msra.mxu0 0.0
        %2611 = vmatprep.subr.mxu0 0.0
        %2612 = vmatpush1.msra.mxu0 0.0
        %2613 = vmatprep.subr.mxu0 0.0
        %2614 = vmatpush1.msra.mxu0 0.0
        %2615 = vmatprep.subr.mxu0 0.0
        %2616 = vmatpush1.msra.mxu0 0.0
        %2617 = vmatprep.subr.mxu0 0.0
        %2618 = vmatpush1.msra.mxu0 0.0
        %2619 = vmatprep.subr.mxu0 0.0
        %2620 = vmatpush1.msra.mxu0 0.0
        %2621 = vmatprep.subr.mxu0 0.0
        %2622 = vmatpush1.msra.mxu0 0.0
        %2623 = vmatprep.subr.mxu0 0.0
        %2624 = vmatpush1.msra.mxu0 0.0
        %2625 = vmatprep.subr.mxu0 0.0
        %2626 = vmatpush1.msra.mxu0 0.0
        %2627 = vmatprep.subr.mxu0 0.0
        %2628 = vmatpush1.msra.mxu0 0.0
        %2629 = vmatprep.subr.mxu0 0.0
        %2630 = vmatpush1.msra.mxu0 0.0
        %2631 = vmatprep.subr.mxu0 0.0
        %2632 = vmatpush1.msra.mxu0 0.0
        %2633 = vmatprep.subr.mxu0 0.0
        %2634 = vmatpush1.msra.mxu0 0.0
        %2635 = vmatprep.subr.mxu0 0.0
        %2636 = vmatpush1.msra.mxu0 0.0
        %2637 = vmatprep.subr.mxu0 0.0
        %2638 = vmatpush1.msra.mxu0 0.0
        %2639 = vmatprep.subr.mxu0 0.0
        %2640 = vmatpush1.msra.mxu0 0.0
        %2641 = vmatprep.subr.mxu0 0.0
        %2642 = vmatpush1.msra.mxu0 0.0
        %2643 = vmatprep.subr.mxu0 0.0
        %2644 = vmatpush1.msra.mxu0 0.0
        %2645 = vmatprep.subr.mxu0 0.0
        %2646 = vmatpush1.msra.mxu0 0.0
        %2647 = vmatprep.subr.mxu0 0.0
        %2648 = vmatpush1.msra.mxu0 0.0
        %2649 = vmatprep.subr.mxu0 0.0
        %2650 = vmatpush1.msra.mxu0 0.0
        %2651 = vmatprep.subr.mxu0 0.0
        %2652 = vmatpush1.msra.mxu0 0.0
        %2653 = vmatprep.subr.mxu0 0.0
        %2654 = vmatpush1.msra.mxu0 0.0
        %2655 = vmatprep.subr.mxu0 0.0
        %2656 = vmatpush1.msra.mxu0 0.0
        %2657 = vmatprep.subr.mxu0 0.0
        %2658 = vmatpush1.msra.mxu0 0.0
        %2659 = vmatprep.subr.mxu0 0.0
        %2660 = vmatpush1.msra.mxu0 0.0
        %2661 = vmatprep.mubr.f32.mxu0 0.0
        %2662 = vmatmul.mubr.f32.gmra.mrb[0].mxu0 %v2550
        %v2663 = vpop.f32.mrb[0].mxu0
        %v2664 = vadd.f32 %v2471, %v2663
        %v2665 = vpop.f32.mrb[0].mxu0
        %2666 = vmatprep.mubr.f32.mxu0 0.0
        %2667 = vmatmul.mubr.f32.gmra.mrb[0].mxu0 %v2553
        %v2668 = vpop.f32.mrb[0].mxu0
        %v2669 = vadd.f32 %v2476, %v2668
        %v2670 = vpop.f32.mrb[0].mxu0
        %2671 = vmatprep.mubr.f32.mxu0 0.0
        %2672 = vmatmul.mubr.f32.gmra.mrb[0].mxu0 %v2556
        %v2673 = vpop.f32.mrb[0].mxu0
        %v2674 = vadd.f32 %v2481, %v2673
        %v2675 = vpop.f32.mrb[0].mxu0
        %2676 = vmatprep.mubr.f32.mxu0 0.0
        %2677 = vmatmul.mubr.f32.gmra.mrb[0].mxu0 %v2559
        %v2678 = vpop.f32.mrb[0].mxu0
        %v2679 = vadd.f32 %v2486, %v2678
        %v2680 = vpop.f32.mrb[0].mxu0
        %2681 = vmatprep.mubr.f32.mxu0 0.0
        %2682 = vmatmul.mubr.f32.gmra.mrb[0].mxu0 %v2562
        %v2683 = vpop.f32.mrb[0].mxu0
        %v2684 = vadd.f32 %v2491, %v2683
        %v2685 = vpop.f32.mrb[0].mxu0
        %2686 = vmatprep.mubr.f32.mxu0 0.0
        %2687 = vmatmul.mubr.f32.gmra.mrb[0].mxu0 %v2565
        %v2688 = vpop.f32.mrb[0].mxu0
        %v2689 = vadd.f32 %v2496, %v2688
        %v2690 = vpop.f32.mrb[0].mxu0
        %2691 = vmatprep.mubr.f32.mxu0 0.0
        %2692 = vmatmul.mubr.f32.gmra.mrb[0].mxu0 %v2568
        %v2693 = vpop.f32.mrb[0].mxu0
        %v2694 = vadd.f32 %v2501, %v2693
        %v2695 = vpop.f32.mrb[0].mxu0
        %2696 = vmatprep.mubr.f32.mxu0 0.0
        %2697 = vmatmul.mubr.f32.gmra.mrb[0].mxu0 %v2571
        %v2698 = vpop.f32.mrb[0].mxu0
        %v2699 = vadd.f32 %v2506, %v2698
        %v2700 = vpop.f32.mrb[0].mxu0
        %2701 = vmatprep.mubr.f32.mxu0 0.0
        %2702 = vmatmul.mubr.f32.gmra.mrb[0].mxu0 %v2574
        %v2703 = vpop.f32.mrb[0].mxu0
        %v2704 = vadd.f32 %v2511, %v2703
        %v2705 = vpop.f32.mrb[0].mxu0
        %2706 = vmatprep.mubr.f32.mxu0 0.0
        %2707 = vmatmul.mubr.f32.gmra.mrb[0].mxu0 %v2577
        %v2708 = vpop.f32.mrb[0].mxu0
        %v2709 = vadd.f32 %v2516, %v2708
        %v2710 = vpop.f32.mrb[0].mxu0
        %2711 = vmatprep.mubr.f32.mxu0 0.0
        %2712 = vmatmul.mubr.f32.gmra.mrb[0].mxu0 %v2580
        %v2713 = vpop.f32.mrb[0].mxu0
        %v2714 = vadd.f32 %v2521, %v2713
        %v2715 = vpop.f32.mrb[0].mxu0
        %2716 = vmatprep.mubr.f32.mxu0 0.0
        %2717 = vmatmul.mubr.f32.gmra.mrb[0].mxu0 %v2583
        %v2718 = vpop.f32.mrb[0].mxu0
        %v2719 = vadd.f32 %v2526, %v2718
        %v2720 = vpop.f32.mrb[0].mxu0
        %2721 = vmatprep.mubr.f32.mxu0 0.0
        %2722 = vmatmul.mubr.f32.gmra.mrb[0].mxu0 %v2586
        %v2723 = vpop.f32.mrb[0].mxu0
        %v2724 = vadd.f32 %v2531, %v2723
        %v2725 = vpop.f32.mrb[0].mxu0
        %2726 = vmatprep.mubr.f32.mxu0 0.0
        %2727 = vmatmul.mubr.f32.gmra.mrb[0].mxu0 %v2589
        %v2728 = vpop.f32.mrb[0].mxu0
        %v2729 = vadd.f32 %v2536, %v2728
        %v2730 = vpop.f32.mrb[0].mxu0
        %2731 = vmatprep.mubr.f32.mxu0 0.0
        %2732 = vmatmul.mubr.f32.gmra.mrb[0].mxu0 %v2592
        %v2733 = vpop.f32.mrb[0].mxu0
        %v2734 = vadd.f32 %v2541, %v2733
        %v2735 = vpop.f32.mrb[0].mxu0
        %2736 = vmatprep.mubr.f32.mxu0 0.0
        %2737 = vmatmul.mubr.f32.gmra.mrb[0].mxu0 %v2595
        %v2738 = vpop.f32.mrb[0].mxu0
        %v2739 = vadd.f32 %v2546, %v2738
        %v2740 = vpop.f32.mrb[0].mxu0
        %2741 = vdwg.mxu0
        %v2742 = vld [vmem:[%s2320 + $0x2] sm:$0xff]
        %v2743 = vld [vmem:[%s2320 + $0xa] sm:$0xff]
        %v2744 = vld [vmem:[%s2320 + $0x12] sm:$0xff]
        %v2745 = vld [vmem:[%s2320 + $0x1a] sm:$0xff]
        %v2746 = vld [vmem:[%s2320 + $0x22] sm:$0xff]
        %v2747 = vld [vmem:[%s2320 + $0x2a] sm:$0xff]
        %v2748 = vld [vmem:[%s2320 + $0x32] sm:$0xff]
        %v2749 = vld [vmem:[%s2320 + $0x3a] sm:$0xff]
        %v2750 = vld [vmem:[%s2320 + $0x4a] sm:$0xff]
        %v2751 = vld [vmem:[%s2320 + $0x52] sm:$0xff]
        %v2752 = vld [vmem:[%s2320 + $0x5a] sm:$0xff]
        %v2753 = vld [vmem:[%s2320 + $0x62] sm:$0xff]
        %v2754 = vld [vmem:[%s2320 + $0x6a] sm:$0xff]
        %v2755 = vld [vmem:[%s2320 + $0x72] sm:$0xff]
        %v2756 = vld [vmem:[%s2320 + $0x7a] sm:$0xff]
        %v2757 = vld [vmem:[%s2320 + $0x82] sm:$0xff]
        %s2758 = scalar_lea.vmem %s1, 16
        %v2759 = vld [vmem:[%s2758] sm:$0xff]
        %v2761 = vsel %vm385, %v2742, 0
        %v2764 = vsel %vm385, %v2743, 0
        %v2767 = vsel %vm385, %v2744, 0
        %v2770 = vsel %vm385, %v2745, 0
        %v2773 = vsel %vm385, %v2746, 0
        %v2776 = vsel %vm385, %v2747, 0
        %v2779 = vsel %vm385, %v2748, 0
        %v2782 = vsel %vm385, %v2749, 0
        %v2785 = vsel %vm385, %v2750, 0
        %v2788 = vsel %vm385, %v2751, 0
        %v2791 = vsel %vm385, %v2752, 0
        %v2794 = vsel %vm385, %v2753, 0
        %v2797 = vsel %vm385, %v2754, 0
        %v2800 = vsel %vm385, %v2755, 0
        %v2803 = vsel %vm385, %v2756, 0
        %v2806 = vsel %vm385, %v2757, 0
        %2808 = vmatprep.subr.mxu0 0.0
        %2809 = vmatpush1.msra.mxu0 %v2759
        %2810 = vmatprep.subr.mxu0 0.0
        %2811 = vmatpush1.msra.mxu0 0.0
        %2812 = vmatprep.subr.mxu0 0.0
        %2813 = vmatpush1.msra.mxu0 0.0
        %2814 = vmatprep.subr.mxu0 0.0
        %2815 = vmatpush1.msra.mxu0 0.0
        %2816 = vmatprep.subr.mxu0 0.0
        %2817 = vmatpush1.msra.mxu0 0.0
        %2818 = vmatprep.subr.mxu0 0.0
        %2819 = vmatpush1.msra.mxu0 0.0
        %2820 = vmatprep.subr.mxu0 0.0
        %2821 = vmatpush1.msra.mxu0 0.0
        %2822 = vmatprep.subr.mxu0 0.0
        %2823 = vmatpush1.msra.mxu0 0.0
        %2824 = vmatprep.subr.mxu0 0.0
        %2825 = vmatpush1.msra.mxu0 0.0
        %2826 = vmatprep.subr.mxu0 0.0
        %2827 = vmatpush1.msra.mxu0 0.0
        %2828 = vmatprep.subr.mxu0 0.0
        %2829 = vmatpush1.msra.mxu0 0.0
        %2830 = vmatprep.subr.mxu0 0.0
        %2831 = vmatpush1.msra.mxu0 0.0
        %2832 = vmatprep.subr.mxu0 0.0
        %2833 = vmatpush1.msra.mxu0 0.0
        %2834 = vmatprep.subr.mxu0 0.0
        %2835 = vmatpush1.msra.mxu0 0.0
        %2836 = vmatprep.subr.mxu0 0.0
        %2837 = vmatpush1.msra.mxu0 0.0
        %2838 = vmatprep.subr.mxu0 0.0
        %2839 = vmatpush1.msra.mxu0 0.0
        %2840 = vmatprep.subr.mxu0 0.0
        %2841 = vmatpush1.msra.mxu0 0.0
        %2842 = vmatprep.subr.mxu0 0.0
        %2843 = vmatpush1.msra.mxu0 0.0
        %2844 = vmatprep.subr.mxu0 0.0
        %2845 = vmatpush1.msra.mxu0 0.0
        %2846 = vmatprep.subr.mxu0 0.0
        %2847 = vmatpush1.msra.mxu0 0.0
        %2848 = vmatprep.subr.mxu0 0.0
        %2849 = vmatpush1.msra.mxu0 0.0
        %2850 = vmatprep.subr.mxu0 0.0
        %2851 = vmatpush1.msra.mxu0 0.0
        %2852 = vmatprep.subr.mxu0 0.0
        %2853 = vmatpush1.msra.mxu0 0.0
        %2854 = vmatprep.subr.mxu0 0.0
        %2855 = vmatpush1.msra.mxu0 0.0
        %2856 = vmatprep.subr.mxu0 0.0
        %2857 = vmatpush1.msra.mxu0 0.0
        %2858 = vmatprep.subr.mxu0 0.0
        %2859 = vmatpush1.msra.mxu0 0.0
        %2860 = vmatprep.subr.mxu0 0.0
        %2861 = vmatpush1.msra.mxu0 0.0
        %2862 = vmatprep.subr.mxu0 0.0
        %2863 = vmatpush1.msra.mxu0 0.0
        %2864 = vmatprep.subr.mxu0 0.0
        %2865 = vmatpush1.msra.mxu0 0.0
        %2866 = vmatprep.subr.mxu0 0.0
        %2867 = vmatpush1.msra.mxu0 0.0
        %2868 = vmatprep.subr.mxu0 0.0
        %2869 = vmatpush1.msra.mxu0 0.0
        %2870 = vmatprep.subr.mxu0 0.0
        %2871 = vmatpush1.msra.mxu0 0.0
        %2872 = vmatprep.mubr.f32.mxu0 0.0
        %2873 = vmatmul.mubr.f32.gmra.mrb[0].mxu0 %v2761
        %v2874 = vpop.f32.mrb[0].mxu0
        %v2875 = vadd.f32 0.0, %v2874
        %v2876 = vpop.f32.mrb[0].mxu0
        %2877 = vmatprep.mubr.f32.mxu0 0.0
        %2878 = vmatmul.mubr.f32.gmra.mrb[0].mxu0 %v2764
        %v2879 = vpop.f32.mrb[0].mxu0
        %v2880 = vadd.f32 0.0, %v2879
        %v2881 = vpop.f32.mrb[0].mxu0
        %2882 = vmatprep.mubr.f32.mxu0 0.0
        %2883 = vmatmul.mubr.f32.gmra.mrb[0].mxu0 %v2767
        %v2884 = vpop.f32.mrb[0].mxu0
        %v2885 = vadd.f32 0.0, %v2884
        %v2886 = vpop.f32.mrb[0].mxu0
        %2887 = vmatprep.mubr.f32.mxu0 0.0
        %2888 = vmatmul.mubr.f32.gmra.mrb[0].mxu0 %v2770
        %v2889 = vpop.f32.mrb[0].mxu0
        %v2890 = vadd.f32 0.0, %v2889
        %v2891 = vpop.f32.mrb[0].mxu0
        %2892 = vmatprep.mubr.f32.mxu0 0.0
        %2893 = vmatmul.mubr.f32.gmra.mrb[0].mxu0 %v2773
        %v2894 = vpop.f32.mrb[0].mxu0
        %v2895 = vadd.f32 0.0, %v2894
        %v2896 = vpop.f32.mrb[0].mxu0
        %2897 = vmatprep.mubr.f32.mxu0 0.0
        %2898 = vmatmul.mubr.f32.gmra.mrb[0].mxu0 %v2776
        %v2899 = vpop.f32.mrb[0].mxu0
        %v2900 = vadd.f32 0.0, %v2899
        %v2901 = vpop.f32.mrb[0].mxu0
        %2902 = vmatprep.mubr.f32.mxu0 0.0
        %2903 = vmatmul.mubr.f32.gmra.mrb[0].mxu0 %v2779
        %v2904 = vpop.f32.mrb[0].mxu0
        %v2905 = vadd.f32 0.0, %v2904
        %v2906 = vpop.f32.mrb[0].mxu0
        %2907 = vmatprep.mubr.f32.mxu0 0.0
        %2908 = vmatmul.mubr.f32.gmra.mrb[0].mxu0 %v2782
        %v2909 = vpop.f32.mrb[0].mxu0
        %v2910 = vadd.f32 0.0, %v2909
        %v2911 = vpop.f32.mrb[0].mxu0
        %2912 = vmatprep.mubr.f32.mxu0 0.0
        %2913 = vmatmul.mubr.f32.gmra.mrb[0].mxu0 %v2785
        %v2914 = vpop.f32.mrb[0].mxu0
        %v2915 = vadd.f32 0.0, %v2914
        %v2916 = vpop.f32.mrb[0].mxu0
        %2917 = vmatprep.mubr.f32.mxu0 0.0
        %2918 = vmatmul.mubr.f32.gmra.mrb[0].mxu0 %v2788
        %v2919 = vpop.f32.mrb[0].mxu0
        %v2920 = vadd.f32 0.0, %v2919
        %v2921 = vpop.f32.mrb[0].mxu0
        %2922 = vmatprep.mubr.f32.mxu0 0.0
        %2923 = vmatmul.mubr.f32.gmra.mrb[0].mxu0 %v2791
        %v2924 = vpop.f32.mrb[0].mxu0
        %v2925 = vadd.f32 0.0, %v2924
        %v2926 = vpop.f32.mrb[0].mxu0
        %2927 = vmatprep.mubr.f32.mxu0 0.0
        %2928 = vmatmul.mubr.f32.gmra.mrb[0].mxu0 %v2794
        %v2929 = vpop.f32.mrb[0].mxu0
        %v2930 = vadd.f32 0.0, %v2929
        %v2931 = vpop.f32.mrb[0].mxu0
        %2932 = vmatprep.mubr.f32.mxu0 0.0
        %2933 = vmatmul.mubr.f32.gmra.mrb[0].mxu0 %v2797
        %v2934 = vpop.f32.mrb[0].mxu0
        %v2935 = vadd.f32 0.0, %v2934
        %v2936 = vpop.f32.mrb[0].mxu0
        %2937 = vmatprep.mubr.f32.mxu0 0.0
        %2938 = vmatmul.mubr.f32.gmra.mrb[0].mxu0 %v2800
        %v2939 = vpop.f32.mrb[0].mxu0
        %v2940 = vadd.f32 0.0, %v2939
        %v2941 = vpop.f32.mrb[0].mxu0
        %2942 = vmatprep.mubr.f32.mxu0 0.0
        %2943 = vmatmul.mubr.f32.gmra.mrb[0].mxu0 %v2803
        %v2944 = vpop.f32.mrb[0].mxu0
        %v2945 = vadd.f32 0.0, %v2944
        %v2946 = vpop.f32.mrb[0].mxu0
        %2947 = vmatprep.mubr.f32.mxu0 0.0
        %2948 = vmatmul.mubr.f32.gmra.mrb[0].mxu0 %v2806
        %v2949 = vpop.f32.mrb[0].mxu0
        %v2950 = vadd.f32 0.0, %v2949
        %v2951 = vpop.f32.mrb[0].mxu0
        %2952 = vdwg.mxu0
        %v2953 = vadd.f32 %v2664, %v2875
        %v2954 = vadd.f32 %v2669, %v2880
        %v2955 = vadd.f32 %v2674, %v2885
        %v2956 = vadd.f32 %v2679, %v2890
        %v2957 = vadd.f32 %v2684, %v2895
        %v2958 = vadd.f32 %v2689, %v2900
        %v2959 = vadd.f32 %v2694, %v2905
        %v2960 = vadd.f32 %v2699, %v2910
        %v2961 = vadd.f32 %v2704, %v2915
        %v2962 = vadd.f32 %v2709, %v2920
        %v2963 = vadd.f32 %v2714, %v2925
        %v2964 = vadd.f32 %v2719, %v2930
        %v2965 = vadd.f32 %v2724, %v2935
        %v2966 = vadd.f32 %v2729, %v2940
        %v2967 = vadd.f32 %v2734, %v2945
        %v2968 = vadd.f32 %v2739, %v2950
        %s2969 = sadd.s32 %s2318, 1
        %s2970 = smul.u32 %s2969, 72
        %s2971 = scalar_lea.vmem [#allocation2], %s2970
        %v2972 = vld [vmem:[%s2971] sm:$0xff]
        %v2973 = vld [vmem:[%s2971 + $0x8] sm:$0xff]
        %v2974 = vld [vmem:[%s2971 + $0x10] sm:$0xff]
        %v2975 = vld [vmem:[%s2971 + $0x18] sm:$0xff]
        %v2976 = vld [vmem:[%s2971 + $0x20] sm:$0xff]
        %v2977 = vld [vmem:[%s2971 + $0x28] sm:$0xff]
        %v2978 = vld [vmem:[%s2971 + $0x30] sm:$0xff]
        %v2979 = vld [vmem:[%s2971 + $0x38] sm:$0xff]
        %v2980 = vld [vmem:[%s2971 + $0x48] sm:$0xff]
        %v2981 = vld [vmem:[%s2971 + $0x50] sm:$0xff]
        %v2982 = vld [vmem:[%s2971 + $0x58] sm:$0xff]
        %v2983 = vld [vmem:[%s2971 + $0x60] sm:$0xff]
        %v2984 = vld [vmem:[%s2971 + $0x68] sm:$0xff]
        %v2985 = vld [vmem:[%s2971 + $0x70] sm:$0xff]
        %v2986 = vld [vmem:[%s2971 + $0x78] sm:$0xff]
        %v2987 = vld [vmem:[%s2971 + $0x80] sm:$0xff]
        %s2988 = scalar_lea.vmem %s1, 24
        %v2989 = vld [vmem:[%s2988] sm:$0xff]
        %v2991 = vsel %vm385, %v2972, 0
        %v2994 = vsel %vm385, %v2973, 0
        %v2997 = vsel %vm385, %v2974, 0
        %v3000 = vsel %vm385, %v2975, 0
        %v3003 = vsel %vm385, %v2976, 0
        %v3006 = vsel %vm385, %v2977, 0
        %v3009 = vsel %vm385, %v2978, 0
        %v3012 = vsel %vm385, %v2979, 0
        %v3015 = vsel %vm385, %v2980, 0
        %v3018 = vsel %vm385, %v2981, 0
        %v3021 = vsel %vm385, %v2982, 0
        %v3024 = vsel %vm385, %v2983, 0
        %v3027 = vsel %vm385, %v2984, 0
        %v3030 = vsel %vm385, %v2985, 0
        %v3033 = vsel %vm385, %v2986, 0
        %v3036 = vsel %vm385, %v2987, 0
        %3038 = vmatprep.subr.mxu0 0.0
        %3039 = vmatpush1.msra.mxu0 %v2989
        %3040 = vmatprep.subr.mxu0 0.0
        %3041 = vmatpush1.msra.mxu0 0.0
        %3042 = vmatprep.subr.mxu0 0.0
        %3043 = vmatpush1.msra.mxu0 0.0
        %3044 = vmatprep.subr.mxu0 0.0
        %3045 = vmatpush1.msra.mxu0 0.0
        %3046 = vmatprep.subr.mxu0 0.0
        %3047 = vmatpush1.msra.mxu0 0.0
        %3048 = vmatprep.subr.mxu0 0.0
        %3049 = vmatpush1.msra.mxu0 0.0
        %3050 = vmatprep.subr.mxu0 0.0
        %3051 = vmatpush1.msra.mxu0 0.0
        %3052 = vmatprep.subr.mxu0 0.0
        %3053 = vmatpush1.msra.mxu0 0.0
        %3054 = vmatprep.subr.mxu0 0.0
        %3055 = vmatpush1.msra.mxu0 0.0
        %3056 = vmatprep.subr.mxu0 0.0
        %3057 = vmatpush1.msra.mxu0 0.0
        %3058 = vmatprep.subr.mxu0 0.0
        %3059 = vmatpush1.msra.mxu0 0.0
        %3060 = vmatprep.subr.mxu0 0.0
        %3061 = vmatpush1.msra.mxu0 0.0
        %3062 = vmatprep.subr.mxu0 0.0
        %3063 = vmatpush1.msra.mxu0 0.0
        %3064 = vmatprep.subr.mxu0 0.0
        %3065 = vmatpush1.msra.mxu0 0.0
        %3066 = vmatprep.subr.mxu0 0.0
        %3067 = vmatpush1.msra.mxu0 0.0
        %3068 = vmatprep.subr.mxu0 0.0
        %3069 = vmatpush1.msra.mxu0 0.0
        %3070 = vmatprep.subr.mxu0 0.0
        %3071 = vmatpush1.msra.mxu0 0.0
        %3072 = vmatprep.subr.mxu0 0.0
        %3073 = vmatpush1.msra.mxu0 0.0
        %3074 = vmatprep.subr.mxu0 0.0
        %3075 = vmatpush1.msra.mxu0 0.0
        %3076 = vmatprep.subr.mxu0 0.0
        %3077 = vmatpush1.msra.mxu0 0.0
        %3078 = vmatprep.subr.mxu0 0.0
        %3079 = vmatpush1.msra.mxu0 0.0
        %3080 = vmatprep.subr.mxu0 0.0
        %3081 = vmatpush1.msra.mxu0 0.0
        %3082 = vmatprep.subr.mxu0 0.0
        %3083 = vmatpush1.msra.mxu0 0.0
        %3084 = vmatprep.subr.mxu0 0.0
        %3085 = vmatpush1.msra.mxu0 0.0
        %3086 = vmatprep.subr.mxu0 0.0
        %3087 = vmatpush1.msra.mxu0 0.0
        %3088 = vmatprep.subr.mxu0 0.0
        %3089 = vmatpush1.msra.mxu0 0.0
        %3090 = vmatprep.subr.mxu0 0.0
        %3091 = vmatpush1.msra.mxu0 0.0
        %3092 = vmatprep.subr.mxu0 0.0
        %3093 = vmatpush1.msra.mxu0 0.0
        %3094 = vmatprep.subr.mxu0 0.0
        %3095 = vmatpush1.msra.mxu0 0.0
        %3096 = vmatprep.subr.mxu0 0.0
        %3097 = vmatpush1.msra.mxu0 0.0
        %3098 = vmatprep.subr.mxu0 0.0
        %3099 = vmatpush1.msra.mxu0 0.0
        %3100 = vmatprep.subr.mxu0 0.0
        %3101 = vmatpush1.msra.mxu0 0.0
        %3102 = vmatprep.mubr.f32.mxu0 0.0
        %3103 = vmatmul.mubr.f32.gmra.mrb[0].mxu0 %v2991
        %v3104 = vpop.f32.mrb[0].mxu0
        %v3105 = vadd.f32 0.0, %v3104
        %v3106 = vpop.f32.mrb[0].mxu0
        %3107 = vmatprep.mubr.f32.mxu0 0.0
        %3108 = vmatmul.mubr.f32.gmra.mrb[0].mxu0 %v2994
        %v3109 = vpop.f32.mrb[0].mxu0
        %v3110 = vadd.f32 0.0, %v3109
        %v3111 = vpop.f32.mrb[0].mxu0
        %3112 = vmatprep.mubr.f32.mxu0 0.0
        %3113 = vmatmul.mubr.f32.gmra.mrb[0].mxu0 %v2997
        %v3114 = vpop.f32.mrb[0].mxu0
        %v3115 = vadd.f32 0.0, %v3114
        %v3116 = vpop.f32.mrb[0].mxu0
        %3117 = vmatprep.mubr.f32.mxu0 0.0
        %3118 = vmatmul.mubr.f32.gmra.mrb[0].mxu0 %v3000
        %v3119 = vpop.f32.mrb[0].mxu0
        %v3120 = vadd.f32 0.0, %v3119
        %v3121 = vpop.f32.mrb[0].mxu0
        %3122 = vmatprep.mubr.f32.mxu0 0.0
        %3123 = vmatmul.mubr.f32.gmra.mrb[0].mxu0 %v3003
        %v3124 = vpop.f32.mrb[0].mxu0
        %v3125 = vadd.f32 0.0, %v3124
        %v3126 = vpop.f32.mrb[0].mxu0
        %3127 = vmatprep.mubr.f32.mxu0 0.0
        %3128 = vmatmul.mubr.f32.gmra.mrb[0].mxu0 %v3006
        %v3129 = vpop.f32.mrb[0].mxu0
        %v3130 = vadd.f32 0.0, %v3129
        %v3131 = vpop.f32.mrb[0].mxu0
        %3132 = vmatprep.mubr.f32.mxu0 0.0
        %3133 = vmatmul.mubr.f32.gmra.mrb[0].mxu0 %v3009
        %v3134 = vpop.f32.mrb[0].mxu0
        %v3135 = vadd.f32 0.0, %v3134
        %v3136 = vpop.f32.mrb[0].mxu0
        %3137 = vmatprep.mubr.f32.mxu0 0.0
        %3138 = vmatmul.mubr.f32.gmra.mrb[0].mxu0 %v3012
        %v3139 = vpop.f32.mrb[0].mxu0
        %v3140 = vadd.f32 0.0, %v3139
        %v3141 = vpop.f32.mrb[0].mxu0
        %3142 = vmatprep.mubr.f32.mxu0 0.0
        %3143 = vmatmul.mubr.f32.gmra.mrb[0].mxu0 %v3015
        %v3144 = vpop.f32.mrb[0].mxu0
        %v3145 = vadd.f32 0.0, %v3144
        %v3146 = vpop.f32.mrb[0].mxu0
        %3147 = vmatprep.mubr.f32.mxu0 0.0
        %3148 = vmatmul.mubr.f32.gmra.mrb[0].mxu0 %v3018
        %v3149 = vpop.f32.mrb[0].mxu0
        %v3150 = vadd.f32 0.0, %v3149
        %v3151 = vpop.f32.mrb[0].mxu0
        %3152 = vmatprep.mubr.f32.mxu0 0.0
        %3153 = vmatmul.mubr.f32.gmra.mrb[0].mxu0 %v3021
        %v3154 = vpop.f32.mrb[0].mxu0
        %v3155 = vadd.f32 0.0, %v3154
        %v3156 = vpop.f32.mrb[0].mxu0
        %3157 = vmatprep.mubr.f32.mxu0 0.0
        %3158 = vmatmul.mubr.f32.gmra.mrb[0].mxu0 %v3024
        %v3159 = vpop.f32.mrb[0].mxu0
        %v3160 = vadd.f32 0.0, %v3159
        %v3161 = vpop.f32.mrb[0].mxu0
        %3162 = vmatprep.mubr.f32.mxu0 0.0
        %3163 = vmatmul.mubr.f32.gmra.mrb[0].mxu0 %v3027
        %v3164 = vpop.f32.mrb[0].mxu0
        %v3165 = vadd.f32 0.0, %v3164
        %v3166 = vpop.f32.mrb[0].mxu0
        %3167 = vmatprep.mubr.f32.mxu0 0.0
        %3168 = vmatmul.mubr.f32.gmra.mrb[0].mxu0 %v3030
        %v3169 = vpop.f32.mrb[0].mxu0
        %v3170 = vadd.f32 0.0, %v3169
        %v3171 = vpop.f32.mrb[0].mxu0
        %3172 = vmatprep.mubr.f32.mxu0 0.0
        %3173 = vmatmul.mubr.f32.gmra.mrb[0].mxu0 %v3033
        %v3174 = vpop.f32.mrb[0].mxu0
        %v3175 = vadd.f32 0.0, %v3174
        %v3176 = vpop.f32.mrb[0].mxu0
        %3177 = vmatprep.mubr.f32.mxu0 0.0
        %3178 = vmatmul.mubr.f32.gmra.mrb[0].mxu0 %v3036
        %v3179 = vpop.f32.mrb[0].mxu0
        %v3180 = vadd.f32 0.0, %v3179
        %v3181 = vpop.f32.mrb[0].mxu0
        %3182 = vdwg.mxu0
        %v3183 = vadd.f32 %v2953, %v3105
        %v3184 = vadd.f32 %v2954, %v3110
        %v3185 = vadd.f32 %v2955, %v3115
        %v3186 = vadd.f32 %v2956, %v3120
        %v3187 = vadd.f32 %v2957, %v3125
        %v3188 = vadd.f32 %v2958, %v3130
        %v3189 = vadd.f32 %v2959, %v3135
        %v3190 = vadd.f32 %v2960, %v3140
        %v3191 = vadd.f32 %v2961, %v3145
        %v3192 = vadd.f32 %v2962, %v3150
        %v3193 = vadd.f32 %v2963, %v3155
        %v3194 = vadd.f32 %v2964, %v3160
        %v3195 = vadd.f32 %v2965, %v3165
        %v3196 = vadd.f32 %v2966, %v3170
        %v3197 = vadd.f32 %v2967, %v3175
        %v3198 = vadd.f32 %v2968, %v3180
        %v3199 = vld [vmem:[%s2971 + $0x1] sm:$0xff]
        %v3200 = vld [vmem:[%s2971 + $0x9] sm:$0xff]
        %v3201 = vld [vmem:[%s2971 + $0x11] sm:$0xff]
        %v3202 = vld [vmem:[%s2971 + $0x19] sm:$0xff]
        %v3203 = vld [vmem:[%s2971 + $0x21] sm:$0xff]
        %v3204 = vld [vmem:[%s2971 + $0x29] sm:$0xff]
        %v3205 = vld [vmem:[%s2971 + $0x31] sm:$0xff]
        %v3206 = vld [vmem:[%s2971 + $0x39] sm:$0xff]
        %v3207 = vld [vmem:[%s2971 + $0x49] sm:$0xff]
        %v3208 = vld [vmem:[%s2971 + $0x51] sm:$0xff]
        %v3209 = vld [vmem:[%s2971 + $0x59] sm:$0xff]
        %v3210 = vld [vmem:[%s2971 + $0x61] sm:$0xff]
        %v3211 = vld [vmem:[%s2971 + $0x69] sm:$0xff]
        %v3212 = vld [vmem:[%s2971 + $0x71] sm:$0xff]
        %v3213 = vld [vmem:[%s2971 + $0x79] sm:$0xff]
        %v3214 = vld [vmem:[%s2971 + $0x81] sm:$0xff]
        %s3215 = scalar_lea.vmem %s1, 32
        %v3216 = vld [vmem:[%s3215] sm:$0xff]
        %v3218 = vsel %vm385, %v3199, 0
        %v3221 = vsel %vm385, %v3200, 0
        %v3224 = vsel %vm385, %v3201, 0
        %v3227 = vsel %vm385, %v3202, 0
        %v3230 = vsel %vm385, %v3203, 0
        %v3233 = vsel %vm385, %v3204, 0
        %v3236 = vsel %vm385, %v3205, 0
        %v3239 = vsel %vm385, %v3206, 0
        %v3242 = vsel %vm385, %v3207, 0
        %v3245 = vsel %vm385, %v3208, 0
        %v3248 = vsel %vm385, %v3209, 0
        %v3251 = vsel %vm385, %v3210, 0
        %v3254 = vsel %vm385, %v3211, 0
        %v3257 = vsel %vm385, %v3212, 0
        %v3260 = vsel %vm385, %v3213, 0
        %v3263 = vsel %vm385, %v3214, 0
        %3265 = vmatprep.subr.mxu0 0.0
        %3266 = vmatpush1.msra.mxu0 %v3216
        %3267 = vmatprep.subr.mxu0 0.0
        %3268 = vmatpush1.msra.mxu0 0.0
        %3269 = vmatprep.subr.mxu0 0.0
        %3270 = vmatpush1.msra.mxu0 0.0
        %3271 = vmatprep.subr.mxu0 0.0
        %3272 = vmatpush1.msra.mxu0 0.0
        %3273 = vmatprep.subr.mxu0 0.0
        %3274 = vmatpush1.msra.mxu0 0.0
        %3275 = vmatprep.subr.mxu0 0.0
        %3276 = vmatpush1.msra.mxu0 0.0
        %3277 = vmatprep.subr.mxu0 0.0
        %3278 = vmatpush1.msra.mxu0 0.0
        %3279 = vmatprep.subr.mxu0 0.0
        %3280 = vmatpush1.msra.mxu0 0.0
        %3281 = vmatprep.subr.mxu0 0.0
        %3282 = vmatpush1.msra.mxu0 0.0
        %3283 = vmatprep.subr.mxu0 0.0
        %3284 = vmatpush1.msra.mxu0 0.0
        %3285 = vmatprep.subr.mxu0 0.0
        %3286 = vmatpush1.msra.mxu0 0.0
        %3287 = vmatprep.subr.mxu0 0.0
        %3288 = vmatpush1.msra.mxu0 0.0
        %3289 = vmatprep.subr.mxu0 0.0
        %3290 = vmatpush1.msra.mxu0 0.0
        %3291 = vmatprep.subr.mxu0 0.0
        %3292 = vmatpush1.msra.mxu0 0.0
        %3293 = vmatprep.subr.mxu0 0.0
        %3294 = vmatpush1.msra.mxu0 0.0
        %3295 = vmatprep.subr.mxu0 0.0
        %3296 = vmatpush1.msra.mxu0 0.0
        %3297 = vmatprep.subr.mxu0 0.0
        %3298 = vmatpush1.msra.mxu0 0.0
        %3299 = vmatprep.subr.mxu0 0.0
        %3300 = vmatpush1.msra.mxu0 0.0
        %3301 = vmatprep.subr.mxu0 0.0
        %3302 = vmatpush1.msra.mxu0 0.0
        %3303 = vmatprep.subr.mxu0 0.0
        %3304 = vmatpush1.msra.mxu0 0.0
        %3305 = vmatprep.subr.mxu0 0.0
        %3306 = vmatpush1.msra.mxu0 0.0
        %3307 = vmatprep.subr.mxu0 0.0
        %3308 = vmatpush1.msra.mxu0 0.0
        %3309 = vmatprep.subr.mxu0 0.0
        %3310 = vmatpush1.msra.mxu0 0.0
        %3311 = vmatprep.subr.mxu0 0.0
        %3312 = vmatpush1.msra.mxu0 0.0
        %3313 = vmatprep.subr.mxu0 0.0
        %3314 = vmatpush1.msra.mxu0 0.0
        %3315 = vmatprep.subr.mxu0 0.0
        %3316 = vmatpush1.msra.mxu0 0.0
        %3317 = vmatprep.subr.mxu0 0.0
        %3318 = vmatpush1.msra.mxu0 0.0
        %3319 = vmatprep.subr.mxu0 0.0
        %3320 = vmatpush1.msra.mxu0 0.0
        %3321 = vmatprep.subr.mxu0 0.0
        %3322 = vmatpush1.msra.mxu0 0.0
        %3323 = vmatprep.subr.mxu0 0.0
        %3324 = vmatpush1.msra.mxu0 0.0
        %3325 = vmatprep.subr.mxu0 0.0
        %3326 = vmatpush1.msra.mxu0 0.0
        %3327 = vmatprep.subr.mxu0 0.0
        %3328 = vmatpush1.msra.mxu0 0.0
        %3329 = vmatprep.mubr.f32.mxu0 0.0
        %3330 = vmatmul.mubr.f32.gmra.mrb[0].mxu0 %v3218
        %v3331 = vpop.f32.mrb[0].mxu0
        %v3332 = vadd.f32 0.0, %v3331
        %v3333 = vpop.f32.mrb[0].mxu0
        %3334 = vmatprep.mubr.f32.mxu0 0.0
        %3335 = vmatmul.mubr.f32.gmra.mrb[0].mxu0 %v3221
        %v3336 = vpop.f32.mrb[0].mxu0
        %v3337 = vadd.f32 0.0, %v3336
        %v3338 = vpop.f32.mrb[0].mxu0
        %3339 = vmatprep.mubr.f32.mxu0 0.0
        %3340 = vmatmul.mubr.f32.gmra.mrb[0].mxu0 %v3224
        %v3341 = vpop.f32.mrb[0].mxu0
        %v3342 = vadd.f32 0.0, %v3341
        %v3343 = vpop.f32.mrb[0].mxu0
        %3344 = vmatprep.mubr.f32.mxu0 0.0
        %3345 = vmatmul.mubr.f32.gmra.mrb[0].mxu0 %v3227
        %v3346 = vpop.f32.mrb[0].mxu0
        %v3347 = vadd.f32 0.0, %v3346
        %v3348 = vpop.f32.mrb[0].mxu0
        %3349 = vmatprep.mubr.f32.mxu0 0.0
        %3350 = vmatmul.mubr.f32.gmra.mrb[0].mxu0 %v3230
        %v3351 = vpop.f32.mrb[0].mxu0
        %v3352 = vadd.f32 0.0, %v3351
        %v3353 = vpop.f32.mrb[0].mxu0
        %3354 = vmatprep.mubr.f32.mxu0 0.0
        %3355 = vmatmul.mubr.f32.gmra.mrb[0].mxu0 %v3233
        %v3356 = vpop.f32.mrb[0].mxu0
        %v3357 = vadd.f32 0.0, %v3356
        %v3358 = vpop.f32.mrb[0].mxu0
        %3359 = vmatprep.mubr.f32.mxu0 0.0
        %3360 = vmatmul.mubr.f32.gmra.mrb[0].mxu0 %v3236
        %v3361 = vpop.f32.mrb[0].mxu0
        %v3362 = vadd.f32 0.0, %v3361
        %v3363 = vpop.f32.mrb[0].mxu0
        %3364 = vmatprep.mubr.f32.mxu0 0.0
        %3365 = vmatmul.mubr.f32.gmra.mrb[0].mxu0 %v3239
        %v3366 = vpop.f32.mrb[0].mxu0
        %v3367 = vadd.f32 0.0, %v3366
        %v3368 = vpop.f32.mrb[0].mxu0
        %3369 = vmatprep.mubr.f32.mxu0 0.0
        %3370 = vmatmul.mubr.f32.gmra.mrb[0].mxu0 %v3242
        %v3371 = vpop.f32.mrb[0].mxu0
        %v3372 = vadd.f32 0.0, %v3371
        %v3373 = vpop.f32.mrb[0].mxu0
        %3374 = vmatprep.mubr.f32.mxu0 0.0
        %3375 = vmatmul.mubr.f32.gmra.mrb[0].mxu0 %v3245
        %v3376 = vpop.f32.mrb[0].mxu0
        %v3377 = vadd.f32 0.0, %v3376
        %v3378 = vpop.f32.mrb[0].mxu0
        %3379 = vmatprep.mubr.f32.mxu0 0.0
        %3380 = vmatmul.mubr.f32.gmra.mrb[0].mxu0 %v3248
        %v3381 = vpop.f32.mrb[0].mxu0
        %v3382 = vadd.f32 0.0, %v3381
        %v3383 = vpop.f32.mrb[0].mxu0
        %3384 = vmatprep.mubr.f32.mxu0 0.0
        %3385 = vmatmul.mubr.f32.gmra.mrb[0].mxu0 %v3251
        %v3386 = vpop.f32.mrb[0].mxu0
        %v3387 = vadd.f32 0.0, %v3386
        %v3388 = vpop.f32.mrb[0].mxu0
        %3389 = vmatprep.mubr.f32.mxu0 0.0
        %3390 = vmatmul.mubr.f32.gmra.mrb[0].mxu0 %v3254
        %v3391 = vpop.f32.mrb[0].mxu0
        %v3392 = vadd.f32 0.0, %v3391
        %v3393 = vpop.f32.mrb[0].mxu0
        %3394 = vmatprep.mubr.f32.mxu0 0.0
        %3395 = vmatmul.mubr.f32.gmra.mrb[0].mxu0 %v3257
        %v3396 = vpop.f32.mrb[0].mxu0
        %v3397 = vadd.f32 0.0, %v3396
        %v3398 = vpop.f32.mrb[0].mxu0
        %3399 = vmatprep.mubr.f32.mxu0 0.0
        %3400 = vmatmul.mubr.f32.gmra.mrb[0].mxu0 %v3260
        %v3401 = vpop.f32.mrb[0].mxu0
        %v3402 = vadd.f32 0.0, %v3401
        %v3403 = vpop.f32.mrb[0].mxu0
        %3404 = vmatprep.mubr.f32.mxu0 0.0
        %3405 = vmatmul.mubr.f32.gmra.mrb[0].mxu0 %v3263
        %v3406 = vpop.f32.mrb[0].mxu0
        %v3407 = vadd.f32 0.0, %v3406
        %v3408 = vpop.f32.mrb[0].mxu0
        %3409 = vdwg.mxu0
        %v3410 = vadd.f32 %v3183, %v3332
        %v3411 = vadd.f32 %v3184, %v3337
        %v3412 = vadd.f32 %v3185, %v3342
        %v3413 = vadd.f32 %v3186, %v3347
        %v3414 = vadd.f32 %v3187, %v3352
        %v3415 = vadd.f32 %v3188, %v3357
        %v3416 = vadd.f32 %v3189, %v3362
        %v3417 = vadd.f32 %v3190, %v3367
        %v3418 = vadd.f32 %v3191, %v3372
        %v3419 = vadd.f32 %v3192, %v3377
        %v3420 = vadd.f32 %v3193, %v3382
        %v3421 = vadd.f32 %v3194, %v3387
        %v3422 = vadd.f32 %v3195, %v3392
        %v3423 = vadd.f32 %v3196, %v3397
        %v3424 = vadd.f32 %v3197, %v3402
        %v3425 = vadd.f32 %v3198, %v3407
        %v3426 = vld [vmem:[%s2971 + $0x2] sm:$0xff]
        %v3427 = vld [vmem:[%s2971 + $0xa] sm:$0xff]
        %v3428 = vld [vmem:[%s2971 + $0x12] sm:$0xff]
        %v3429 = vld [vmem:[%s2971 + $0x1a] sm:$0xff]
        %v3430 = vld [vmem:[%s2971 + $0x22] sm:$0xff]
        %v3431 = vld [vmem:[%s2971 + $0x2a] sm:$0xff]
        %v3432 = vld [vmem:[%s2971 + $0x32] sm:$0xff]
        %v3433 = vld [vmem:[%s2971 + $0x3a] sm:$0xff]
        %v3434 = vld [vmem:[%s2971 + $0x4a] sm:$0xff]
        %v3435 = vld [vmem:[%s2971 + $0x52] sm:$0xff]
        %v3436 = vld [vmem:[%s2971 + $0x5a] sm:$0xff]
        %v3437 = vld [vmem:[%s2971 + $0x62] sm:$0xff]
        %v3438 = vld [vmem:[%s2971 + $0x6a] sm:$0xff]
        %v3439 = vld [vmem:[%s2971 + $0x72] sm:$0xff]
        %v3440 = vld [vmem:[%s2971 + $0x7a] sm:$0xff]
        %v3441 = vld [vmem:[%s2971 + $0x82] sm:$0xff]
        %s3442 = scalar_lea.vmem %s1, 40
        %v3443 = vld [vmem:[%s3442] sm:$0xff]
        %v3445 = vsel %vm385, %v3426, 0
        %v3448 = vsel %vm385, %v3427, 0
        %v3451 = vsel %vm385, %v3428, 0
        %v3454 = vsel %vm385, %v3429, 0
        %v3457 = vsel %vm385, %v3430, 0
        %v3460 = vsel %vm385, %v3431, 0
        %v3463 = vsel %vm385, %v3432, 0
        %v3466 = vsel %vm385, %v3433, 0
        %v3469 = vsel %vm385, %v3434, 0
        %v3472 = vsel %vm385, %v3435, 0
        %v3475 = vsel %vm385, %v3436, 0
        %v3478 = vsel %vm385, %v3437, 0
        %v3481 = vsel %vm385, %v3438, 0
        %v3484 = vsel %vm385, %v3439, 0
        %v3487 = vsel %vm385, %v3440, 0
        %v3490 = vsel %vm385, %v3441, 0
        %3492 = vmatprep.subr.mxu0 0.0
        %3493 = vmatpush1.msra.mxu0 %v3443
        %3494 = vmatprep.subr.mxu0 0.0
        %3495 = vmatpush1.msra.mxu0 0.0
        %3496 = vmatprep.subr.mxu0 0.0
        %3497 = vmatpush1.msra.mxu0 0.0
        %3498 = vmatprep.subr.mxu0 0.0
        %3499 = vmatpush1.msra.mxu0 0.0
        %3500 = vmatprep.subr.mxu0 0.0
        %3501 = vmatpush1.msra.mxu0 0.0
        %3502 = vmatprep.subr.mxu0 0.0
        %3503 = vmatpush1.msra.mxu0 0.0
        %3504 = vmatprep.subr.mxu0 0.0
        %3505 = vmatpush1.msra.mxu0 0.0
        %3506 = vmatprep.subr.mxu0 0.0
        %3507 = vmatpush1.msra.mxu0 0.0
        %3508 = vmatprep.subr.mxu0 0.0
        %3509 = vmatpush1.msra.mxu0 0.0
        %3510 = vmatprep.subr.mxu0 0.0
        %3511 = vmatpush1.msra.mxu0 0.0
        %3512 = vmatprep.subr.mxu0 0.0
        %3513 = vmatpush1.msra.mxu0 0.0
        %3514 = vmatprep.subr.mxu0 0.0
        %3515 = vmatpush1.msra.mxu0 0.0
        %3516 = vmatprep.subr.mxu0 0.0
        %3517 = vmatpush1.msra.mxu0 0.0
        %3518 = vmatprep.subr.mxu0 0.0
        %3519 = vmatpush1.msra.mxu0 0.0
        %3520 = vmatprep.subr.mxu0 0.0
        %3521 = vmatpush1.msra.mxu0 0.0
        %3522 = vmatprep.subr.mxu0 0.0
        %3523 = vmatpush1.msra.mxu0 0.0
        %3524 = vmatprep.subr.mxu0 0.0
        %3525 = vmatpush1.msra.mxu0 0.0
        %3526 = vmatprep.subr.mxu0 0.0
        %3527 = vmatpush1.msra.mxu0 0.0
        %3528 = vmatprep.subr.mxu0 0.0
        %3529 = vmatpush1.msra.mxu0 0.0
        %3530 = vmatprep.subr.mxu0 0.0
        %3531 = vmatpush1.msra.mxu0 0.0
        %3532 = vmatprep.subr.mxu0 0.0
        %3533 = vmatpush1.msra.mxu0 0.0
        %3534 = vmatprep.subr.mxu0 0.0
        %3535 = vmatpush1.msra.mxu0 0.0
        %3536 = vmatprep.subr.mxu0 0.0
        %3537 = vmatpush1.msra.mxu0 0.0
        %3538 = vmatprep.subr.mxu0 0.0
        %3539 = vmatpush1.msra.mxu0 0.0
        %3540 = vmatprep.subr.mxu0 0.0
        %3541 = vmatpush1.msra.mxu0 0.0
        %3542 = vmatprep.subr.mxu0 0.0
        %3543 = vmatpush1.msra.mxu0 0.0
        %3544 = vmatprep.subr.mxu0 0.0
        %3545 = vmatpush1.msra.mxu0 0.0
        %3546 = vmatprep.subr.mxu0 0.0
        %3547 = vmatpush1.msra.mxu0 0.0
        %3548 = vmatprep.subr.mxu0 0.0
        %3549 = vmatpush1.msra.mxu0 0.0
        %3550 = vmatprep.subr.mxu0 0.0
        %3551 = vmatpush1.msra.mxu0 0.0
        %3552 = vmatprep.subr.mxu0 0.0
        %3553 = vmatpush1.msra.mxu0 0.0
        %3554 = vmatprep.subr.mxu0 0.0
        %3555 = vmatpush1.msra.mxu0 0.0
        %3556 = vmatprep.mubr.f32.mxu0 0.0
        %3557 = vmatmul.mubr.f32.gmra.mrb[0].mxu0 %v3445
        %v3558 = vpop.f32.mrb[0].mxu0
        %v3559 = vadd.f32 0.0, %v3558
        %v3560 = vpop.f32.mrb[0].mxu0
        %3561 = vmatprep.mubr.f32.mxu0 0.0
        %3562 = vmatmul.mubr.f32.gmra.mrb[0].mxu0 %v3448
        %v3563 = vpop.f32.mrb[0].mxu0
        %v3564 = vadd.f32 0.0, %v3563
        %v3565 = vpop.f32.mrb[0].mxu0
        %3566 = vmatprep.mubr.f32.mxu0 0.0
        %3567 = vmatmul.mubr.f32.gmra.mrb[0].mxu0 %v3451
        %v3568 = vpop.f32.mrb[0].mxu0
        %v3569 = vadd.f32 0.0, %v3568
        %v3570 = vpop.f32.mrb[0].mxu0
        %3571 = vmatprep.mubr.f32.mxu0 0.0
        %3572 = vmatmul.mubr.f32.gmra.mrb[0].mxu0 %v3454
        %v3573 = vpop.f32.mrb[0].mxu0
        %v3574 = vadd.f32 0.0, %v3573
        %v3575 = vpop.f32.mrb[0].mxu0
        %3576 = vmatprep.mubr.f32.mxu0 0.0
        %3577 = vmatmul.mubr.f32.gmra.mrb[0].mxu0 %v3457
        %v3578 = vpop.f32.mrb[0].mxu0
        %v3579 = vadd.f32 0.0, %v3578
        %v3580 = vpop.f32.mrb[0].mxu0
        %3581 = vmatprep.mubr.f32.mxu0 0.0
        %3582 = vmatmul.mubr.f32.gmra.mrb[0].mxu0 %v3460
        %v3583 = vpop.f32.mrb[0].mxu0
        %v3584 = vadd.f32 0.0, %v3583
        %v3585 = vpop.f32.mrb[0].mxu0
        %3586 = vmatprep.mubr.f32.mxu0 0.0
        %3587 = vmatmul.mubr.f32.gmra.mrb[0].mxu0 %v3463
        %v3588 = vpop.f32.mrb[0].mxu0
        %v3589 = vadd.f32 0.0, %v3588
        %v3590 = vpop.f32.mrb[0].mxu0
        %3591 = vmatprep.mubr.f32.mxu0 0.0
        %3592 = vmatmul.mubr.f32.gmra.mrb[0].mxu0 %v3466
        %v3593 = vpop.f32.mrb[0].mxu0
        %v3594 = vadd.f32 0.0, %v3593
        %v3595 = vpop.f32.mrb[0].mxu0
        %3596 = vmatprep.mubr.f32.mxu0 0.0
        %3597 = vmatmul.mubr.f32.gmra.mrb[0].mxu0 %v3469
        %v3598 = vpop.f32.mrb[0].mxu0
        %v3599 = vadd.f32 0.0, %v3598
        %v3600 = vpop.f32.mrb[0].mxu0
        %3601 = vmatprep.mubr.f32.mxu0 0.0
        %3602 = vmatmul.mubr.f32.gmra.mrb[0].mxu0 %v3472
        %v3603 = vpop.f32.mrb[0].mxu0
        %v3604 = vadd.f32 0.0, %v3603
        %v3605 = vpop.f32.mrb[0].mxu0
        %3606 = vmatprep.mubr.f32.mxu0 0.0
        %3607 = vmatmul.mubr.f32.gmra.mrb[0].mxu0 %v3475
        %v3608 = vpop.f32.mrb[0].mxu0
        %v3609 = vadd.f32 0.0, %v3608
        %v3610 = vpop.f32.mrb[0].mxu0
        %3611 = vmatprep.mubr.f32.mxu0 0.0
        %3612 = vmatmul.mubr.f32.gmra.mrb[0].mxu0 %v3478
        %v3613 = vpop.f32.mrb[0].mxu0
        %v3614 = vadd.f32 0.0, %v3613
        %v3615 = vpop.f32.mrb[0].mxu0
        %3616 = vmatprep.mubr.f32.mxu0 0.0
        %3617 = vmatmul.mubr.f32.gmra.mrb[0].mxu0 %v3481
        %v3618 = vpop.f32.mrb[0].mxu0
        %v3619 = vadd.f32 0.0, %v3618
        %v3620 = vpop.f32.mrb[0].mxu0
        %3621 = vmatprep.mubr.f32.mxu0 0.0
        %3622 = vmatmul.mubr.f32.gmra.mrb[0].mxu0 %v3484
        %v3623 = vpop.f32.mrb[0].mxu0
        %v3624 = vadd.f32 0.0, %v3623
        %v3625 = vpop.f32.mrb[0].mxu0
        %3626 = vmatprep.mubr.f32.mxu0 0.0
        %3627 = vmatmul.mubr.f32.gmra.mrb[0].mxu0 %v3487
        %v3628 = vpop.f32.mrb[0].mxu0
        %v3629 = vadd.f32 0.0, %v3628
        %v3630 = vpop.f32.mrb[0].mxu0
        %3631 = vmatprep.mubr.f32.mxu0 0.0
        %3632 = vmatmul.mubr.f32.gmra.mrb[0].mxu0 %v3490
        %v3633 = vpop.f32.mrb[0].mxu0
        %v3634 = vadd.f32 0.0, %v3633
        %v3635 = vpop.f32.mrb[0].mxu0
        %3636 = vdwg.mxu0
        %v3637 = vadd.f32 %v3410, %v3559
        %v3638 = vadd.f32 %v3411, %v3564
        %v3639 = vadd.f32 %v3412, %v3569
        %v3640 = vadd.f32 %v3413, %v3574
        %v3641 = vadd.f32 %v3414, %v3579
        %v3642 = vadd.f32 %v3415, %v3584
        %v3643 = vadd.f32 %v3416, %v3589
        %v3644 = vadd.f32 %v3417, %v3594
        %v3645 = vadd.f32 %v3418, %v3599
        %v3646 = vadd.f32 %v3419, %v3604
        %v3647 = vadd.f32 %v3420, %v3609
        %v3648 = vadd.f32 %v3421, %v3614
        %v3649 = vadd.f32 %v3422, %v3619
        %v3650 = vadd.f32 %v3423, %v3624
        %v3651 = vadd.f32 %v3424, %v3629
        %v3652 = vadd.f32 %v3425, %v3634
        %s3653 = sadd.s32 %s2318, 2
        %s3654 = smul.u32 %s3653, 72
        %s3655 = scalar_lea.vmem [#allocation2], %s3654
        %v3656 = vld [vmem:[%s3655] sm:$0xff]
        %v3657 = vld [vmem:[%s3655 + $0x8] sm:$0xff]
        %v3658 = vld [vmem:[%s3655 + $0x10] sm:$0xff]
        %v3659 = vld [vmem:[%s3655 + $0x18] sm:$0xff]
        %v3660 = vld [vmem:[%s3655 + $0x20] sm:$0xff]
        %v3661 = vld [vmem:[%s3655 + $0x28] sm:$0xff]
        %v3662 = vld [vmem:[%s3655 + $0x30] sm:$0xff]
        %v3663 = vld [vmem:[%s3655 + $0x38] sm:$0xff]
        %v3664 = vld [vmem:[%s3655 + $0x48] sm:$0xff]
        %v3665 = vld [vmem:[%s3655 + $0x50] sm:$0xff]
        %v3666 = vld [vmem:[%s3655 + $0x58] sm:$0xff]
        %v3667 = vld [vmem:[%s3655 + $0x60] sm:$0xff]
        %v3668 = vld [vmem:[%s3655 + $0x68] sm:$0xff]
        %v3669 = vld [vmem:[%s3655 + $0x70] sm:$0xff]
        %v3670 = vld [vmem:[%s3655 + $0x78] sm:$0xff]
        %v3671 = vld [vmem:[%s3655 + $0x80] sm:$0xff]
        %s3672 = scalar_lea.vmem %s1, 48
        %v3673 = vld [vmem:[%s3672] sm:$0xff]
        %v3675 = vsel %vm385, %v3656, 0
        %v3678 = vsel %vm385, %v3657, 0
        %v3681 = vsel %vm385, %v3658, 0
        %v3684 = vsel %vm385, %v3659, 0
        %v3687 = vsel %vm385, %v3660, 0
        %v3690 = vsel %vm385, %v3661, 0
        %v3693 = vsel %vm385, %v3662, 0
        %v3696 = vsel %vm385, %v3663, 0
        %v3699 = vsel %vm385, %v3664, 0
        %v3702 = vsel %vm385, %v3665, 0
        %v3705 = vsel %vm385, %v3666, 0
        %v3708 = vsel %vm385, %v3667, 0
        %v3711 = vsel %vm385, %v3668, 0
        %v3714 = vsel %vm385, %v3669, 0
        %v3717 = vsel %vm385, %v3670, 0
        %v3720 = vsel %vm385, %v3671, 0
        %3722 = vmatprep.subr.mxu0 0.0
        %3723 = vmatpush1.msra.mxu0 %v3673
        %3724 = vmatprep.subr.mxu0 0.0
        %3725 = vmatpush1.msra.mxu0 0.0
        %3726 = vmatprep.subr.mxu0 0.0
        %3727 = vmatpush1.msra.mxu0 0.0
        %3728 = vmatprep.subr.mxu0 0.0
        %3729 = vmatpush1.msra.mxu0 0.0
        %3730 = vmatprep.subr.mxu0 0.0
        %3731 = vmatpush1.msra.mxu0 0.0
        %3732 = vmatprep.subr.mxu0 0.0
        %3733 = vmatpush1.msra.mxu0 0.0
        %3734 = vmatprep.subr.mxu0 0.0
        %3735 = vmatpush1.msra.mxu0 0.0
        %3736 = vmatprep.subr.mxu0 0.0
        %3737 = vmatpush1.msra.mxu0 0.0
        %3738 = vmatprep.subr.mxu0 0.0
        %3739 = vmatpush1.msra.mxu0 0.0
        %3740 = vmatprep.subr.mxu0 0.0
        %3741 = vmatpush1.msra.mxu0 0.0
        %3742 = vmatprep.subr.mxu0 0.0
        %3743 = vmatpush1.msra.mxu0 0.0
        %3744 = vmatprep.subr.mxu0 0.0
        %3745 = vmatpush1.msra.mxu0 0.0
        %3746 = vmatprep.subr.mxu0 0.0
        %3747 = vmatpush1.msra.mxu0 0.0
        %3748 = vmatprep.subr.mxu0 0.0
        %3749 = vmatpush1.msra.mxu0 0.0
        %3750 = vmatprep.subr.mxu0 0.0
        %3751 = vmatpush1.msra.mxu0 0.0
        %3752 = vmatprep.subr.mxu0 0.0
        %3753 = vmatpush1.msra.mxu0 0.0
        %3754 = vmatprep.subr.mxu0 0.0
        %3755 = vmatpush1.msra.mxu0 0.0
        %3756 = vmatprep.subr.mxu0 0.0
        %3757 = vmatpush1.msra.mxu0 0.0
        %3758 = vmatprep.subr.mxu0 0.0
        %3759 = vmatpush1.msra.mxu0 0.0
        %3760 = vmatprep.subr.mxu0 0.0
        %3761 = vmatpush1.msra.mxu0 0.0
        %3762 = vmatprep.subr.mxu0 0.0
        %3763 = vmatpush1.msra.mxu0 0.0
        %3764 = vmatprep.subr.mxu0 0.0
        %3765 = vmatpush1.msra.mxu0 0.0
        %3766 = vmatprep.subr.mxu0 0.0
        %3767 = vmatpush1.msra.mxu0 0.0
        %3768 = vmatprep.subr.mxu0 0.0
        %3769 = vmatpush1.msra.mxu0 0.0
        %3770 = vmatprep.subr.mxu0 0.0
        %3771 = vmatpush1.msra.mxu0 0.0
        %3772 = vmatprep.subr.mxu0 0.0
        %3773 = vmatpush1.msra.mxu0 0.0
        %3774 = vmatprep.subr.mxu0 0.0
        %3775 = vmatpush1.msra.mxu0 0.0
        %3776 = vmatprep.subr.mxu0 0.0
        %3777 = vmatpush1.msra.mxu0 0.0
        %3778 = vmatprep.subr.mxu0 0.0
        %3779 = vmatpush1.msra.mxu0 0.0
        %3780 = vmatprep.subr.mxu0 0.0
        %3781 = vmatpush1.msra.mxu0 0.0
        %3782 = vmatprep.subr.mxu0 0.0
        %3783 = vmatpush1.msra.mxu0 0.0
        %3784 = vmatprep.subr.mxu0 0.0
        %3785 = vmatpush1.msra.mxu0 0.0
        %3786 = vmatprep.mubr.f32.mxu0 0.0
        %3787 = vmatmul.mubr.f32.gmra.mrb[0].mxu0 %v3675
        %v3788 = vpop.f32.mrb[0].mxu0
        %v3789 = vadd.f32 0.0, %v3788
        %v3790 = vpop.f32.mrb[0].mxu0
        %3791 = vmatprep.mubr.f32.mxu0 0.0
        %3792 = vmatmul.mubr.f32.gmra.mrb[0].mxu0 %v3678
        %v3793 = vpop.f32.mrb[0].mxu0
        %v3794 = vadd.f32 0.0, %v3793
        %v3795 = vpop.f32.mrb[0].mxu0
        %3796 = vmatprep.mubr.f32.mxu0 0.0
        %3797 = vmatmul.mubr.f32.gmra.mrb[0].mxu0 %v3681
        %v3798 = vpop.f32.mrb[0].mxu0
        %v3799 = vadd.f32 0.0, %v3798
        %v3800 = vpop.f32.mrb[0].mxu0
        %3801 = vmatprep.mubr.f32.mxu0 0.0
        %3802 = vmatmul.mubr.f32.gmra.mrb[0].mxu0 %v3684
        %v3803 = vpop.f32.mrb[0].mxu0
        %v3804 = vadd.f32 0.0, %v3803
        %v3805 = vpop.f32.mrb[0].mxu0
        %3806 = vmatprep.mubr.f32.mxu0 0.0
        %3807 = vmatmul.mubr.f32.gmra.mrb[0].mxu0 %v3687
        %v3808 = vpop.f32.mrb[0].mxu0
        %v3809 = vadd.f32 0.0, %v3808
        %v3810 = vpop.f32.mrb[0].mxu0
        %3811 = vmatprep.mubr.f32.mxu0 0.0
        %3812 = vmatmul.mubr.f32.gmra.mrb[0].mxu0 %v3690
        %v3813 = vpop.f32.mrb[0].mxu0
        %v3814 = vadd.f32 0.0, %v3813
        %v3815 = vpop.f32.mrb[0].mxu0
        %3816 = vmatprep.mubr.f32.mxu0 0.0
        %3817 = vmatmul.mubr.f32.gmra.mrb[0].mxu0 %v3693
        %v3818 = vpop.f32.mrb[0].mxu0
        %v3819 = vadd.f32 0.0, %v3818
        %v3820 = vpop.f32.mrb[0].mxu0
        %3821 = vmatprep.mubr.f32.mxu0 0.0
        %3822 = vmatmul.mubr.f32.gmra.mrb[0].mxu0 %v3696
        %v3823 = vpop.f32.mrb[0].mxu0
        %v3824 = vadd.f32 0.0, %v3823
        %v3825 = vpop.f32.mrb[0].mxu0
        %3826 = vmatprep.mubr.f32.mxu0 0.0
        %3827 = vmatmul.mubr.f32.gmra.mrb[0].mxu0 %v3699
        %v3828 = vpop.f32.mrb[0].mxu0
        %v3829 = vadd.f32 0.0, %v3828
        %v3830 = vpop.f32.mrb[0].mxu0
        %3831 = vmatprep.mubr.f32.mxu0 0.0
        %3832 = vmatmul.mubr.f32.gmra.mrb[0].mxu0 %v3702
        %v3833 = vpop.f32.mrb[0].mxu0
        %v3834 = vadd.f32 0.0, %v3833
        %v3835 = vpop.f32.mrb[0].mxu0
        %3836 = vmatprep.mubr.f32.mxu0 0.0
        %3837 = vmatmul.mubr.f32.gmra.mrb[0].mxu0 %v3705
        %v3838 = vpop.f32.mrb[0].mxu0
        %v3839 = vadd.f32 0.0, %v3838
        %v3840 = vpop.f32.mrb[0].mxu0
        %3841 = vmatprep.mubr.f32.mxu0 0.0
        %3842 = vmatmul.mubr.f32.gmra.mrb[0].mxu0 %v3708
        %v3843 = vpop.f32.mrb[0].mxu0
        %v3844 = vadd.f32 0.0, %v3843
        %v3845 = vpop.f32.mrb[0].mxu0
        %3846 = vmatprep.mubr.f32.mxu0 0.0
        %3847 = vmatmul.mubr.f32.gmra.mrb[0].mxu0 %v3711
        %v3848 = vpop.f32.mrb[0].mxu0
        %v3849 = vadd.f32 0.0, %v3848
        %v3850 = vpop.f32.mrb[0].mxu0
        %3851 = vmatprep.mubr.f32.mxu0 0.0
        %3852 = vmatmul.mubr.f32.gmra.mrb[0].mxu0 %v3714
        %v3853 = vpop.f32.mrb[0].mxu0
        %v3854 = vadd.f32 0.0, %v3853
        %v3855 = vpop.f32.mrb[0].mxu0
        %3856 = vmatprep.mubr.f32.mxu0 0.0
        %3857 = vmatmul.mubr.f32.gmra.mrb[0].mxu0 %v3717
        %v3858 = vpop.f32.mrb[0].mxu0
        %v3859 = vadd.f32 0.0, %v3858
        %v3860 = vpop.f32.mrb[0].mxu0
        %3861 = vmatprep.mubr.f32.mxu0 0.0
        %3862 = vmatmul.mubr.f32.gmra.mrb[0].mxu0 %v3720
        %v3863 = vpop.f32.mrb[0].mxu0
        %v3864 = vadd.f32 0.0, %v3863
        %v3865 = vpop.f32.mrb[0].mxu0
        %3866 = vdwg.mxu0
        %v3867 = vadd.f32 %v3637, %v3789
        %v3868 = vadd.f32 %v3638, %v3794
        %v3869 = vadd.f32 %v3639, %v3799
        %v3870 = vadd.f32 %v3640, %v3804
        %v3871 = vadd.f32 %v3641, %v3809
        %v3872 = vadd.f32 %v3642, %v3814
        %v3873 = vadd.f32 %v3643, %v3819
        %v3874 = vadd.f32 %v3644, %v3824
        %v3875 = vadd.f32 %v3645, %v3829
        %v3876 = vadd.f32 %v3646, %v3834
        %v3877 = vadd.f32 %v3647, %v3839
        %v3878 = vadd.f32 %v3648, %v3844
        %v3879 = vadd.f32 %v3649, %v3849
        %v3880 = vadd.f32 %v3650, %v3854
        %v3881 = vadd.f32 %v3651, %v3859
        %v3882 = vadd.f32 %v3652, %v3864
        %v3883 = vld [vmem:[%s3655 + $0x1] sm:$0xff]
        %v3884 = vld [vmem:[%s3655 + $0x9] sm:$0xff]
        %v3885 = vld [vmem:[%s3655 + $0x11] sm:$0xff]
        %v3886 = vld [vmem:[%s3655 + $0x19] sm:$0xff]
        %v3887 = vld [vmem:[%s3655 + $0x21] sm:$0xff]
        %v3888 = vld [vmem:[%s3655 + $0x29] sm:$0xff]
        %v3889 = vld [vmem:[%s3655 + $0x31] sm:$0xff]
        %v3890 = vld [vmem:[%s3655 + $0x39] sm:$0xff]
        %v3891 = vld [vmem:[%s3655 + $0x49] sm:$0xff]
        %v3892 = vld [vmem:[%s3655 + $0x51] sm:$0xff]
        %v3893 = vld [vmem:[%s3655 + $0x59] sm:$0xff]
        %v3894 = vld [vmem:[%s3655 + $0x61] sm:$0xff]
        %v3895 = vld [vmem:[%s3655 + $0x69] sm:$0xff]
        %v3896 = vld [vmem:[%s3655 + $0x71] sm:$0xff]
        %v3897 = vld [vmem:[%s3655 + $0x79] sm:$0xff]
        %v3898 = vld [vmem:[%s3655 + $0x81] sm:$0xff]
        %s3899 = scalar_lea.vmem %s1, 56
        %v3900 = vld [vmem:[%s3899] sm:$0xff]
        %v3902 = vsel %vm385, %v3883, 0
        %v3905 = vsel %vm385, %v3884, 0
        %v3908 = vsel %vm385, %v3885, 0
        %v3911 = vsel %vm385, %v3886, 0
        %v3914 = vsel %vm385, %v3887, 0
        %v3917 = vsel %vm385, %v3888, 0
        %v3920 = vsel %vm385, %v3889, 0
        %v3923 = vsel %vm385, %v3890, 0
        %v3926 = vsel %vm385, %v3891, 0
        %v3929 = vsel %vm385, %v3892, 0
        %v3932 = vsel %vm385, %v3893, 0
        %v3935 = vsel %vm385, %v3894, 0
        %v3938 = vsel %vm385, %v3895, 0
        %v3941 = vsel %vm385, %v3896, 0
        %v3944 = vsel %vm385, %v3897, 0
        %v3947 = vsel %vm385, %v3898, 0
        %3949 = vmatprep.subr.mxu0 0.0
        %3950 = vmatpush1.msra.mxu0 %v3900
        %3951 = vmatprep.subr.mxu0 0.0
        %3952 = vmatpush1.msra.mxu0 0.0
        %3953 = vmatprep.subr.mxu0 0.0
        %3954 = vmatpush1.msra.mxu0 0.0
        %3955 = vmatprep.subr.mxu0 0.0
        %3956 = vmatpush1.msra.mxu0 0.0
        %3957 = vmatprep.subr.mxu0 0.0
        %3958 = vmatpush1.msra.mxu0 0.0
        %3959 = vmatprep.subr.mxu0 0.0
        %3960 = vmatpush1.msra.mxu0 0.0
        %3961 = vmatprep.subr.mxu0 0.0
        %3962 = vmatpush1.msra.mxu0 0.0
        %3963 = vmatprep.subr.mxu0 0.0
        %3964 = vmatpush1.msra.mxu0 0.0
        %3965 = vmatprep.subr.mxu0 0.0
        %3966 = vmatpush1.msra.mxu0 0.0
        %3967 = vmatprep.subr.mxu0 0.0
        %3968 = vmatpush1.msra.mxu0 0.0
        %3969 = vmatprep.subr.mxu0 0.0
        %3970 = vmatpush1.msra.mxu0 0.0
        %3971 = vmatprep.subr.mxu0 0.0
        %3972 = vmatpush1.msra.mxu0 0.0
        %3973 = vmatprep.subr.mxu0 0.0
        %3974 = vmatpush1.msra.mxu0 0.0
        %3975 = vmatprep.subr.mxu0 0.0
        %3976 = vmatpush1.msra.mxu0 0.0
        %3977 = vmatprep.subr.mxu0 0.0
        %3978 = vmatpush1.msra.mxu0 0.0
        %3979 = vmatprep.subr.mxu0 0.0
        %3980 = vmatpush1.msra.mxu0 0.0
        %3981 = vmatprep.subr.mxu0 0.0
        %3982 = vmatpush1.msra.mxu0 0.0
        %3983 = vmatprep.subr.mxu0 0.0
        %3984 = vmatpush1.msra.mxu0 0.0
        %3985 = vmatprep.subr.mxu0 0.0
        %3986 = vmatpush1.msra.mxu0 0.0
        %3987 = vmatprep.subr.mxu0 0.0
        %3988 = vmatpush1.msra.mxu0 0.0
        %3989 = vmatprep.subr.mxu0 0.0
        %3990 = vmatpush1.msra.mxu0 0.0
        %3991 = vmatprep.subr.mxu0 0.0
        %3992 = vmatpush1.msra.mxu0 0.0
        %3993 = vmatprep.subr.mxu0 0.0
        %3994 = vmatpush1.msra.mxu0 0.0
        %3995 = vmatprep.subr.mxu0 0.0
        %3996 = vmatpush1.msra.mxu0 0.0
        %3997 = vmatprep.subr.mxu0 0.0
        %3998 = vmatpush1.msra.mxu0 0.0
        %3999 = vmatprep.subr.mxu0 0.0
        %4000 = vmatpush1.msra.mxu0 0.0
        %4001 = vmatprep.subr.mxu0 0.0
        %4002 = vmatpush1.msra.mxu0 0.0
        %4003 = vmatprep.subr.mxu0 0.0
        %4004 = vmatpush1.msra.mxu0 0.0
        %4005 = vmatprep.subr.mxu0 0.0
        %4006 = vmatpush1.msra.mxu0 0.0
        %4007 = vmatprep.subr.mxu0 0.0
        %4008 = vmatpush1.msra.mxu0 0.0
        %4009 = vmatprep.subr.mxu0 0.0
        %4010 = vmatpush1.msra.mxu0 0.0
        %4011 = vmatprep.subr.mxu0 0.0
        %4012 = vmatpush1.msra.mxu0 0.0
        %4013 = vmatprep.mubr.f32.mxu0 0.0
        %4014 = vmatmul.mubr.f32.gmra.mrb[0].mxu0 %v3902
        %v4015 = vpop.f32.mrb[0].mxu0
        %v4016 = vadd.f32 0.0, %v4015
        %v4017 = vpop.f32.mrb[0].mxu0
        %4018 = vmatprep.mubr.f32.mxu0 0.0
        %4019 = vmatmul.mubr.f32.gmra.mrb[0].mxu0 %v3905
        %v4020 = vpop.f32.mrb[0].mxu0
        %v4021 = vadd.f32 0.0, %v4020
        %v4022 = vpop.f32.mrb[0].mxu0
        %4023 = vmatprep.mubr.f32.mxu0 0.0
        %4024 = vmatmul.mubr.f32.gmra.mrb[0].mxu0 %v3908
        %v4025 = vpop.f32.mrb[0].mxu0
        %v4026 = vadd.f32 0.0, %v4025
        %v4027 = vpop.f32.mrb[0].mxu0
        %4028 = vmatprep.mubr.f32.mxu0 0.0
        %4029 = vmatmul.mubr.f32.gmra.mrb[0].mxu0 %v3911
        %v4030 = vpop.f32.mrb[0].mxu0
        %v4031 = vadd.f32 0.0, %v4030
        %v4032 = vpop.f32.mrb[0].mxu0
        %4033 = vmatprep.mubr.f32.mxu0 0.0
        %4034 = vmatmul.mubr.f32.gmra.mrb[0].mxu0 %v3914
        %v4035 = vpop.f32.mrb[0].mxu0
        %v4036 = vadd.f32 0.0, %v4035
        %v4037 = vpop.f32.mrb[0].mxu0
        %4038 = vmatprep.mubr.f32.mxu0 0.0
        %4039 = vmatmul.mubr.f32.gmra.mrb[0].mxu0 %v3917
        %v4040 = vpop.f32.mrb[0].mxu0
        %v4041 = vadd.f32 0.0, %v4040
        %v4042 = vpop.f32.mrb[0].mxu0
        %4043 = vmatprep.mubr.f32.mxu0 0.0
        %4044 = vmatmul.mubr.f32.gmra.mrb[0].mxu0 %v3920
        %v4045 = vpop.f32.mrb[0].mxu0
        %v4046 = vadd.f32 0.0, %v4045
        %v4047 = vpop.f32.mrb[0].mxu0
        %4048 = vmatprep.mubr.f32.mxu0 0.0
        %4049 = vmatmul.mubr.f32.gmra.mrb[0].mxu0 %v3923
        %v4050 = vpop.f32.mrb[0].mxu0
        %v4051 = vadd.f32 0.0, %v4050
        %v4052 = vpop.f32.mrb[0].mxu0
        %4053 = vmatprep.mubr.f32.mxu0 0.0
        %4054 = vmatmul.mubr.f32.gmra.mrb[0].mxu0 %v3926
        %v4055 = vpop.f32.mrb[0].mxu0
        %v4056 = vadd.f32 0.0, %v4055
        %v4057 = vpop.f32.mrb[0].mxu0
        %4058 = vmatprep.mubr.f32.mxu0 0.0
        %4059 = vmatmul.mubr.f32.gmra.mrb[0].mxu0 %v3929
        %v4060 = vpop.f32.mrb[0].mxu0
        %v4061 = vadd.f32 0.0, %v4060
        %v4062 = vpop.f32.mrb[0].mxu0
        %4063 = vmatprep.mubr.f32.mxu0 0.0
        %4064 = vmatmul.mubr.f32.gmra.mrb[0].mxu0 %v3932
        %v4065 = vpop.f32.mrb[0].mxu0
        %v4066 = vadd.f32 0.0, %v4065
        %v4067 = vpop.f32.mrb[0].mxu0
        %4068 = vmatprep.mubr.f32.mxu0 0.0
        %4069 = vmatmul.mubr.f32.gmra.mrb[0].mxu0 %v3935
        %v4070 = vpop.f32.mrb[0].mxu0
        %v4071 = vadd.f32 0.0, %v4070
        %v4072 = vpop.f32.mrb[0].mxu0
        %4073 = vmatprep.mubr.f32.mxu0 0.0
        %4074 = vmatmul.mubr.f32.gmra.mrb[0].mxu0 %v3938
        %v4075 = vpop.f32.mrb[0].mxu0
        %v4076 = vadd.f32 0.0, %v4075
        %v4077 = vpop.f32.mrb[0].mxu0
        %4078 = vmatprep.mubr.f32.mxu0 0.0
        %4079 = vmatmul.mubr.f32.gmra.mrb[0].mxu0 %v3941
        %v4080 = vpop.f32.mrb[0].mxu0
        %v4081 = vadd.f32 0.0, %v4080
        %v4082 = vpop.f32.mrb[0].mxu0
        %4083 = vmatprep.mubr.f32.mxu0 0.0
        %4084 = vmatmul.mubr.f32.gmra.mrb[0].mxu0 %v3944
        %v4085 = vpop.f32.mrb[0].mxu0
        %v4086 = vadd.f32 0.0, %v4085
        %v4087 = vpop.f32.mrb[0].mxu0
        %4088 = vmatprep.mubr.f32.mxu0 0.0
        %4089 = vmatmul.mubr.f32.gmra.mrb[0].mxu0 %v3947
        %v4090 = vpop.f32.mrb[0].mxu0
        %v4091 = vadd.f32 0.0, %v4090
        %v4092 = vpop.f32.mrb[0].mxu0
        %4093 = vdwg.mxu0
        %v4094 = vadd.f32 %v3867, %v4016
        %v4095 = vadd.f32 %v3868, %v4021
        %v4096 = vadd.f32 %v3869, %v4026
        %v4097 = vadd.f32 %v3870, %v4031
        %v4098 = vadd.f32 %v3871, %v4036
        %v4099 = vadd.f32 %v3872, %v4041
        %v4100 = vadd.f32 %v3873, %v4046
        %v4101 = vadd.f32 %v3874, %v4051
        %v4102 = vadd.f32 %v3875, %v4056
        %v4103 = vadd.f32 %v3876, %v4061
        %v4104 = vadd.f32 %v3877, %v4066
        %v4105 = vadd.f32 %v3878, %v4071
        %v4106 = vadd.f32 %v3879, %v4076
        %v4107 = vadd.f32 %v3880, %v4081
        %v4108 = vadd.f32 %v3881, %v4086
        %v4109 = vadd.f32 %v3882, %v4091
        %v4110 = vld [vmem:[%s3655 + $0x2] sm:$0xff]
        %v4111 = vld [vmem:[%s3655 + $0xa] sm:$0xff]
        %v4112 = vld [vmem:[%s3655 + $0x12] sm:$0xff]
        %v4113 = vld [vmem:[%s3655 + $0x1a] sm:$0xff]
        %v4114 = vld [vmem:[%s3655 + $0x22] sm:$0xff]
        %v4115 = vld [vmem:[%s3655 + $0x2a] sm:$0xff]
        %v4116 = vld [vmem:[%s3655 + $0x32] sm:$0xff]
        %v4117 = vld [vmem:[%s3655 + $0x3a] sm:$0xff]
        %v4118 = vld [vmem:[%s3655 + $0x4a] sm:$0xff]
        %v4119 = vld [vmem:[%s3655 + $0x52] sm:$0xff]
        %v4120 = vld [vmem:[%s3655 + $0x5a] sm:$0xff]
        %v4121 = vld [vmem:[%s3655 + $0x62] sm:$0xff]
        %v4122 = vld [vmem:[%s3655 + $0x6a] sm:$0xff]
        %v4123 = vld [vmem:[%s3655 + $0x72] sm:$0xff]
        %v4124 = vld [vmem:[%s3655 + $0x7a] sm:$0xff]
        %v4125 = vld [vmem:[%s3655 + $0x82] sm:$0xff]
        %s4126 = scalar_lea.vmem %s1, 64
        %v4127 = vld [vmem:[%s4126] sm:$0xff]
        %v4129 = vsel %vm385, %v4110, 0
        %v4132 = vsel %vm385, %v4111, 0
        %v4135 = vsel %vm385, %v4112, 0
        %v4138 = vsel %vm385, %v4113, 0
        %v4141 = vsel %vm385, %v4114, 0
        %v4144 = vsel %vm385, %v4115, 0
        %v4147 = vsel %vm385, %v4116, 0
        %v4150 = vsel %vm385, %v4117, 0
        %v4153 = vsel %vm385, %v4118, 0
        %v4156 = vsel %vm385, %v4119, 0
        %v4159 = vsel %vm385, %v4120, 0
        %v4162 = vsel %vm385, %v4121, 0
        %v4165 = vsel %vm385, %v4122, 0
        %v4168 = vsel %vm385, %v4123, 0
        %v4171 = vsel %vm385, %v4124, 0
        %v4174 = vsel %vm385, %v4125, 0
        %4176 = vmatprep.subr.mxu0 0.0
        %4177 = vmatpush1.msra.mxu0 %v4127
        %4178 = vmatprep.subr.mxu0 0.0
        %4179 = vmatpush1.msra.mxu0 0.0
        %4180 = vmatprep.subr.mxu0 0.0
        %4181 = vmatpush1.msra.mxu0 0.0
        %4182 = vmatprep.subr.mxu0 0.0
        %4183 = vmatpush1.msra.mxu0 0.0
        %4184 = vmatprep.subr.mxu0 0.0
        %4185 = vmatpush1.msra.mxu0 0.0
        %4186 = vmatprep.subr.mxu0 0.0
        %4187 = vmatpush1.msra.mxu0 0.0
        %4188 = vmatprep.subr.mxu0 0.0
        %4189 = vmatpush1.msra.mxu0 0.0
        %4190 = vmatprep.subr.mxu0 0.0
        %4191 = vmatpush1.msra.mxu0 0.0
        %4192 = vmatprep.subr.mxu0 0.0
        %4193 = vmatpush1.msra.mxu0 0.0
        %4194 = vmatprep.subr.mxu0 0.0
        %4195 = vmatpush1.msra.mxu0 0.0
        %4196 = vmatprep.subr.mxu0 0.0
        %4197 = vmatpush1.msra.mxu0 0.0
        %4198 = vmatprep.subr.mxu0 0.0
        %4199 = vmatpush1.msra.mxu0 0.0
        %4200 = vmatprep.subr.mxu0 0.0
        %4201 = vmatpush1.msra.mxu0 0.0
        %4202 = vmatprep.subr.mxu0 0.0
        %4203 = vmatpush1.msra.mxu0 0.0
        %4204 = vmatprep.subr.mxu0 0.0
        %4205 = vmatpush1.msra.mxu0 0.0
        %4206 = vmatprep.subr.mxu0 0.0
        %4207 = vmatpush1.msra.mxu0 0.0
        %4208 = vmatprep.subr.mxu0 0.0
        %4209 = vmatpush1.msra.mxu0 0.0
        %4210 = vmatprep.subr.mxu0 0.0
        %4211 = vmatpush1.msra.mxu0 0.0
        %4212 = vmatprep.subr.mxu0 0.0
        %4213 = vmatpush1.msra.mxu0 0.0
        %4214 = vmatprep.subr.mxu0 0.0
        %4215 = vmatpush1.msra.mxu0 0.0
        %4216 = vmatprep.subr.mxu0 0.0
        %4217 = vmatpush1.msra.mxu0 0.0
        %4218 = vmatprep.subr.mxu0 0.0
        %4219 = vmatpush1.msra.mxu0 0.0
        %4220 = vmatprep.subr.mxu0 0.0
        %4221 = vmatpush1.msra.mxu0 0.0
        %4222 = vmatprep.subr.mxu0 0.0
        %4223 = vmatpush1.msra.mxu0 0.0
        %4224 = vmatprep.subr.mxu0 0.0
        %4225 = vmatpush1.msra.mxu0 0.0
        %4226 = vmatprep.subr.mxu0 0.0
        %4227 = vmatpush1.msra.mxu0 0.0
        %4228 = vmatprep.subr.mxu0 0.0
        %4229 = vmatpush1.msra.mxu0 0.0
        %4230 = vmatprep.subr.mxu0 0.0
        %4231 = vmatpush1.msra.mxu0 0.0
        %4232 = vmatprep.subr.mxu0 0.0
        %4233 = vmatpush1.msra.mxu0 0.0
        %4234 = vmatprep.subr.mxu0 0.0
        %4235 = vmatpush1.msra.mxu0 0.0
        %4236 = vmatprep.subr.mxu0 0.0
        %4237 = vmatpush1.msra.mxu0 0.0
        %4238 = vmatprep.subr.mxu0 0.0
        %4239 = vmatpush1.msra.mxu0 0.0
        %4240 = vmatprep.mubr.f32.mxu0 0.0
        %4241 = vmatmul.mubr.f32.gmra.mrb[0].mxu0 %v4129
        %v4242 = vpop.f32.mrb[0].mxu0
        %v4243 = vadd.f32 0.0, %v4242
        %v4244 = vpop.f32.mrb[0].mxu0
        %4245 = vmatprep.mubr.f32.mxu0 0.0
        %4246 = vmatmul.mubr.f32.gmra.mrb[0].mxu0 %v4132
        %v4247 = vpop.f32.mrb[0].mxu0
        %v4248 = vadd.f32 0.0, %v4247
        %v4249 = vpop.f32.mrb[0].mxu0
        %4250 = vmatprep.mubr.f32.mxu0 0.0
        %4251 = vmatmul.mubr.f32.gmra.mrb[0].mxu0 %v4135
        %v4252 = vpop.f32.mrb[0].mxu0
        %v4253 = vadd.f32 0.0, %v4252
        %v4254 = vpop.f32.mrb[0].mxu0
        %4255 = vmatprep.mubr.f32.mxu0 0.0
        %4256 = vmatmul.mubr.f32.gmra.mrb[0].mxu0 %v4138
        %v4257 = vpop.f32.mrb[0].mxu0
        %v4258 = vadd.f32 0.0, %v4257
        %v4259 = vpop.f32.mrb[0].mxu0
        %4260 = vmatprep.mubr.f32.mxu0 0.0
        %4261 = vmatmul.mubr.f32.gmra.mrb[0].mxu0 %v4141
        %v4262 = vpop.f32.mrb[0].mxu0
        %v4263 = vadd.f32 0.0, %v4262
        %v4264 = vpop.f32.mrb[0].mxu0
        %4265 = vmatprep.mubr.f32.mxu0 0.0
        %4266 = vmatmul.mubr.f32.gmra.mrb[0].mxu0 %v4144
        %v4267 = vpop.f32.mrb[0].mxu0
        %v4268 = vadd.f32 0.0, %v4267
        %v4269 = vpop.f32.mrb[0].mxu0
        %4270 = vmatprep.mubr.f32.mxu0 0.0
        %4271 = vmatmul.mubr.f32.gmra.mrb[0].mxu0 %v4147
        %v4272 = vpop.f32.mrb[0].mxu0
        %v4273 = vadd.f32 0.0, %v4272
        %v4274 = vpop.f32.mrb[0].mxu0
        %4275 = vmatprep.mubr.f32.mxu0 0.0
        %4276 = vmatmul.mubr.f32.gmra.mrb[0].mxu0 %v4150
        %v4277 = vpop.f32.mrb[0].mxu0
        %v4278 = vadd.f32 0.0, %v4277
        %v4279 = vpop.f32.mrb[0].mxu0
        %4280 = vmatprep.mubr.f32.mxu0 0.0
        %4281 = vmatmul.mubr.f32.gmra.mrb[0].mxu0 %v4153
        %v4282 = vpop.f32.mrb[0].mxu0
        %v4283 = vadd.f32 0.0, %v4282
        %v4284 = vpop.f32.mrb[0].mxu0
        %4285 = vmatprep.mubr.f32.mxu0 0.0
        %4286 = vmatmul.mubr.f32.gmra.mrb[0].mxu0 %v4156
        %v4287 = vpop.f32.mrb[0].mxu0
        %v4288 = vadd.f32 0.0, %v4287
        %v4289 = vpop.f32.mrb[0].mxu0
        %4290 = vmatprep.mubr.f32.mxu0 0.0
        %4291 = vmatmul.mubr.f32.gmra.mrb[0].mxu0 %v4159
        %v4292 = vpop.f32.mrb[0].mxu0
        %v4293 = vadd.f32 0.0, %v4292
        %v4294 = vpop.f32.mrb[0].mxu0
        %4295 = vmatprep.mubr.f32.mxu0 0.0
        %4296 = vmatmul.mubr.f32.gmra.mrb[0].mxu0 %v4162
        %v4297 = vpop.f32.mrb[0].mxu0
        %v4298 = vadd.f32 0.0, %v4297
        %v4299 = vpop.f32.mrb[0].mxu0
        %4300 = vmatprep.mubr.f32.mxu0 0.0
        %4301 = vmatmul.mubr.f32.gmra.mrb[0].mxu0 %v4165
        %v4302 = vpop.f32.mrb[0].mxu0
        %v4303 = vadd.f32 0.0, %v4302
        %v4304 = vpop.f32.mrb[0].mxu0
        %4305 = vmatprep.mubr.f32.mxu0 0.0
        %4306 = vmatmul.mubr.f32.gmra.mrb[0].mxu0 %v4168
        %v4307 = vpop.f32.mrb[0].mxu0
        %v4308 = vadd.f32 0.0, %v4307
        %v4309 = vpop.f32.mrb[0].mxu0
        %4310 = vmatprep.mubr.f32.mxu0 0.0
        %4311 = vmatmul.mubr.f32.gmra.mrb[0].mxu0 %v4171
        %v4312 = vpop.f32.mrb[0].mxu0
        %v4313 = vadd.f32 0.0, %v4312
        %v4314 = vpop.f32.mrb[0].mxu0
        %4315 = vmatprep.mubr.f32.mxu0 0.0
        %4316 = vmatmul.mubr.f32.gmra.mrb[0].mxu0 %v4174
        %v4317 = vpop.f32.mrb[0].mxu0
        %v4318 = vadd.f32 0.0, %v4317
        %v4319 = vpop.f32.mrb[0].mxu0
        %4320 = vdwg.mxu0
        %v4321 = vadd.f32 %v4094, %v4243
        %v4322 = vadd.f32 %v4095, %v4248
        %v4323 = vadd.f32 %v4096, %v4253
        %v4324 = vadd.f32 %v4097, %v4258
        %v4325 = vadd.f32 %v4098, %v4263
        %v4326 = vadd.f32 %v4099, %v4268
        %v4327 = vadd.f32 %v4100, %v4273
        %v4328 = vadd.f32 %v4101, %v4278
        %v4329 = vadd.f32 %v4102, %v4283
        %v4330 = vadd.f32 %v4103, %v4288
        %v4331 = vadd.f32 %v4104, %v4293
        %v4332 = vadd.f32 %v4105, %v4298
        %v4333 = vadd.f32 %v4106, %v4303
        %v4334 = vadd.f32 %v4107, %v4308
        %v4335 = vadd.f32 %v4108, %v4313
        %v4336 = vadd.f32 %v4109, %v4318
        %v4338 = vlaneseq
        %v4339 = vshrl.u32 %v4338, 7
        %v4340 = vsub.s32 0, %v4339
        %v4341 = vrot.slane %v2311, %v4340
        %v4343 = vadd.f32 %v4321, %v4341
        %v4344 = vadd.f32 %v4322, %v4341
        %v4345 = vadd.f32 %v4323, %v4341
        %v4346 = vadd.f32 %v4324, %v4341
        %v4347 = vadd.f32 %v4325, %v4341
        %v4348 = vadd.f32 %v4326, %v4341
        %v4349 = vadd.f32 %v4327, %v4341
        %v4350 = vadd.f32 %v4328, %v4341
        %v4351 = vadd.f32 %v4329, %v4341
        %v4352 = vadd.f32 %v4330, %v4341
        %v4353 = vadd.f32 %v4331, %v4341
        %v4354 = vadd.f32 %v4332, %v4341
        %v4355 = vadd.f32 %v4333, %v4341
        %v4356 = vadd.f32 %v4334, %v4341
        %v4357 = vadd.f32 %v4335, %v4341
        %v4358 = vadd.f32 %v4336, %v4341
        %v4359 = vmax.f32 %v4343, 0.0
        %v4360 = vmax.f32 %v4344, 0.0
        %v4361 = vmax.f32 %v4345, 0.0
        %v4362 = vmax.f32 %v4346, 0.0
        %v4363 = vmax.f32 %v4347, 0.0
        %v4364 = vmax.f32 %v4348, 0.0
        %v4365 = vmax.f32 %v4349, 0.0
        %v4366 = vmax.f32 %v4350, 0.0
        %v4367 = vmax.f32 %v4351, 0.0
        %v4368 = vmax.f32 %v4352, 0.0
        %v4369 = vmax.f32 %v4353, 0.0
        %v4370 = vmax.f32 %v4354, 0.0
        %v4371 = vmax.f32 %v4355, 0.0
        %v4372 = vmax.f32 %v4356, 0.0
        %v4373 = vmax.f32 %v4357, 0.0
        %v4374 = vmax.f32 %v4358, 0.0
        %4375 = vmatprep.subr.mxu0 0.0
        %4376 = vmatpush1.msra.mxu0 %v4359
        %4377 = vmatprep.subr.mxu0 0.0
        %4378 = vmatpush1.msra.mxu0 %v4360
        %4379 = vmatprep.subr.mxu0 0.0
        %4380 = vmatpush1.msra.mxu0 %v4361
        %4381 = vmatprep.subr.mxu0 0.0
        %4382 = vmatpush1.msra.mxu0 %v4362
        %4383 = vmatprep.subr.mxu0 0.0
        %4384 = vmatpush1.msra.mxu0 %v4363
        %4385 = vmatprep.subr.mxu0 0.0
        %4386 = vmatpush1.msra.mxu0 %v4364
        %4387 = vmatprep.subr.mxu0 0.0
        %4388 = vmatpush1.msra.mxu0 %v4365
        %4389 = vmatprep.subr.mxu0 0.0
        %4390 = vmatpush1.msra.mxu0 %v4366
        %4391 = vmatprep.subr.mxu0 0.0
        %4392 = vmatpush1.msra.mxu0 %v4367
        %4393 = vmatprep.subr.mxu0 0.0
        %4394 = vmatpush1.msra.mxu0 %v4368
        %4395 = vmatprep.subr.mxu0 0.0
        %4396 = vmatpush1.msra.mxu0 %v4369
        %4397 = vmatprep.subr.mxu0 0.0
        %4398 = vmatpush1.msra.mxu0 %v4370
        %4399 = vmatprep.subr.mxu0 0.0
        %4400 = vmatpush1.msra.mxu0 %v4371
        %4401 = vmatprep.subr.mxu0 0.0
        %4402 = vmatpush1.msra.mxu0 %v4372
        %4403 = vmatprep.subr.mxu0 0.0
        %4404 = vmatpush1.msra.mxu0 %v4373
        %4405 = vmatprep.subr.mxu0 0.0
        %4406 = vmatpush1.msra.mxu0 %v4374
        %4407 = vmatprep.subr.mxu0 0.0
        %4408 = vmatpush1.msra.mxu0 0.0
        %4409 = vmatprep.subr.mxu0 0.0
        %4410 = vmatpush1.msra.mxu0 0.0
        %4411 = vmatprep.subr.mxu0 0.0
        %4412 = vmatpush1.msra.mxu0 0.0
        %4413 = vmatprep.subr.mxu0 0.0
        %4414 = vmatpush1.msra.mxu0 0.0
        %4415 = vmatprep.subr.mxu0 0.0
        %4416 = vmatpush1.msra.mxu0 0.0
        %4417 = vmatprep.subr.mxu0 0.0
        %4418 = vmatpush1.msra.mxu0 0.0
        %4419 = vmatprep.subr.mxu0 0.0
        %4420 = vmatpush1.msra.mxu0 0.0
        %4421 = vmatprep.subr.mxu0 0.0
        %4422 = vmatpush1.msra.mxu0 0.0
        %4423 = vmatprep.subr.mxu0 0.0
        %4424 = vmatpush1.msra.mxu0 0.0
        %4425 = vmatprep.subr.mxu0 0.0
        %4426 = vmatpush1.msra.mxu0 0.0
        %4427 = vmatprep.subr.mxu0 0.0
        %4428 = vmatpush1.msra.mxu0 0.0
        %4429 = vmatprep.subr.mxu0 0.0
        %4430 = vmatpush1.msra.mxu0 0.0
        %4431 = vmatprep.subr.mxu0 0.0
        %4432 = vmatpush1.msra.mxu0 0.0
        %4433 = vmatprep.subr.mxu0 0.0
        %4434 = vmatpush1.msra.mxu0 0.0
        %4435 = vmatprep.subr.mxu0 0.0
        %4436 = vmatpush1.msra.mxu0 0.0
        %4437 = vmatprep.subr.mxu0 0.0
        %4438 = vmatpush1.msra.mxu0 0.0
        %4439 = vmatprep.mubr.f32.mxu0 0.0
        %4440 = vmatmul.mubr.f32.gmra.mrb[0].mxu0 %v2279
        %v4441 = vpop.f32.mrb[0].mxu0
        %v4442 = vadd.f32 0.0, %v4441
        %v4443 = vpop.f32.mrb[0].mxu0
        %4444 = vmatprep.mubr.f32.mxu0 0.0
        %4445 = vmatmul.mubr.f32.gmra.mrb[0].mxu0 %v2280
        %v4446 = vpop.f32.mrb[0].mxu0
        %v4447 = vadd.f32 0.0, %v4446
        %v4448 = vpop.f32.mrb[0].mxu0
        %4449 = vmatprep.mubr.f32.mxu0 0.0
        %4450 = vmatmul.mubr.f32.gmra.mrb[0].mxu0 %v2281
        %v4451 = vpop.f32.mrb[0].mxu0
        %v4452 = vadd.f32 0.0, %v4451
        %v4453 = vpop.f32.mrb[0].mxu0
        %4454 = vmatprep.mubr.f32.mxu0 0.0
        %4455 = vmatmul.mubr.f32.gmra.mrb[0].mxu0 %v2282
        %v4456 = vpop.f32.mrb[0].mxu0
        %v4457 = vadd.f32 0.0, %v4456
        %v4458 = vpop.f32.mrb[0].mxu0
        %4459 = vmatprep.mubr.f32.mxu0 0.0
        %4460 = vmatmul.mubr.f32.gmra.mrb[0].mxu0 %v2283
        %v4461 = vpop.f32.mrb[0].mxu0
        %v4462 = vadd.f32 0.0, %v4461
        %v4463 = vpop.f32.mrb[0].mxu0
        %4464 = vmatprep.mubr.f32.mxu0 0.0
        %4465 = vmatmul.mubr.f32.gmra.mrb[0].mxu0 %v2284
        %v4466 = vpop.f32.mrb[0].mxu0
        %v4467 = vadd.f32 0.0, %v4466
        %v4468 = vpop.f32.mrb[0].mxu0
        %4469 = vmatprep.mubr.f32.mxu0 0.0
        %4470 = vmatmul.mubr.f32.gmra.mrb[0].mxu0 %v2285
        %v4471 = vpop.f32.mrb[0].mxu0
        %v4472 = vadd.f32 0.0, %v4471
        %v4473 = vpop.f32.mrb[0].mxu0
        %4474 = vmatprep.mubr.f32.mxu0 0.0
        %4475 = vmatmul.mubr.f32.gmra.mrb[0].mxu0 %v2286
        %v4476 = vpop.f32.mrb[0].mxu0
        %v4477 = vadd.f32 0.0, %v4476
        %v4478 = vpop.f32.mrb[0].mxu0
        %4479 = vdwg.mxu0
        %4480 = vmatprep.subr.mxu0 0.0
        %4481 = vmatpush1.msra.mxu0 %v4359
        %4482 = vmatprep.subr.mxu0 0.0
        %4483 = vmatpush1.msra.mxu0 %v4360
        %4484 = vmatprep.subr.mxu0 0.0
        %4485 = vmatpush1.msra.mxu0 %v4361
        %4486 = vmatprep.subr.mxu0 0.0
        %4487 = vmatpush1.msra.mxu0 %v4362
        %4488 = vmatprep.subr.mxu0 0.0
        %4489 = vmatpush1.msra.mxu0 %v4363
        %4490 = vmatprep.subr.mxu0 0.0
        %4491 = vmatpush1.msra.mxu0 %v4364
        %4492 = vmatprep.subr.mxu0 0.0
        %4493 = vmatpush1.msra.mxu0 %v4365
        %4494 = vmatprep.subr.mxu0 0.0
        %4495 = vmatpush1.msra.mxu0 %v4366
        %4496 = vmatprep.subr.mxu0 0.0
        %4497 = vmatpush1.msra.mxu0 %v4367
        %4498 = vmatprep.subr.mxu0 0.0
        %4499 = vmatpush1.msra.mxu0 %v4368
        %4500 = vmatprep.subr.mxu0 0.0
        %4501 = vmatpush1.msra.mxu0 %v4369
        %4502 = vmatprep.subr.mxu0 0.0
        %4503 = vmatpush1.msra.mxu0 %v4370
        %4504 = vmatprep.subr.mxu0 0.0
        %4505 = vmatpush1.msra.mxu0 %v4371
        %4506 = vmatprep.subr.mxu0 0.0
        %4507 = vmatpush1.msra.mxu0 %v4372
        %4508 = vmatprep.subr.mxu0 0.0
        %4509 = vmatpush1.msra.mxu0 %v4373
        %4510 = vmatprep.subr.mxu0 0.0
        %4511 = vmatpush1.msra.mxu0 %v4374
        %4512 = vmatprep.subr.mxu0 0.0
        %4513 = vmatpush1.msra.mxu0 0.0
        %4514 = vmatprep.subr.mxu0 0.0
        %4515 = vmatpush1.msra.mxu0 0.0
        %4516 = vmatprep.subr.mxu0 0.0
        %4517 = vmatpush1.msra.mxu0 0.0
        %4518 = vmatprep.subr.mxu0 0.0
        %4519 = vmatpush1.msra.mxu0 0.0
        %4520 = vmatprep.subr.mxu0 0.0
        %4521 = vmatpush1.msra.mxu0 0.0
        %4522 = vmatprep.subr.mxu0 0.0
        %4523 = vmatpush1.msra.mxu0 0.0
        %4524 = vmatprep.subr.mxu0 0.0
        %4525 = vmatpush1.msra.mxu0 0.0
        %4526 = vmatprep.subr.mxu0 0.0
        %4527 = vmatpush1.msra.mxu0 0.0
        %4528 = vmatprep.subr.mxu0 0.0
        %4529 = vmatpush1.msra.mxu0 0.0
        %4530 = vmatprep.subr.mxu0 0.0
        %4531 = vmatpush1.msra.mxu0 0.0
        %4532 = vmatprep.subr.mxu0 0.0
        %4533 = vmatpush1.msra.mxu0 0.0
        %4534 = vmatprep.subr.mxu0 0.0
        %4535 = vmatpush1.msra.mxu0 0.0
        %4536 = vmatprep.subr.mxu0 0.0
        %4537 = vmatpush1.msra.mxu0 0.0
        %4538 = vmatprep.subr.mxu0 0.0
        %4539 = vmatpush1.msra.mxu0 0.0
        %4540 = vmatprep.subr.mxu0 0.0
        %4541 = vmatpush1.msra.mxu0 0.0
        %4542 = vmatprep.subr.mxu0 0.0
        %4543 = vmatpush1.msra.mxu0 0.0
        %4544 = vmatprep.mubr.f32.mxu0 0.0
        %4545 = vmatmul.mubr.f32.gmra.mrb[0].mxu0 %v2303
        %v4546 = vpop.f32.mrb[0].mxu0
        %v4547 = vadd.f32 0.0, %v4546
        %v4548 = vpop.f32.mrb[0].mxu0
        %4549 = vmatprep.mubr.f32.mxu0 0.0
        %4550 = vmatmul.mubr.f32.gmra.mrb[0].mxu0 %v2304
        %v4551 = vpop.f32.mrb[0].mxu0
        %v4552 = vadd.f32 0.0, %v4551
        %v4553 = vpop.f32.mrb[0].mxu0
        %4554 = vmatprep.mubr.f32.mxu0 0.0
        %4555 = vmatmul.mubr.f32.gmra.mrb[0].mxu0 %v2305
        %v4556 = vpop.f32.mrb[0].mxu0
        %v4557 = vadd.f32 0.0, %v4556
        %v4558 = vpop.f32.mrb[0].mxu0
        %4559 = vmatprep.mubr.f32.mxu0 0.0
        %4560 = vmatmul.mubr.f32.gmra.mrb[0].mxu0 %v2306
        %v4561 = vpop.f32.mrb[0].mxu0
        %v4562 = vadd.f32 0.0, %v4561
        %v4563 = vpop.f32.mrb[0].mxu0
        %4564 = vmatprep.mubr.f32.mxu0 0.0
        %4565 = vmatmul.mubr.f32.gmra.mrb[0].mxu0 %v2307
        %v4566 = vpop.f32.mrb[0].mxu0
        %v4567 = vadd.f32 0.0, %v4566
        %v4568 = vpop.f32.mrb[0].mxu0
        %4569 = vmatprep.mubr.f32.mxu0 0.0
        %4570 = vmatmul.mubr.f32.gmra.mrb[0].mxu0 %v2308
        %v4571 = vpop.f32.mrb[0].mxu0
        %v4572 = vadd.f32 0.0, %v4571
        %v4573 = vpop.f32.mrb[0].mxu0
        %4574 = vmatprep.mubr.f32.mxu0 0.0
        %4575 = vmatmul.mubr.f32.gmra.mrb[0].mxu0 %v2309
        %v4576 = vpop.f32.mrb[0].mxu0
        %v4577 = vadd.f32 0.0, %v4576
        %v4578 = vpop.f32.mrb[0].mxu0
        %4579 = vmatprep.mubr.f32.mxu0 0.0
        %4580 = vmatmul.mubr.f32.gmra.mrb[0].mxu0 %v2310
        %v4581 = vpop.f32.mrb[0].mxu0
        %v4582 = vadd.f32 0.0, %v4581
        %v4583 = vpop.f32.mrb[0].mxu0
        %4584 = vdwg.mxu0
        %v4585 = vmax.f32 %v4442, %v4547
        %v4586 = vmax.f32 %v4447, %v4552
        %v4587 = vmax.f32 %v4452, %v4557
        %v4588 = vmax.f32 %v4457, %v4562
        %v4589 = vmax.f32 %v4462, %v4567
        %v4590 = vmax.f32 %v4467, %v4572
        %v4591 = vmax.f32 %v4472, %v4577
        %v4592 = vmax.f32 %v4477, %v4582
        %v4593 = vmax.f32 %v4585, %v4589
        %v4594 = vmax.f32 %v4586, %v4590
        %v4595 = vmax.f32 %v4587, %v4591
        %v4596 = vmax.f32 %v4588, %v4592
        %s4597 = sadd.s32 %s2313, 1
        %s4598 = smul.u32 %s4597, 40
        %s4599 = scalar_lea.vmem [#allocation3], %s4598
        %4600 = vst.msk [vmem:[%s4599 + $0x1] sm:$0xff] %vm981, %v4593
        %4601 = vst.msk [vmem:[%s4599 + $0x9] sm:$0xff] %vm981, %v4594
        %4602 = vst.msk [vmem:[%s4599 + $0x11] sm:$0xff] %vm981, %v4595
        %4603 = vst.msk [vmem:[%s4599 + $0x19] sm:$0xff] %vm981, %v4596
      $region69: #{simple_cnn_forward.1} parent=63 // loop_footer
        %s2317 = sadd.s32 1, %s2313
      $region70: #{simple_cnn_forward.1} parent=63 // loop_footer_branch
        %2312 = sbr.rel target = $region66
      $region71: #{simple_cnn_forward.1} parent=63 // loop_exit
        _
      %v4604 = vld [vmem:[%s4] sm:$0x1]
      loop: start=0, step=1, limit=16
      $region72: #{simple_cnn_forward.1} parent=63 // loop_pre_header
        _
      $region73: #{simple_cnn_forward.1} parent=63 // loop_header
        %s4606 = sphi 0, %s4610
        %p4607 = scmp.ge.s32.totalorder %s4606, 16
      $region74: #{simple_cnn_forward.1} parent=63 // loop_header_branch
        %4609 = sbr.rel (%p4607) target = $region78
      $region75: #{simple_cnn_forward.1} parent=63 // loop_body
        %s4611 = smul.u32 %s4606, 2
        %s4612 = smul.u32 %s4611, 40
        %s4613 = scalar_lea.vmem [#allocation3], %s4612
        %v4614 = vld [vmem:[%s4613] sm:$0xff]
        %v4615 = vld [vmem:[%s4613 + $0x8] sm:$0xff]
        %v4616 = vld [vmem:[%s4613 + $0x10] sm:$0xff]
        %v4617 = vld [vmem:[%s4613 + $0x18] sm:$0xff]
        %v4618 = vld [vmem:[%s4613 + $0x28] sm:$0xff]
        %v4619 = vld [vmem:[%s4613 + $0x30] sm:$0xff]
        %v4620 = vld [vmem:[%s4613 + $0x38] sm:$0xff]
        %v4621 = vld [vmem:[%s4613 + $0x40] sm:$0xff]
        %v4622 = vld [vmem:[%s3] sm:$0xff]
        %v4623 = vld [vmem:[%s3 + $0x8] sm:$0xff]
        %v4624 = vld [vmem:[%s3 + $0x10] sm:$0xff]
        %v4625 = vld [vmem:[%s3 + $0x18] sm:$0xff]
        %v4626 = vld [vmem:[%s4613 + $0x1] sm:$0xff]
        %v4627 = vld [vmem:[%s4613 + $0x9] sm:$0xff]
        %v4628 = vld [vmem:[%s4613 + $0x11] sm:$0xff]
        %v4629 = vld [vmem:[%s4613 + $0x19] sm:$0xff]
        %v4630 = vld [vmem:[%s4613 + $0x29] sm:$0xff]
        %v4631 = vld [vmem:[%s4613 + $0x31] sm:$0xff]
        %v4632 = vld [vmem:[%s4613 + $0x39] sm:$0xff]
        %v4633 = vld [vmem:[%s4613 + $0x41] sm:$0xff]
        %s4634 = scalar_lea.vmem %s3, 32
        %v4635 = vld [vmem:[%s4634] sm:$0xff]
        %v4636 = vld [vmem:[%s4634 + $0x8] sm:$0xff]
        %v4637 = vld [vmem:[%s4634 + $0x10] sm:$0xff]
        %v4638 = vld [vmem:[%s4634 + $0x18] sm:$0xff]
        %v4640 = vsel %vm981, %v4626, 0
        %v4643 = vsel %vm981, %v4627, 0
        %v4646 = vsel %vm981, %v4628, 0
        %v4649 = vsel %vm981, %v4629, 0
        %v4652 = vsel %vm981, %v4630, 0
        %v4655 = vsel %vm981, %v4631, 0
        %v4658 = vsel %vm981, %v4632, 0
        %v4661 = vsel %vm981, %v4633, 0
        %4663 = vmatprep.subr.mxu0 0.0
        %4664 = vmatpush1.msra.mxu0 %v4635
        %4665 = vmatprep.subr.mxu0 0.0
        %4666 = vmatpush1.msra.mxu0 %v4636
        %4667 = vmatprep.subr.mxu0 0.0
        %4668 = vmatpush1.msra.mxu0 %v4637
        %4669 = vmatprep.subr.mxu0 0.0
        %4670 = vmatpush1.msra.mxu0 %v4638
        %4671 = vmatprep.subr.mxu0 0.0
        %4672 = vmatpush1.msra.mxu0 0.0
        %4673 = vmatprep.subr.mxu0 0.0
        %4674 = vmatpush1.msra.mxu0 0.0
        %4675 = vmatprep.subr.mxu0 0.0
        %4676 = vmatpush1.msra.mxu0 0.0
        %4677 = vmatprep.subr.mxu0 0.0
        %4678 = vmatpush1.msra.mxu0 0.0
        %4679 = vmatprep.subr.mxu0 0.0
        %4680 = vmatpush1.msra.mxu0 0.0
        %4681 = vmatprep.subr.mxu0 0.0
        %4682 = vmatpush1.msra.mxu0 0.0
        %4683 = vmatprep.subr.mxu0 0.0
        %4684 = vmatpush1.msra.mxu0 0.0
        %4685 = vmatprep.subr.mxu0 0.0
        %4686 = vmatpush1.msra.mxu0 0.0
        %4687 = vmatprep.subr.mxu0 0.0
        %4688 = vmatpush1.msra.mxu0 0.0
        %4689 = vmatprep.subr.mxu0 0.0
        %4690 = vmatpush1.msra.mxu0 0.0
        %4691 = vmatprep.subr.mxu0 0.0
        %4692 = vmatpush1.msra.mxu0 0.0
        %4693 = vmatprep.subr.mxu0 0.0
        %4694 = vmatpush1.msra.mxu0 0.0
        %4695 = vmatprep.subr.mxu0 0.0
        %4696 = vmatpush1.msra.mxu0 0.0
        %4697 = vmatprep.subr.mxu0 0.0
        %4698 = vmatpush1.msra.mxu0 0.0
        %4699 = vmatprep.subr.mxu0 0.0
        %4700 = vmatpush1.msra.mxu0 0.0
        %4701 = vmatprep.subr.mxu0 0.0
        %4702 = vmatpush1.msra.mxu0 0.0
        %4703 = vmatprep.subr.mxu0 0.0
        %4704 = vmatpush1.msra.mxu0 0.0
        %4705 = vmatprep.subr.mxu0 0.0
        %4706 = vmatpush1.msra.mxu0 0.0
        %4707 = vmatprep.subr.mxu0 0.0
        %4708 = vmatpush1.msra.mxu0 0.0
        %4709 = vmatprep.subr.mxu0 0.0
        %4710 = vmatpush1.msra.mxu0 0.0
        %4711 = vmatprep.subr.mxu0 0.0
        %4712 = vmatpush1.msra.mxu0 0.0
        %4713 = vmatprep.subr.mxu0 0.0
        %4714 = vmatpush1.msra.mxu0 0.0
        %4715 = vmatprep.subr.mxu0 0.0
        %4716 = vmatpush1.msra.mxu0 0.0
        %4717 = vmatprep.subr.mxu0 0.0
        %4718 = vmatpush1.msra.mxu0 0.0
        %4719 = vmatprep.subr.mxu0 0.0
        %4720 = vmatpush1.msra.mxu0 0.0
        %4721 = vmatprep.subr.mxu0 0.0
        %4722 = vmatpush1.msra.mxu0 0.0
        %4723 = vmatprep.subr.mxu0 0.0
        %4724 = vmatpush1.msra.mxu0 0.0
        %4725 = vmatprep.subr.mxu0 0.0
        %4726 = vmatpush1.msra.mxu0 0.0
        %4727 = vmatprep.mubr.f32.mxu0 0.0
        %4728 = vmatmul.mubr.f32.gmra.mrb[0].mxu0 %v4640
        %v4729 = vpop.f32.mrb[0].mxu0
        %v4730 = vadd.f32 0.0, %v4729
        %v4731 = vpop.f32.mrb[0].mxu0
        %4732 = vmatprep.mubr.f32.mxu0 0.0
        %4733 = vmatmul.mubr.f32.gmra.mrb[0].mxu0 %v4643
        %v4734 = vpop.f32.mrb[0].mxu0
        %v4735 = vadd.f32 0.0, %v4734
        %v4736 = vpop.f32.mrb[0].mxu0
        %4737 = vmatprep.mubr.f32.mxu0 0.0
        %4738 = vmatmul.mubr.f32.gmra.mrb[0].mxu0 %v4646
        %v4739 = vpop.f32.mrb[0].mxu0
        %v4740 = vadd.f32 0.0, %v4739
        %v4741 = vpop.f32.mrb[0].mxu0
        %4742 = vmatprep.mubr.f32.mxu0 0.0
        %4743 = vmatmul.mubr.f32.gmra.mrb[0].mxu0 %v4649
        %v4744 = vpop.f32.mrb[0].mxu0
        %v4745 = vadd.f32 0.0, %v4744
        %v4746 = vpop.f32.mrb[0].mxu0
        %4747 = vmatprep.mubr.f32.mxu0 0.0
        %4748 = vmatmul.mubr.f32.gmra.mrb[0].mxu0 %v4652
        %v4749 = vpop.f32.mrb[0].mxu0
        %v4750 = vadd.f32 0.0, %v4749
        %v4751 = vpop.f32.mrb[0].mxu0
        %4752 = vmatprep.mubr.f32.mxu0 0.0
        %4753 = vmatmul.mubr.f32.gmra.mrb[0].mxu0 %v4655
        %v4754 = vpop.f32.mrb[0].mxu0
        %v4755 = vadd.f32 0.0, %v4754
        %v4756 = vpop.f32.mrb[0].mxu0
        %4757 = vmatprep.mubr.f32.mxu0 0.0
        %4758 = vmatmul.mubr.f32.gmra.mrb[0].mxu0 %v4658
        %v4759 = vpop.f32.mrb[0].mxu0
        %v4760 = vadd.f32 0.0, %v4759
        %v4761 = vpop.f32.mrb[0].mxu0
        %4762 = vmatprep.mubr.f32.mxu0 0.0
        %4763 = vmatmul.mubr.f32.gmra.mrb[0].mxu0 %v4661
        %v4764 = vpop.f32.mrb[0].mxu0
        %v4765 = vadd.f32 0.0, %v4764
        %v4766 = vpop.f32.mrb[0].mxu0
        %4767 = vdwg.mxu0
        %v4769 = vsel %vm981, %v4614, 0
        %v4772 = vsel %vm981, %v4615, 0
        %v4775 = vsel %vm981, %v4616, 0
        %v4778 = vsel %vm981, %v4617, 0
        %v4781 = vsel %vm981, %v4618, 0
        %v4784 = vsel %vm981, %v4619, 0
        %v4787 = vsel %vm981, %v4620, 0
        %v4790 = vsel %vm981, %v4621, 0
        %4792 = vmatprep.subr.mxu0 0.0
        %4793 = vmatpush1.msra.mxu0 %v4622
        %4794 = vmatprep.subr.mxu0 0.0
        %4795 = vmatpush1.msra.mxu0 %v4623
        %4796 = vmatprep.subr.mxu0 0.0
        %4797 = vmatpush1.msra.mxu0 %v4624
        %4798 = vmatprep.subr.mxu0 0.0
        %4799 = vmatpush1.msra.mxu0 %v4625
        %4800 = vmatprep.subr.mxu0 0.0
        %4801 = vmatpush1.msra.mxu0 0.0
        %4802 = vmatprep.subr.mxu0 0.0
        %4803 = vmatpush1.msra.mxu0 0.0
        %4804 = vmatprep.subr.mxu0 0.0
        %4805 = vmatpush1.msra.mxu0 0.0
        %4806 = vmatprep.subr.mxu0 0.0
        %4807 = vmatpush1.msra.mxu0 0.0
        %4808 = vmatprep.subr.mxu0 0.0
        %4809 = vmatpush1.msra.mxu0 0.0
        %4810 = vmatprep.subr.mxu0 0.0
        %4811 = vmatpush1.msra.mxu0 0.0
        %4812 = vmatprep.subr.mxu0 0.0
        %4813 = vmatpush1.msra.mxu0 0.0
        %4814 = vmatprep.subr.mxu0 0.0
        %4815 = vmatpush1.msra.mxu0 0.0
        %4816 = vmatprep.subr.mxu0 0.0
        %4817 = vmatpush1.msra.mxu0 0.0
        %4818 = vmatprep.subr.mxu0 0.0
        %4819 = vmatpush1.msra.mxu0 0.0
        %4820 = vmatprep.subr.mxu0 0.0
        %4821 = vmatpush1.msra.mxu0 0.0
        %4822 = vmatprep.subr.mxu0 0.0
        %4823 = vmatpush1.msra.mxu0 0.0
        %4824 = vmatprep.subr.mxu0 0.0
        %4825 = vmatpush1.msra.mxu0 0.0
        %4826 = vmatprep.subr.mxu0 0.0
        %4827 = vmatpush1.msra.mxu0 0.0
        %4828 = vmatprep.subr.mxu0 0.0
        %4829 = vmatpush1.msra.mxu0 0.0
        %4830 = vmatprep.subr.mxu0 0.0
        %4831 = vmatpush1.msra.mxu0 0.0
        %4832 = vmatprep.subr.mxu0 0.0
        %4833 = vmatpush1.msra.mxu0 0.0
        %4834 = vmatprep.subr.mxu0 0.0
        %4835 = vmatpush1.msra.mxu0 0.0
        %4836 = vmatprep.subr.mxu0 0.0
        %4837 = vmatpush1.msra.mxu0 0.0
        %4838 = vmatprep.subr.mxu0 0.0
        %4839 = vmatpush1.msra.mxu0 0.0
        %4840 = vmatprep.subr.mxu0 0.0
        %4841 = vmatpush1.msra.mxu0 0.0
        %4842 = vmatprep.subr.mxu0 0.0
        %4843 = vmatpush1.msra.mxu0 0.0
        %4844 = vmatprep.subr.mxu0 0.0
        %4845 = vmatpush1.msra.mxu0 0.0
        %4846 = vmatprep.subr.mxu0 0.0
        %4847 = vmatpush1.msra.mxu0 0.0
        %4848 = vmatprep.subr.mxu0 0.0
        %4849 = vmatpush1.msra.mxu0 0.0
        %4850 = vmatprep.subr.mxu0 0.0
        %4851 = vmatpush1.msra.mxu0 0.0
        %4852 = vmatprep.subr.mxu0 0.0
        %4853 = vmatpush1.msra.mxu0 0.0
        %4854 = vmatprep.subr.mxu0 0.0
        %4855 = vmatpush1.msra.mxu0 0.0
        %4856 = vmatprep.mubr.f32.mxu0 0.0
        %4857 = vmatmul.mubr.f32.gmra.mrb[0].mxu0 %v4769
        %v4858 = vpop.f32.mrb[0].mxu0
        %v4859 = vadd.f32 %v4730, %v4858
        %v4860 = vpop.f32.mrb[0].mxu0
        %4861 = vmatprep.mubr.f32.mxu0 0.0
        %4862 = vmatmul.mubr.f32.gmra.mrb[0].mxu0 %v4772
        %v4863 = vpop.f32.mrb[0].mxu0
        %v4864 = vadd.f32 %v4735, %v4863
        %v4865 = vpop.f32.mrb[0].mxu0
        %4866 = vmatprep.mubr.f32.mxu0 0.0
        %4867 = vmatmul.mubr.f32.gmra.mrb[0].mxu0 %v4775
        %v4868 = vpop.f32.mrb[0].mxu0
        %v4869 = vadd.f32 %v4740, %v4868
        %v4870 = vpop.f32.mrb[0].mxu0
        %4871 = vmatprep.mubr.f32.mxu0 0.0
        %4872 = vmatmul.mubr.f32.gmra.mrb[0].mxu0 %v4778
        %v4873 = vpop.f32.mrb[0].mxu0
        %v4874 = vadd.f32 %v4745, %v4873
        %v4875 = vpop.f32.mrb[0].mxu0
        %4876 = vmatprep.mubr.f32.mxu0 0.0
        %4877 = vmatmul.mubr.f32.gmra.mrb[0].mxu0 %v4781
        %v4878 = vpop.f32.mrb[0].mxu0
        %v4879 = vadd.f32 %v4750, %v4878
        %v4880 = vpop.f32.mrb[0].mxu0
        %4881 = vmatprep.mubr.f32.mxu0 0.0
        %4882 = vmatmul.mubr.f32.gmra.mrb[0].mxu0 %v4784
        %v4883 = vpop.f32.mrb[0].mxu0
        %v4884 = vadd.f32 %v4755, %v4883
        %v4885 = vpop.f32.mrb[0].mxu0
        %4886 = vmatprep.mubr.f32.mxu0 0.0
        %4887 = vmatmul.mubr.f32.gmra.mrb[0].mxu0 %v4787
        %v4888 = vpop.f32.mrb[0].mxu0
        %v4889 = vadd.f32 %v4760, %v4888
        %v4890 = vpop.f32.mrb[0].mxu0
        %4891 = vmatprep.mubr.f32.mxu0 0.0
        %4892 = vmatmul.mubr.f32.gmra.mrb[0].mxu0 %v4790
        %v4893 = vpop.f32.mrb[0].mxu0
        %v4894 = vadd.f32 %v4765, %v4893
        %v4895 = vpop.f32.mrb[0].mxu0
        %4896 = vdwg.mxu0
        %v4897 = vld [vmem:[%s4613 + $0x2] sm:$0xff]
        %v4898 = vld [vmem:[%s4613 + $0xa] sm:$0xff]
        %v4899 = vld [vmem:[%s4613 + $0x12] sm:$0xff]
        %v4900 = vld [vmem:[%s4613 + $0x1a] sm:$0xff]
        %v4901 = vld [vmem:[%s4613 + $0x2a] sm:$0xff]
        %v4902 = vld [vmem:[%s4613 + $0x32] sm:$0xff]
        %v4903 = vld [vmem:[%s4613 + $0x3a] sm:$0xff]
        %v4904 = vld [vmem:[%s4613 + $0x42] sm:$0xff]
        %s4905 = scalar_lea.vmem %s3, 64
        %v4906 = vld [vmem:[%s4905] sm:$0xff]
        %v4907 = vld [vmem:[%s4905 + $0x8] sm:$0xff]
        %v4908 = vld [vmem:[%s4905 + $0x10] sm:$0xff]
        %v4909 = vld [vmem:[%s4905 + $0x18] sm:$0xff]
        %v4911 = vsel %vm981, %v4897, 0
        %v4914 = vsel %vm981, %v4898, 0
        %v4917 = vsel %vm981, %v4899, 0
        %v4920 = vsel %vm981, %v4900, 0
        %v4923 = vsel %vm981, %v4901, 0
        %v4926 = vsel %vm981, %v4902, 0
        %v4929 = vsel %vm981, %v4903, 0
        %v4932 = vsel %vm981, %v4904, 0
        %4934 = vmatprep.subr.mxu0 0.0
        %4935 = vmatpush1.msra.mxu0 %v4906
        %4936 = vmatprep.subr.mxu0 0.0
        %4937 = vmatpush1.msra.mxu0 %v4907
        %4938 = vmatprep.subr.mxu0 0.0
        %4939 = vmatpush1.msra.mxu0 %v4908
        %4940 = vmatprep.subr.mxu0 0.0
        %4941 = vmatpush1.msra.mxu0 %v4909
        %4942 = vmatprep.subr.mxu0 0.0
        %4943 = vmatpush1.msra.mxu0 0.0
        %4944 = vmatprep.subr.mxu0 0.0
        %4945 = vmatpush1.msra.mxu0 0.0
        %4946 = vmatprep.subr.mxu0 0.0
        %4947 = vmatpush1.msra.mxu0 0.0
        %4948 = vmatprep.subr.mxu0 0.0
        %4949 = vmatpush1.msra.mxu0 0.0
        %4950 = vmatprep.subr.mxu0 0.0
        %4951 = vmatpush1.msra.mxu0 0.0
        %4952 = vmatprep.subr.mxu0 0.0
        %4953 = vmatpush1.msra.mxu0 0.0
        %4954 = vmatprep.subr.mxu0 0.0
        %4955 = vmatpush1.msra.mxu0 0.0
        %4956 = vmatprep.subr.mxu0 0.0
        %4957 = vmatpush1.msra.mxu0 0.0
        %4958 = vmatprep.subr.mxu0 0.0
        %4959 = vmatpush1.msra.mxu0 0.0
        %4960 = vmatprep.subr.mxu0 0.0
        %4961 = vmatpush1.msra.mxu0 0.0
        %4962 = vmatprep.subr.mxu0 0.0
        %4963 = vmatpush1.msra.mxu0 0.0
        %4964 = vmatprep.subr.mxu0 0.0
        %4965 = vmatpush1.msra.mxu0 0.0
        %4966 = vmatprep.subr.mxu0 0.0
        %4967 = vmatpush1.msra.mxu0 0.0
        %4968 = vmatprep.subr.mxu0 0.0
        %4969 = vmatpush1.msra.mxu0 0.0
        %4970 = vmatprep.subr.mxu0 0.0
        %4971 = vmatpush1.msra.mxu0 0.0
        %4972 = vmatprep.subr.mxu0 0.0
        %4973 = vmatpush1.msra.mxu0 0.0
        %4974 = vmatprep.subr.mxu0 0.0
        %4975 = vmatpush1.msra.mxu0 0.0
        %4976 = vmatprep.subr.mxu0 0.0
        %4977 = vmatpush1.msra.mxu0 0.0
        %4978 = vmatprep.subr.mxu0 0.0
        %4979 = vmatpush1.msra.mxu0 0.0
        %4980 = vmatprep.subr.mxu0 0.0
        %4981 = vmatpush1.msra.mxu0 0.0
        %4982 = vmatprep.subr.mxu0 0.0
        %4983 = vmatpush1.msra.mxu0 0.0
        %4984 = vmatprep.subr.mxu0 0.0
        %4985 = vmatpush1.msra.mxu0 0.0
        %4986 = vmatprep.subr.mxu0 0.0
        %4987 = vmatpush1.msra.mxu0 0.0
        %4988 = vmatprep.subr.mxu0 0.0
        %4989 = vmatpush1.msra.mxu0 0.0
        %4990 = vmatprep.subr.mxu0 0.0
        %4991 = vmatpush1.msra.mxu0 0.0
        %4992 = vmatprep.subr.mxu0 0.0
        %4993 = vmatpush1.msra.mxu0 0.0
        %4994 = vmatprep.subr.mxu0 0.0
        %4995 = vmatpush1.msra.mxu0 0.0
        %4996 = vmatprep.subr.mxu0 0.0
        %4997 = vmatpush1.msra.mxu0 0.0
        %4998 = vmatprep.mubr.f32.mxu0 0.0
        %4999 = vmatmul.mubr.f32.gmra.mrb[0].mxu0 %v4911
        %v5000 = vpop.f32.mrb[0].mxu0
        %v5001 = vadd.f32 0.0, %v5000
        %v5002 = vpop.f32.mrb[0].mxu0
        %5003 = vmatprep.mubr.f32.mxu0 0.0
        %5004 = vmatmul.mubr.f32.gmra.mrb[0].mxu0 %v4914
        %v5005 = vpop.f32.mrb[0].mxu0
        %v5006 = vadd.f32 0.0, %v5005
        %v5007 = vpop.f32.mrb[0].mxu0
        %5008 = vmatprep.mubr.f32.mxu0 0.0
        %5009 = vmatmul.mubr.f32.gmra.mrb[0].mxu0 %v4917
        %v5010 = vpop.f32.mrb[0].mxu0
        %v5011 = vadd.f32 0.0, %v5010
        %v5012 = vpop.f32.mrb[0].mxu0
        %5013 = vmatprep.mubr.f32.mxu0 0.0
        %5014 = vmatmul.mubr.f32.gmra.mrb[0].mxu0 %v4920
        %v5015 = vpop.f32.mrb[0].mxu0
        %v5016 = vadd.f32 0.0, %v5015
        %v5017 = vpop.f32.mrb[0].mxu0
        %5018 = vmatprep.mubr.f32.mxu0 0.0
        %5019 = vmatmul.mubr.f32.gmra.mrb[0].mxu0 %v4923
        %v5020 = vpop.f32.mrb[0].mxu0
        %v5021 = vadd.f32 0.0, %v5020
        %v5022 = vpop.f32.mrb[0].mxu0
        %5023 = vmatprep.mubr.f32.mxu0 0.0
        %5024 = vmatmul.mubr.f32.gmra.mrb[0].mxu0 %v4926
        %v5025 = vpop.f32.mrb[0].mxu0
        %v5026 = vadd.f32 0.0, %v5025
        %v5027 = vpop.f32.mrb[0].mxu0
        %5028 = vmatprep.mubr.f32.mxu0 0.0
        %5029 = vmatmul.mubr.f32.gmra.mrb[0].mxu0 %v4929
        %v5030 = vpop.f32.mrb[0].mxu0
        %v5031 = vadd.f32 0.0, %v5030
        %v5032 = vpop.f32.mrb[0].mxu0
        %5033 = vmatprep.mubr.f32.mxu0 0.0
        %5034 = vmatmul.mubr.f32.gmra.mrb[0].mxu0 %v4932
        %v5035 = vpop.f32.mrb[0].mxu0
        %v5036 = vadd.f32 0.0, %v5035
        %v5037 = vpop.f32.mrb[0].mxu0
        %5038 = vdwg.mxu0
        %v5039 = vadd.f32 %v4859, %v5001
        %v5040 = vadd.f32 %v4864, %v5006
        %v5041 = vadd.f32 %v4869, %v5011
        %v5042 = vadd.f32 %v4874, %v5016
        %v5043 = vadd.f32 %v4879, %v5021
        %v5044 = vadd.f32 %v4884, %v5026
        %v5045 = vadd.f32 %v4889, %v5031
        %v5046 = vadd.f32 %v4894, %v5036
        %s5047 = sadd.s32 %s4611, 1
        %s5048 = smul.u32 %s5047, 40
        %s5049 = scalar_lea.vmem [#allocation3], %s5048
        %v5050 = vld [vmem:[%s5049] sm:$0xff]
        %v5051 = vld [vmem:[%s5049 + $0x8] sm:$0xff]
        %v5052 = vld [vmem:[%s5049 + $0x10] sm:$0xff]
        %v5053 = vld [vmem:[%s5049 + $0x18] sm:$0xff]
        %v5054 = vld [vmem:[%s5049 + $0x28] sm:$0xff]
        %v5055 = vld [vmem:[%s5049 + $0x30] sm:$0xff]
        %v5056 = vld [vmem:[%s5049 + $0x38] sm:$0xff]
        %v5057 = vld [vmem:[%s5049 + $0x40] sm:$0xff]
        %s5058 = scalar_lea.vmem %s3, 96
        %v5059 = vld [vmem:[%s5058] sm:$0xff]
        %v5060 = vld [vmem:[%s5058 + $0x8] sm:$0xff]
        %v5061 = vld [vmem:[%s5058 + $0x10] sm:$0xff]
        %v5062 = vld [vmem:[%s5058 + $0x18] sm:$0xff]
        %v5064 = vsel %vm981, %v5050, 0
        %v5067 = vsel %vm981, %v5051, 0
        %v5070 = vsel %vm981, %v5052, 0
        %v5073 = vsel %vm981, %v5053, 0
        %v5076 = vsel %vm981, %v5054, 0
        %v5079 = vsel %vm981, %v5055, 0
        %v5082 = vsel %vm981, %v5056, 0
        %v5085 = vsel %vm981, %v5057, 0
        %5087 = vmatprep.subr.mxu0 0.0
        %5088 = vmatpush1.msra.mxu0 %v5059
        %5089 = vmatprep.subr.mxu0 0.0
        %5090 = vmatpush1.msra.mxu0 %v5060
        %5091 = vmatprep.subr.mxu0 0.0
        %5092 = vmatpush1.msra.mxu0 %v5061
        %5093 = vmatprep.subr.mxu0 0.0
        %5094 = vmatpush1.msra.mxu0 %v5062
        %5095 = vmatprep.subr.mxu0 0.0
        %5096 = vmatpush1.msra.mxu0 0.0
        %5097 = vmatprep.subr.mxu0 0.0
        %5098 = vmatpush1.msra.mxu0 0.0
        %5099 = vmatprep.subr.mxu0 0.0
        %5100 = vmatpush1.msra.mxu0 0.0
        %5101 = vmatprep.subr.mxu0 0.0
        %5102 = vmatpush1.msra.mxu0 0.0
        %5103 = vmatprep.subr.mxu0 0.0
        %5104 = vmatpush1.msra.mxu0 0.0
        %5105 = vmatprep.subr.mxu0 0.0
        %5106 = vmatpush1.msra.mxu0 0.0
        %5107 = vmatprep.subr.mxu0 0.0
        %5108 = vmatpush1.msra.mxu0 0.0
        %5109 = vmatprep.subr.mxu0 0.0
        %5110 = vmatpush1.msra.mxu0 0.0
        %5111 = vmatprep.subr.mxu0 0.0
        %5112 = vmatpush1.msra.mxu0 0.0
        %5113 = vmatprep.subr.mxu0 0.0
        %5114 = vmatpush1.msra.mxu0 0.0
        %5115 = vmatprep.subr.mxu0 0.0
        %5116 = vmatpush1.msra.mxu0 0.0
        %5117 = vmatprep.subr.mxu0 0.0
        %5118 = vmatpush1.msra.mxu0 0.0
        %5119 = vmatprep.subr.mxu0 0.0
        %5120 = vmatpush1.msra.mxu0 0.0
        %5121 = vmatprep.subr.mxu0 0.0
        %5122 = vmatpush1.msra.mxu0 0.0
        %5123 = vmatprep.subr.mxu0 0.0
        %5124 = vmatpush1.msra.mxu0 0.0
        %5125 = vmatprep.subr.mxu0 0.0
        %5126 = vmatpush1.msra.mxu0 0.0
        %5127 = vmatprep.subr.mxu0 0.0
        %5128 = vmatpush1.msra.mxu0 0.0
        %5129 = vmatprep.subr.mxu0 0.0
        %5130 = vmatpush1.msra.mxu0 0.0
        %5131 = vmatprep.subr.mxu0 0.0
        %5132 = vmatpush1.msra.mxu0 0.0
        %5133 = vmatprep.subr.mxu0 0.0
        %5134 = vmatpush1.msra.mxu0 0.0
        %5135 = vmatprep.subr.mxu0 0.0
        %5136 = vmatpush1.msra.mxu0 0.0
        %5137 = vmatprep.subr.mxu0 0.0
        %5138 = vmatpush1.msra.mxu0 0.0
        %5139 = vmatprep.subr.mxu0 0.0
        %5140 = vmatpush1.msra.mxu0 0.0
        %5141 = vmatprep.subr.mxu0 0.0
        %5142 = vmatpush1.msra.mxu0 0.0
        %5143 = vmatprep.subr.mxu0 0.0
        %5144 = vmatpush1.msra.mxu0 0.0
        %5145 = vmatprep.subr.mxu0 0.0
        %5146 = vmatpush1.msra.mxu0 0.0
        %5147 = vmatprep.subr.mxu0 0.0
        %5148 = vmatpush1.msra.mxu0 0.0
        %5149 = vmatprep.subr.mxu0 0.0
        %5150 = vmatpush1.msra.mxu0 0.0
        %5151 = vmatprep.mubr.f32.mxu0 0.0
        %5152 = vmatmul.mubr.f32.gmra.mrb[0].mxu0 %v5064
        %v5153 = vpop.f32.mrb[0].mxu0
        %v5154 = vadd.f32 0.0, %v5153
        %v5155 = vpop.f32.mrb[0].mxu0
        %5156 = vmatprep.mubr.f32.mxu0 0.0
        %5157 = vmatmul.mubr.f32.gmra.mrb[0].mxu0 %v5067
        %v5158 = vpop.f32.mrb[0].mxu0
        %v5159 = vadd.f32 0.0, %v5158
        %v5160 = vpop.f32.mrb[0].mxu0
        %5161 = vmatprep.mubr.f32.mxu0 0.0
        %5162 = vmatmul.mubr.f32.gmra.mrb[0].mxu0 %v5070
        %v5163 = vpop.f32.mrb[0].mxu0
        %v5164 = vadd.f32 0.0, %v5163
        %v5165 = vpop.f32.mrb[0].mxu0
        %5166 = vmatprep.mubr.f32.mxu0 0.0
        %5167 = vmatmul.mubr.f32.gmra.mrb[0].mxu0 %v5073
        %v5168 = vpop.f32.mrb[0].mxu0
        %v5169 = vadd.f32 0.0, %v5168
        %v5170 = vpop.f32.mrb[0].mxu0
        %5171 = vmatprep.mubr.f32.mxu0 0.0
        %5172 = vmatmul.mubr.f32.gmra.mrb[0].mxu0 %v5076
        %v5173 = vpop.f32.mrb[0].mxu0
        %v5174 = vadd.f32 0.0, %v5173
        %v5175 = vpop.f32.mrb[0].mxu0
        %5176 = vmatprep.mubr.f32.mxu0 0.0
        %5177 = vmatmul.mubr.f32.gmra.mrb[0].mxu0 %v5079
        %v5178 = vpop.f32.mrb[0].mxu0
        %v5179 = vadd.f32 0.0, %v5178
        %v5180 = vpop.f32.mrb[0].mxu0
        %5181 = vmatprep.mubr.f32.mxu0 0.0
        %5182 = vmatmul.mubr.f32.gmra.mrb[0].mxu0 %v5082
        %v5183 = vpop.f32.mrb[0].mxu0
        %v5184 = vadd.f32 0.0, %v5183
        %v5185 = vpop.f32.mrb[0].mxu0
        %5186 = vmatprep.mubr.f32.mxu0 0.0
        %5187 = vmatmul.mubr.f32.gmra.mrb[0].mxu0 %v5085
        %v5188 = vpop.f32.mrb[0].mxu0
        %v5189 = vadd.f32 0.0, %v5188
        %v5190 = vpop.f32.mrb[0].mxu0
        %5191 = vdwg.mxu0
        %v5192 = vadd.f32 %v5039, %v5154
        %v5193 = vadd.f32 %v5040, %v5159
        %v5194 = vadd.f32 %v5041, %v5164
        %v5195 = vadd.f32 %v5042, %v5169
        %v5196 = vadd.f32 %v5043, %v5174
        %v5197 = vadd.f32 %v5044, %v5179
        %v5198 = vadd.f32 %v5045, %v5184
        %v5199 = vadd.f32 %v5046, %v5189
        %v5200 = vld [vmem:[%s5049 + $0x1] sm:$0xff]
        %v5201 = vld [vmem:[%s5049 + $0x9] sm:$0xff]
        %v5202 = vld [vmem:[%s5049 + $0x11] sm:$0xff]
        %v5203 = vld [vmem:[%s5049 + $0x19] sm:$0xff]
        %v5204 = vld [vmem:[%s5049 + $0x29] sm:$0xff]
        %v5205 = vld [vmem:[%s5049 + $0x31] sm:$0xff]
        %v5206 = vld [vmem:[%s5049 + $0x39] sm:$0xff]
        %v5207 = vld [vmem:[%s5049 + $0x41] sm:$0xff]
        %s5208 = scalar_lea.vmem %s3, 128
        %v5209 = vld [vmem:[%s5208] sm:$0xff]
        %v5210 = vld [vmem:[%s5208 + $0x8] sm:$0xff]
        %v5211 = vld [vmem:[%s5208 + $0x10] sm:$0xff]
        %v5212 = vld [vmem:[%s5208 + $0x18] sm:$0xff]
        %v5214 = vsel %vm981, %v5200, 0
        %v5217 = vsel %vm981, %v5201, 0
        %v5220 = vsel %vm981, %v5202, 0
        %v5223 = vsel %vm981, %v5203, 0
        %v5226 = vsel %vm981, %v5204, 0
        %v5229 = vsel %vm981, %v5205, 0
        %v5232 = vsel %vm981, %v5206, 0
        %v5235 = vsel %vm981, %v5207, 0
        %5237 = vmatprep.subr.mxu0 0.0
        %5238 = vmatpush1.msra.mxu0 %v5209
        %5239 = vmatprep.subr.mxu0 0.0
        %5240 = vmatpush1.msra.mxu0 %v5210
        %5241 = vmatprep.subr.mxu0 0.0
        %5242 = vmatpush1.msra.mxu0 %v5211
        %5243 = vmatprep.subr.mxu0 0.0
        %5244 = vmatpush1.msra.mxu0 %v5212
        %5245 = vmatprep.subr.mxu0 0.0
        %5246 = vmatpush1.msra.mxu0 0.0
        %5247 = vmatprep.subr.mxu0 0.0
        %5248 = vmatpush1.msra.mxu0 0.0
        %5249 = vmatprep.subr.mxu0 0.0
        %5250 = vmatpush1.msra.mxu0 0.0
        %5251 = vmatprep.subr.mxu0 0.0
        %5252 = vmatpush1.msra.mxu0 0.0
        %5253 = vmatprep.subr.mxu0 0.0
        %5254 = vmatpush1.msra.mxu0 0.0
        %5255 = vmatprep.subr.mxu0 0.0
        %5256 = vmatpush1.msra.mxu0 0.0
        %5257 = vmatprep.subr.mxu0 0.0
        %5258 = vmatpush1.msra.mxu0 0.0
        %5259 = vmatprep.subr.mxu0 0.0
        %5260 = vmatpush1.msra.mxu0 0.0
        %5261 = vmatprep.subr.mxu0 0.0
        %5262 = vmatpush1.msra.mxu0 0.0
        %5263 = vmatprep.subr.mxu0 0.0
        %5264 = vmatpush1.msra.mxu0 0.0
        %5265 = vmatprep.subr.mxu0 0.0
        %5266 = vmatpush1.msra.mxu0 0.0
        %5267 = vmatprep.subr.mxu0 0.0
        %5268 = vmatpush1.msra.mxu0 0.0
        %5269 = vmatprep.subr.mxu0 0.0
        %5270 = vmatpush1.msra.mxu0 0.0
        %5271 = vmatprep.subr.mxu0 0.0
        %5272 = vmatpush1.msra.mxu0 0.0
        %5273 = vmatprep.subr.mxu0 0.0
        %5274 = vmatpush1.msra.mxu0 0.0
        %5275 = vmatprep.subr.mxu0 0.0
        %5276 = vmatpush1.msra.mxu0 0.0
        %5277 = vmatprep.subr.mxu0 0.0
        %5278 = vmatpush1.msra.mxu0 0.0
        %5279 = vmatprep.subr.mxu0 0.0
        %5280 = vmatpush1.msra.mxu0 0.0
        %5281 = vmatprep.subr.mxu0 0.0
        %5282 = vmatpush1.msra.mxu0 0.0
        %5283 = vmatprep.subr.mxu0 0.0
        %5284 = vmatpush1.msra.mxu0 0.0
        %5285 = vmatprep.subr.mxu0 0.0
        %5286 = vmatpush1.msra.mxu0 0.0
        %5287 = vmatprep.subr.mxu0 0.0
        %5288 = vmatpush1.msra.mxu0 0.0
        %5289 = vmatprep.subr.mxu0 0.0
        %5290 = vmatpush1.msra.mxu0 0.0
        %5291 = vmatprep.subr.mxu0 0.0
        %5292 = vmatpush1.msra.mxu0 0.0
        %5293 = vmatprep.subr.mxu0 0.0
        %5294 = vmatpush1.msra.mxu0 0.0
        %5295 = vmatprep.subr.mxu0 0.0
        %5296 = vmatpush1.msra.mxu0 0.0
        %5297 = vmatprep.subr.mxu0 0.0
        %5298 = vmatpush1.msra.mxu0 0.0
        %5299 = vmatprep.subr.mxu0 0.0
        %5300 = vmatpush1.msra.mxu0 0.0
        %5301 = vmatprep.mubr.f32.mxu0 0.0
        %5302 = vmatmul.mubr.f32.gmra.mrb[0].mxu0 %v5214
        %v5303 = vpop.f32.mrb[0].mxu0
        %v5304 = vadd.f32 0.0, %v5303
        %v5305 = vpop.f32.mrb[0].mxu0
        %5306 = vmatprep.mubr.f32.mxu0 0.0
        %5307 = vmatmul.mubr.f32.gmra.mrb[0].mxu0 %v5217
        %v5308 = vpop.f32.mrb[0].mxu0
        %v5309 = vadd.f32 0.0, %v5308
        %v5310 = vpop.f32.mrb[0].mxu0
        %5311 = vmatprep.mubr.f32.mxu0 0.0
        %5312 = vmatmul.mubr.f32.gmra.mrb[0].mxu0 %v5220
        %v5313 = vpop.f32.mrb[0].mxu0
        %v5314 = vadd.f32 0.0, %v5313
        %v5315 = vpop.f32.mrb[0].mxu0
        %5316 = vmatprep.mubr.f32.mxu0 0.0
        %5317 = vmatmul.mubr.f32.gmra.mrb[0].mxu0 %v5223
        %v5318 = vpop.f32.mrb[0].mxu0
        %v5319 = vadd.f32 0.0, %v5318
        %v5320 = vpop.f32.mrb[0].mxu0
        %5321 = vmatprep.mubr.f32.mxu0 0.0
        %5322 = vmatmul.mubr.f32.gmra.mrb[0].mxu0 %v5226
        %v5323 = vpop.f32.mrb[0].mxu0
        %v5324 = vadd.f32 0.0, %v5323
        %v5325 = vpop.f32.mrb[0].mxu0
        %5326 = vmatprep.mubr.f32.mxu0 0.0
        %5327 = vmatmul.mubr.f32.gmra.mrb[0].mxu0 %v5229
        %v5328 = vpop.f32.mrb[0].mxu0
        %v5329 = vadd.f32 0.0, %v5328
        %v5330 = vpop.f32.mrb[0].mxu0
        %5331 = vmatprep.mubr.f32.mxu0 0.0
        %5332 = vmatmul.mubr.f32.gmra.mrb[0].mxu0 %v5232
        %v5333 = vpop.f32.mrb[0].mxu0
        %v5334 = vadd.f32 0.0, %v5333
        %v5335 = vpop.f32.mrb[0].mxu0
        %5336 = vmatprep.mubr.f32.mxu0 0.0
        %5337 = vmatmul.mubr.f32.gmra.mrb[0].mxu0 %v5235
        %v5338 = vpop.f32.mrb[0].mxu0
        %v5339 = vadd.f32 0.0, %v5338
        %v5340 = vpop.f32.mrb[0].mxu0
        %5341 = vdwg.mxu0
        %v5342 = vadd.f32 %v5192, %v5304
        %v5343 = vadd.f32 %v5193, %v5309
        %v5344 = vadd.f32 %v5194, %v5314
        %v5345 = vadd.f32 %v5195, %v5319
        %v5346 = vadd.f32 %v5196, %v5324
        %v5347 = vadd.f32 %v5197, %v5329
        %v5348 = vadd.f32 %v5198, %v5334
        %v5349 = vadd.f32 %v5199, %v5339
        %v5350 = vld [vmem:[%s5049 + $0x2] sm:$0xff]
        %v5351 = vld [vmem:[%s5049 + $0xa] sm:$0xff]
        %v5352 = vld [vmem:[%s5049 + $0x12] sm:$0xff]
        %v5353 = vld [vmem:[%s5049 + $0x1a] sm:$0xff]
        %v5354 = vld [vmem:[%s5049 + $0x2a] sm:$0xff]
        %v5355 = vld [vmem:[%s5049 + $0x32] sm:$0xff]
        %v5356 = vld [vmem:[%s5049 + $0x3a] sm:$0xff]
        %v5357 = vld [vmem:[%s5049 + $0x42] sm:$0xff]
        %s5358 = scalar_lea.vmem %s3, 160
        %v5359 = vld [vmem:[%s5358] sm:$0xff]
        %v5360 = vld [vmem:[%s5358 + $0x8] sm:$0xff]
        %v5361 = vld [vmem:[%s5358 + $0x10] sm:$0xff]
        %v5362 = vld [vmem:[%s5358 + $0x18] sm:$0xff]
        %v5364 = vsel %vm981, %v5350, 0
        %v5367 = vsel %vm981, %v5351, 0
        %v5370 = vsel %vm981, %v5352, 0
        %v5373 = vsel %vm981, %v5353, 0
        %v5376 = vsel %vm981, %v5354, 0
        %v5379 = vsel %vm981, %v5355, 0
        %v5382 = vsel %vm981, %v5356, 0
        %v5385 = vsel %vm981, %v5357, 0
        %5387 = vmatprep.subr.mxu0 0.0
        %5388 = vmatpush1.msra.mxu0 %v5359
        %5389 = vmatprep.subr.mxu0 0.0
        %5390 = vmatpush1.msra.mxu0 %v5360
        %5391 = vmatprep.subr.mxu0 0.0
        %5392 = vmatpush1.msra.mxu0 %v5361
        %5393 = vmatprep.subr.mxu0 0.0
        %5394 = vmatpush1.msra.mxu0 %v5362
        %5395 = vmatprep.subr.mxu0 0.0
        %5396 = vmatpush1.msra.mxu0 0.0
        %5397 = vmatprep.subr.mxu0 0.0
        %5398 = vmatpush1.msra.mxu0 0.0
        %5399 = vmatprep.subr.mxu0 0.0
        %5400 = vmatpush1.msra.mxu0 0.0
        %5401 = vmatprep.subr.mxu0 0.0
        %5402 = vmatpush1.msra.mxu0 0.0
        %5403 = vmatprep.subr.mxu0 0.0
        %5404 = vmatpush1.msra.mxu0 0.0
        %5405 = vmatprep.subr.mxu0 0.0
        %5406 = vmatpush1.msra.mxu0 0.0
        %5407 = vmatprep.subr.mxu0 0.0
        %5408 = vmatpush1.msra.mxu0 0.0
        %5409 = vmatprep.subr.mxu0 0.0
        %5410 = vmatpush1.msra.mxu0 0.0
        %5411 = vmatprep.subr.mxu0 0.0
        %5412 = vmatpush1.msra.mxu0 0.0
        %5413 = vmatprep.subr.mxu0 0.0
        %5414 = vmatpush1.msra.mxu0 0.0
        %5415 = vmatprep.subr.mxu0 0.0
        %5416 = vmatpush1.msra.mxu0 0.0
        %5417 = vmatprep.subr.mxu0 0.0
        %5418 = vmatpush1.msra.mxu0 0.0
        %5419 = vmatprep.subr.mxu0 0.0
        %5420 = vmatpush1.msra.mxu0 0.0
        %5421 = vmatprep.subr.mxu0 0.0
        %5422 = vmatpush1.msra.mxu0 0.0
        %5423 = vmatprep.subr.mxu0 0.0
        %5424 = vmatpush1.msra.mxu0 0.0
        %5425 = vmatprep.subr.mxu0 0.0
        %5426 = vmatpush1.msra.mxu0 0.0
        %5427 = vmatprep.subr.mxu0 0.0
        %5428 = vmatpush1.msra.mxu0 0.0
        %5429 = vmatprep.subr.mxu0 0.0
        %5430 = vmatpush1.msra.mxu0 0.0
        %5431 = vmatprep.subr.mxu0 0.0
        %5432 = vmatpush1.msra.mxu0 0.0
        %5433 = vmatprep.subr.mxu0 0.0
        %5434 = vmatpush1.msra.mxu0 0.0
        %5435 = vmatprep.subr.mxu0 0.0
        %5436 = vmatpush1.msra.mxu0 0.0
        %5437 = vmatprep.subr.mxu0 0.0
        %5438 = vmatpush1.msra.mxu0 0.0
        %5439 = vmatprep.subr.mxu0 0.0
        %5440 = vmatpush1.msra.mxu0 0.0
        %5441 = vmatprep.subr.mxu0 0.0
        %5442 = vmatpush1.msra.mxu0 0.0
        %5443 = vmatprep.subr.mxu0 0.0
        %5444 = vmatpush1.msra.mxu0 0.0
        %5445 = vmatprep.subr.mxu0 0.0
        %5446 = vmatpush1.msra.mxu0 0.0
        %5447 = vmatprep.subr.mxu0 0.0
        %5448 = vmatpush1.msra.mxu0 0.0
        %5449 = vmatprep.subr.mxu0 0.0
        %5450 = vmatpush1.msra.mxu0 0.0
        %5451 = vmatprep.mubr.f32.mxu0 0.0
        %5452 = vmatmul.mubr.f32.gmra.mrb[0].mxu0 %v5364
        %v5453 = vpop.f32.mrb[0].mxu0
        %v5454 = vadd.f32 0.0, %v5453
        %v5455 = vpop.f32.mrb[0].mxu0
        %5456 = vmatprep.mubr.f32.mxu0 0.0
        %5457 = vmatmul.mubr.f32.gmra.mrb[0].mxu0 %v5367
        %v5458 = vpop.f32.mrb[0].mxu0
        %v5459 = vadd.f32 0.0, %v5458
        %v5460 = vpop.f32.mrb[0].mxu0
        %5461 = vmatprep.mubr.f32.mxu0 0.0
        %5462 = vmatmul.mubr.f32.gmra.mrb[0].mxu0 %v5370
        %v5463 = vpop.f32.mrb[0].mxu0
        %v5464 = vadd.f32 0.0, %v5463
        %v5465 = vpop.f32.mrb[0].mxu0
        %5466 = vmatprep.mubr.f32.mxu0 0.0
        %5467 = vmatmul.mubr.f32.gmra.mrb[0].mxu0 %v5373
        %v5468 = vpop.f32.mrb[0].mxu0
        %v5469 = vadd.f32 0.0, %v5468
        %v5470 = vpop.f32.mrb[0].mxu0
        %5471 = vmatprep.mubr.f32.mxu0 0.0
        %5472 = vmatmul.mubr.f32.gmra.mrb[0].mxu0 %v5376
        %v5473 = vpop.f32.mrb[0].mxu0
        %v5474 = vadd.f32 0.0, %v5473
        %v5475 = vpop.f32.mrb[0].mxu0
        %5476 = vmatprep.mubr.f32.mxu0 0.0
        %5477 = vmatmul.mubr.f32.gmra.mrb[0].mxu0 %v5379
        %v5478 = vpop.f32.mrb[0].mxu0
        %v5479 = vadd.f32 0.0, %v5478
        %v5480 = vpop.f32.mrb[0].mxu0
        %5481 = vmatprep.mubr.f32.mxu0 0.0
        %5482 = vmatmul.mubr.f32.gmra.mrb[0].mxu0 %v5382
        %v5483 = vpop.f32.mrb[0].mxu0
        %v5484 = vadd.f32 0.0, %v5483
        %v5485 = vpop.f32.mrb[0].mxu0
        %5486 = vmatprep.mubr.f32.mxu0 0.0
        %5487 = vmatmul.mubr.f32.gmra.mrb[0].mxu0 %v5385
        %v5488 = vpop.f32.mrb[0].mxu0
        %v5489 = vadd.f32 0.0, %v5488
        %v5490 = vpop.f32.mrb[0].mxu0
        %5491 = vdwg.mxu0
        %v5492 = vadd.f32 %v5342, %v5454
        %v5493 = vadd.f32 %v5343, %v5459
        %v5494 = vadd.f32 %v5344, %v5464
        %v5495 = vadd.f32 %v5345, %v5469
        %v5496 = vadd.f32 %v5346, %v5474
        %v5497 = vadd.f32 %v5347, %v5479
        %v5498 = vadd.f32 %v5348, %v5484
        %v5499 = vadd.f32 %v5349, %v5489
        %s5500 = sadd.s32 %s4611, 2
        %s5501 = smul.u32 %s5500, 40
        %s5502 = scalar_lea.vmem [#allocation3], %s5501
        %v5503 = vld [vmem:[%s5502] sm:$0xff]
        %v5504 = vld [vmem:[%s5502 + $0x8] sm:$0xff]
        %v5505 = vld [vmem:[%s5502 + $0x10] sm:$0xff]
        %v5506 = vld [vmem:[%s5502 + $0x18] sm:$0xff]
        %v5507 = vld [vmem:[%s5502 + $0x28] sm:$0xff]
        %v5508 = vld [vmem:[%s5502 + $0x30] sm:$0xff]
        %v5509 = vld [vmem:[%s5502 + $0x38] sm:$0xff]
        %v5510 = vld [vmem:[%s5502 + $0x40] sm:$0xff]
        %s5511 = scalar_lea.vmem %s3, 192
        %v5512 = vld [vmem:[%s5511] sm:$0xff]
        %v5513 = vld [vmem:[%s5511 + $0x8] sm:$0xff]
        %v5514 = vld [vmem:[%s5511 + $0x10] sm:$0xff]
        %v5515 = vld [vmem:[%s5511 + $0x18] sm:$0xff]
        %v5517 = vsel %vm981, %v5503, 0
        %v5520 = vsel %vm981, %v5504, 0
        %v5523 = vsel %vm981, %v5505, 0
        %v5526 = vsel %vm981, %v5506, 0
        %v5529 = vsel %vm981, %v5507, 0
        %v5532 = vsel %vm981, %v5508, 0
        %v5535 = vsel %vm981, %v5509, 0
        %v5538 = vsel %vm981, %v5510, 0
        %5540 = vmatprep.subr.mxu0 0.0
        %5541 = vmatpush1.msra.mxu0 %v5512
        %5542 = vmatprep.subr.mxu0 0.0
        %5543 = vmatpush1.msra.mxu0 %v5513
        %5544 = vmatprep.subr.mxu0 0.0
        %5545 = vmatpush1.msra.mxu0 %v5514
        %5546 = vmatprep.subr.mxu0 0.0
        %5547 = vmatpush1.msra.mxu0 %v5515
        %5548 = vmatprep.subr.mxu0 0.0
        %5549 = vmatpush1.msra.mxu0 0.0
        %5550 = vmatprep.subr.mxu0 0.0
        %5551 = vmatpush1.msra.mxu0 0.0
        %5552 = vmatprep.subr.mxu0 0.0
        %5553 = vmatpush1.msra.mxu0 0.0
        %5554 = vmatprep.subr.mxu0 0.0
        %5555 = vmatpush1.msra.mxu0 0.0
        %5556 = vmatprep.subr.mxu0 0.0
        %5557 = vmatpush1.msra.mxu0 0.0
        %5558 = vmatprep.subr.mxu0 0.0
        %5559 = vmatpush1.msra.mxu0 0.0
        %5560 = vmatprep.subr.mxu0 0.0
        %5561 = vmatpush1.msra.mxu0 0.0
        %5562 = vmatprep.subr.mxu0 0.0
        %5563 = vmatpush1.msra.mxu0 0.0
        %5564 = vmatprep.subr.mxu0 0.0
        %5565 = vmatpush1.msra.mxu0 0.0
        %5566 = vmatprep.subr.mxu0 0.0
        %5567 = vmatpush1.msra.mxu0 0.0
        %5568 = vmatprep.subr.mxu0 0.0
        %5569 = vmatpush1.msra.mxu0 0.0
        %5570 = vmatprep.subr.mxu0 0.0
        %5571 = vmatpush1.msra.mxu0 0.0
        %5572 = vmatprep.subr.mxu0 0.0
        %5573 = vmatpush1.msra.mxu0 0.0
        %5574 = vmatprep.subr.mxu0 0.0
        %5575 = vmatpush1.msra.mxu0 0.0
        %5576 = vmatprep.subr.mxu0 0.0
        %5577 = vmatpush1.msra.mxu0 0.0
        %5578 = vmatprep.subr.mxu0 0.0
        %5579 = vmatpush1.msra.mxu0 0.0
        %5580 = vmatprep.subr.mxu0 0.0
        %5581 = vmatpush1.msra.mxu0 0.0
        %5582 = vmatprep.subr.mxu0 0.0
        %5583 = vmatpush1.msra.mxu0 0.0
        %5584 = vmatprep.subr.mxu0 0.0
        %5585 = vmatpush1.msra.mxu0 0.0
        %5586 = vmatprep.subr.mxu0 0.0
        %5587 = vmatpush1.msra.mxu0 0.0
        %5588 = vmatprep.subr.mxu0 0.0
        %5589 = vmatpush1.msra.mxu0 0.0
        %5590 = vmatprep.subr.mxu0 0.0
        %5591 = vmatpush1.msra.mxu0 0.0
        %5592 = vmatprep.subr.mxu0 0.0
        %5593 = vmatpush1.msra.mxu0 0.0
        %5594 = vmatprep.subr.mxu0 0.0
        %5595 = vmatpush1.msra.mxu0 0.0
        %5596 = vmatprep.subr.mxu0 0.0
        %5597 = vmatpush1.msra.mxu0 0.0
        %5598 = vmatprep.subr.mxu0 0.0
        %5599 = vmatpush1.msra.mxu0 0.0
        %5600 = vmatprep.subr.mxu0 0.0
        %5601 = vmatpush1.msra.mxu0 0.0
        %5602 = vmatprep.subr.mxu0 0.0
        %5603 = vmatpush1.msra.mxu0 0.0
        %5604 = vmatprep.mubr.f32.mxu0 0.0
        %5605 = vmatmul.mubr.f32.gmra.mrb[0].mxu0 %v5517
        %v5606 = vpop.f32.mrb[0].mxu0
        %v5607 = vadd.f32 0.0, %v5606
        %v5608 = vpop.f32.mrb[0].mxu0
        %5609 = vmatprep.mubr.f32.mxu0 0.0
        %5610 = vmatmul.mubr.f32.gmra.mrb[0].mxu0 %v5520
        %v5611 = vpop.f32.mrb[0].mxu0
        %v5612 = vadd.f32 0.0, %v5611
        %v5613 = vpop.f32.mrb[0].mxu0
        %5614 = vmatprep.mubr.f32.mxu0 0.0
        %5615 = vmatmul.mubr.f32.gmra.mrb[0].mxu0 %v5523
        %v5616 = vpop.f32.mrb[0].mxu0
        %v5617 = vadd.f32 0.0, %v5616
        %v5618 = vpop.f32.mrb[0].mxu0
        %5619 = vmatprep.mubr.f32.mxu0 0.0
        %5620 = vmatmul.mubr.f32.gmra.mrb[0].mxu0 %v5526
        %v5621 = vpop.f32.mrb[0].mxu0
        %v5622 = vadd.f32 0.0, %v5621
        %v5623 = vpop.f32.mrb[0].mxu0
        %5624 = vmatprep.mubr.f32.mxu0 0.0
        %5625 = vmatmul.mubr.f32.gmra.mrb[0].mxu0 %v5529
        %v5626 = vpop.f32.mrb[0].mxu0
        %v5627 = vadd.f32 0.0, %v5626
        %v5628 = vpop.f32.mrb[0].mxu0
        %5629 = vmatprep.mubr.f32.mxu0 0.0
        %5630 = vmatmul.mubr.f32.gmra.mrb[0].mxu0 %v5532
        %v5631 = vpop.f32.mrb[0].mxu0
        %v5632 = vadd.f32 0.0, %v5631
        %v5633 = vpop.f32.mrb[0].mxu0
        %5634 = vmatprep.mubr.f32.mxu0 0.0
        %5635 = vmatmul.mubr.f32.gmra.mrb[0].mxu0 %v5535
        %v5636 = vpop.f32.mrb[0].mxu0
        %v5637 = vadd.f32 0.0, %v5636
        %v5638 = vpop.f32.mrb[0].mxu0
        %5639 = vmatprep.mubr.f32.mxu0 0.0
        %5640 = vmatmul.mubr.f32.gmra.mrb[0].mxu0 %v5538
        %v5641 = vpop.f32.mrb[0].mxu0
        %v5642 = vadd.f32 0.0, %v5641
        %v5643 = vpop.f32.mrb[0].mxu0
        %5644 = vdwg.mxu0
        %v5645 = vadd.f32 %v5492, %v5607
        %v5646 = vadd.f32 %v5493, %v5612
        %v5647 = vadd.f32 %v5494, %v5617
        %v5648 = vadd.f32 %v5495, %v5622
        %v5649 = vadd.f32 %v5496, %v5627
        %v5650 = vadd.f32 %v5497, %v5632
        %v5651 = vadd.f32 %v5498, %v5637
        %v5652 = vadd.f32 %v5499, %v5642
        %v5653 = vld [vmem:[%s5502 + $0x1] sm:$0xff]
        %v5654 = vld [vmem:[%s5502 + $0x9] sm:$0xff]
        %v5655 = vld [vmem:[%s5502 + $0x11] sm:$0xff]
        %v5656 = vld [vmem:[%s5502 + $0x19] sm:$0xff]
        %v5657 = vld [vmem:[%s5502 + $0x29] sm:$0xff]
        %v5658 = vld [vmem:[%s5502 + $0x31] sm:$0xff]
        %v5659 = vld [vmem:[%s5502 + $0x39] sm:$0xff]
        %v5660 = vld [vmem:[%s5502 + $0x41] sm:$0xff]
        %s5661 = scalar_lea.vmem %s3, 224
        %v5662 = vld [vmem:[%s5661] sm:$0xff]
        %v5663 = vld [vmem:[%s5661 + $0x8] sm:$0xff]
        %v5664 = vld [vmem:[%s5661 + $0x10] sm:$0xff]
        %v5665 = vld [vmem:[%s5661 + $0x18] sm:$0xff]
        %v5667 = vsel %vm981, %v5653, 0
        %v5670 = vsel %vm981, %v5654, 0
        %v5673 = vsel %vm981, %v5655, 0
        %v5676 = vsel %vm981, %v5656, 0
        %v5679 = vsel %vm981, %v5657, 0
        %v5682 = vsel %vm981, %v5658, 0
        %v5685 = vsel %vm981, %v5659, 0
        %v5688 = vsel %vm981, %v5660, 0
        %5690 = vmatprep.subr.mxu0 0.0
        %5691 = vmatpush1.msra.mxu0 %v5662
        %5692 = vmatprep.subr.mxu0 0.0
        %5693 = vmatpush1.msra.mxu0 %v5663
        %5694 = vmatprep.subr.mxu0 0.0
        %5695 = vmatpush1.msra.mxu0 %v5664
        %5696 = vmatprep.subr.mxu0 0.0
        %5697 = vmatpush1.msra.mxu0 %v5665
        %5698 = vmatprep.subr.mxu0 0.0
        %5699 = vmatpush1.msra.mxu0 0.0
        %5700 = vmatprep.subr.mxu0 0.0
        %5701 = vmatpush1.msra.mxu0 0.0
        %5702 = vmatprep.subr.mxu0 0.0
        %5703 = vmatpush1.msra.mxu0 0.0
        %5704 = vmatprep.subr.mxu0 0.0
        %5705 = vmatpush1.msra.mxu0 0.0
        %5706 = vmatprep.subr.mxu0 0.0
        %5707 = vmatpush1.msra.mxu0 0.0
        %5708 = vmatprep.subr.mxu0 0.0
        %5709 = vmatpush1.msra.mxu0 0.0
        %5710 = vmatprep.subr.mxu0 0.0
        %5711 = vmatpush1.msra.mxu0 0.0
        %5712 = vmatprep.subr.mxu0 0.0
        %5713 = vmatpush1.msra.mxu0 0.0
        %5714 = vmatprep.subr.mxu0 0.0
        %5715 = vmatpush1.msra.mxu0 0.0
        %5716 = vmatprep.subr.mxu0 0.0
        %5717 = vmatpush1.msra.mxu0 0.0
        %5718 = vmatprep.subr.mxu0 0.0
        %5719 = vmatpush1.msra.mxu0 0.0
        %5720 = vmatprep.subr.mxu0 0.0
        %5721 = vmatpush1.msra.mxu0 0.0
        %5722 = vmatprep.subr.mxu0 0.0
        %5723 = vmatpush1.msra.mxu0 0.0
        %5724 = vmatprep.subr.mxu0 0.0
        %5725 = vmatpush1.msra.mxu0 0.0
        %5726 = vmatprep.subr.mxu0 0.0
        %5727 = vmatpush1.msra.mxu0 0.0
        %5728 = vmatprep.subr.mxu0 0.0
        %5729 = vmatpush1.msra.mxu0 0.0
        %5730 = vmatprep.subr.mxu0 0.0
        %5731 = vmatpush1.msra.mxu0 0.0
        %5732 = vmatprep.subr.mxu0 0.0
        %5733 = vmatpush1.msra.mxu0 0.0
        %5734 = vmatprep.subr.mxu0 0.0
        %5735 = vmatpush1.msra.mxu0 0.0
        %5736 = vmatprep.subr.mxu0 0.0
        %5737 = vmatpush1.msra.mxu0 0.0
        %5738 = vmatprep.subr.mxu0 0.0
        %5739 = vmatpush1.msra.mxu0 0.0
        %5740 = vmatprep.subr.mxu0 0.0
        %5741 = vmatpush1.msra.mxu0 0.0
        %5742 = vmatprep.subr.mxu0 0.0
        %5743 = vmatpush1.msra.mxu0 0.0
        %5744 = vmatprep.subr.mxu0 0.0
        %5745 = vmatpush1.msra.mxu0 0.0
        %5746 = vmatprep.subr.mxu0 0.0
        %5747 = vmatpush1.msra.mxu0 0.0
        %5748 = vmatprep.subr.mxu0 0.0
        %5749 = vmatpush1.msra.mxu0 0.0
        %5750 = vmatprep.subr.mxu0 0.0
        %5751 = vmatpush1.msra.mxu0 0.0
        %5752 = vmatprep.subr.mxu0 0.0
        %5753 = vmatpush1.msra.mxu0 0.0
        %5754 = vmatprep.mubr.f32.mxu0 0.0
        %5755 = vmatmul.mubr.f32.gmra.mrb[0].mxu0 %v5667
        %v5756 = vpop.f32.mrb[0].mxu0
        %v5757 = vadd.f32 0.0, %v5756
        %v5758 = vpop.f32.mrb[0].mxu0
        %5759 = vmatprep.mubr.f32.mxu0 0.0
        %5760 = vmatmul.mubr.f32.gmra.mrb[0].mxu0 %v5670
        %v5761 = vpop.f32.mrb[0].mxu0
        %v5762 = vadd.f32 0.0, %v5761
        %v5763 = vpop.f32.mrb[0].mxu0
        %5764 = vmatprep.mubr.f32.mxu0 0.0
        %5765 = vmatmul.mubr.f32.gmra.mrb[0].mxu0 %v5673
        %v5766 = vpop.f32.mrb[0].mxu0
        %v5767 = vadd.f32 0.0, %v5766
        %v5768 = vpop.f32.mrb[0].mxu0
        %5769 = vmatprep.mubr.f32.mxu0 0.0
        %5770 = vmatmul.mubr.f32.gmra.mrb[0].mxu0 %v5676
        %v5771 = vpop.f32.mrb[0].mxu0
        %v5772 = vadd.f32 0.0, %v5771
        %v5773 = vpop.f32.mrb[0].mxu0
        %5774 = vmatprep.mubr.f32.mxu0 0.0
        %5775 = vmatmul.mubr.f32.gmra.mrb[0].mxu0 %v5679
        %v5776 = vpop.f32.mrb[0].mxu0
        %v5777 = vadd.f32 0.0, %v5776
        %v5778 = vpop.f32.mrb[0].mxu0
        %5779 = vmatprep.mubr.f32.mxu0 0.0
        %5780 = vmatmul.mubr.f32.gmra.mrb[0].mxu0 %v5682
        %v5781 = vpop.f32.mrb[0].mxu0
        %v5782 = vadd.f32 0.0, %v5781
        %v5783 = vpop.f32.mrb[0].mxu0
        %5784 = vmatprep.mubr.f32.mxu0 0.0
        %5785 = vmatmul.mubr.f32.gmra.mrb[0].mxu0 %v5685
        %v5786 = vpop.f32.mrb[0].mxu0
        %v5787 = vadd.f32 0.0, %v5786
        %v5788 = vpop.f32.mrb[0].mxu0
        %5789 = vmatprep.mubr.f32.mxu0 0.0
        %5790 = vmatmul.mubr.f32.gmra.mrb[0].mxu0 %v5688
        %v5791 = vpop.f32.mrb[0].mxu0
        %v5792 = vadd.f32 0.0, %v5791
        %v5793 = vpop.f32.mrb[0].mxu0
        %5794 = vdwg.mxu0
        %v5795 = vadd.f32 %v5645, %v5757
        %v5796 = vadd.f32 %v5646, %v5762
        %v5797 = vadd.f32 %v5647, %v5767
        %v5798 = vadd.f32 %v5648, %v5772
        %v5799 = vadd.f32 %v5649, %v5777
        %v5800 = vadd.f32 %v5650, %v5782
        %v5801 = vadd.f32 %v5651, %v5787
        %v5802 = vadd.f32 %v5652, %v5792
        %v5803 = vld [vmem:[%s5502 + $0x2] sm:$0xff]
        %v5804 = vld [vmem:[%s5502 + $0xa] sm:$0xff]
        %v5805 = vld [vmem:[%s5502 + $0x12] sm:$0xff]
        %v5806 = vld [vmem:[%s5502 + $0x1a] sm:$0xff]
        %v5807 = vld [vmem:[%s5502 + $0x2a] sm:$0xff]
        %v5808 = vld [vmem:[%s5502 + $0x32] sm:$0xff]
        %v5809 = vld [vmem:[%s5502 + $0x3a] sm:$0xff]
        %v5810 = vld [vmem:[%s5502 + $0x42] sm:$0xff]
        %s5811 = scalar_lea.vmem %s3, 256
        %v5812 = vld [vmem:[%s5811] sm:$0xff]
        %v5813 = vld [vmem:[%s5811 + $0x8] sm:$0xff]
        %v5814 = vld [vmem:[%s5811 + $0x10] sm:$0xff]
        %v5815 = vld [vmem:[%s5811 + $0x18] sm:$0xff]
        %v5817 = vsel %vm981, %v5803, 0
        %v5820 = vsel %vm981, %v5804, 0
        %v5823 = vsel %vm981, %v5805, 0
        %v5826 = vsel %vm981, %v5806, 0
        %v5829 = vsel %vm981, %v5807, 0
        %v5832 = vsel %vm981, %v5808, 0
        %v5835 = vsel %vm981, %v5809, 0
        %v5838 = vsel %vm981, %v5810, 0
        %5840 = vmatprep.subr.mxu0 0.0
        %5841 = vmatpush1.msra.mxu0 %v5812
        %5842 = vmatprep.subr.mxu0 0.0
        %5843 = vmatpush1.msra.mxu0 %v5813
        %5844 = vmatprep.subr.mxu0 0.0
        %5845 = vmatpush1.msra.mxu0 %v5814
        %5846 = vmatprep.subr.mxu0 0.0
        %5847 = vmatpush1.msra.mxu0 %v5815
        %5848 = vmatprep.subr.mxu0 0.0
        %5849 = vmatpush1.msra.mxu0 0.0
        %5850 = vmatprep.subr.mxu0 0.0
        %5851 = vmatpush1.msra.mxu0 0.0
        %5852 = vmatprep.subr.mxu0 0.0
        %5853 = vmatpush1.msra.mxu0 0.0
        %5854 = vmatprep.subr.mxu0 0.0
        %5855 = vmatpush1.msra.mxu0 0.0
        %5856 = vmatprep.subr.mxu0 0.0
        %5857 = vmatpush1.msra.mxu0 0.0
        %5858 = vmatprep.subr.mxu0 0.0
        %5859 = vmatpush1.msra.mxu0 0.0
        %5860 = vmatprep.subr.mxu0 0.0
        %5861 = vmatpush1.msra.mxu0 0.0
        %5862 = vmatprep.subr.mxu0 0.0
        %5863 = vmatpush1.msra.mxu0 0.0
        %5864 = vmatprep.subr.mxu0 0.0
        %5865 = vmatpush1.msra.mxu0 0.0
        %5866 = vmatprep.subr.mxu0 0.0
        %5867 = vmatpush1.msra.mxu0 0.0
        %5868 = vmatprep.subr.mxu0 0.0
        %5869 = vmatpush1.msra.mxu0 0.0
        %5870 = vmatprep.subr.mxu0 0.0
        %5871 = vmatpush1.msra.mxu0 0.0
        %5872 = vmatprep.subr.mxu0 0.0
        %5873 = vmatpush1.msra.mxu0 0.0
        %5874 = vmatprep.subr.mxu0 0.0
        %5875 = vmatpush1.msra.mxu0 0.0
        %5876 = vmatprep.subr.mxu0 0.0
        %5877 = vmatpush1.msra.mxu0 0.0
        %5878 = vmatprep.subr.mxu0 0.0
        %5879 = vmatpush1.msra.mxu0 0.0
        %5880 = vmatprep.subr.mxu0 0.0
        %5881 = vmatpush1.msra.mxu0 0.0
        %5882 = vmatprep.subr.mxu0 0.0
        %5883 = vmatpush1.msra.mxu0 0.0
        %5884 = vmatprep.subr.mxu0 0.0
        %5885 = vmatpush1.msra.mxu0 0.0
        %5886 = vmatprep.subr.mxu0 0.0
        %5887 = vmatpush1.msra.mxu0 0.0
        %5888 = vmatprep.subr.mxu0 0.0
        %5889 = vmatpush1.msra.mxu0 0.0
        %5890 = vmatprep.subr.mxu0 0.0
        %5891 = vmatpush1.msra.mxu0 0.0
        %5892 = vmatprep.subr.mxu0 0.0
        %5893 = vmatpush1.msra.mxu0 0.0
        %5894 = vmatprep.subr.mxu0 0.0
        %5895 = vmatpush1.msra.mxu0 0.0
        %5896 = vmatprep.subr.mxu0 0.0
        %5897 = vmatpush1.msra.mxu0 0.0
        %5898 = vmatprep.subr.mxu0 0.0
        %5899 = vmatpush1.msra.mxu0 0.0
        %5900 = vmatprep.subr.mxu0 0.0
        %5901 = vmatpush1.msra.mxu0 0.0
        %5902 = vmatprep.subr.mxu0 0.0
        %5903 = vmatpush1.msra.mxu0 0.0
        %5904 = vmatprep.mubr.f32.mxu0 0.0
        %5905 = vmatmul.mubr.f32.gmra.mrb[0].mxu0 %v5817
        %v5906 = vpop.f32.mrb[0].mxu0
        %v5907 = vadd.f32 0.0, %v5906
        %v5908 = vpop.f32.mrb[0].mxu0
        %5909 = vmatprep.mubr.f32.mxu0 0.0
        %5910 = vmatmul.mubr.f32.gmra.mrb[0].mxu0 %v5820
        %v5911 = vpop.f32.mrb[0].mxu0
        %v5912 = vadd.f32 0.0, %v5911
        %v5913 = vpop.f32.mrb[0].mxu0
        %5914 = vmatprep.mubr.f32.mxu0 0.0
        %5915 = vmatmul.mubr.f32.gmra.mrb[0].mxu0 %v5823
        %v5916 = vpop.f32.mrb[0].mxu0
        %v5917 = vadd.f32 0.0, %v5916
        %v5918 = vpop.f32.mrb[0].mxu0
        %5919 = vmatprep.mubr.f32.mxu0 0.0
        %5920 = vmatmul.mubr.f32.gmra.mrb[0].mxu0 %v5826
        %v5921 = vpop.f32.mrb[0].mxu0
        %v5922 = vadd.f32 0.0, %v5921
        %v5923 = vpop.f32.mrb[0].mxu0
        %5924 = vmatprep.mubr.f32.mxu0 0.0
        %5925 = vmatmul.mubr.f32.gmra.mrb[0].mxu0 %v5829
        %v5926 = vpop.f32.mrb[0].mxu0
        %v5927 = vadd.f32 0.0, %v5926
        %v5928 = vpop.f32.mrb[0].mxu0
        %5929 = vmatprep.mubr.f32.mxu0 0.0
        %5930 = vmatmul.mubr.f32.gmra.mrb[0].mxu0 %v5832
        %v5931 = vpop.f32.mrb[0].mxu0
        %v5932 = vadd.f32 0.0, %v5931
        %v5933 = vpop.f32.mrb[0].mxu0
        %5934 = vmatprep.mubr.f32.mxu0 0.0
        %5935 = vmatmul.mubr.f32.gmra.mrb[0].mxu0 %v5835
        %v5936 = vpop.f32.mrb[0].mxu0
        %v5937 = vadd.f32 0.0, %v5936
        %v5938 = vpop.f32.mrb[0].mxu0
        %5939 = vmatprep.mubr.f32.mxu0 0.0
        %5940 = vmatmul.mubr.f32.gmra.mrb[0].mxu0 %v5838
        %v5941 = vpop.f32.mrb[0].mxu0
        %v5942 = vadd.f32 0.0, %v5941
        %v5943 = vpop.f32.mrb[0].mxu0
        %5944 = vdwg.mxu0
        %v5945 = vadd.f32 %v5795, %v5907
        %v5946 = vadd.f32 %v5796, %v5912
        %v5947 = vadd.f32 %v5797, %v5917
        %v5948 = vadd.f32 %v5798, %v5922
        %v5949 = vadd.f32 %v5799, %v5927
        %v5950 = vadd.f32 %v5800, %v5932
        %v5951 = vadd.f32 %v5801, %v5937
        %v5952 = vadd.f32 %v5802, %v5942
        %v5954 = vlaneseq
        %v5955 = vshrl.u32 %v5954, 7
        %v5956 = vsub.s32 0, %v5955
        %v5957 = vrot.slane %v4604, %v5956
        %v5959 = vadd.f32 %v5945, %v5957
        %v5960 = vadd.f32 %v5946, %v5957
        %v5961 = vadd.f32 %v5947, %v5957
        %v5962 = vadd.f32 %v5948, %v5957
        %v5963 = vadd.f32 %v5949, %v5957
        %v5964 = vadd.f32 %v5950, %v5957
        %v5965 = vadd.f32 %v5951, %v5957
        %v5966 = vadd.f32 %v5952, %v5957
        %v5967 = vmax.f32 %v5959, 0.0
        %v5968 = vmax.f32 %v5960, 0.0
        %v5969 = vmax.f32 %v5961, 0.0
        %v5970 = vmax.f32 %v5962, 0.0
        %v5971 = vmax.f32 %v5963, 0.0
        %v5972 = vmax.f32 %v5964, 0.0
        %v5973 = vmax.f32 %v5965, 0.0
        %v5974 = vmax.f32 %v5966, 0.0
        %vm5975 = vcmask 523264
        %v5977 = vsel %vm5975, %v2279, 0
        %v5980 = vsel %vm5975, %v2280, 0
        %v5983 = vsel %vm5975, %v2281, 0
        %v5986 = vsel %vm5975, %v2282, 0
        %5988 = vmatprep.subr.mxu0 0.0
        %5989 = vmatpush1.msra.mxu0 %v5967
        %5990 = vmatprep.subr.mxu0 0.0
        %5991 = vmatpush1.msra.mxu0 %v5968
        %5992 = vmatprep.subr.mxu0 0.0
        %5993 = vmatpush1.msra.mxu0 %v5969
        %5994 = vmatprep.subr.mxu0 0.0
        %5995 = vmatpush1.msra.mxu0 %v5970
        %5996 = vmatprep.subr.mxu0 0.0
        %5997 = vmatpush1.msra.mxu0 %v5971
        %5998 = vmatprep.subr.mxu0 0.0
        %5999 = vmatpush1.msra.mxu0 %v5972
        %6000 = vmatprep.subr.mxu0 0.0
        %6001 = vmatpush1.msra.mxu0 %v5973
        %6002 = vmatprep.subr.mxu0 0.0
        %6003 = vmatpush1.msra.mxu0 %v5974
        %6004 = vmatprep.subr.mxu0 0.0
        %6005 = vmatpush1.msra.mxu0 0.0
        %6006 = vmatprep.subr.mxu0 0.0
        %6007 = vmatpush1.msra.mxu0 0.0
        %6008 = vmatprep.subr.mxu0 0.0
        %6009 = vmatpush1.msra.mxu0 0.0
        %6010 = vmatprep.subr.mxu0 0.0
        %6011 = vmatpush1.msra.mxu0 0.0
        %6012 = vmatprep.subr.mxu0 0.0
        %6013 = vmatpush1.msra.mxu0 0.0
        %6014 = vmatprep.subr.mxu0 0.0
        %6015 = vmatpush1.msra.mxu0 0.0
        %6016 = vmatprep.subr.mxu0 0.0
        %6017 = vmatpush1.msra.mxu0 0.0
        %6018 = vmatprep.subr.mxu0 0.0
        %6019 = vmatpush1.msra.mxu0 0.0
        %6020 = vmatprep.subr.mxu0 0.0
        %6021 = vmatpush1.msra.mxu0 0.0
        %6022 = vmatprep.subr.mxu0 0.0
        %6023 = vmatpush1.msra.mxu0 0.0
        %6024 = vmatprep.subr.mxu0 0.0
        %6025 = vmatpush1.msra.mxu0 0.0
        %6026 = vmatprep.subr.mxu0 0.0
        %6027 = vmatpush1.msra.mxu0 0.0
        %6028 = vmatprep.subr.mxu0 0.0
        %6029 = vmatpush1.msra.mxu0 0.0
        %6030 = vmatprep.subr.mxu0 0.0
        %6031 = vmatpush1.msra.mxu0 0.0
        %6032 = vmatprep.subr.mxu0 0.0
        %6033 = vmatpush1.msra.mxu0 0.0
        %6034 = vmatprep.subr.mxu0 0.0
        %6035 = vmatpush1.msra.mxu0 0.0
        %6036 = vmatprep.subr.mxu0 0.0
        %6037 = vmatpush1.msra.mxu0 0.0
        %6038 = vmatprep.subr.mxu0 0.0
        %6039 = vmatpush1.msra.mxu0 0.0
        %6040 = vmatprep.subr.mxu0 0.0
        %6041 = vmatpush1.msra.mxu0 0.0
        %6042 = vmatprep.subr.mxu0 0.0
        %6043 = vmatpush1.msra.mxu0 0.0
        %6044 = vmatprep.subr.mxu0 0.0
        %6045 = vmatpush1.msra.mxu0 0.0
        %6046 = vmatprep.subr.mxu0 0.0
        %6047 = vmatpush1.msra.mxu0 0.0
        %6048 = vmatprep.subr.mxu0 0.0
        %6049 = vmatpush1.msra.mxu0 0.0
        %6050 = vmatprep.subr.mxu0 0.0
        %6051 = vmatpush1.msra.mxu0 0.0
        %6052 = vmatprep.mubr.f32.mxu0 0.0
        %6053 = vmatmul.mubr.f32.gmra.mrb[0].mxu0 %v5977
        %v6054 = vpop.f32.mrb[0].mxu0
        %v6055 = vadd.f32 0.0, %v6054
        %v6056 = vpop.f32.mrb[0].mxu0
        %6057 = vmatprep.mubr.f32.mxu0 0.0
        %6058 = vmatmul.mubr.f32.gmra.mrb[0].mxu0 %v5980
        %v6059 = vpop.f32.mrb[0].mxu0
        %v6060 = vadd.f32 0.0, %v6059
        %v6061 = vpop.f32.mrb[0].mxu0
        %6062 = vmatprep.mubr.f32.mxu0 0.0
        %6063 = vmatmul.mubr.f32.gmra.mrb[0].mxu0 %v5983
        %v6064 = vpop.f32.mrb[0].mxu0
        %v6065 = vadd.f32 0.0, %v6064
        %v6066 = vpop.f32.mrb[0].mxu0
        %6067 = vmatprep.mubr.f32.mxu0 0.0
        %6068 = vmatmul.mubr.f32.gmra.mrb[0].mxu0 %v5986
        %v6069 = vpop.f32.mrb[0].mxu0
        %v6070 = vadd.f32 0.0, %v6069
        %v6071 = vpop.f32.mrb[0].mxu0
        %6072 = vdwg.mxu0
        %v6074 = vsel %vm5975, %v2303, 0
        %v6077 = vsel %vm5975, %v2304, 0
        %v6080 = vsel %vm5975, %v2305, 0
        %v6083 = vsel %vm5975, %v2306, 0
        %6085 = vmatprep.subr.mxu0 0.0
        %6086 = vmatpush1.msra.mxu0 %v5967
        %6087 = vmatprep.subr.mxu0 0.0
        %6088 = vmatpush1.msra.mxu0 %v5968
        %6089 = vmatprep.subr.mxu0 0.0
        %6090 = vmatpush1.msra.mxu0 %v5969
        %6091 = vmatprep.subr.mxu0 0.0
        %6092 = vmatpush1.msra.mxu0 %v5970
        %6093 = vmatprep.subr.mxu0 0.0
        %6094 = vmatpush1.msra.mxu0 %v5971
        %6095 = vmatprep.subr.mxu0 0.0
        %6096 = vmatpush1.msra.mxu0 %v5972
        %6097 = vmatprep.subr.mxu0 0.0
        %6098 = vmatpush1.msra.mxu0 %v5973
        %6099 = vmatprep.subr.mxu0 0.0
        %6100 = vmatpush1.msra.mxu0 %v5974
        %6101 = vmatprep.subr.mxu0 0.0
        %6102 = vmatpush1.msra.mxu0 0.0
        %6103 = vmatprep.subr.mxu0 0.0
        %6104 = vmatpush1.msra.mxu0 0.0
        %6105 = vmatprep.subr.mxu0 0.0
        %6106 = vmatpush1.msra.mxu0 0.0
        %6107 = vmatprep.subr.mxu0 0.0
        %6108 = vmatpush1.msra.mxu0 0.0
        %6109 = vmatprep.subr.mxu0 0.0
        %6110 = vmatpush1.msra.mxu0 0.0
        %6111 = vmatprep.subr.mxu0 0.0
        %6112 = vmatpush1.msra.mxu0 0.0
        %6113 = vmatprep.subr.mxu0 0.0
        %6114 = vmatpush1.msra.mxu0 0.0
        %6115 = vmatprep.subr.mxu0 0.0
        %6116 = vmatpush1.msra.mxu0 0.0
        %6117 = vmatprep.subr.mxu0 0.0
        %6118 = vmatpush1.msra.mxu0 0.0
        %6119 = vmatprep.subr.mxu0 0.0
        %6120 = vmatpush1.msra.mxu0 0.0
        %6121 = vmatprep.subr.mxu0 0.0
        %6122 = vmatpush1.msra.mxu0 0.0
        %6123 = vmatprep.subr.mxu0 0.0
        %6124 = vmatpush1.msra.mxu0 0.0
        %6125 = vmatprep.subr.mxu0 0.0
        %6126 = vmatpush1.msra.mxu0 0.0
        %6127 = vmatprep.subr.mxu0 0.0
        %6128 = vmatpush1.msra.mxu0 0.0
        %6129 = vmatprep.subr.mxu0 0.0
        %6130 = vmatpush1.msra.mxu0 0.0
        %6131 = vmatprep.subr.mxu0 0.0
        %6132 = vmatpush1.msra.mxu0 0.0
        %6133 = vmatprep.subr.mxu0 0.0
        %6134 = vmatpush1.msra.mxu0 0.0
        %6135 = vmatprep.subr.mxu0 0.0
        %6136 = vmatpush1.msra.mxu0 0.0
        %6137 = vmatprep.subr.mxu0 0.0
        %6138 = vmatpush1.msra.mxu0 0.0
        %6139 = vmatprep.subr.mxu0 0.0
        %6140 = vmatpush1.msra.mxu0 0.0
        %6141 = vmatprep.subr.mxu0 0.0
        %6142 = vmatpush1.msra.mxu0 0.0
        %6143 = vmatprep.subr.mxu0 0.0
        %6144 = vmatpush1.msra.mxu0 0.0
        %6145 = vmatprep.subr.mxu0 0.0
        %6146 = vmatpush1.msra.mxu0 0.0
        %6147 = vmatprep.subr.mxu0 0.0
        %6148 = vmatpush1.msra.mxu0 0.0
        %6149 = vmatprep.mubr.f32.mxu0 0.0
        %6150 = vmatmul.mubr.f32.gmra.mrb[0].mxu0 %v6074
        %v6151 = vpop.f32.mrb[0].mxu0
        %v6152 = vadd.f32 0.0, %v6151
        %v6153 = vpop.f32.mrb[0].mxu0
        %6154 = vmatprep.mubr.f32.mxu0 0.0
        %6155 = vmatmul.mubr.f32.gmra.mrb[0].mxu0 %v6077
        %v6156 = vpop.f32.mrb[0].mxu0
        %v6157 = vadd.f32 0.0, %v6156
        %v6158 = vpop.f32.mrb[0].mxu0
        %6159 = vmatprep.mubr.f32.mxu0 0.0
        %6160 = vmatmul.mubr.f32.gmra.mrb[0].mxu0 %v6080
        %v6161 = vpop.f32.mrb[0].mxu0
        %v6162 = vadd.f32 0.0, %v6161
        %v6163 = vpop.f32.mrb[0].mxu0
        %6164 = vmatprep.mubr.f32.mxu0 0.0
        %6165 = vmatmul.mubr.f32.gmra.mrb[0].mxu0 %v6083
        %v6166 = vpop.f32.mrb[0].mxu0
        %v6167 = vadd.f32 0.0, %v6166
        %v6168 = vpop.f32.mrb[0].mxu0
        %6169 = vdwg.mxu0
        %v6170 = vmax.f32 %v6055, %v6152
        %v6171 = vmax.f32 %v6060, %v6157
        %v6172 = vmax.f32 %v6065, %v6162
        %v6173 = vmax.f32 %v6070, %v6167
        %v6174 = vmax.f32 %v6170, %v6172
        %v6175 = vmax.f32 %v6171, %v6173
        %s6176 = sadd.s32 %s4606, 1
        %s6177 = smul.u32 %s6176, 24
        %s6178 = scalar_lea.vmem [#allocation4], %s6177
        %6179 = vst.msk [vmem:[%s6178 + $0x1] sm:$0xff] %vm981, %v6174
        %6180 = vst.msk [vmem:[%s6178 + $0x9] sm:$0xff] %vm981, %v6175
      $region76: #{simple_cnn_forward.1} parent=63 // loop_footer
        %s4610 = sadd.s32 1, %s4606
      $region77: #{simple_cnn_forward.1} parent=63 // loop_footer_branch
        %4605 = sbr.rel target = $region73
      $region78: #{simple_cnn_forward.1} parent=63 // loop_exit
        _
      %v6181 = vld [vmem:[%s6] sm:$0x1]
      loop: start=0, step=1, limit=8
      $region79: #{simple_cnn_forward.1} parent=63 // loop_pre_header
        _
      $region80: #{simple_cnn_forward.1} parent=63 // loop_header
        %s6183 = sphi 0, %s6187
        %p6184 = scmp.ge.s32.totalorder %s6183, 8
      $region81: #{simple_cnn_forward.1} parent=63 // loop_header_branch
        %6186 = sbr.rel (%p6184) target = $region85
      $region82: #{simple_cnn_forward.1} parent=63 // loop_body
        %s6188 = smul.u32 %s6183, 2
        %s6189 = smul.u32 %s6188, 24
        %s6190 = scalar_lea.vmem [#allocation4], %s6189
        %v6191 = vld [vmem:[%s6190] sm:$0xff]
        %v6192 = vld [vmem:[%s6190 + $0x8] sm:$0xff]
        %v6193 = vld [vmem:[%s6190 + $0x18] sm:$0xff]
        %v6194 = vld [vmem:[%s6190 + $0x20] sm:$0xff]
        %v6195 = vld [vmem:[%s5] sm:$0xff]
        %v6196 = vld [vmem:[%s5 + $0x8] sm:$0xff]
        %v6197 = vld [vmem:[%s5 + $0x10] sm:$0xff]
        %v6198 = vld [vmem:[%s5 + $0x18] sm:$0xff]
        %v6199 = vld [vmem:[%s6190 + $0x1] sm:$0xff]
        %v6200 = vld [vmem:[%s6190 + $0x9] sm:$0xff]
        %v6201 = vld [vmem:[%s6190 + $0x19] sm:$0xff]
        %v6202 = vld [vmem:[%s6190 + $0x21] sm:$0xff]
        %s6203 = scalar_lea.vmem %s5, 32
        %v6204 = vld [vmem:[%s6203] sm:$0xff]
        %v6205 = vld [vmem:[%s6203 + $0x8] sm:$0xff]
        %v6206 = vld [vmem:[%s6203 + $0x10] sm:$0xff]
        %v6207 = vld [vmem:[%s6203 + $0x18] sm:$0xff]
        %v6209 = vsel %vm981, %v6199, 0
        %v6212 = vsel %vm981, %v6200, 0
        %v6215 = vsel %vm981, %v6201, 0
        %v6218 = vsel %vm981, %v6202, 0
        %6220 = vmatprep.subr.mxu0 0.0
        %6221 = vmatpush1.msra.mxu0 %v6204
        %6222 = vmatprep.subr.mxu0 0.0
        %6223 = vmatpush1.msra.mxu0 %v6205
        %6224 = vmatprep.subr.mxu0 0.0
        %6225 = vmatpush1.msra.mxu0 %v6206
        %6226 = vmatprep.subr.mxu0 0.0
        %6227 = vmatpush1.msra.mxu0 %v6207
        %6228 = vmatprep.subr.mxu0 0.0
        %6229 = vmatpush1.msra.mxu0 0.0
        %6230 = vmatprep.subr.mxu0 0.0
        %6231 = vmatpush1.msra.mxu0 0.0
        %6232 = vmatprep.subr.mxu0 0.0
        %6233 = vmatpush1.msra.mxu0 0.0
        %6234 = vmatprep.subr.mxu0 0.0
        %6235 = vmatpush1.msra.mxu0 0.0
        %6236 = vmatprep.subr.mxu0 0.0
        %6237 = vmatpush1.msra.mxu0 0.0
        %6238 = vmatprep.subr.mxu0 0.0
        %6239 = vmatpush1.msra.mxu0 0.0
        %6240 = vmatprep.subr.mxu0 0.0
        %6241 = vmatpush1.msra.mxu0 0.0
        %6242 = vmatprep.subr.mxu0 0.0
        %6243 = vmatpush1.msra.mxu0 0.0
        %6244 = vmatprep.subr.mxu0 0.0
        %6245 = vmatpush1.msra.mxu0 0.0
        %6246 = vmatprep.subr.mxu0 0.0
        %6247 = vmatpush1.msra.mxu0 0.0
        %6248 = vmatprep.subr.mxu0 0.0
        %6249 = vmatpush1.msra.mxu0 0.0
        %6250 = vmatprep.subr.mxu0 0.0
        %6251 = vmatpush1.msra.mxu0 0.0
        %6252 = vmatprep.subr.mxu0 0.0
        %6253 = vmatpush1.msra.mxu0 0.0
        %6254 = vmatprep.subr.mxu0 0.0
        %6255 = vmatpush1.msra.mxu0 0.0
        %6256 = vmatprep.subr.mxu0 0.0
        %6257 = vmatpush1.msra.mxu0 0.0
        %6258 = vmatprep.subr.mxu0 0.0
        %6259 = vmatpush1.msra.mxu0 0.0
        %6260 = vmatprep.subr.mxu0 0.0
        %6261 = vmatpush1.msra.mxu0 0.0
        %6262 = vmatprep.subr.mxu0 0.0
        %6263 = vmatpush1.msra.mxu0 0.0
        %6264 = vmatprep.subr.mxu0 0.0
        %6265 = vmatpush1.msra.mxu0 0.0
        %6266 = vmatprep.subr.mxu0 0.0
        %6267 = vmatpush1.msra.mxu0 0.0
        %6268 = vmatprep.subr.mxu0 0.0
        %6269 = vmatpush1.msra.mxu0 0.0
        %6270 = vmatprep.subr.mxu0 0.0
        %6271 = vmatpush1.msra.mxu0 0.0
        %6272 = vmatprep.subr.mxu0 0.0
        %6273 = vmatpush1.msra.mxu0 0.0
        %6274 = vmatprep.subr.mxu0 0.0
        %6275 = vmatpush1.msra.mxu0 0.0
        %6276 = vmatprep.subr.mxu0 0.0
        %6277 = vmatpush1.msra.mxu0 0.0
        %6278 = vmatprep.subr.mxu0 0.0
        %6279 = vmatpush1.msra.mxu0 0.0
        %6280 = vmatprep.subr.mxu0 0.0
        %6281 = vmatpush1.msra.mxu0 0.0
        %6282 = vmatprep.subr.mxu0 0.0
        %6283 = vmatpush1.msra.mxu0 0.0
        %6284 = vmatprep.mubr.f32.mxu0 0.0
        %6285 = vmatmul.mubr.f32.gmra.mrb[0].mxu0 %v6209
        %v6286 = vpop.f32.mrb[0].mxu0
        %v6287 = vadd.f32 0.0, %v6286
        %v6288 = vpop.f32.mrb[0].mxu0
        %6289 = vmatprep.mubr.f32.mxu0 0.0
        %6290 = vmatmul.mubr.f32.gmra.mrb[0].mxu0 %v6212
        %v6291 = vpop.f32.mrb[0].mxu0
        %v6292 = vadd.f32 0.0, %v6291
        %v6293 = vpop.f32.mrb[0].mxu0
        %6294 = vmatprep.mubr.f32.mxu0 0.0
        %6295 = vmatmul.mubr.f32.gmra.mrb[0].mxu0 %v6215
        %v6296 = vpop.f32.mrb[0].mxu0
        %v6297 = vadd.f32 0.0, %v6296
        %v6298 = vpop.f32.mrb[0].mxu0
        %6299 = vmatprep.mubr.f32.mxu0 0.0
        %6300 = vmatmul.mubr.f32.gmra.mrb[0].mxu0 %v6218
        %v6301 = vpop.f32.mrb[0].mxu0
        %v6302 = vadd.f32 0.0, %v6301
        %v6303 = vpop.f32.mrb[0].mxu0
        %6304 = vdwg.mxu0
        %v6306 = vsel %vm981, %v6191, 0
        %v6309 = vsel %vm981, %v6192, 0
        %v6312 = vsel %vm981, %v6193, 0
        %v6315 = vsel %vm981, %v6194, 0
        %6317 = vmatprep.subr.mxu0 0.0
        %6318 = vmatpush1.msra.mxu0 %v6195
        %6319 = vmatprep.subr.mxu0 0.0
        %6320 = vmatpush1.msra.mxu0 %v6196
        %6321 = vmatprep.subr.mxu0 0.0
        %6322 = vmatpush1.msra.mxu0 %v6197
        %6323 = vmatprep.subr.mxu0 0.0
        %6324 = vmatpush1.msra.mxu0 %v6198
        %6325 = vmatprep.subr.mxu0 0.0
        %6326 = vmatpush1.msra.mxu0 0.0
        %6327 = vmatprep.subr.mxu0 0.0
        %6328 = vmatpush1.msra.mxu0 0.0
        %6329 = vmatprep.subr.mxu0 0.0
        %6330 = vmatpush1.msra.mxu0 0.0
        %6331 = vmatprep.subr.mxu0 0.0
        %6332 = vmatpush1.msra.mxu0 0.0
        %6333 = vmatprep.subr.mxu0 0.0
        %6334 = vmatpush1.msra.mxu0 0.0
        %6335 = vmatprep.subr.mxu0 0.0
        %6336 = vmatpush1.msra.mxu0 0.0
        %6337 = vmatprep.subr.mxu0 0.0
        %6338 = vmatpush1.msra.mxu0 0.0
        %6339 = vmatprep.subr.mxu0 0.0
        %6340 = vmatpush1.msra.mxu0 0.0
        %6341 = vmatprep.subr.mxu0 0.0
        %6342 = vmatpush1.msra.mxu0 0.0
        %6343 = vmatprep.subr.mxu0 0.0
        %6344 = vmatpush1.msra.mxu0 0.0
        %6345 = vmatprep.subr.mxu0 0.0
        %6346 = vmatpush1.msra.mxu0 0.0
        %6347 = vmatprep.subr.mxu0 0.0
        %6348 = vmatpush1.msra.mxu0 0.0
        %6349 = vmatprep.subr.mxu0 0.0
        %6350 = vmatpush1.msra.mxu0 0.0
        %6351 = vmatprep.subr.mxu0 0.0
        %6352 = vmatpush1.msra.mxu0 0.0
        %6353 = vmatprep.subr.mxu0 0.0
        %6354 = vmatpush1.msra.mxu0 0.0
        %6355 = vmatprep.subr.mxu0 0.0
        %6356 = vmatpush1.msra.mxu0 0.0
        %6357 = vmatprep.subr.mxu0 0.0
        %6358 = vmatpush1.msra.mxu0 0.0
        %6359 = vmatprep.subr.mxu0 0.0
        %6360 = vmatpush1.msra.mxu0 0.0
        %6361 = vmatprep.subr.mxu0 0.0
        %6362 = vmatpush1.msra.mxu0 0.0
        %6363 = vmatprep.subr.mxu0 0.0
        %6364 = vmatpush1.msra.mxu0 0.0
        %6365 = vmatprep.subr.mxu0 0.0
        %6366 = vmatpush1.msra.mxu0 0.0
        %6367 = vmatprep.subr.mxu0 0.0
        %6368 = vmatpush1.msra.mxu0 0.0
        %6369 = vmatprep.subr.mxu0 0.0
        %6370 = vmatpush1.msra.mxu0 0.0
        %6371 = vmatprep.subr.mxu0 0.0
        %6372 = vmatpush1.msra.mxu0 0.0
        %6373 = vmatprep.subr.mxu0 0.0
        %6374 = vmatpush1.msra.mxu0 0.0
        %6375 = vmatprep.subr.mxu0 0.0
        %6376 = vmatpush1.msra.mxu0 0.0
        %6377 = vmatprep.subr.mxu0 0.0
        %6378 = vmatpush1.msra.mxu0 0.0
        %6379 = vmatprep.subr.mxu0 0.0
        %6380 = vmatpush1.msra.mxu0 0.0
        %6381 = vmatprep.mubr.f32.mxu0 0.0
        %6382 = vmatmul.mubr.f32.gmra.mrb[0].mxu0 %v6306
        %v6383 = vpop.f32.mrb[0].mxu0
        %v6384 = vadd.f32 %v6287, %v6383
        %v6385 = vpop.f32.mrb[0].mxu0
        %6386 = vmatprep.mubr.f32.mxu0 0.0
        %6387 = vmatmul.mubr.f32.gmra.mrb[0].mxu0 %v6309
        %v6388 = vpop.f32.mrb[0].mxu0
        %v6389 = vadd.f32 %v6292, %v6388
        %v6390 = vpop.f32.mrb[0].mxu0
        %6391 = vmatprep.mubr.f32.mxu0 0.0
        %6392 = vmatmul.mubr.f32.gmra.mrb[0].mxu0 %v6312
        %v6393 = vpop.f32.mrb[0].mxu0
        %v6394 = vadd.f32 %v6297, %v6393
        %v6395 = vpop.f32.mrb[0].mxu0
        %6396 = vmatprep.mubr.f32.mxu0 0.0
        %6397 = vmatmul.mubr.f32.gmra.mrb[0].mxu0 %v6315
        %v6398 = vpop.f32.mrb[0].mxu0
        %v6399 = vadd.f32 %v6302, %v6398
        %v6400 = vpop.f32.mrb[0].mxu0
        %6401 = vdwg.mxu0
        %v6402 = vld [vmem:[%s6190 + $0x2] sm:$0xff]
        %v6403 = vld [vmem:[%s6190 + $0xa] sm:$0xff]
        %v6404 = vld [vmem:[%s6190 + $0x1a] sm:$0xff]
        %v6405 = vld [vmem:[%s6190 + $0x22] sm:$0xff]
        %s6406 = scalar_lea.vmem %s5, 64
        %v6407 = vld [vmem:[%s6406] sm:$0xff]
        %v6408 = vld [vmem:[%s6406 + $0x8] sm:$0xff]
        %v6409 = vld [vmem:[%s6406 + $0x10] sm:$0xff]
        %v6410 = vld [vmem:[%s6406 + $0x18] sm:$0xff]
        %v6412 = vsel %vm981, %v6402, 0
        %v6415 = vsel %vm981, %v6403, 0
        %v6418 = vsel %vm981, %v6404, 0
        %v6421 = vsel %vm981, %v6405, 0
        %6423 = vmatprep.subr.mxu0 0.0
        %6424 = vmatpush1.msra.mxu0 %v6407
        %6425 = vmatprep.subr.mxu0 0.0
        %6426 = vmatpush1.msra.mxu0 %v6408
        %6427 = vmatprep.subr.mxu0 0.0
        %6428 = vmatpush1.msra.mxu0 %v6409
        %6429 = vmatprep.subr.mxu0 0.0
        %6430 = vmatpush1.msra.mxu0 %v6410
        %6431 = vmatprep.subr.mxu0 0.0
        %6432 = vmatpush1.msra.mxu0 0.0
        %6433 = vmatprep.subr.mxu0 0.0
        %6434 = vmatpush1.msra.mxu0 0.0
        %6435 = vmatprep.subr.mxu0 0.0
        %6436 = vmatpush1.msra.mxu0 0.0
        %6437 = vmatprep.subr.mxu0 0.0
        %6438 = vmatpush1.msra.mxu0 0.0
        %6439 = vmatprep.subr.mxu0 0.0
        %6440 = vmatpush1.msra.mxu0 0.0
        %6441 = vmatprep.subr.mxu0 0.0
        %6442 = vmatpush1.msra.mxu0 0.0
        %6443 = vmatprep.subr.mxu0 0.0
        %6444 = vmatpush1.msra.mxu0 0.0
        %6445 = vmatprep.subr.mxu0 0.0
        %6446 = vmatpush1.msra.mxu0 0.0
        %6447 = vmatprep.subr.mxu0 0.0
        %6448 = vmatpush1.msra.mxu0 0.0
        %6449 = vmatprep.subr.mxu0 0.0
        %6450 = vmatpush1.msra.mxu0 0.0
        %6451 = vmatprep.subr.mxu0 0.0
        %6452 = vmatpush1.msra.mxu0 0.0
        %6453 = vmatprep.subr.mxu0 0.0
        %6454 = vmatpush1.msra.mxu0 0.0
        %6455 = vmatprep.subr.mxu0 0.0
        %6456 = vmatpush1.msra.mxu0 0.0
        %6457 = vmatprep.subr.mxu0 0.0
        %6458 = vmatpush1.msra.mxu0 0.0
        %6459 = vmatprep.subr.mxu0 0.0
        %6460 = vmatpush1.msra.mxu0 0.0
        %6461 = vmatprep.subr.mxu0 0.0
        %6462 = vmatpush1.msra.mxu0 0.0
        %6463 = vmatprep.subr.mxu0 0.0
        %6464 = vmatpush1.msra.mxu0 0.0
        %6465 = vmatprep.subr.mxu0 0.0
        %6466 = vmatpush1.msra.mxu0 0.0
        %6467 = vmatprep.subr.mxu0 0.0
        %6468 = vmatpush1.msra.mxu0 0.0
        %6469 = vmatprep.subr.mxu0 0.0
        %6470 = vmatpush1.msra.mxu0 0.0
        %6471 = vmatprep.subr.mxu0 0.0
        %6472 = vmatpush1.msra.mxu0 0.0
        %6473 = vmatprep.subr.mxu0 0.0
        %6474 = vmatpush1.msra.mxu0 0.0
        %6475 = vmatprep.subr.mxu0 0.0
        %6476 = vmatpush1.msra.mxu0 0.0
        %6477 = vmatprep.subr.mxu0 0.0
        %6478 = vmatpush1.msra.mxu0 0.0
        %6479 = vmatprep.subr.mxu0 0.0
        %6480 = vmatpush1.msra.mxu0 0.0
        %6481 = vmatprep.subr.mxu0 0.0
        %6482 = vmatpush1.msra.mxu0 0.0
        %6483 = vmatprep.subr.mxu0 0.0
        %6484 = vmatpush1.msra.mxu0 0.0
        %6485 = vmatprep.subr.mxu0 0.0
        %6486 = vmatpush1.msra.mxu0 0.0
        %6487 = vmatprep.mubr.f32.mxu0 0.0
        %6488 = vmatmul.mubr.f32.gmra.mrb[0].mxu0 %v6412
        %v6489 = vpop.f32.mrb[0].mxu0
        %v6490 = vadd.f32 0.0, %v6489
        %v6491 = vpop.f32.mrb[0].mxu0
        %6492 = vmatprep.mubr.f32.mxu0 0.0
        %6493 = vmatmul.mubr.f32.gmra.mrb[0].mxu0 %v6415
        %v6494 = vpop.f32.mrb[0].mxu0
        %v6495 = vadd.f32 0.0, %v6494
        %v6496 = vpop.f32.mrb[0].mxu0
        %6497 = vmatprep.mubr.f32.mxu0 0.0
        %6498 = vmatmul.mubr.f32.gmra.mrb[0].mxu0 %v6418
        %v6499 = vpop.f32.mrb[0].mxu0
        %v6500 = vadd.f32 0.0, %v6499
        %v6501 = vpop.f32.mrb[0].mxu0
        %6502 = vmatprep.mubr.f32.mxu0 0.0
        %6503 = vmatmul.mubr.f32.gmra.mrb[0].mxu0 %v6421
        %v6504 = vpop.f32.mrb[0].mxu0
        %v6505 = vadd.f32 0.0, %v6504
        %v6506 = vpop.f32.mrb[0].mxu0
        %6507 = vdwg.mxu0
        %v6508 = vadd.f32 %v6384, %v6490
        %v6509 = vadd.f32 %v6389, %v6495
        %v6510 = vadd.f32 %v6394, %v6500
        %v6511 = vadd.f32 %v6399, %v6505
        %s6512 = sadd.s32 %s6188, 1
        %s6513 = smul.u32 %s6512, 24
        %s6514 = scalar_lea.vmem [#allocation4], %s6513
        %v6515 = vld [vmem:[%s6514] sm:$0xff]
        %v6516 = vld [vmem:[%s6514 + $0x8] sm:$0xff]
        %v6517 = vld [vmem:[%s6514 + $0x18] sm:$0xff]
        %v6518 = vld [vmem:[%s6514 + $0x20] sm:$0xff]
        %s6519 = scalar_lea.vmem %s5, 96
        %v6520 = vld [vmem:[%s6519] sm:$0xff]
        %v6521 = vld [vmem:[%s6519 + $0x8] sm:$0xff]
        %v6522 = vld [vmem:[%s6519 + $0x10] sm:$0xff]
        %v6523 = vld [vmem:[%s6519 + $0x18] sm:$0xff]
        %v6525 = vsel %vm981, %v6515, 0
        %v6528 = vsel %vm981, %v6516, 0
        %v6531 = vsel %vm981, %v6517, 0
        %v6534 = vsel %vm981, %v6518, 0
        %6536 = vmatprep.subr.mxu0 0.0
        %6537 = vmatpush1.msra.mxu0 %v6520
        %6538 = vmatprep.subr.mxu0 0.0
        %6539 = vmatpush1.msra.mxu0 %v6521
        %6540 = vmatprep.subr.mxu0 0.0
        %6541 = vmatpush1.msra.mxu0 %v6522
        %6542 = vmatprep.subr.mxu0 0.0
        %6543 = vmatpush1.msra.mxu0 %v6523
        %6544 = vmatprep.subr.mxu0 0.0
        %6545 = vmatpush1.msra.mxu0 0.0
        %6546 = vmatprep.subr.mxu0 0.0
        %6547 = vmatpush1.msra.mxu0 0.0
        %6548 = vmatprep.subr.mxu0 0.0
        %6549 = vmatpush1.msra.mxu0 0.0
        %6550 = vmatprep.subr.mxu0 0.0
        %6551 = vmatpush1.msra.mxu0 0.0
        %6552 = vmatprep.subr.mxu0 0.0
        %6553 = vmatpush1.msra.mxu0 0.0
        %6554 = vmatprep.subr.mxu0 0.0
        %6555 = vmatpush1.msra.mxu0 0.0
        %6556 = vmatprep.subr.mxu0 0.0
        %6557 = vmatpush1.msra.mxu0 0.0
        %6558 = vmatprep.subr.mxu0 0.0
        %6559 = vmatpush1.msra.mxu0 0.0
        %6560 = vmatprep.subr.mxu0 0.0
        %6561 = vmatpush1.msra.mxu0 0.0
        %6562 = vmatprep.subr.mxu0 0.0
        %6563 = vmatpush1.msra.mxu0 0.0
        %6564 = vmatprep.subr.mxu0 0.0
        %6565 = vmatpush1.msra.mxu0 0.0
        %6566 = vmatprep.subr.mxu0 0.0
        %6567 = vmatpush1.msra.mxu0 0.0
        %6568 = vmatprep.subr.mxu0 0.0
        %6569 = vmatpush1.msra.mxu0 0.0
        %6570 = vmatprep.subr.mxu0 0.0
        %6571 = vmatpush1.msra.mxu0 0.0
        %6572 = vmatprep.subr.mxu0 0.0
        %6573 = vmatpush1.msra.mxu0 0.0
        %6574 = vmatprep.subr.mxu0 0.0
        %6575 = vmatpush1.msra.mxu0 0.0
        %6576 = vmatprep.subr.mxu0 0.0
        %6577 = vmatpush1.msra.mxu0 0.0
        %6578 = vmatprep.subr.mxu0 0.0
        %6579 = vmatpush1.msra.mxu0 0.0
        %6580 = vmatprep.subr.mxu0 0.0
        %6581 = vmatpush1.msra.mxu0 0.0
        %6582 = vmatprep.subr.mxu0 0.0
        %6583 = vmatpush1.msra.mxu0 0.0
        %6584 = vmatprep.subr.mxu0 0.0
        %6585 = vmatpush1.msra.mxu0 0.0
        %6586 = vmatprep.subr.mxu0 0.0
        %6587 = vmatpush1.msra.mxu0 0.0
        %6588 = vmatprep.subr.mxu0 0.0
        %6589 = vmatpush1.msra.mxu0 0.0
        %6590 = vmatprep.subr.mxu0 0.0
        %6591 = vmatpush1.msra.mxu0 0.0
        %6592 = vmatprep.subr.mxu0 0.0
        %6593 = vmatpush1.msra.mxu0 0.0
        %6594 = vmatprep.subr.mxu0 0.0
        %6595 = vmatpush1.msra.mxu0 0.0
        %6596 = vmatprep.subr.mxu0 0.0
        %6597 = vmatpush1.msra.mxu0 0.0
        %6598 = vmatprep.subr.mxu0 0.0
        %6599 = vmatpush1.msra.mxu0 0.0
        %6600 = vmatprep.mubr.f32.mxu0 0.0
        %6601 = vmatmul.mubr.f32.gmra.mrb[0].mxu0 %v6525
        %v6602 = vpop.f32.mrb[0].mxu0
        %v6603 = vadd.f32 0.0, %v6602
        %v6604 = vpop.f32.mrb[0].mxu0
        %6605 = vmatprep.mubr.f32.mxu0 0.0
        %6606 = vmatmul.mubr.f32.gmra.mrb[0].mxu0 %v6528
        %v6607 = vpop.f32.mrb[0].mxu0
        %v6608 = vadd.f32 0.0, %v6607
        %v6609 = vpop.f32.mrb[0].mxu0
        %6610 = vmatprep.mubr.f32.mxu0 0.0
        %6611 = vmatmul.mubr.f32.gmra.mrb[0].mxu0 %v6531
        %v6612 = vpop.f32.mrb[0].mxu0
        %v6613 = vadd.f32 0.0, %v6612
        %v6614 = vpop.f32.mrb[0].mxu0
        %6615 = vmatprep.mubr.f32.mxu0 0.0
        %6616 = vmatmul.mubr.f32.gmra.mrb[0].mxu0 %v6534
        %v6617 = vpop.f32.mrb[0].mxu0
        %v6618 = vadd.f32 0.0, %v6617
        %v6619 = vpop.f32.mrb[0].mxu0
        %6620 = vdwg.mxu0
        %v6621 = vadd.f32 %v6508, %v6603
        %v6622 = vadd.f32 %v6509, %v6608
        %v6623 = vadd.f32 %v6510, %v6613
        %v6624 = vadd.f32 %v6511, %v6618
        %v6625 = vld [vmem:[%s6514 + $0x1] sm:$0xff]
        %v6626 = vld [vmem:[%s6514 + $0x9] sm:$0xff]
        %v6627 = vld [vmem:[%s6514 + $0x19] sm:$0xff]
        %v6628 = vld [vmem:[%s6514 + $0x21] sm:$0xff]
        %s6629 = scalar_lea.vmem %s5, 128
        %v6630 = vld [vmem:[%s6629] sm:$0xff]
        %v6631 = vld [vmem:[%s6629 + $0x8] sm:$0xff]
        %v6632 = vld [vmem:[%s6629 + $0x10] sm:$0xff]
        %v6633 = vld [vmem:[%s6629 + $0x18] sm:$0xff]
        %v6635 = vsel %vm981, %v6625, 0
        %v6638 = vsel %vm981, %v6626, 0
        %v6641 = vsel %vm981, %v6627, 0
        %v6644 = vsel %vm981, %v6628, 0
        %6646 = vmatprep.subr.mxu0 0.0
        %6647 = vmatpush1.msra.mxu0 %v6630
        %6648 = vmatprep.subr.mxu0 0.0
        %6649 = vmatpush1.msra.mxu0 %v6631
        %6650 = vmatprep.subr.mxu0 0.0
        %6651 = vmatpush1.msra.mxu0 %v6632
        %6652 = vmatprep.subr.mxu0 0.0
        %6653 = vmatpush1.msra.mxu0 %v6633
        %6654 = vmatprep.subr.mxu0 0.0
        %6655 = vmatpush1.msra.mxu0 0.0
        %6656 = vmatprep.subr.mxu0 0.0
        %6657 = vmatpush1.msra.mxu0 0.0
        %6658 = vmatprep.subr.mxu0 0.0
        %6659 = vmatpush1.msra.mxu0 0.0
        %6660 = vmatprep.subr.mxu0 0.0
        %6661 = vmatpush1.msra.mxu0 0.0
        %6662 = vmatprep.subr.mxu0 0.0
        %6663 = vmatpush1.msra.mxu0 0.0
        %6664 = vmatprep.subr.mxu0 0.0
        %6665 = vmatpush1.msra.mxu0 0.0
        %6666 = vmatprep.subr.mxu0 0.0
        %6667 = vmatpush1.msra.mxu0 0.0
        %6668 = vmatprep.subr.mxu0 0.0
        %6669 = vmatpush1.msra.mxu0 0.0
        %6670 = vmatprep.subr.mxu0 0.0
        %6671 = vmatpush1.msra.mxu0 0.0
        %6672 = vmatprep.subr.mxu0 0.0
        %6673 = vmatpush1.msra.mxu0 0.0
        %6674 = vmatprep.subr.mxu0 0.0
        %6675 = vmatpush1.msra.mxu0 0.0
        %6676 = vmatprep.subr.mxu0 0.0
        %6677 = vmatpush1.msra.mxu0 0.0
        %6678 = vmatprep.subr.mxu0 0.0
        %6679 = vmatpush1.msra.mxu0 0.0
        %6680 = vmatprep.subr.mxu0 0.0
        %6681 = vmatpush1.msra.mxu0 0.0
        %6682 = vmatprep.subr.mxu0 0.0
        %6683 = vmatpush1.msra.mxu0 0.0
        %6684 = vmatprep.subr.mxu0 0.0
        %6685 = vmatpush1.msra.mxu0 0.0
        %6686 = vmatprep.subr.mxu0 0.0
        %6687 = vmatpush1.msra.mxu0 0.0
        %6688 = vmatprep.subr.mxu0 0.0
        %6689 = vmatpush1.msra.mxu0 0.0
        %6690 = vmatprep.subr.mxu0 0.0
        %6691 = vmatpush1.msra.mxu0 0.0
        %6692 = vmatprep.subr.mxu0 0.0
        %6693 = vmatpush1.msra.mxu0 0.0
        %6694 = vmatprep.subr.mxu0 0.0
        %6695 = vmatpush1.msra.mxu0 0.0
        %6696 = vmatprep.subr.mxu0 0.0
        %6697 = vmatpush1.msra.mxu0 0.0
        %6698 = vmatprep.subr.mxu0 0.0
        %6699 = vmatpush1.msra.mxu0 0.0
        %6700 = vmatprep.subr.mxu0 0.0
        %6701 = vmatpush1.msra.mxu0 0.0
        %6702 = vmatprep.subr.mxu0 0.0
        %6703 = vmatpush1.msra.mxu0 0.0
        %6704 = vmatprep.subr.mxu0 0.0
        %6705 = vmatpush1.msra.mxu0 0.0
        %6706 = vmatprep.subr.mxu0 0.0
        %6707 = vmatpush1.msra.mxu0 0.0
        %6708 = vmatprep.subr.mxu0 0.0
        %6709 = vmatpush1.msra.mxu0 0.0
        %6710 = vmatprep.mubr.f32.mxu0 0.0
        %6711 = vmatmul.mubr.f32.gmra.mrb[0].mxu0 %v6635
        %v6712 = vpop.f32.mrb[0].mxu0
        %v6713 = vadd.f32 0.0, %v6712
        %v6714 = vpop.f32.mrb[0].mxu0
        %6715 = vmatprep.mubr.f32.mxu0 0.0
        %6716 = vmatmul.mubr.f32.gmra.mrb[0].mxu0 %v6638
        %v6717 = vpop.f32.mrb[0].mxu0
        %v6718 = vadd.f32 0.0, %v6717
        %v6719 = vpop.f32.mrb[0].mxu0
        %6720 = vmatprep.mubr.f32.mxu0 0.0
        %6721 = vmatmul.mubr.f32.gmra.mrb[0].mxu0 %v6641
        %v6722 = vpop.f32.mrb[0].mxu0
        %v6723 = vadd.f32 0.0, %v6722
        %v6724 = vpop.f32.mrb[0].mxu0
        %6725 = vmatprep.mubr.f32.mxu0 0.0
        %6726 = vmatmul.mubr.f32.gmra.mrb[0].mxu0 %v6644
        %v6727 = vpop.f32.mrb[0].mxu0
        %v6728 = vadd.f32 0.0, %v6727
        %v6729 = vpop.f32.mrb[0].mxu0
        %6730 = vdwg.mxu0
        %v6731 = vadd.f32 %v6621, %v6713
        %v6732 = vadd.f32 %v6622, %v6718
        %v6733 = vadd.f32 %v6623, %v6723
        %v6734 = vadd.f32 %v6624, %v6728
        %v6735 = vld [vmem:[%s6514 + $0x2] sm:$0xff]
        %v6736 = vld [vmem:[%s6514 + $0xa] sm:$0xff]
        %v6737 = vld [vmem:[%s6514 + $0x1a] sm:$0xff]
        %v6738 = vld [vmem:[%s6514 + $0x22] sm:$0xff]
        %s6739 = scalar_lea.vmem %s5, 160
        %v6740 = vld [vmem:[%s6739] sm:$0xff]
        %v6741 = vld [vmem:[%s6739 + $0x8] sm:$0xff]
        %v6742 = vld [vmem:[%s6739 + $0x10] sm:$0xff]
        %v6743 = vld [vmem:[%s6739 + $0x18] sm:$0xff]
        %v6745 = vsel %vm981, %v6735, 0
        %v6748 = vsel %vm981, %v6736, 0
        %v6751 = vsel %vm981, %v6737, 0
        %v6754 = vsel %vm981, %v6738, 0
        %6756 = vmatprep.subr.mxu0 0.0
        %6757 = vmatpush1.msra.mxu0 %v6740
        %6758 = vmatprep.subr.mxu0 0.0
        %6759 = vmatpush1.msra.mxu0 %v6741
        %6760 = vmatprep.subr.mxu0 0.0
        %6761 = vmatpush1.msra.mxu0 %v6742
        %6762 = vmatprep.subr.mxu0 0.0
        %6763 = vmatpush1.msra.mxu0 %v6743
        %6764 = vmatprep.subr.mxu0 0.0
        %6765 = vmatpush1.msra.mxu0 0.0
        %6766 = vmatprep.subr.mxu0 0.0
        %6767 = vmatpush1.msra.mxu0 0.0
        %6768 = vmatprep.subr.mxu0 0.0
        %6769 = vmatpush1.msra.mxu0 0.0
        %6770 = vmatprep.subr.mxu0 0.0
        %6771 = vmatpush1.msra.mxu0 0.0
        %6772 = vmatprep.subr.mxu0 0.0
        %6773 = vmatpush1.msra.mxu0 0.0
        %6774 = vmatprep.subr.mxu0 0.0
        %6775 = vmatpush1.msra.mxu0 0.0
        %6776 = vmatprep.subr.mxu0 0.0
        %6777 = vmatpush1.msra.mxu0 0.0
        %6778 = vmatprep.subr.mxu0 0.0
        %6779 = vmatpush1.msra.mxu0 0.0
        %6780 = vmatprep.subr.mxu0 0.0
        %6781 = vmatpush1.msra.mxu0 0.0
        %6782 = vmatprep.subr.mxu0 0.0
        %6783 = vmatpush1.msra.mxu0 0.0
        %6784 = vmatprep.subr.mxu0 0.0
        %6785 = vmatpush1.msra.mxu0 0.0
        %6786 = vmatprep.subr.mxu0 0.0
        %6787 = vmatpush1.msra.mxu0 0.0
        %6788 = vmatprep.subr.mxu0 0.0
        %6789 = vmatpush1.msra.mxu0 0.0
        %6790 = vmatprep.subr.mxu0 0.0
        %6791 = vmatpush1.msra.mxu0 0.0
        %6792 = vmatprep.subr.mxu0 0.0
        %6793 = vmatpush1.msra.mxu0 0.0
        %6794 = vmatprep.subr.mxu0 0.0
        %6795 = vmatpush1.msra.mxu0 0.0
        %6796 = vmatprep.subr.mxu0 0.0
        %6797 = vmatpush1.msra.mxu0 0.0
        %6798 = vmatprep.subr.mxu0 0.0
        %6799 = vmatpush1.msra.mxu0 0.0
        %6800 = vmatprep.subr.mxu0 0.0
        %6801 = vmatpush1.msra.mxu0 0.0
        %6802 = vmatprep.subr.mxu0 0.0
        %6803 = vmatpush1.msra.mxu0 0.0
        %6804 = vmatprep.subr.mxu0 0.0
        %6805 = vmatpush1.msra.mxu0 0.0
        %6806 = vmatprep.subr.mxu0 0.0
        %6807 = vmatpush1.msra.mxu0 0.0
        %6808 = vmatprep.subr.mxu0 0.0
        %6809 = vmatpush1.msra.mxu0 0.0
        %6810 = vmatprep.subr.mxu0 0.0
        %6811 = vmatpush1.msra.mxu0 0.0
        %6812 = vmatprep.subr.mxu0 0.0
        %6813 = vmatpush1.msra.mxu0 0.0
        %6814 = vmatprep.subr.mxu0 0.0
        %6815 = vmatpush1.msra.mxu0 0.0
        %6816 = vmatprep.subr.mxu0 0.0
        %6817 = vmatpush1.msra.mxu0 0.0
        %6818 = vmatprep.subr.mxu0 0.0
        %6819 = vmatpush1.msra.mxu0 0.0
        %6820 = vmatprep.mubr.f32.mxu0 0.0
        %6821 = vmatmul.mubr.f32.gmra.mrb[0].mxu0 %v6745
        %v6822 = vpop.f32.mrb[0].mxu0
        %v6823 = vadd.f32 0.0, %v6822
        %v6824 = vpop.f32.mrb[0].mxu0
        %6825 = vmatprep.mubr.f32.mxu0 0.0
        %6826 = vmatmul.mubr.f32.gmra.mrb[0].mxu0 %v6748
        %v6827 = vpop.f32.mrb[0].mxu0
        %v6828 = vadd.f32 0.0, %v6827
        %v6829 = vpop.f32.mrb[0].mxu0
        %6830 = vmatprep.mubr.f32.mxu0 0.0
        %6831 = vmatmul.mubr.f32.gmra.mrb[0].mxu0 %v6751
        %v6832 = vpop.f32.mrb[0].mxu0
        %v6833 = vadd.f32 0.0, %v6832
        %v6834 = vpop.f32.mrb[0].mxu0
        %6835 = vmatprep.mubr.f32.mxu0 0.0
        %6836 = vmatmul.mubr.f32.gmra.mrb[0].mxu0 %v6754
        %v6837 = vpop.f32.mrb[0].mxu0
        %v6838 = vadd.f32 0.0, %v6837
        %v6839 = vpop.f32.mrb[0].mxu0
        %6840 = vdwg.mxu0
        %v6841 = vadd.f32 %v6731, %v6823
        %v6842 = vadd.f32 %v6732, %v6828
        %v6843 = vadd.f32 %v6733, %v6833
        %v6844 = vadd.f32 %v6734, %v6838
        %s6845 = sadd.s32 %s6188, 2
        %s6846 = smul.u32 %s6845, 24
        %s6847 = scalar_lea.vmem [#allocation4], %s6846
        %v6848 = vld [vmem:[%s6847] sm:$0xff]
        %v6849 = vld [vmem:[%s6847 + $0x8] sm:$0xff]
        %v6850 = vld [vmem:[%s6847 + $0x18] sm:$0xff]
        %v6851 = vld [vmem:[%s6847 + $0x20] sm:$0xff]
        %s6852 = scalar_lea.vmem %s5, 192
        %v6853 = vld [vmem:[%s6852] sm:$0xff]
        %v6854 = vld [vmem:[%s6852 + $0x8] sm:$0xff]
        %v6855 = vld [vmem:[%s6852 + $0x10] sm:$0xff]
        %v6856 = vld [vmem:[%s6852 + $0x18] sm:$0xff]
        %v6858 = vsel %vm981, %v6848, 0
        %v6861 = vsel %vm981, %v6849, 0
        %v6864 = vsel %vm981, %v6850, 0
        %v6867 = vsel %vm981, %v6851, 0
        %6869 = vmatprep.subr.mxu0 0.0
        %6870 = vmatpush1.msra.mxu0 %v6853
        %6871 = vmatprep.subr.mxu0 0.0
        %6872 = vmatpush1.msra.mxu0 %v6854
        %6873 = vmatprep.subr.mxu0 0.0
        %6874 = vmatpush1.msra.mxu0 %v6855
        %6875 = vmatprep.subr.mxu0 0.0
        %6876 = vmatpush1.msra.mxu0 %v6856
        %6877 = vmatprep.subr.mxu0 0.0
        %6878 = vmatpush1.msra.mxu0 0.0
        %6879 = vmatprep.subr.mxu0 0.0
        %6880 = vmatpush1.msra.mxu0 0.0
        %6881 = vmatprep.subr.mxu0 0.0
        %6882 = vmatpush1.msra.mxu0 0.0
        %6883 = vmatprep.subr.mxu0 0.0
        %6884 = vmatpush1.msra.mxu0 0.0
        %6885 = vmatprep.subr.mxu0 0.0
        %6886 = vmatpush1.msra.mxu0 0.0
        %6887 = vmatprep.subr.mxu0 0.0
        %6888 = vmatpush1.msra.mxu0 0.0
        %6889 = vmatprep.subr.mxu0 0.0
        %6890 = vmatpush1.msra.mxu0 0.0
        %6891 = vmatprep.subr.mxu0 0.0
        %6892 = vmatpush1.msra.mxu0 0.0
        %6893 = vmatprep.subr.mxu0 0.0
        %6894 = vmatpush1.msra.mxu0 0.0
        %6895 = vmatprep.subr.mxu0 0.0
        %6896 = vmatpush1.msra.mxu0 0.0
        %6897 = vmatprep.subr.mxu0 0.0
        %6898 = vmatpush1.msra.mxu0 0.0
        %6899 = vmatprep.subr.mxu0 0.0
        %6900 = vmatpush1.msra.mxu0 0.0
        %6901 = vmatprep.subr.mxu0 0.0
        %6902 = vmatpush1.msra.mxu0 0.0
        %6903 = vmatprep.subr.mxu0 0.0
        %6904 = vmatpush1.msra.mxu0 0.0
        %6905 = vmatprep.subr.mxu0 0.0
        %6906 = vmatpush1.msra.mxu0 0.0
        %6907 = vmatprep.subr.mxu0 0.0
        %6908 = vmatpush1.msra.mxu0 0.0
        %6909 = vmatprep.subr.mxu0 0.0
        %6910 = vmatpush1.msra.mxu0 0.0
        %6911 = vmatprep.subr.mxu0 0.0
        %6912 = vmatpush1.msra.mxu0 0.0
        %6913 = vmatprep.subr.mxu0 0.0
        %6914 = vmatpush1.msra.mxu0 0.0
        %6915 = vmatprep.subr.mxu0 0.0
        %6916 = vmatpush1.msra.mxu0 0.0
        %6917 = vmatprep.subr.mxu0 0.0
        %6918 = vmatpush1.msra.mxu0 0.0
        %6919 = vmatprep.subr.mxu0 0.0
        %6920 = vmatpush1.msra.mxu0 0.0
        %6921 = vmatprep.subr.mxu0 0.0
        %6922 = vmatpush1.msra.mxu0 0.0
        %6923 = vmatprep.subr.mxu0 0.0
        %6924 = vmatpush1.msra.mxu0 0.0
        %6925 = vmatprep.subr.mxu0 0.0
        %6926 = vmatpush1.msra.mxu0 0.0
        %6927 = vmatprep.subr.mxu0 0.0
        %6928 = vmatpush1.msra.mxu0 0.0
        %6929 = vmatprep.subr.mxu0 0.0
        %6930 = vmatpush1.msra.mxu0 0.0
        %6931 = vmatprep.subr.mxu0 0.0
        %6932 = vmatpush1.msra.mxu0 0.0
        %6933 = vmatprep.mubr.f32.mxu0 0.0
        %6934 = vmatmul.mubr.f32.gmra.mrb[0].mxu0 %v6858
        %v6935 = vpop.f32.mrb[0].mxu0
        %v6936 = vadd.f32 0.0, %v6935
        %v6937 = vpop.f32.mrb[0].mxu0
        %6938 = vmatprep.mubr.f32.mxu0 0.0
        %6939 = vmatmul.mubr.f32.gmra.mrb[0].mxu0 %v6861
        %v6940 = vpop.f32.mrb[0].mxu0
        %v6941 = vadd.f32 0.0, %v6940
        %v6942 = vpop.f32.mrb[0].mxu0
        %6943 = vmatprep.mubr.f32.mxu0 0.0
        %6944 = vmatmul.mubr.f32.gmra.mrb[0].mxu0 %v6864
        %v6945 = vpop.f32.mrb[0].mxu0
        %v6946 = vadd.f32 0.0, %v6945
        %v6947 = vpop.f32.mrb[0].mxu0
        %6948 = vmatprep.mubr.f32.mxu0 0.0
        %6949 = vmatmul.mubr.f32.gmra.mrb[0].mxu0 %v6867
        %v6950 = vpop.f32.mrb[0].mxu0
        %v6951 = vadd.f32 0.0, %v6950
        %v6952 = vpop.f32.mrb[0].mxu0
        %6953 = vdwg.mxu0
        %v6954 = vadd.f32 %v6841, %v6936
        %v6955 = vadd.f32 %v6842, %v6941
        %v6956 = vadd.f32 %v6843, %v6946
        %v6957 = vadd.f32 %v6844, %v6951
        %v6958 = vld [vmem:[%s6847 + $0x1] sm:$0xff]
        %v6959 = vld [vmem:[%s6847 + $0x9] sm:$0xff]
        %v6960 = vld [vmem:[%s6847 + $0x19] sm:$0xff]
        %v6961 = vld [vmem:[%s6847 + $0x21] sm:$0xff]
        %s6962 = scalar_lea.vmem %s5, 224
        %v6963 = vld [vmem:[%s6962] sm:$0xff]
        %v6964 = vld [vmem:[%s6962 + $0x8] sm:$0xff]
        %v6965 = vld [vmem:[%s6962 + $0x10] sm:$0xff]
        %v6966 = vld [vmem:[%s6962 + $0x18] sm:$0xff]
        %v6968 = vsel %vm981, %v6958, 0
        %v6971 = vsel %vm981, %v6959, 0
        %v6974 = vsel %vm981, %v6960, 0
        %v6977 = vsel %vm981, %v6961, 0
        %6979 = vmatprep.subr.mxu0 0.0
        %6980 = vmatpush1.msra.mxu0 %v6963
        %6981 = vmatprep.subr.mxu0 0.0
        %6982 = vmatpush1.msra.mxu0 %v6964
        %6983 = vmatprep.subr.mxu0 0.0
        %6984 = vmatpush1.msra.mxu0 %v6965
        %6985 = vmatprep.subr.mxu0 0.0
        %6986 = vmatpush1.msra.mxu0 %v6966
        %6987 = vmatprep.subr.mxu0 0.0
        %6988 = vmatpush1.msra.mxu0 0.0
        %6989 = vmatprep.subr.mxu0 0.0
        %6990 = vmatpush1.msra.mxu0 0.0
        %6991 = vmatprep.subr.mxu0 0.0
        %6992 = vmatpush1.msra.mxu0 0.0
        %6993 = vmatprep.subr.mxu0 0.0
        %6994 = vmatpush1.msra.mxu0 0.0
        %6995 = vmatprep.subr.mxu0 0.0
        %6996 = vmatpush1.msra.mxu0 0.0
        %6997 = vmatprep.subr.mxu0 0.0
        %6998 = vmatpush1.msra.mxu0 0.0
        %6999 = vmatprep.subr.mxu0 0.0
        %7000 = vmatpush1.msra.mxu0 0.0
        %7001 = vmatprep.subr.mxu0 0.0
        %7002 = vmatpush1.msra.mxu0 0.0
        %7003 = vmatprep.subr.mxu0 0.0
        %7004 = vmatpush1.msra.mxu0 0.0
        %7005 = vmatprep.subr.mxu0 0.0
        %7006 = vmatpush1.msra.mxu0 0.0
        %7007 = vmatprep.subr.mxu0 0.0
        %7008 = vmatpush1.msra.mxu0 0.0
        %7009 = vmatprep.subr.mxu0 0.0
        %7010 = vmatpush1.msra.mxu0 0.0
        %7011 = vmatprep.subr.mxu0 0.0
        %7012 = vmatpush1.msra.mxu0 0.0
        %7013 = vmatprep.subr.mxu0 0.0
        %7014 = vmatpush1.msra.mxu0 0.0
        %7015 = vmatprep.subr.mxu0 0.0
        %7016 = vmatpush1.msra.mxu0 0.0
        %7017 = vmatprep.subr.mxu0 0.0
        %7018 = vmatpush1.msra.mxu0 0.0
        %7019 = vmatprep.subr.mxu0 0.0
        %7020 = vmatpush1.msra.mxu0 0.0
        %7021 = vmatprep.subr.mxu0 0.0
        %7022 = vmatpush1.msra.mxu0 0.0
        %7023 = vmatprep.subr.mxu0 0.0
        %7024 = vmatpush1.msra.mxu0 0.0
        %7025 = vmatprep.subr.mxu0 0.0
        %7026 = vmatpush1.msra.mxu0 0.0
        %7027 = vmatprep.subr.mxu0 0.0
        %7028 = vmatpush1.msra.mxu0 0.0
        %7029 = vmatprep.subr.mxu0 0.0
        %7030 = vmatpush1.msra.mxu0 0.0
        %7031 = vmatprep.subr.mxu0 0.0
        %7032 = vmatpush1.msra.mxu0 0.0
        %7033 = vmatprep.subr.mxu0 0.0
        %7034 = vmatpush1.msra.mxu0 0.0
        %7035 = vmatprep.subr.mxu0 0.0
        %7036 = vmatpush1.msra.mxu0 0.0
        %7037 = vmatprep.subr.mxu0 0.0
        %7038 = vmatpush1.msra.mxu0 0.0
        %7039 = vmatprep.subr.mxu0 0.0
        %7040 = vmatpush1.msra.mxu0 0.0
        %7041 = vmatprep.subr.mxu0 0.0
        %7042 = vmatpush1.msra.mxu0 0.0
        %7043 = vmatprep.mubr.f32.mxu0 0.0
        %7044 = vmatmul.mubr.f32.gmra.mrb[0].mxu0 %v6968
        %v7045 = vpop.f32.mrb[0].mxu0
        %v7046 = vadd.f32 0.0, %v7045
        %v7047 = vpop.f32.mrb[0].mxu0
        %7048 = vmatprep.mubr.f32.mxu0 0.0
        %7049 = vmatmul.mubr.f32.gmra.mrb[0].mxu0 %v6971
        %v7050 = vpop.f32.mrb[0].mxu0
        %v7051 = vadd.f32 0.0, %v7050
        %v7052 = vpop.f32.mrb[0].mxu0
        %7053 = vmatprep.mubr.f32.mxu0 0.0
        %7054 = vmatmul.mubr.f32.gmra.mrb[0].mxu0 %v6974
        %v7055 = vpop.f32.mrb[0].mxu0
        %v7056 = vadd.f32 0.0, %v7055
        %v7057 = vpop.f32.mrb[0].mxu0
        %7058 = vmatprep.mubr.f32.mxu0 0.0
        %7059 = vmatmul.mubr.f32.gmra.mrb[0].mxu0 %v6977
        %v7060 = vpop.f32.mrb[0].mxu0
        %v7061 = vadd.f32 0.0, %v7060
        %v7062 = vpop.f32.mrb[0].mxu0
        %7063 = vdwg.mxu0
        %v7064 = vadd.f32 %v6954, %v7046
        %v7065 = vadd.f32 %v6955, %v7051
        %v7066 = vadd.f32 %v6956, %v7056
        %v7067 = vadd.f32 %v6957, %v7061
        %v7068 = vld [vmem:[%s6847 + $0x2] sm:$0xff]
        %v7069 = vld [vmem:[%s6847 + $0xa] sm:$0xff]
        %v7070 = vld [vmem:[%s6847 + $0x1a] sm:$0xff]
        %v7071 = vld [vmem:[%s6847 + $0x22] sm:$0xff]
        %s7072 = scalar_lea.vmem %s5, 256
        %v7073 = vld [vmem:[%s7072] sm:$0xff]
        %v7074 = vld [vmem:[%s7072 + $0x8] sm:$0xff]
        %v7075 = vld [vmem:[%s7072 + $0x10] sm:$0xff]
        %v7076 = vld [vmem:[%s7072 + $0x18] sm:$0xff]
        %v7078 = vsel %vm981, %v7068, 0
        %v7081 = vsel %vm981, %v7069, 0
        %v7084 = vsel %vm981, %v7070, 0
        %v7087 = vsel %vm981, %v7071, 0
        %7089 = vmatprep.subr.mxu0 0.0
        %7090 = vmatpush1.msra.mxu0 %v7073
        %7091 = vmatprep.subr.mxu0 0.0
        %7092 = vmatpush1.msra.mxu0 %v7074
        %7093 = vmatprep.subr.mxu0 0.0
        %7094 = vmatpush1.msra.mxu0 %v7075
        %7095 = vmatprep.subr.mxu0 0.0
        %7096 = vmatpush1.msra.mxu0 %v7076
        %7097 = vmatprep.subr.mxu0 0.0
        %7098 = vmatpush1.msra.mxu0 0.0
        %7099 = vmatprep.subr.mxu0 0.0
        %7100 = vmatpush1.msra.mxu0 0.0
        %7101 = vmatprep.subr.mxu0 0.0
        %7102 = vmatpush1.msra.mxu0 0.0
        %7103 = vmatprep.subr.mxu0 0.0
        %7104 = vmatpush1.msra.mxu0 0.0
        %7105 = vmatprep.subr.mxu0 0.0
        %7106 = vmatpush1.msra.mxu0 0.0
        %7107 = vmatprep.subr.mxu0 0.0
        %7108 = vmatpush1.msra.mxu0 0.0
        %7109 = vmatprep.subr.mxu0 0.0
        %7110 = vmatpush1.msra.mxu0 0.0
        %7111 = vmatprep.subr.mxu0 0.0
        %7112 = vmatpush1.msra.mxu0 0.0
        %7113 = vmatprep.subr.mxu0 0.0
        %7114 = vmatpush1.msra.mxu0 0.0
        %7115 = vmatprep.subr.mxu0 0.0
        %7116 = vmatpush1.msra.mxu0 0.0
        %7117 = vmatprep.subr.mxu0 0.0
        %7118 = vmatpush1.msra.mxu0 0.0
        %7119 = vmatprep.subr.mxu0 0.0
        %7120 = vmatpush1.msra.mxu0 0.0
        %7121 = vmatprep.subr.mxu0 0.0
        %7122 = vmatpush1.msra.mxu0 0.0
        %7123 = vmatprep.subr.mxu0 0.0
        %7124 = vmatpush1.msra.mxu0 0.0
        %7125 = vmatprep.subr.mxu0 0.0
        %7126 = vmatpush1.msra.mxu0 0.0
        %7127 = vmatprep.subr.mxu0 0.0
        %7128 = vmatpush1.msra.mxu0 0.0
        %7129 = vmatprep.subr.mxu0 0.0
        %7130 = vmatpush1.msra.mxu0 0.0
        %7131 = vmatprep.subr.mxu0 0.0
        %7132 = vmatpush1.msra.mxu0 0.0
        %7133 = vmatprep.subr.mxu0 0.0
        %7134 = vmatpush1.msra.mxu0 0.0
        %7135 = vmatprep.subr.mxu0 0.0
        %7136 = vmatpush1.msra.mxu0 0.0
        %7137 = vmatprep.subr.mxu0 0.0
        %7138 = vmatpush1.msra.mxu0 0.0
        %7139 = vmatprep.subr.mxu0 0.0
        %7140 = vmatpush1.msra.mxu0 0.0
        %7141 = vmatprep.subr.mxu0 0.0
        %7142 = vmatpush1.msra.mxu0 0.0
        %7143 = vmatprep.subr.mxu0 0.0
        %7144 = vmatpush1.msra.mxu0 0.0
        %7145 = vmatprep.subr.mxu0 0.0
        %7146 = vmatpush1.msra.mxu0 0.0
        %7147 = vmatprep.subr.mxu0 0.0
        %7148 = vmatpush1.msra.mxu0 0.0
        %7149 = vmatprep.subr.mxu0 0.0
        %7150 = vmatpush1.msra.mxu0 0.0
        %7151 = vmatprep.subr.mxu0 0.0
        %7152 = vmatpush1.msra.mxu0 0.0
        %7153 = vmatprep.mubr.f32.mxu0 0.0
        %7154 = vmatmul.mubr.f32.gmra.mrb[0].mxu0 %v7078
        %v7155 = vpop.f32.mrb[0].mxu0
        %v7156 = vadd.f32 0.0, %v7155
        %v7157 = vpop.f32.mrb[0].mxu0
        %7158 = vmatprep.mubr.f32.mxu0 0.0
        %7159 = vmatmul.mubr.f32.gmra.mrb[0].mxu0 %v7081
        %v7160 = vpop.f32.mrb[0].mxu0
        %v7161 = vadd.f32 0.0, %v7160
        %v7162 = vpop.f32.mrb[0].mxu0
        %7163 = vmatprep.mubr.f32.mxu0 0.0
        %7164 = vmatmul.mubr.f32.gmra.mrb[0].mxu0 %v7084
        %v7165 = vpop.f32.mrb[0].mxu0
        %v7166 = vadd.f32 0.0, %v7165
        %v7167 = vpop.f32.mrb[0].mxu0
        %7168 = vmatprep.mubr.f32.mxu0 0.0
        %7169 = vmatmul.mubr.f32.gmra.mrb[0].mxu0 %v7087
        %v7170 = vpop.f32.mrb[0].mxu0
        %v7171 = vadd.f32 0.0, %v7170
        %v7172 = vpop.f32.mrb[0].mxu0
        %7173 = vdwg.mxu0
        %v7174 = vadd.f32 %v7064, %v7156
        %v7175 = vadd.f32 %v7065, %v7161
        %v7176 = vadd.f32 %v7066, %v7166
        %v7177 = vadd.f32 %v7067, %v7171
        %v7179 = vlaneseq
        %v7180 = vshrl.u32 %v7179, 7
        %v7181 = vsub.s32 0, %v7180
        %v7182 = vrot.slane %v6181, %v7181
        %v7184 = vadd.f32 %v7174, %v7182
        %v7185 = vadd.f32 %v7175, %v7182
        %v7186 = vadd.f32 %v7176, %v7182
        %v7187 = vadd.f32 %v7177, %v7182
        %v7188 = vmax.f32 %v7184, 0.0
        %v7189 = vmax.f32 %v7185, 0.0
        %v7190 = vmax.f32 %v7186, 0.0
        %v7191 = vmax.f32 %v7187, 0.0
        %v7193 = vsel %vm981, %v2279, 0
        %v7196 = vsel %vm981, %v2280, 0
        %7198 = vmatprep.subr.mxu0 0.0
        %7199 = vmatpush1.msra.mxu0 %v7188
        %7200 = vmatprep.subr.mxu0 0.0
        %7201 = vmatpush1.msra.mxu0 %v7189
        %7202 = vmatprep.subr.mxu0 0.0
        %7203 = vmatpush1.msra.mxu0 %v7190
        %7204 = vmatprep.subr.mxu0 0.0
        %7205 = vmatpush1.msra.mxu0 %v7191
        %7206 = vmatprep.subr.mxu0 0.0
        %7207 = vmatpush1.msra.mxu0 0.0
        %7208 = vmatprep.subr.mxu0 0.0
        %7209 = vmatpush1.msra.mxu0 0.0
        %7210 = vmatprep.subr.mxu0 0.0
        %7211 = vmatpush1.msra.mxu0 0.0
        %7212 = vmatprep.subr.mxu0 0.0
        %7213 = vmatpush1.msra.mxu0 0.0
        %7214 = vmatprep.subr.mxu0 0.0
        %7215 = vmatpush1.msra.mxu0 0.0
        %7216 = vmatprep.subr.mxu0 0.0
        %7217 = vmatpush1.msra.mxu0 0.0
        %7218 = vmatprep.subr.mxu0 0.0
        %7219 = vmatpush1.msra.mxu0 0.0
        %7220 = vmatprep.subr.mxu0 0.0
        %7221 = vmatpush1.msra.mxu0 0.0
        %7222 = vmatprep.subr.mxu0 0.0
        %7223 = vmatpush1.msra.mxu0 0.0
        %7224 = vmatprep.subr.mxu0 0.0
        %7225 = vmatpush1.msra.mxu0 0.0
        %7226 = vmatprep.subr.mxu0 0.0
        %7227 = vmatpush1.msra.mxu0 0.0
        %7228 = vmatprep.subr.mxu0 0.0
        %7229 = vmatpush1.msra.mxu0 0.0
        %7230 = vmatprep.subr.mxu0 0.0
        %7231 = vmatpush1.msra.mxu0 0.0
        %7232 = vmatprep.subr.mxu0 0.0
        %7233 = vmatpush1.msra.mxu0 0.0
        %7234 = vmatprep.subr.mxu0 0.0
        %7235 = vmatpush1.msra.mxu0 0.0
        %7236 = vmatprep.subr.mxu0 0.0
        %7237 = vmatpush1.msra.mxu0 0.0
        %7238 = vmatprep.subr.mxu0 0.0
        %7239 = vmatpush1.msra.mxu0 0.0
        %7240 = vmatprep.subr.mxu0 0.0
        %7241 = vmatpush1.msra.mxu0 0.0
        %7242 = vmatprep.subr.mxu0 0.0
        %7243 = vmatpush1.msra.mxu0 0.0
        %7244 = vmatprep.subr.mxu0 0.0
        %7245 = vmatpush1.msra.mxu0 0.0
        %7246 = vmatprep.subr.mxu0 0.0
        %7247 = vmatpush1.msra.mxu0 0.0
        %7248 = vmatprep.subr.mxu0 0.0
        %7249 = vmatpush1.msra.mxu0 0.0
        %7250 = vmatprep.subr.mxu0 0.0
        %7251 = vmatpush1.msra.mxu0 0.0
        %7252 = vmatprep.subr.mxu0 0.0
        %7253 = vmatpush1.msra.mxu0 0.0
        %7254 = vmatprep.subr.mxu0 0.0
        %7255 = vmatpush1.msra.mxu0 0.0
        %7256 = vmatprep.subr.mxu0 0.0
        %7257 = vmatpush1.msra.mxu0 0.0
        %7258 = vmatprep.subr.mxu0 0.0
        %7259 = vmatpush1.msra.mxu0 0.0
        %7260 = vmatprep.subr.mxu0 0.0
        %7261 = vmatpush1.msra.mxu0 0.0
        %7262 = vmatprep.mubr.f32.mxu0 0.0
        %7263 = vmatmul.mubr.f32.gmra.mrb[0].mxu0 %v7193
        %v7264 = vpop.f32.mrb[0].mxu0
        %v7265 = vadd.f32 0.0, %v7264
        %v7266 = vpop.f32.mrb[0].mxu0
        %7267 = vmatprep.mubr.f32.mxu0 0.0
        %7268 = vmatmul.mubr.f32.gmra.mrb[0].mxu0 %v7196
        %v7269 = vpop.f32.mrb[0].mxu0
        %v7270 = vadd.f32 0.0, %v7269
        %v7271 = vpop.f32.mrb[0].mxu0
        %7272 = vdwg.mxu0
        %v7274 = vsel %vm981, %v2303, 0
        %v7277 = vsel %vm981, %v2304, 0
        %7279 = vmatprep.subr.mxu0 0.0
        %7280 = vmatpush1.msra.mxu0 %v7188
        %7281 = vmatprep.subr.mxu0 0.0
        %7282 = vmatpush1.msra.mxu0 %v7189
        %7283 = vmatprep.subr.mxu0 0.0
        %7284 = vmatpush1.msra.mxu0 %v7190
        %7285 = vmatprep.subr.mxu0 0.0
        %7286 = vmatpush1.msra.mxu0 %v7191
        %7287 = vmatprep.subr.mxu0 0.0
        %7288 = vmatpush1.msra.mxu0 0.0
        %7289 = vmatprep.subr.mxu0 0.0
        %7290 = vmatpush1.msra.mxu0 0.0
        %7291 = vmatprep.subr.mxu0 0.0
        %7292 = vmatpush1.msra.mxu0 0.0
        %7293 = vmatprep.subr.mxu0 0.0
        %7294 = vmatpush1.msra.mxu0 0.0
        %7295 = vmatprep.subr.mxu0 0.0
        %7296 = vmatpush1.msra.mxu0 0.0
        %7297 = vmatprep.subr.mxu0 0.0
        %7298 = vmatpush1.msra.mxu0 0.0
        %7299 = vmatprep.subr.mxu0 0.0
        %7300 = vmatpush1.msra.mxu0 0.0
        %7301 = vmatprep.subr.mxu0 0.0
        %7302 = vmatpush1.msra.mxu0 0.0
        %7303 = vmatprep.subr.mxu0 0.0
        %7304 = vmatpush1.msra.mxu0 0.0
        %7305 = vmatprep.subr.mxu0 0.0
        %7306 = vmatpush1.msra.mxu0 0.0
        %7307 = vmatprep.subr.mxu0 0.0
        %7308 = vmatpush1.msra.mxu0 0.0
        %7309 = vmatprep.subr.mxu0 0.0
        %7310 = vmatpush1.msra.mxu0 0.0
        %7311 = vmatprep.subr.mxu0 0.0
        %7312 = vmatpush1.msra.mxu0 0.0
        %7313 = vmatprep.subr.mxu0 0.0
        %7314 = vmatpush1.msra.mxu0 0.0
        %7315 = vmatprep.subr.mxu0 0.0
        %7316 = vmatpush1.msra.mxu0 0.0
        %7317 = vmatprep.subr.mxu0 0.0
        %7318 = vmatpush1.msra.mxu0 0.0
        %7319 = vmatprep.subr.mxu0 0.0
        %7320 = vmatpush1.msra.mxu0 0.0
        %7321 = vmatprep.subr.mxu0 0.0
        %7322 = vmatpush1.msra.mxu0 0.0
        %7323 = vmatprep.subr.mxu0 0.0
        %7324 = vmatpush1.msra.mxu0 0.0
        %7325 = vmatprep.subr.mxu0 0.0
        %7326 = vmatpush1.msra.mxu0 0.0
        %7327 = vmatprep.subr.mxu0 0.0
        %7328 = vmatpush1.msra.mxu0 0.0
        %7329 = vmatprep.subr.mxu0 0.0
        %7330 = vmatpush1.msra.mxu0 0.0
        %7331 = vmatprep.subr.mxu0 0.0
        %7332 = vmatpush1.msra.mxu0 0.0
        %7333 = vmatprep.subr.mxu0 0.0
        %7334 = vmatpush1.msra.mxu0 0.0
        %7335 = vmatprep.subr.mxu0 0.0
        %7336 = vmatpush1.msra.mxu0 0.0
        %7337 = vmatprep.subr.mxu0 0.0
        %7338 = vmatpush1.msra.mxu0 0.0
        %7339 = vmatprep.subr.mxu0 0.0
        %7340 = vmatpush1.msra.mxu0 0.0
        %7341 = vmatprep.subr.mxu0 0.0
        %7342 = vmatpush1.msra.mxu0 0.0
        %7343 = vmatprep.mubr.f32.mxu0 0.0
        %7344 = vmatmul.mubr.f32.gmra.mrb[0].mxu0 %v7274
        %v7345 = vpop.f32.mrb[0].mxu0
        %v7346 = vadd.f32 0.0, %v7345
        %v7347 = vpop.f32.mrb[0].mxu0
        %7348 = vmatprep.mubr.f32.mxu0 0.0
        %7349 = vmatmul.mubr.f32.gmra.mrb[0].mxu0 %v7277
        %v7350 = vpop.f32.mrb[0].mxu0
        %v7351 = vadd.f32 0.0, %v7350
        %v7352 = vpop.f32.mrb[0].mxu0
        %7353 = vdwg.mxu0
        %v7354 = vmax.f32 %v7265, %v7346
        %v7355 = vmax.f32 %v7270, %v7351
        %v7356 = vmax.f32 %v7354, %v7355
        %s7357 = sadd.s32 %s6183, 1
        %s7358 = smul.u32 %s7357, 16
        %s7359 = scalar_lea.vmem [#allocation5], %s7358
        %7360 = vst.msk [vmem:[%s7359 + $0x1] sm:$0xff] %vm981, %v7356
      $region83: #{simple_cnn_forward.1} parent=63 // loop_footer
        %s6187 = sadd.s32 1, %s6183
      $region84: #{simple_cnn_forward.1} parent=63 // loop_footer_branch
        %6182 = sbr.rel target = $region80
      $region85: #{simple_cnn_forward.1} parent=63 // loop_exit
        _
      %v7361 = vld [vmem:[%s8] sm:$0x1]
      loop: start=0, step=1, limit=4
      $region86: #{simple_cnn_forward.1} parent=63 // loop_pre_header
        _
      $region87: #{simple_cnn_forward.1} parent=63 // loop_header
        %s7363 = sphi 0, %s7367
        %p7364 = scmp.ge.s32.totalorder %s7363, 4
      $region88: #{simple_cnn_forward.1} parent=63 // loop_header_branch
        %7366 = sbr.rel (%p7364) target = $region92
      $region89: #{simple_cnn_forward.1} parent=63 // loop_body
        %s7368 = smul.u32 %s7363, 2
        %s7369 = smul.u32 %s7368, 16
        %s7370 = scalar_lea.vmem [#allocation5], %s7369
        %v7371 = vld [vmem:[%s7370] sm:$0xff]
        %v7372 = vld [vmem:[%s7370 + $0x10] sm:$0xff]
        %v7373 = vld [vmem:[%s7] sm:$0xff]
        %v7374 = vld [vmem:[%s7 + $0x8] sm:$0xff]
        %v7375 = vld [vmem:[%s7 + $0x10] sm:$0xff]
        %v7376 = vld [vmem:[%s7 + $0x18] sm:$0xff]
        %v7377 = vld [vmem:[%s7370 + $0x1] sm:$0xff]
        %v7378 = vld [vmem:[%s7370 + $0x11] sm:$0xff]
        %s7379 = scalar_lea.vmem %s7, 32
        %v7380 = vld [vmem:[%s7379] sm:$0xff]
        %v7381 = vld [vmem:[%s7379 + $0x8] sm:$0xff]
        %v7382 = vld [vmem:[%s7379 + $0x10] sm:$0xff]
        %v7383 = vld [vmem:[%s7379 + $0x18] sm:$0xff]
        %v7385 = vsel %vm981, %v7377, 0
        %v7388 = vsel %vm981, %v7378, 0
        %7390 = vmatprep.subr.mxu0 0.0
        %7391 = vmatpush1.msra.mxu0 %v7380
        %7392 = vmatprep.subr.mxu0 0.0
        %7393 = vmatpush1.msra.mxu0 %v7381
        %7394 = vmatprep.subr.mxu0 0.0
        %7395 = vmatpush1.msra.mxu0 %v7382
        %7396 = vmatprep.subr.mxu0 0.0
        %7397 = vmatpush1.msra.mxu0 %v7383
        %7398 = vmatprep.subr.mxu0 0.0
        %7399 = vmatpush1.msra.mxu0 0.0
        %7400 = vmatprep.subr.mxu0 0.0
        %7401 = vmatpush1.msra.mxu0 0.0
        %7402 = vmatprep.subr.mxu0 0.0
        %7403 = vmatpush1.msra.mxu0 0.0
        %7404 = vmatprep.subr.mxu0 0.0
        %7405 = vmatpush1.msra.mxu0 0.0
        %7406 = vmatprep.subr.mxu0 0.0
        %7407 = vmatpush1.msra.mxu0 0.0
        %7408 = vmatprep.subr.mxu0 0.0
        %7409 = vmatpush1.msra.mxu0 0.0
        %7410 = vmatprep.subr.mxu0 0.0
        %7411 = vmatpush1.msra.mxu0 0.0
        %7412 = vmatprep.subr.mxu0 0.0
        %7413 = vmatpush1.msra.mxu0 0.0
        %7414 = vmatprep.subr.mxu0 0.0
        %7415 = vmatpush1.msra.mxu0 0.0
        %7416 = vmatprep.subr.mxu0 0.0
        %7417 = vmatpush1.msra.mxu0 0.0
        %7418 = vmatprep.subr.mxu0 0.0
        %7419 = vmatpush1.msra.mxu0 0.0
        %7420 = vmatprep.subr.mxu0 0.0
        %7421 = vmatpush1.msra.mxu0 0.0
        %7422 = vmatprep.subr.mxu0 0.0
        %7423 = vmatpush1.msra.mxu0 0.0
        %7424 = vmatprep.subr.mxu0 0.0
        %7425 = vmatpush1.msra.mxu0 0.0
        %7426 = vmatprep.subr.mxu0 0.0
        %7427 = vmatpush1.msra.mxu0 0.0
        %7428 = vmatprep.subr.mxu0 0.0
        %7429 = vmatpush1.msra.mxu0 0.0
        %7430 = vmatprep.subr.mxu0 0.0
        %7431 = vmatpush1.msra.mxu0 0.0
        %7432 = vmatprep.subr.mxu0 0.0
        %7433 = vmatpush1.msra.mxu0 0.0
        %7434 = vmatprep.subr.mxu0 0.0
        %7435 = vmatpush1.msra.mxu0 0.0
        %7436 = vmatprep.subr.mxu0 0.0
        %7437 = vmatpush1.msra.mxu0 0.0
        %7438 = vmatprep.subr.mxu0 0.0
        %7439 = vmatpush1.msra.mxu0 0.0
        %7440 = vmatprep.subr.mxu0 0.0
        %7441 = vmatpush1.msra.mxu0 0.0
        %7442 = vmatprep.subr.mxu0 0.0
        %7443 = vmatpush1.msra.mxu0 0.0
        %7444 = vmatprep.subr.mxu0 0.0
        %7445 = vmatpush1.msra.mxu0 0.0
        %7446 = vmatprep.subr.mxu0 0.0
        %7447 = vmatpush1.msra.mxu0 0.0
        %7448 = vmatprep.subr.mxu0 0.0
        %7449 = vmatpush1.msra.mxu0 0.0
        %7450 = vmatprep.subr.mxu0 0.0
        %7451 = vmatpush1.msra.mxu0 0.0
        %7452 = vmatprep.subr.mxu0 0.0
        %7453 = vmatpush1.msra.mxu0 0.0
        %7454 = vmatprep.mubr.f32.mxu0 0.0
        %7455 = vmatmul.mubr.f32.gmra.mrb[0].mxu0 %v7385
        %v7456 = vpop.f32.mrb[0].mxu0
        %v7457 = vadd.f32 0.0, %v7456
        %v7458 = vpop.f32.mrb[0].mxu0
        %7459 = vmatprep.mubr.f32.mxu0 0.0
        %7460 = vmatmul.mubr.f32.gmra.mrb[0].mxu0 %v7388
        %v7461 = vpop.f32.mrb[0].mxu0
        %v7462 = vadd.f32 0.0, %v7461
        %v7463 = vpop.f32.mrb[0].mxu0
        %7464 = vdwg.mxu0
        %v7466 = vsel %vm981, %v7371, 0
        %v7469 = vsel %vm981, %v7372, 0
        %7471 = vmatprep.subr.mxu0 0.0
        %7472 = vmatpush1.msra.mxu0 %v7373
        %7473 = vmatprep.subr.mxu0 0.0
        %7474 = vmatpush1.msra.mxu0 %v7374
        %7475 = vmatprep.subr.mxu0 0.0
        %7476 = vmatpush1.msra.mxu0 %v7375
        %7477 = vmatprep.subr.mxu0 0.0
        %7478 = vmatpush1.msra.mxu0 %v7376
        %7479 = vmatprep.subr.mxu0 0.0
        %7480 = vmatpush1.msra.mxu0 0.0
        %7481 = vmatprep.subr.mxu0 0.0
        %7482 = vmatpush1.msra.mxu0 0.0
        %7483 = vmatprep.subr.mxu0 0.0
        %7484 = vmatpush1.msra.mxu0 0.0
        %7485 = vmatprep.subr.mxu0 0.0
        %7486 = vmatpush1.msra.mxu0 0.0
        %7487 = vmatprep.subr.mxu0 0.0
        %7488 = vmatpush1.msra.mxu0 0.0
        %7489 = vmatprep.subr.mxu0 0.0
        %7490 = vmatpush1.msra.mxu0 0.0
        %7491 = vmatprep.subr.mxu0 0.0
        %7492 = vmatpush1.msra.mxu0 0.0
        %7493 = vmatprep.subr.mxu0 0.0
        %7494 = vmatpush1.msra.mxu0 0.0
        %7495 = vmatprep.subr.mxu0 0.0
        %7496 = vmatpush1.msra.mxu0 0.0
        %7497 = vmatprep.subr.mxu0 0.0
        %7498 = vmatpush1.msra.mxu0 0.0
        %7499 = vmatprep.subr.mxu0 0.0
        %7500 = vmatpush1.msra.mxu0 0.0
        %7501 = vmatprep.subr.mxu0 0.0
        %7502 = vmatpush1.msra.mxu0 0.0
        %7503 = vmatprep.subr.mxu0 0.0
        %7504 = vmatpush1.msra.mxu0 0.0
        %7505 = vmatprep.subr.mxu0 0.0
        %7506 = vmatpush1.msra.mxu0 0.0
        %7507 = vmatprep.subr.mxu0 0.0
        %7508 = vmatpush1.msra.mxu0 0.0
        %7509 = vmatprep.subr.mxu0 0.0
        %7510 = vmatpush1.msra.mxu0 0.0
        %7511 = vmatprep.subr.mxu0 0.0
        %7512 = vmatpush1.msra.mxu0 0.0
        %7513 = vmatprep.subr.mxu0 0.0
        %7514 = vmatpush1.msra.mxu0 0.0
        %7515 = vmatprep.subr.mxu0 0.0
        %7516 = vmatpush1.msra.mxu0 0.0
        %7517 = vmatprep.subr.mxu0 0.0
        %7518 = vmatpush1.msra.mxu0 0.0
        %7519 = vmatprep.subr.mxu0 0.0
        %7520 = vmatpush1.msra.mxu0 0.0
        %7521 = vmatprep.subr.mxu0 0.0
        %7522 = vmatpush1.msra.mxu0 0.0
        %7523 = vmatprep.subr.mxu0 0.0
        %7524 = vmatpush1.msra.mxu0 0.0
        %7525 = vmatprep.subr.mxu0 0.0
        %7526 = vmatpush1.msra.mxu0 0.0
        %7527 = vmatprep.subr.mxu0 0.0
        %7528 = vmatpush1.msra.mxu0 0.0
        %7529 = vmatprep.subr.mxu0 0.0
        %7530 = vmatpush1.msra.mxu0 0.0
        %7531 = vmatprep.subr.mxu0 0.0
        %7532 = vmatpush1.msra.mxu0 0.0
        %7533 = vmatprep.subr.mxu0 0.0
        %7534 = vmatpush1.msra.mxu0 0.0
        %7535 = vmatprep.mubr.f32.mxu0 0.0
        %7536 = vmatmul.mubr.f32.gmra.mrb[0].mxu0 %v7466
        %v7537 = vpop.f32.mrb[0].mxu0
        %v7538 = vadd.f32 %v7457, %v7537
        %v7539 = vpop.f32.mrb[0].mxu0
        %7540 = vmatprep.mubr.f32.mxu0 0.0
        %7541 = vmatmul.mubr.f32.gmra.mrb[0].mxu0 %v7469
        %v7542 = vpop.f32.mrb[0].mxu0
        %v7543 = vadd.f32 %v7462, %v7542
        %v7544 = vpop.f32.mrb[0].mxu0
        %7545 = vdwg.mxu0
        %v7546 = vld [vmem:[%s7370 + $0x2] sm:$0xff]
        %v7547 = vld [vmem:[%s7370 + $0x12] sm:$0xff]
        %s7548 = scalar_lea.vmem %s7, 64
        %v7549 = vld [vmem:[%s7548] sm:$0xff]
        %v7550 = vld [vmem:[%s7548 + $0x8] sm:$0xff]
        %v7551 = vld [vmem:[%s7548 + $0x10] sm:$0xff]
        %v7552 = vld [vmem:[%s7548 + $0x18] sm:$0xff]
        %v7554 = vsel %vm981, %v7546, 0
        %v7557 = vsel %vm981, %v7547, 0
        %7559 = vmatprep.subr.mxu0 0.0
        %7560 = vmatpush1.msra.mxu0 %v7549
        %7561 = vmatprep.subr.mxu0 0.0
        %7562 = vmatpush1.msra.mxu0 %v7550
        %7563 = vmatprep.subr.mxu0 0.0
        %7564 = vmatpush1.msra.mxu0 %v7551
        %7565 = vmatprep.subr.mxu0 0.0
        %7566 = vmatpush1.msra.mxu0 %v7552
        %7567 = vmatprep.subr.mxu0 0.0
        %7568 = vmatpush1.msra.mxu0 0.0
        %7569 = vmatprep.subr.mxu0 0.0
        %7570 = vmatpush1.msra.mxu0 0.0
        %7571 = vmatprep.subr.mxu0 0.0
        %7572 = vmatpush1.msra.mxu0 0.0
        %7573 = vmatprep.subr.mxu0 0.0
        %7574 = vmatpush1.msra.mxu0 0.0
        %7575 = vmatprep.subr.mxu0 0.0
        %7576 = vmatpush1.msra.mxu0 0.0
        %7577 = vmatprep.subr.mxu0 0.0
        %7578 = vmatpush1.msra.mxu0 0.0
        %7579 = vmatprep.subr.mxu0 0.0
        %7580 = vmatpush1.msra.mxu0 0.0
        %7581 = vmatprep.subr.mxu0 0.0
        %7582 = vmatpush1.msra.mxu0 0.0
        %7583 = vmatprep.subr.mxu0 0.0
        %7584 = vmatpush1.msra.mxu0 0.0
        %7585 = vmatprep.subr.mxu0 0.0
        %7586 = vmatpush1.msra.mxu0 0.0
        %7587 = vmatprep.subr.mxu0 0.0
        %7588 = vmatpush1.msra.mxu0 0.0
        %7589 = vmatprep.subr.mxu0 0.0
        %7590 = vmatpush1.msra.mxu0 0.0
        %7591 = vmatprep.subr.mxu0 0.0
        %7592 = vmatpush1.msra.mxu0 0.0
        %7593 = vmatprep.subr.mxu0 0.0
        %7594 = vmatpush1.msra.mxu0 0.0
        %7595 = vmatprep.subr.mxu0 0.0
        %7596 = vmatpush1.msra.mxu0 0.0
        %7597 = vmatprep.subr.mxu0 0.0
        %7598 = vmatpush1.msra.mxu0 0.0
        %7599 = vmatprep.subr.mxu0 0.0
        %7600 = vmatpush1.msra.mxu0 0.0
        %7601 = vmatprep.subr.mxu0 0.0
        %7602 = vmatpush1.msra.mxu0 0.0
        %7603 = vmatprep.subr.mxu0 0.0
        %7604 = vmatpush1.msra.mxu0 0.0
        %7605 = vmatprep.subr.mxu0 0.0
        %7606 = vmatpush1.msra.mxu0 0.0
        %7607 = vmatprep.subr.mxu0 0.0
        %7608 = vmatpush1.msra.mxu0 0.0
        %7609 = vmatprep.subr.mxu0 0.0
        %7610 = vmatpush1.msra.mxu0 0.0
        %7611 = vmatprep.subr.mxu0 0.0
        %7612 = vmatpush1.msra.mxu0 0.0
        %7613 = vmatprep.subr.mxu0 0.0
        %7614 = vmatpush1.msra.mxu0 0.0
        %7615 = vmatprep.subr.mxu0 0.0
        %7616 = vmatpush1.msra.mxu0 0.0
        %7617 = vmatprep.subr.mxu0 0.0
        %7618 = vmatpush1.msra.mxu0 0.0
        %7619 = vmatprep.subr.mxu0 0.0
        %7620 = vmatpush1.msra.mxu0 0.0
        %7621 = vmatprep.subr.mxu0 0.0
        %7622 = vmatpush1.msra.mxu0 0.0
        %7623 = vmatprep.mubr.f32.mxu0 0.0
        %7624 = vmatmul.mubr.f32.gmra.mrb[0].mxu0 %v7554
        %v7625 = vpop.f32.mrb[0].mxu0
        %v7626 = vadd.f32 0.0, %v7625
        %v7627 = vpop.f32.mrb[0].mxu0
        %7628 = vmatprep.mubr.f32.mxu0 0.0
        %7629 = vmatmul.mubr.f32.gmra.mrb[0].mxu0 %v7557
        %v7630 = vpop.f32.mrb[0].mxu0
        %v7631 = vadd.f32 0.0, %v7630
        %v7632 = vpop.f32.mrb[0].mxu0
        %7633 = vdwg.mxu0
        %v7634 = vadd.f32 %v7538, %v7626
        %v7635 = vadd.f32 %v7543, %v7631
        %s7636 = sadd.s32 %s7368, 1
        %s7637 = smul.u32 %s7636, 16
        %s7638 = scalar_lea.vmem [#allocation5], %s7637
        %v7639 = vld [vmem:[%s7638] sm:$0xff]
        %v7640 = vld [vmem:[%s7638 + $0x10] sm:$0xff]
        %s7641 = scalar_lea.vmem %s7, 96
        %v7642 = vld [vmem:[%s7641] sm:$0xff]
        %v7643 = vld [vmem:[%s7641 + $0x8] sm:$0xff]
        %v7644 = vld [vmem:[%s7641 + $0x10] sm:$0xff]
        %v7645 = vld [vmem:[%s7641 + $0x18] sm:$0xff]
        %v7647 = vsel %vm981, %v7639, 0
        %v7650 = vsel %vm981, %v7640, 0
        %7652 = vmatprep.subr.mxu0 0.0
        %7653 = vmatpush1.msra.mxu0 %v7642
        %7654 = vmatprep.subr.mxu0 0.0
        %7655 = vmatpush1.msra.mxu0 %v7643
        %7656 = vmatprep.subr.mxu0 0.0
        %7657 = vmatpush1.msra.mxu0 %v7644
        %7658 = vmatprep.subr.mxu0 0.0
        %7659 = vmatpush1.msra.mxu0 %v7645
        %7660 = vmatprep.subr.mxu0 0.0
        %7661 = vmatpush1.msra.mxu0 0.0
        %7662 = vmatprep.subr.mxu0 0.0
        %7663 = vmatpush1.msra.mxu0 0.0
        %7664 = vmatprep.subr.mxu0 0.0
        %7665 = vmatpush1.msra.mxu0 0.0
        %7666 = vmatprep.subr.mxu0 0.0
        %7667 = vmatpush1.msra.mxu0 0.0
        %7668 = vmatprep.subr.mxu0 0.0
        %7669 = vmatpush1.msra.mxu0 0.0
        %7670 = vmatprep.subr.mxu0 0.0
        %7671 = vmatpush1.msra.mxu0 0.0
        %7672 = vmatprep.subr.mxu0 0.0
        %7673 = vmatpush1.msra.mxu0 0.0
        %7674 = vmatprep.subr.mxu0 0.0
        %7675 = vmatpush1.msra.mxu0 0.0
        %7676 = vmatprep.subr.mxu0 0.0
        %7677 = vmatpush1.msra.mxu0 0.0
        %7678 = vmatprep.subr.mxu0 0.0
        %7679 = vmatpush1.msra.mxu0 0.0
        %7680 = vmatprep.subr.mxu0 0.0
        %7681 = vmatpush1.msra.mxu0 0.0
        %7682 = vmatprep.subr.mxu0 0.0
        %7683 = vmatpush1.msra.mxu0 0.0
        %7684 = vmatprep.subr.mxu0 0.0
        %7685 = vmatpush1.msra.mxu0 0.0
        %7686 = vmatprep.subr.mxu0 0.0
        %7687 = vmatpush1.msra.mxu0 0.0
        %7688 = vmatprep.subr.mxu0 0.0
        %7689 = vmatpush1.msra.mxu0 0.0
        %7690 = vmatprep.subr.mxu0 0.0
        %7691 = vmatpush1.msra.mxu0 0.0
        %7692 = vmatprep.subr.mxu0 0.0
        %7693 = vmatpush1.msra.mxu0 0.0
        %7694 = vmatprep.subr.mxu0 0.0
        %7695 = vmatpush1.msra.mxu0 0.0
        %7696 = vmatprep.subr.mxu0 0.0
        %7697 = vmatpush1.msra.mxu0 0.0
        %7698 = vmatprep.subr.mxu0 0.0
        %7699 = vmatpush1.msra.mxu0 0.0
        %7700 = vmatprep.subr.mxu0 0.0
        %7701 = vmatpush1.msra.mxu0 0.0
        %7702 = vmatprep.subr.mxu0 0.0
        %7703 = vmatpush1.msra.mxu0 0.0
        %7704 = vmatprep.subr.mxu0 0.0
        %7705 = vmatpush1.msra.mxu0 0.0
        %7706 = vmatprep.subr.mxu0 0.0
        %7707 = vmatpush1.msra.mxu0 0.0
        %7708 = vmatprep.subr.mxu0 0.0
        %7709 = vmatpush1.msra.mxu0 0.0
        %7710 = vmatprep.subr.mxu0 0.0
        %7711 = vmatpush1.msra.mxu0 0.0
        %7712 = vmatprep.subr.mxu0 0.0
        %7713 = vmatpush1.msra.mxu0 0.0
        %7714 = vmatprep.subr.mxu0 0.0
        %7715 = vmatpush1.msra.mxu0 0.0
        %7716 = vmatprep.mubr.f32.mxu0 0.0
        %7717 = vmatmul.mubr.f32.gmra.mrb[0].mxu0 %v7647
        %v7718 = vpop.f32.mrb[0].mxu0
        %v7719 = vadd.f32 0.0, %v7718
        %v7720 = vpop.f32.mrb[0].mxu0
        %7721 = vmatprep.mubr.f32.mxu0 0.0
        %7722 = vmatmul.mubr.f32.gmra.mrb[0].mxu0 %v7650
        %v7723 = vpop.f32.mrb[0].mxu0
        %v7724 = vadd.f32 0.0, %v7723
        %v7725 = vpop.f32.mrb[0].mxu0
        %7726 = vdwg.mxu0
        %v7727 = vadd.f32 %v7634, %v7719
        %v7728 = vadd.f32 %v7635, %v7724
        %v7729 = vld [vmem:[%s7638 + $0x1] sm:$0xff]
        %v7730 = vld [vmem:[%s7638 + $0x11] sm:$0xff]
        %s7731 = scalar_lea.vmem %s7, 128
        %v7732 = vld [vmem:[%s7731] sm:$0xff]
        %v7733 = vld [vmem:[%s7731 + $0x8] sm:$0xff]
        %v7734 = vld [vmem:[%s7731 + $0x10] sm:$0xff]
        %v7735 = vld [vmem:[%s7731 + $0x18] sm:$0xff]
        %v7737 = vsel %vm981, %v7729, 0
        %v7740 = vsel %vm981, %v7730, 0
        %7742 = vmatprep.subr.mxu0 0.0
        %7743 = vmatpush1.msra.mxu0 %v7732
        %7744 = vmatprep.subr.mxu0 0.0
        %7745 = vmatpush1.msra.mxu0 %v7733
        %7746 = vmatprep.subr.mxu0 0.0
        %7747 = vmatpush1.msra.mxu0 %v7734
        %7748 = vmatprep.subr.mxu0 0.0
        %7749 = vmatpush1.msra.mxu0 %v7735
        %7750 = vmatprep.subr.mxu0 0.0
        %7751 = vmatpush1.msra.mxu0 0.0
        %7752 = vmatprep.subr.mxu0 0.0
        %7753 = vmatpush1.msra.mxu0 0.0
        %7754 = vmatprep.subr.mxu0 0.0
        %7755 = vmatpush1.msra.mxu0 0.0
        %7756 = vmatprep.subr.mxu0 0.0
        %7757 = vmatpush1.msra.mxu0 0.0
        %7758 = vmatprep.subr.mxu0 0.0
        %7759 = vmatpush1.msra.mxu0 0.0
        %7760 = vmatprep.subr.mxu0 0.0
        %7761 = vmatpush1.msra.mxu0 0.0
        %7762 = vmatprep.subr.mxu0 0.0
        %7763 = vmatpush1.msra.mxu0 0.0
        %7764 = vmatprep.subr.mxu0 0.0
        %7765 = vmatpush1.msra.mxu0 0.0
        %7766 = vmatprep.subr.mxu0 0.0
        %7767 = vmatpush1.msra.mxu0 0.0
        %7768 = vmatprep.subr.mxu0 0.0
        %7769 = vmatpush1.msra.mxu0 0.0
        %7770 = vmatprep.subr.mxu0 0.0
        %7771 = vmatpush1.msra.mxu0 0.0
        %7772 = vmatprep.subr.mxu0 0.0
        %7773 = vmatpush1.msra.mxu0 0.0
        %7774 = vmatprep.subr.mxu0 0.0
        %7775 = vmatpush1.msra.mxu0 0.0
        %7776 = vmatprep.subr.mxu0 0.0
        %7777 = vmatpush1.msra.mxu0 0.0
        %7778 = vmatprep.subr.mxu0 0.0
        %7779 = vmatpush1.msra.mxu0 0.0
        %7780 = vmatprep.subr.mxu0 0.0
        %7781 = vmatpush1.msra.mxu0 0.0
        %7782 = vmatprep.subr.mxu0 0.0
        %7783 = vmatpush1.msra.mxu0 0.0
        %7784 = vmatprep.subr.mxu0 0.0
        %7785 = vmatpush1.msra.mxu0 0.0
        %7786 = vmatprep.subr.mxu0 0.0
        %7787 = vmatpush1.msra.mxu0 0.0
        %7788 = vmatprep.subr.mxu0 0.0
        %7789 = vmatpush1.msra.mxu0 0.0
        %7790 = vmatprep.subr.mxu0 0.0
        %7791 = vmatpush1.msra.mxu0 0.0
        %7792 = vmatprep.subr.mxu0 0.0
        %7793 = vmatpush1.msra.mxu0 0.0
        %7794 = vmatprep.subr.mxu0 0.0
        %7795 = vmatpush1.msra.mxu0 0.0
        %7796 = vmatprep.subr.mxu0 0.0
        %7797 = vmatpush1.msra.mxu0 0.0
        %7798 = vmatprep.subr.mxu0 0.0
        %7799 = vmatpush1.msra.mxu0 0.0
        %7800 = vmatprep.subr.mxu0 0.0
        %7801 = vmatpush1.msra.mxu0 0.0
        %7802 = vmatprep.subr.mxu0 0.0
        %7803 = vmatpush1.msra.mxu0 0.0
        %7804 = vmatprep.subr.mxu0 0.0
        %7805 = vmatpush1.msra.mxu0 0.0
        %7806 = vmatprep.mubr.f32.mxu0 0.0
        %7807 = vmatmul.mubr.f32.gmra.mrb[0].mxu0 %v7737
        %v7808 = vpop.f32.mrb[0].mxu0
        %v7809 = vadd.f32 0.0, %v7808
        %v7810 = vpop.f32.mrb[0].mxu0
        %7811 = vmatprep.mubr.f32.mxu0 0.0
        %7812 = vmatmul.mubr.f32.gmra.mrb[0].mxu0 %v7740
        %v7813 = vpop.f32.mrb[0].mxu0
        %v7814 = vadd.f32 0.0, %v7813
        %v7815 = vpop.f32.mrb[0].mxu0
        %7816 = vdwg.mxu0
        %v7817 = vadd.f32 %v7727, %v7809
        %v7818 = vadd.f32 %v7728, %v7814
        %v7819 = vld [vmem:[%s7638 + $0x2] sm:$0xff]
        %v7820 = vld [vmem:[%s7638 + $0x12] sm:$0xff]
        %s7821 = scalar_lea.vmem %s7, 160
        %v7822 = vld [vmem:[%s7821] sm:$0xff]
        %v7823 = vld [vmem:[%s7821 + $0x8] sm:$0xff]
        %v7824 = vld [vmem:[%s7821 + $0x10] sm:$0xff]
        %v7825 = vld [vmem:[%s7821 + $0x18] sm:$0xff]
        %v7827 = vsel %vm981, %v7819, 0
        %v7830 = vsel %vm981, %v7820, 0
        %7832 = vmatprep.subr.mxu0 0.0
        %7833 = vmatpush1.msra.mxu0 %v7822
        %7834 = vmatprep.subr.mxu0 0.0
        %7835 = vmatpush1.msra.mxu0 %v7823
        %7836 = vmatprep.subr.mxu0 0.0
        %7837 = vmatpush1.msra.mxu0 %v7824
        %7838 = vmatprep.subr.mxu0 0.0
        %7839 = vmatpush1.msra.mxu0 %v7825
        %7840 = vmatprep.subr.mxu0 0.0
        %7841 = vmatpush1.msra.mxu0 0.0
        %7842 = vmatprep.subr.mxu0 0.0
        %7843 = vmatpush1.msra.mxu0 0.0
        %7844 = vmatprep.subr.mxu0 0.0
        %7845 = vmatpush1.msra.mxu0 0.0
        %7846 = vmatprep.subr.mxu0 0.0
        %7847 = vmatpush1.msra.mxu0 0.0
        %7848 = vmatprep.subr.mxu0 0.0
        %7849 = vmatpush1.msra.mxu0 0.0
        %7850 = vmatprep.subr.mxu0 0.0
        %7851 = vmatpush1.msra.mxu0 0.0
        %7852 = vmatprep.subr.mxu0 0.0
        %7853 = vmatpush1.msra.mxu0 0.0
        %7854 = vmatprep.subr.mxu0 0.0
        %7855 = vmatpush1.msra.mxu0 0.0
        %7856 = vmatprep.subr.mxu0 0.0
        %7857 = vmatpush1.msra.mxu0 0.0
        %7858 = vmatprep.subr.mxu0 0.0
        %7859 = vmatpush1.msra.mxu0 0.0
        %7860 = vmatprep.subr.mxu0 0.0
        %7861 = vmatpush1.msra.mxu0 0.0
        %7862 = vmatprep.subr.mxu0 0.0
        %7863 = vmatpush1.msra.mxu0 0.0
        %7864 = vmatprep.subr.mxu0 0.0
        %7865 = vmatpush1.msra.mxu0 0.0
        %7866 = vmatprep.subr.mxu0 0.0
        %7867 = vmatpush1.msra.mxu0 0.0
        %7868 = vmatprep.subr.mxu0 0.0
        %7869 = vmatpush1.msra.mxu0 0.0
        %7870 = vmatprep.subr.mxu0 0.0
        %7871 = vmatpush1.msra.mxu0 0.0
        %7872 = vmatprep.subr.mxu0 0.0
        %7873 = vmatpush1.msra.mxu0 0.0
        %7874 = vmatprep.subr.mxu0 0.0
        %7875 = vmatpush1.msra.mxu0 0.0
        %7876 = vmatprep.subr.mxu0 0.0
        %7877 = vmatpush1.msra.mxu0 0.0
        %7878 = vmatprep.subr.mxu0 0.0
        %7879 = vmatpush1.msra.mxu0 0.0
        %7880 = vmatprep.subr.mxu0 0.0
        %7881 = vmatpush1.msra.mxu0 0.0
        %7882 = vmatprep.subr.mxu0 0.0
        %7883 = vmatpush1.msra.mxu0 0.0
        %7884 = vmatprep.subr.mxu0 0.0
        %7885 = vmatpush1.msra.mxu0 0.0
        %7886 = vmatprep.subr.mxu0 0.0
        %7887 = vmatpush1.msra.mxu0 0.0
        %7888 = vmatprep.subr.mxu0 0.0
        %7889 = vmatpush1.msra.mxu0 0.0
        %7890 = vmatprep.subr.mxu0 0.0
        %7891 = vmatpush1.msra.mxu0 0.0
        %7892 = vmatprep.subr.mxu0 0.0
        %7893 = vmatpush1.msra.mxu0 0.0
        %7894 = vmatprep.subr.mxu0 0.0
        %7895 = vmatpush1.msra.mxu0 0.0
        %7896 = vmatprep.mubr.f32.mxu0 0.0
        %7897 = vmatmul.mubr.f32.gmra.mrb[0].mxu0 %v7827
        %v7898 = vpop.f32.mrb[0].mxu0
        %v7899 = vadd.f32 0.0, %v7898
        %v7900 = vpop.f32.mrb[0].mxu0
        %7901 = vmatprep.mubr.f32.mxu0 0.0
        %7902 = vmatmul.mubr.f32.gmra.mrb[0].mxu0 %v7830
        %v7903 = vpop.f32.mrb[0].mxu0
        %v7904 = vadd.f32 0.0, %v7903
        %v7905 = vpop.f32.mrb[0].mxu0
        %7906 = vdwg.mxu0
        %v7907 = vadd.f32 %v7817, %v7899
        %v7908 = vadd.f32 %v7818, %v7904
        %s7909 = sadd.s32 %s7368, 2
        %s7910 = smul.u32 %s7909, 16
        %s7911 = scalar_lea.vmem [#allocation5], %s7910
        %v7912 = vld [vmem:[%s7911] sm:$0xff]
        %v7913 = vld [vmem:[%s7911 + $0x10] sm:$0xff]
        %s7914 = scalar_lea.vmem %s7, 192
        %v7915 = vld [vmem:[%s7914] sm:$0xff]
        %v7916 = vld [vmem:[%s7914 + $0x8] sm:$0xff]
        %v7917 = vld [vmem:[%s7914 + $0x10] sm:$0xff]
        %v7918 = vld [vmem:[%s7914 + $0x18] sm:$0xff]
        %v7920 = vsel %vm981, %v7912, 0
        %v7923 = vsel %vm981, %v7913, 0
        %7925 = vmatprep.subr.mxu0 0.0
        %7926 = vmatpush1.msra.mxu0 %v7915
        %7927 = vmatprep.subr.mxu0 0.0
        %7928 = vmatpush1.msra.mxu0 %v7916
        %7929 = vmatprep.subr.mxu0 0.0
        %7930 = vmatpush1.msra.mxu0 %v7917
        %7931 = vmatprep.subr.mxu0 0.0
        %7932 = vmatpush1.msra.mxu0 %v7918
        %7933 = vmatprep.subr.mxu0 0.0
        %7934 = vmatpush1.msra.mxu0 0.0
        %7935 = vmatprep.subr.mxu0 0.0
        %7936 = vmatpush1.msra.mxu0 0.0
        %7937 = vmatprep.subr.mxu0 0.0
        %7938 = vmatpush1.msra.mxu0 0.0
        %7939 = vmatprep.subr.mxu0 0.0
        %7940 = vmatpush1.msra.mxu0 0.0
        %7941 = vmatprep.subr.mxu0 0.0
        %7942 = vmatpush1.msra.mxu0 0.0
        %7943 = vmatprep.subr.mxu0 0.0
        %7944 = vmatpush1.msra.mxu0 0.0
        %7945 = vmatprep.subr.mxu0 0.0
        %7946 = vmatpush1.msra.mxu0 0.0
        %7947 = vmatprep.subr.mxu0 0.0
        %7948 = vmatpush1.msra.mxu0 0.0
        %7949 = vmatprep.subr.mxu0 0.0
        %7950 = vmatpush1.msra.mxu0 0.0
        %7951 = vmatprep.subr.mxu0 0.0
        %7952 = vmatpush1.msra.mxu0 0.0
        %7953 = vmatprep.subr.mxu0 0.0
        %7954 = vmatpush1.msra.mxu0 0.0
        %7955 = vmatprep.subr.mxu0 0.0
        %7956 = vmatpush1.msra.mxu0 0.0
        %7957 = vmatprep.subr.mxu0 0.0
        %7958 = vmatpush1.msra.mxu0 0.0
        %7959 = vmatprep.subr.mxu0 0.0
        %7960 = vmatpush1.msra.mxu0 0.0
        %7961 = vmatprep.subr.mxu0 0.0
        %7962 = vmatpush1.msra.mxu0 0.0
        %7963 = vmatprep.subr.mxu0 0.0
        %7964 = vmatpush1.msra.mxu0 0.0
        %7965 = vmatprep.subr.mxu0 0.0
        %7966 = vmatpush1.msra.mxu0 0.0
        %7967 = vmatprep.subr.mxu0 0.0
        %7968 = vmatpush1.msra.mxu0 0.0
        %7969 = vmatprep.subr.mxu0 0.0
        %7970 = vmatpush1.msra.mxu0 0.0
        %7971 = vmatprep.subr.mxu0 0.0
        %7972 = vmatpush1.msra.mxu0 0.0
        %7973 = vmatprep.subr.mxu0 0.0
        %7974 = vmatpush1.msra.mxu0 0.0
        %7975 = vmatprep.subr.mxu0 0.0
        %7976 = vmatpush1.msra.mxu0 0.0
        %7977 = vmatprep.subr.mxu0 0.0
        %7978 = vmatpush1.msra.mxu0 0.0
        %7979 = vmatprep.subr.mxu0 0.0
        %7980 = vmatpush1.msra.mxu0 0.0
        %7981 = vmatprep.subr.mxu0 0.0
        %7982 = vmatpush1.msra.mxu0 0.0
        %7983 = vmatprep.subr.mxu0 0.0
        %7984 = vmatpush1.msra.mxu0 0.0
        %7985 = vmatprep.subr.mxu0 0.0
        %7986 = vmatpush1.msra.mxu0 0.0
        %7987 = vmatprep.subr.mxu0 0.0
        %7988 = vmatpush1.msra.mxu0 0.0
        %7989 = vmatprep.mubr.f32.mxu0 0.0
        %7990 = vmatmul.mubr.f32.gmra.mrb[0].mxu0 %v7920
        %v7991 = vpop.f32.mrb[0].mxu0
        %v7992 = vadd.f32 0.0, %v7991
        %v7993 = vpop.f32.mrb[0].mxu0
        %7994 = vmatprep.mubr.f32.mxu0 0.0
        %7995 = vmatmul.mubr.f32.gmra.mrb[0].mxu0 %v7923
        %v7996 = vpop.f32.mrb[0].mxu0
        %v7997 = vadd.f32 0.0, %v7996
        %v7998 = vpop.f32.mrb[0].mxu0
        %7999 = vdwg.mxu0
        %v8000 = vadd.f32 %v7907, %v7992
        %v8001 = vadd.f32 %v7908, %v7997
        %v8002 = vld [vmem:[%s7911 + $0x1] sm:$0xff]
        %v8003 = vld [vmem:[%s7911 + $0x11] sm:$0xff]
        %s8004 = scalar_lea.vmem %s7, 224
        %v8005 = vld [vmem:[%s8004] sm:$0xff]
        %v8006 = vld [vmem:[%s8004 + $0x8] sm:$0xff]
        %v8007 = vld [vmem:[%s8004 + $0x10] sm:$0xff]
        %v8008 = vld [vmem:[%s8004 + $0x18] sm:$0xff]
        %v8010 = vsel %vm981, %v8002, 0
        %v8013 = vsel %vm981, %v8003, 0
        %8015 = vmatprep.subr.mxu0 0.0
        %8016 = vmatpush1.msra.mxu0 %v8005
        %8017 = vmatprep.subr.mxu0 0.0
        %8018 = vmatpush1.msra.mxu0 %v8006
        %8019 = vmatprep.subr.mxu0 0.0
        %8020 = vmatpush1.msra.mxu0 %v8007
        %8021 = vmatprep.subr.mxu0 0.0
        %8022 = vmatpush1.msra.mxu0 %v8008
        %8023 = vmatprep.subr.mxu0 0.0
        %8024 = vmatpush1.msra.mxu0 0.0
        %8025 = vmatprep.subr.mxu0 0.0
        %8026 = vmatpush1.msra.mxu0 0.0
        %8027 = vmatprep.subr.mxu0 0.0
        %8028 = vmatpush1.msra.mxu0 0.0
        %8029 = vmatprep.subr.mxu0 0.0
        %8030 = vmatpush1.msra.mxu0 0.0
        %8031 = vmatprep.subr.mxu0 0.0
        %8032 = vmatpush1.msra.mxu0 0.0
        %8033 = vmatprep.subr.mxu0 0.0
        %8034 = vmatpush1.msra.mxu0 0.0
        %8035 = vmatprep.subr.mxu0 0.0
        %8036 = vmatpush1.msra.mxu0 0.0
        %8037 = vmatprep.subr.mxu0 0.0
        %8038 = vmatpush1.msra.mxu0 0.0
        %8039 = vmatprep.subr.mxu0 0.0
        %8040 = vmatpush1.msra.mxu0 0.0
        %8041 = vmatprep.subr.mxu0 0.0
        %8042 = vmatpush1.msra.mxu0 0.0
        %8043 = vmatprep.subr.mxu0 0.0
        %8044 = vmatpush1.msra.mxu0 0.0
        %8045 = vmatprep.subr.mxu0 0.0
        %8046 = vmatpush1.msra.mxu0 0.0
        %8047 = vmatprep.subr.mxu0 0.0
        %8048 = vmatpush1.msra.mxu0 0.0
        %8049 = vmatprep.subr.mxu0 0.0
        %8050 = vmatpush1.msra.mxu0 0.0
        %8051 = vmatprep.subr.mxu0 0.0
        %8052 = vmatpush1.msra.mxu0 0.0
        %8053 = vmatprep.subr.mxu0 0.0
        %8054 = vmatpush1.msra.mxu0 0.0
        %8055 = vmatprep.subr.mxu0 0.0
        %8056 = vmatpush1.msra.mxu0 0.0
        %8057 = vmatprep.subr.mxu0 0.0
        %8058 = vmatpush1.msra.mxu0 0.0
        %8059 = vmatprep.subr.mxu0 0.0
        %8060 = vmatpush1.msra.mxu0 0.0
        %8061 = vmatprep.subr.mxu0 0.0
        %8062 = vmatpush1.msra.mxu0 0.0
        %8063 = vmatprep.subr.mxu0 0.0
        %8064 = vmatpush1.msra.mxu0 0.0
        %8065 = vmatprep.subr.mxu0 0.0
        %8066 = vmatpush1.msra.mxu0 0.0
        %8067 = vmatprep.subr.mxu0 0.0
        %8068 = vmatpush1.msra.mxu0 0.0
        %8069 = vmatprep.subr.mxu0 0.0
        %8070 = vmatpush1.msra.mxu0 0.0
        %8071 = vmatprep.subr.mxu0 0.0
        %8072 = vmatpush1.msra.mxu0 0.0
        %8073 = vmatprep.subr.mxu0 0.0
        %8074 = vmatpush1.msra.mxu0 0.0
        %8075 = vmatprep.subr.mxu0 0.0
        %8076 = vmatpush1.msra.mxu0 0.0
        %8077 = vmatprep.subr.mxu0 0.0
        %8078 = vmatpush1.msra.mxu0 0.0
        %8079 = vmatprep.mubr.f32.mxu0 0.0
        %8080 = vmatmul.mubr.f32.gmra.mrb[0].mxu0 %v8010
        %v8081 = vpop.f32.mrb[0].mxu0
        %v8082 = vadd.f32 0.0, %v8081
        %v8083 = vpop.f32.mrb[0].mxu0
        %8084 = vmatprep.mubr.f32.mxu0 0.0
        %8085 = vmatmul.mubr.f32.gmra.mrb[0].mxu0 %v8013
        %v8086 = vpop.f32.mrb[0].mxu0
        %v8087 = vadd.f32 0.0, %v8086
        %v8088 = vpop.f32.mrb[0].mxu0
        %8089 = vdwg.mxu0
        %v8090 = vadd.f32 %v8000, %v8082
        %v8091 = vadd.f32 %v8001, %v8087
        %v8092 = vld [vmem:[%s7911 + $0x2] sm:$0xff]
        %v8093 = vld [vmem:[%s7911 + $0x12] sm:$0xff]
        %s8094 = scalar_lea.vmem %s7, 256
        %v8095 = vld [vmem:[%s8094] sm:$0xff]
        %v8096 = vld [vmem:[%s8094 + $0x8] sm:$0xff]
        %v8097 = vld [vmem:[%s8094 + $0x10] sm:$0xff]
        %v8098 = vld [vmem:[%s8094 + $0x18] sm:$0xff]
        %v8100 = vsel %vm981, %v8092, 0
        %v8103 = vsel %vm981, %v8093, 0
        %8105 = vmatprep.subr.mxu0 0.0
        %8106 = vmatpush1.msra.mxu0 %v8095
        %8107 = vmatprep.subr.mxu0 0.0
        %8108 = vmatpush1.msra.mxu0 %v8096
        %8109 = vmatprep.subr.mxu0 0.0
        %8110 = vmatpush1.msra.mxu0 %v8097
        %8111 = vmatprep.subr.mxu0 0.0
        %8112 = vmatpush1.msra.mxu0 %v8098
        %8113 = vmatprep.subr.mxu0 0.0
        %8114 = vmatpush1.msra.mxu0 0.0
        %8115 = vmatprep.subr.mxu0 0.0
        %8116 = vmatpush1.msra.mxu0 0.0
        %8117 = vmatprep.subr.mxu0 0.0
        %8118 = vmatpush1.msra.mxu0 0.0
        %8119 = vmatprep.subr.mxu0 0.0
        %8120 = vmatpush1.msra.mxu0 0.0
        %8121 = vmatprep.subr.mxu0 0.0
        %8122 = vmatpush1.msra.mxu0 0.0
        %8123 = vmatprep.subr.mxu0 0.0
        %8124 = vmatpush1.msra.mxu0 0.0
        %8125 = vmatprep.subr.mxu0 0.0
        %8126 = vmatpush1.msra.mxu0 0.0
        %8127 = vmatprep.subr.mxu0 0.0
        %8128 = vmatpush1.msra.mxu0 0.0
        %8129 = vmatprep.subr.mxu0 0.0
        %8130 = vmatpush1.msra.mxu0 0.0
        %8131 = vmatprep.subr.mxu0 0.0
        %8132 = vmatpush1.msra.mxu0 0.0
        %8133 = vmatprep.subr.mxu0 0.0
        %8134 = vmatpush1.msra.mxu0 0.0
        %8135 = vmatprep.subr.mxu0 0.0
        %8136 = vmatpush1.msra.mxu0 0.0
        %8137 = vmatprep.subr.mxu0 0.0
        %8138 = vmatpush1.msra.mxu0 0.0
        %8139 = vmatprep.subr.mxu0 0.0
        %8140 = vmatpush1.msra.mxu0 0.0
        %8141 = vmatprep.subr.mxu0 0.0
        %8142 = vmatpush1.msra.mxu0 0.0
        %8143 = vmatprep.subr.mxu0 0.0
        %8144 = vmatpush1.msra.mxu0 0.0
        %8145 = vmatprep.subr.mxu0 0.0
        %8146 = vmatpush1.msra.mxu0 0.0
        %8147 = vmatprep.subr.mxu0 0.0
        %8148 = vmatpush1.msra.mxu0 0.0
        %8149 = vmatprep.subr.mxu0 0.0
        %8150 = vmatpush1.msra.mxu0 0.0
        %8151 = vmatprep.subr.mxu0 0.0
        %8152 = vmatpush1.msra.mxu0 0.0
        %8153 = vmatprep.subr.mxu0 0.0
        %8154 = vmatpush1.msra.mxu0 0.0
        %8155 = vmatprep.subr.mxu0 0.0
        %8156 = vmatpush1.msra.mxu0 0.0
        %8157 = vmatprep.subr.mxu0 0.0
        %8158 = vmatpush1.msra.mxu0 0.0
        %8159 = vmatprep.subr.mxu0 0.0
        %8160 = vmatpush1.msra.mxu0 0.0
        %8161 = vmatprep.subr.mxu0 0.0
        %8162 = vmatpush1.msra.mxu0 0.0
        %8163 = vmatprep.subr.mxu0 0.0
        %8164 = vmatpush1.msra.mxu0 0.0
        %8165 = vmatprep.subr.mxu0 0.0
        %8166 = vmatpush1.msra.mxu0 0.0
        %8167 = vmatprep.subr.mxu0 0.0
        %8168 = vmatpush1.msra.mxu0 0.0
        %8169 = vmatprep.mubr.f32.mxu0 0.0
        %8170 = vmatmul.mubr.f32.gmra.mrb[0].mxu0 %v8100
        %v8171 = vpop.f32.mrb[0].mxu0
        %v8172 = vadd.f32 0.0, %v8171
        %v8173 = vpop.f32.mrb[0].mxu0
        %8174 = vmatprep.mubr.f32.mxu0 0.0
        %8175 = vmatmul.mubr.f32.gmra.mrb[0].mxu0 %v8103
        %v8176 = vpop.f32.mrb[0].mxu0
        %v8177 = vadd.f32 0.0, %v8176
        %v8178 = vpop.f32.mrb[0].mxu0
        %8179 = vdwg.mxu0
        %v8180 = vadd.f32 %v8090, %v8172
        %v8181 = vadd.f32 %v8091, %v8177
        %v8183 = vlaneseq
        %v8184 = vshrl.u32 %v8183, 7
        %v8185 = vsub.s32 0, %v8184
        %v8186 = vrot.slane %v7361, %v8185
        %v8188 = vadd.f32 %v8180, %v8186
        %v8189 = vadd.f32 %v8181, %v8186
        %v8190 = vmax.f32 %v8188, 0.0
        %v8191 = vmax.f32 %v8189, 0.0
        %vm8192 = vcmask 130048
        %v8194 = vsel %vm8192, %v2279, 0
        %8196 = vmatprep.subr.mxu0 0.0
        %8197 = vmatpush1.msra.mxu0 %v8190
        %8198 = vmatprep.subr.mxu0 0.0
        %8199 = vmatpush1.msra.mxu0 %v8191
        %8200 = vmatprep.subr.mxu0 0.0
        %8201 = vmatpush1.msra.mxu0 0.0
        %8202 = vmatprep.subr.mxu0 0.0
        %8203 = vmatpush1.msra.mxu0 0.0
        %8204 = vmatprep.subr.mxu0 0.0
        %8205 = vmatpush1.msra.mxu0 0.0
        %8206 = vmatprep.subr.mxu0 0.0
        %8207 = vmatpush1.msra.mxu0 0.0
        %8208 = vmatprep.subr.mxu0 0.0
        %8209 = vmatpush1.msra.mxu0 0.0
        %8210 = vmatprep.subr.mxu0 0.0
        %8211 = vmatpush1.msra.mxu0 0.0
        %8212 = vmatprep.subr.mxu0 0.0
        %8213 = vmatpush1.msra.mxu0 0.0
        %8214 = vmatprep.subr.mxu0 0.0
        %8215 = vmatpush1.msra.mxu0 0.0
        %8216 = vmatprep.subr.mxu0 0.0
        %8217 = vmatpush1.msra.mxu0 0.0
        %8218 = vmatprep.subr.mxu0 0.0
        %8219 = vmatpush1.msra.mxu0 0.0
        %8220 = vmatprep.subr.mxu0 0.0
        %8221 = vmatpush1.msra.mxu0 0.0
        %8222 = vmatprep.subr.mxu0 0.0
        %8223 = vmatpush1.msra.mxu0 0.0
        %8224 = vmatprep.subr.mxu0 0.0
        %8225 = vmatpush1.msra.mxu0 0.0
        %8226 = vmatprep.subr.mxu0 0.0
        %8227 = vmatpush1.msra.mxu0 0.0
        %8228 = vmatprep.subr.mxu0 0.0
        %8229 = vmatpush1.msra.mxu0 0.0
        %8230 = vmatprep.subr.mxu0 0.0
        %8231 = vmatpush1.msra.mxu0 0.0
        %8232 = vmatprep.subr.mxu0 0.0
        %8233 = vmatpush1.msra.mxu0 0.0
        %8234 = vmatprep.subr.mxu0 0.0
        %8235 = vmatpush1.msra.mxu0 0.0
        %8236 = vmatprep.subr.mxu0 0.0
        %8237 = vmatpush1.msra.mxu0 0.0
        %8238 = vmatprep.subr.mxu0 0.0
        %8239 = vmatpush1.msra.mxu0 0.0
        %8240 = vmatprep.subr.mxu0 0.0
        %8241 = vmatpush1.msra.mxu0 0.0
        %8242 = vmatprep.subr.mxu0 0.0
        %8243 = vmatpush1.msra.mxu0 0.0
        %8244 = vmatprep.subr.mxu0 0.0
        %8245 = vmatpush1.msra.mxu0 0.0
        %8246 = vmatprep.subr.mxu0 0.0
        %8247 = vmatpush1.msra.mxu0 0.0
        %8248 = vmatprep.subr.mxu0 0.0
        %8249 = vmatpush1.msra.mxu0 0.0
        %8250 = vmatprep.subr.mxu0 0.0
        %8251 = vmatpush1.msra.mxu0 0.0
        %8252 = vmatprep.subr.mxu0 0.0
        %8253 = vmatpush1.msra.mxu0 0.0
        %8254 = vmatprep.subr.mxu0 0.0
        %8255 = vmatpush1.msra.mxu0 0.0
        %8256 = vmatprep.subr.mxu0 0.0
        %8257 = vmatpush1.msra.mxu0 0.0
        %8258 = vmatprep.subr.mxu0 0.0
        %8259 = vmatpush1.msra.mxu0 0.0
        %8260 = vmatprep.mubr.f32.mxu0 0.0
        %8261 = vmatmul.mubr.f32.gmra.mrb[0].mxu0 %v8194
        %v8262 = vpop.f32.mrb[0].mxu0
        %v8263 = vadd.f32 0.0, %v8262
        %v8264 = vpop.f32.mrb[0].mxu0
        %8265 = vdwg.mxu0
        %v8267 = vsel %vm8192, %v2303, 0
        %8269 = vmatprep.subr.mxu0 0.0
        %8270 = vmatpush1.msra.mxu0 %v8190
        %8271 = vmatprep.subr.mxu0 0.0
        %8272 = vmatpush1.msra.mxu0 %v8191
        %8273 = vmatprep.subr.mxu0 0.0
        %8274 = vmatpush1.msra.mxu0 0.0
        %8275 = vmatprep.subr.mxu0 0.0
        %8276 = vmatpush1.msra.mxu0 0.0
        %8277 = vmatprep.subr.mxu0 0.0
        %8278 = vmatpush1.msra.mxu0 0.0
        %8279 = vmatprep.subr.mxu0 0.0
        %8280 = vmatpush1.msra.mxu0 0.0
        %8281 = vmatprep.subr.mxu0 0.0
        %8282 = vmatpush1.msra.mxu0 0.0
        %8283 = vmatprep.subr.mxu0 0.0
        %8284 = vmatpush1.msra.mxu0 0.0
        %8285 = vmatprep.subr.mxu0 0.0
        %8286 = vmatpush1.msra.mxu0 0.0
        %8287 = vmatprep.subr.mxu0 0.0
        %8288 = vmatpush1.msra.mxu0 0.0
        %8289 = vmatprep.subr.mxu0 0.0
        %8290 = vmatpush1.msra.mxu0 0.0
        %8291 = vmatprep.subr.mxu0 0.0
        %8292 = vmatpush1.msra.mxu0 0.0
        %8293 = vmatprep.subr.mxu0 0.0
        %8294 = vmatpush1.msra.mxu0 0.0
        %8295 = vmatprep.subr.mxu0 0.0
        %8296 = vmatpush1.msra.mxu0 0.0
        %8297 = vmatprep.subr.mxu0 0.0
        %8298 = vmatpush1.msra.mxu0 0.0
        %8299 = vmatprep.subr.mxu0 0.0
        %8300 = vmatpush1.msra.mxu0 0.0
        %8301 = vmatprep.subr.mxu0 0.0
        %8302 = vmatpush1.msra.mxu0 0.0
        %8303 = vmatprep.subr.mxu0 0.0
        %8304 = vmatpush1.msra.mxu0 0.0
        %8305 = vmatprep.subr.mxu0 0.0
        %8306 = vmatpush1.msra.mxu0 0.0
        %8307 = vmatprep.subr.mxu0 0.0
        %8308 = vmatpush1.msra.mxu0 0.0
        %8309 = vmatprep.subr.mxu0 0.0
        %8310 = vmatpush1.msra.mxu0 0.0
        %8311 = vmatprep.subr.mxu0 0.0
        %8312 = vmatpush1.msra.mxu0 0.0
        %8313 = vmatprep.subr.mxu0 0.0
        %8314 = vmatpush1.msra.mxu0 0.0
        %8315 = vmatprep.subr.mxu0 0.0
        %8316 = vmatpush1.msra.mxu0 0.0
        %8317 = vmatprep.subr.mxu0 0.0
        %8318 = vmatpush1.msra.mxu0 0.0
        %8319 = vmatprep.subr.mxu0 0.0
        %8320 = vmatpush1.msra.mxu0 0.0
        %8321 = vmatprep.subr.mxu0 0.0
        %8322 = vmatpush1.msra.mxu0 0.0
        %8323 = vmatprep.subr.mxu0 0.0
        %8324 = vmatpush1.msra.mxu0 0.0
        %8325 = vmatprep.subr.mxu0 0.0
        %8326 = vmatpush1.msra.mxu0 0.0
        %8327 = vmatprep.subr.mxu0 0.0
        %8328 = vmatpush1.msra.mxu0 0.0
        %8329 = vmatprep.subr.mxu0 0.0
        %8330 = vmatpush1.msra.mxu0 0.0
        %8331 = vmatprep.subr.mxu0 0.0
        %8332 = vmatpush1.msra.mxu0 0.0
        %8333 = vmatprep.mubr.f32.mxu0 0.0
        %8334 = vmatmul.mubr.f32.gmra.mrb[0].mxu0 %v8267
        %v8335 = vpop.f32.mrb[0].mxu0
        %v8336 = vadd.f32 0.0, %v8335
        %v8337 = vpop.f32.mrb[0].mxu0
        %8338 = vdwg.mxu0
        %v8339 = vmax.f32 %v8263, %v8336
        %v8341 = vrot.slane %v8339, 4
        %v8343 = vmax.f32 %v8339, %v8341
        %s8344 = smul.u32 %s7363, 4
        %s8345 = scalar_lea.vmem [#allocation6], %s8344
        %vm8346 = vcmask 257024
        %8347 = vst.msk [vmem:[%s8345] sm:$0xf] %vm8346, %v8343
      $region90: #{simple_cnn_forward.1} parent=63 // loop_footer
        %s7367 = sadd.s32 1, %s7363
      $region91: #{simple_cnn_forward.1} parent=63 // loop_footer_branch
        %7362 = sbr.rel target = $region87
      $region92: #{simple_cnn_forward.1} parent=63 // loop_exit
        _
      %v8348 = vld [vmem:[#allocation6] sm:$0xf]
      %v8349 = vld [vmem:[#allocation6 + $0x4] sm:$0xf]
      %v8350 = vld [vmem:[#allocation6 + $0x8] sm:$0xf]
      %v8351 = vld [vmem:[#allocation6 + $0xc] sm:$0xf]
      %v8352 = vld [vmem:[%s9] sm:$0xf]
      %v8353 = vld [vmem:[%s9 + $0x4] sm:$0xf]
      %v8354 = vld [vmem:[%s9 + $0x8] sm:$0xf]
      %v8355 = vld [vmem:[%s9 + $0xc] sm:$0xf]
      %v8356 = vmul.f32 %v8348, %v8352
      %v8357 = vmul.f32 %v8349, %v8353
      %v8358 = vmul.f32 %v8350, %v8354
      %v8359 = vmul.f32 %v8351, %v8355
      %vm8360 = vcmask 257024
      %v8361 = vsel %vm8360, %v8356, 0.0
      %8362 = vadd.xlane.f32.xlu0 %v8361
      %v8363 = vpop.xlane.xlu0 %8362
      %v8364 = vsel %vm8360, %v8357, 0.0
      %8365 = vadd.xlane.f32.xlu0 %v8364
      %v8366 = vpop.xlane.xlu0 %8365
      %v8367 = vsel %vm8360, %v8358, 0.0
      %8368 = vadd.xlane.f32.xlu0 %v8367
      %v8369 = vpop.xlane.xlu0 %8368
      %v8370 = vsel %vm8360, %v8359, 0.0
      %8371 = vadd.xlane.f32.xlu0 %v8370
      %v8372 = vpop.xlane.xlu0 %8371
      %vm8373 = vcmask 1043456
      %v8374 = vsel %vm8373, %v8363, 0.0
      %v8375 = vrot.slane %v8374, 4
      %v8376 = vadd.f32 %v8374, %v8375
      %v8377 = vrot.slane %v8376, 2
      %v8378 = vadd.f32 %v8376, %v8377
      %v8379 = vrot.slane %v8378, 1
      %v8380 = vadd.f32 %v8378, %v8379
      %v8381 = vsel %vm8373, %v8366, 0.0
      %v8382 = vrot.slane %v8381, 4
      %v8383 = vadd.f32 %v8381, %v8382
      %v8384 = vrot.slane %v8383, 2
      %v8385 = vadd.f32 %v8383, %v8384
      %v8386 = vrot.slane %v8385, 1
      %v8387 = vadd.f32 %v8385, %v8386
      %v8388 = vsel %vm8373, %v8369, 0.0
      %v8389 = vrot.slane %v8388, 4
      %v8390 = vadd.f32 %v8388, %v8389
      %v8391 = vrot.slane %v8390, 2
      %v8392 = vadd.f32 %v8390, %v8391
      %v8393 = vrot.slane %v8392, 1
      %v8394 = vadd.f32 %v8392, %v8393
      %v8395 = vsel %vm8373, %v8372, 0.0
      %v8396 = vrot.slane %v8395, 4
      %v8397 = vadd.f32 %v8395, %v8396
      %v8398 = vrot.slane %v8397, 2
      %v8399 = vadd.f32 %v8397, %v8398
      %v8400 = vrot.slane %v8399, 1
      %v8401 = vadd.f32 %v8399, %v8400
      %v8402 = vadd.f32 %v8380, %v8387
      %v8403 = vadd.f32 %v8402, %v8394
      %v8404 = vadd.f32 %v8403, %v8401
      %v8405 = vld [vmem:[#allocation7] sm:$0x1]
      %v8406 = vadd.f32 %v8404, %v8405
      %v8407 = vsub.f32 0.0, %v8406
      %v8408 = vmul.f32 %v8407, 1.442695
      %v8409 = vpow.pop %v8408
      %v8410 = vadd.f32 %v8409, 1.0
      %v8411 = vrcp.pop %v8410
      %v8412 = vmul.f32 1.0, %v8411
      %vm8413 = vcmask 0
      %8414 = vst.msk [vmem:[%s384] sm:$0x1] %vm8413, %v8412
      %p8415 = scmp.lt.s32.totalorder %s24, 1
      %s8416 = scalar_select %p8415, %s24, 1
      %s8417 = scalar_lea.vmem %s11, %s8416
      // Predicated region
      $region93: #{simple_cnn_forward.1} parent=63 // pred_check
        %p8418 = pneg %p278
      $region94: #{simple_cnn_forward.1} parent=63 // pred_check_branch
        %8420 = sbr.rel (%p8418) target = $region96
      $region95: #{simple_cnn_forward.1} parent=63 // pred_region
        _
      $region96: #{simple_cnn_forward.1} parent=63 // pred_fallthru
        _
    $region64: #{simple_cnn_forward.1} parent=5 // pred_fallthru
      _
    %p8421 = scmp.le.s32.totalorder 2, %s19
    // Predicated region
    $region97: #{simple_cnn_forward.1} parent=5 // pred_check
      %p8422 = pneg %p8421
    $region98: #{simple_cnn_forward.1} parent=5 // pred_check_branch
      %8424 = sbr.rel (%p8422) target = $region100
    $region99: #{simple_cnn_forward.1} parent=5 // pred_region
      %s8425 = ssub.s32 %s19, 2
      // Predicated region
      $region101: #{simple_cnn_forward.1} parent=99 // pred_check
        %p8426 = pneg %p284
      $region102: #{simple_cnn_forward.1} parent=99 // pred_check_branch
        %8428 = sbr.rel (%p8426) target = $region104
      $region103: #{simple_cnn_forward.1} parent=99 // pred_region
        %p8429 = scmp.lt.s32.totalorder %s25, 1
        %s8430 = scalar_select %p8429, %s25, 1
        %s8431 = scalar_lea.vmem %s11, %s8430
      $region104: #{simple_cnn_forward.1} parent=99 // pred_fallthru
        _
    $region100: #{simple_cnn_forward.1} parent=5 // pred_fallthru
      _
  $region6: #{simple_cnn_forward.1} parent=0 // loop_footer
    %s23 = sadd.s32 1, %s19
  $region7: #{simple_cnn_forward.1} parent=0 // loop_footer_branch
    %18 = sbr.rel target = $region3
  $region8: #{simple_cnn_forward.1} parent=0 // loop_exit
    _

</llo_original>
